<compile_context>
chip_gen: v7x
topology: tpu7x:2x2x1
jax: 0.10.0
libtpu: 0.0.40
codegen_flags: <defaults>
</compile_context>

<pallas_src>
import functools
import math

import jax
import jax.numpy as jnp
from jax.experimental import pallas as pl
from jax.experimental.pallas import tpu as pltpu

# ----------------------------- model constants ------------------------------
NGF = 4
HIDDEN = 32      # config.hidden_size
NUM_HEADS = 4
MLP_DIM = 64
NUM_LAYERS = 2
BN_EPS = 1e-5
LN_EPS = 1e-6

TILE_M = 512     # lane tile for channel-major conv matmuls / BN
TILE_R = 256     # row tile for transformer token kernels


# ----------------------------- small helpers --------------------------------
def _round_up(n, m):
    return ((n + m - 1) // m) * m


def _pick_tile(n, tile):
    """Return (padded_n, tile, grid). Uses one full-extent block when n <= tile."""
    if n <= tile:
        return n, n, 1
    npad = _round_up(n, tile)
    return npad, tile, npad // tile


def _activate(x, activation):
    if activation == "relu":
        return jnp.maximum(x, 0.0)
    if activation == "tanh":
        return jnp.tanh(x)
    if activation == "gelu":
        # TODO(synk): PyTorch nn.GELU default is exact erf; tanh approximation used here.
        c = math.sqrt(2.0 / math.pi)
        return 0.5 * x * (1.0 + jnp.tanh(c * (x + 0.044715 * x * x * x)))
    return x


# ----------------------------- Pallas kernels -------------------------------
def _mm_cm_kernel(w_ref, x_ref, *rest, activation, has_bias):
    """(Cout, K) @ (K, tm) + bias, fused activation. Lane-dense output."""
    if has_bias:
        b_ref, o_ref = rest
    else:
        (o_ref,) = rest
    acc = jnp.dot(w_ref[...], x_ref[...], preferred_element_type=jnp.float32)
    if has_bias:
        acc = acc + b_ref[...]
    o_ref[...] = _activate(acc, activation)


def matmul_cm(w, x, bias=None, activation="none", tile_m=TILE_M):
    """w: (Cout, K) bf16; x: (K, M); bias: (Cout, 1) f32 or None -> (Cout, M) f32."""
    Cout, K = w.shape
    M = x.shape[1]
    Mp, tm, gm = _pick_tile(M, tile_m)
    x = x.astype(jnp.bfloat16)
    if Mp != M:
        x = jnp.pad(x, ((0, 0), (0, Mp - M)))
    in_specs = [pl.BlockSpec((Cout, K), lambda m: (0, 0)),
                pl.BlockSpec((K, tm), lambda m: (0, m))]
    args = [w, x]
    if bias is not None:
        in_specs.append(pl.BlockSpec((Cout, 1), lambda m: (0, 0)))
        args.append(bias)
    y = pl.pallas_call(
        functools.partial(_mm_cm_kernel, activation=activation,
                          has_bias=bias is not None),
        grid=(gm,),
        in_specs=in_specs,
        out_specs=pl.BlockSpec((Cout, tm), lambda m: (0, m)),
        out_shape=jax.ShapeDtypeStruct((Cout, Mp), jnp.float32),
        compiler_params=pltpu.CompilerParams(dimension_semantics=("parallel",)),
    )(*args)
    return y[:, :M] if Mp != M else y


def _bn_stats_kernel(x_ref, s_ref, ss_ref, *, tile_m, m_total):
    @pl.when(pl.program_id(0) == 0)
    def _init():
        s_ref[...] = jnp.zeros_like(s_ref)
        ss_ref[...] = jnp.zeros_like(ss_ref)

    x = x_ref[...]
    col = pl.program_id(0) * tile_m + jax.lax.broadcasted_iota(jnp.int32, x.shape, 1)
    x = jnp.where(col < m_total, x, 0.0)
    s_ref[...] += jnp.sum(x, axis=1, keepdims=True)
    ss_ref[...] += jnp.sum(x * x, axis=1, keepdims=True)


def _bn_apply_kernel(x_ref, s_ref, ss_ref, g_ref, b_ref, o_ref, *, count, eps, relu):
    inv_n = 1.0 / count
    mean = s_ref[...] * inv_n
    var = jnp.maximum(ss_ref[...] * inv_n - mean * mean, 0.0)
    scale = jax.lax.rsqrt(var + eps) * g_ref[...]
    y = (x_ref[...] - mean) * scale + b_ref[...]
    if relu:
        y = jnp.maximum(y, 0.0)
    o_ref[...] = y


def batchnorm_relu_cm(x4, gamma, beta, relu=True, eps=BN_EPS, tile_m=TILE_M):
    """Training-mode BatchNorm2d (+optional ReLU) on a channel-major (C,N,H,W) tensor."""
    C, N, H, W = x4.shape
    M = N * H * W
    x2 = x4.reshape(C, M)
    Mp, tm, gm = _pick_tile(M, tile_m)
    if Mp != M:
        x2 = jnp.pad(x2, ((0, 0), (0, Mp - M)))

    stat_spec = pl.BlockSpec((C, 1), lambda m: (0, 0))
    s, ss = pl.pallas_call(
        functools.partial(_bn_stats_kernel, tile_m=tm, m_total=M),
        grid=(gm,),
        in_specs=[pl.BlockSpec((C, tm), lambda m: (0, m))],
        out_specs=(stat_spec, stat_spec),
        out_shape=(jax.ShapeDtypeStruct((C, 1), jnp.float32),
                   jax.ShapeDtypeStruct((C, 1), jnp.float32)),
        compiler_params=pltpu.CompilerParams(dimension_semantics=("arbitrary",)),
    )(x2)

    y = pl.pallas_call(
        functools.partial(_bn_apply_kernel, count=float(M), eps=eps, relu=relu),
        grid=(gm,),
        in_specs=[pl.BlockSpec((C, tm), lambda m: (0, m)),
                  stat_spec, stat_spec,
                  pl.BlockSpec((C, 1), lambda m: (0, 0)),
                  pl.BlockSpec((C, 1), lambda m: (0, 0))],
        out_specs=pl.BlockSpec((C, tm), lambda m: (0, m)),
        out_shape=jax.ShapeDtypeStruct((C, Mp), jnp.float32),
        compiler_params=pltpu.CompilerParams(dimension_semantics=("parallel",)),
    )(x2, s, ss, gamma, beta)
    if Mp != M:
        y = y[:, :M]
    return y.reshape(C, N, H, W)


def _ln_kernel(x_ref, g_ref, b_ref, o_ref, *, eps):
    x = x_ref[...]
    mean = jnp.mean(x, axis=1, keepdims=True)
    xc = x - mean
    var = jnp.mean(xc * xc, axis=1, keepdims=True)
    o_ref[...] = xc * jax.lax.rsqrt(var + eps) * g_ref[...] + b_ref[...]


def layernorm(x, g, b, eps=LN_EPS, tile_r=TILE_R):
    R, Hd = x.shape
    Rp, tr, gr = _pick_tile(R, tile_r)
    if Rp != R:
        x = jnp.pad(x, ((0, Rp - R), (0, 0)))
    y = pl.pallas_call(
        functools.partial(_ln_kernel, eps=eps),
        grid=(gr,),
        in_specs=[pl.BlockSpec((tr, Hd), lambda r: (r, 0)),
                  pl.BlockSpec((1, Hd), lambda r: (0, 0)),
                  pl.BlockSpec((1, Hd), lambda r: (0, 0))],
        out_specs=pl.BlockSpec((tr, Hd), lambda r: (r, 0)),
        out_shape=jax.ShapeDtypeStruct((Rp, Hd), jnp.float32),
        compiler_params=pltpu.CompilerParams(dimension_semantics=("parallel",)),
    )(x, g, b)
    return y[:R] if Rp != R else y


def _ln_mm_kernel(x_ref, g_ref, b_ref, w_ref, wb_ref, o_ref, *, eps, activation):
    x = x_ref[...]
    mean = jnp.mean(x, axis=1, keepdims=True)
    xc = x - mean
    var = jnp.mean(xc * xc, axis=1, keepdims=True)
    xn = xc * jax.lax.rsqrt(var + eps) * g_ref[...] + b_ref[...]
    acc = jnp.dot(xn.astype(jnp.bfloat16), w_ref[...],
                  preferred_element_type=jnp.float32) + wb_ref[...]
    o_ref[...] = _activate(acc, activation)


def ln_matmul(x, g, b, w, wb, activation="none", eps=LN_EPS, tile_r=TILE_R):
    """Fused LayerNorm + matmul (+bias, activation). x: (R, Hd), w: (Hd, Nout) bf16."""
    R, Hd = x.shape
    Nout = w.shape[1]
    Rp, tr, gr = _pick_tile(R, tile_r)
    if Rp != R:
        x = jnp.pad(x, ((0, Rp - R), (0, 0)))
    y = pl.pallas_call(
        functools.partial(_ln_mm_kernel, eps=eps, activation=activation),
        grid=(gr,),
        in_specs=[pl.BlockSpec((tr, Hd), lambda r: (r, 0)),
                  pl.BlockSpec((1, Hd), lambda r: (0, 0)),
                  pl.BlockSpec((1, Hd), lambda r: (0, 0)),
                  pl.BlockSpec((Hd, Nout), lambda r: (0, 0)),
                  pl.BlockSpec((1, Nout), lambda r: (0, 0))],
        out_specs=pl.BlockSpec((tr, Nout), lambda r: (r, 0)),
        out_shape=jax.ShapeDtypeStruct((Rp, Nout), jnp.float32),
        compiler_params=pltpu.CompilerParams(dimension_semantics=("parallel",)),
    )(x, g, b, w, wb)
    return y[:R] if Rp != R else y


def _ln_mlp_kernel(x_ref, g_ref, b_ref, w1_ref, b1_ref, w2_ref, b2_ref, o_ref, *, eps):
    x = x_ref[...]
    mean = jnp.mean(x, axis=1, keepdims=True)
    xc = x - mean
    var = jnp.mean(xc * xc, axis=1, keepdims=True)
    xn = xc * jax.lax.rsqrt(var + eps) * g_ref[...] + b_ref[...]
    h = jnp.dot(xn.astype(jnp.bfloat16), w1_ref[...],
                preferred_element_type=jnp.float32) + b1_ref[...]
    h = _activate(h, "gelu")
    y = jnp.dot(h.astype(jnp.bfloat16), w2_ref[...],
                preferred_element_type=jnp.float32) + b2_ref[...]
    o_ref[...] = x + y      # residual fused


def ln_mlp(x, g, b, w1, b1, w2, b2, eps=LN_EPS, tile_r=TILE_R):
    R, Hd = x.shape
    Md = w1.shape[1]
    Rp, tr, gr = _pick_tile(R, tile_r)
    if Rp != R:
        x = jnp.pad(x, ((0, Rp - R), (0, 0)))
    y = pl.pallas_call(
        functools.partial(_ln_mlp_kernel, eps=eps),
        grid=(gr,),
        in_specs=[pl.BlockSpec((tr, Hd), lambda r: (r, 0)),
                  pl.BlockSpec((1, Hd), lambda r: (0, 0)),
                  pl.BlockSpec((1, Hd), lambda r: (0, 0)),
                  pl.BlockSpec((Hd, Md), lambda r: (0, 0)),
                  pl.BlockSpec((1, Md), lambda r: (0, 0)),
                  pl.BlockSpec((Md, Hd), lambda r: (0, 0)),
                  pl.BlockSpec((1, Hd), lambda r: (0, 0))],
        out_specs=pl.BlockSpec((tr, Hd), lambda r: (r, 0)),
        out_shape=jax.ShapeDtypeStruct((Rp, Hd), jnp.float32),
        compiler_params=pltpu.CompilerParams(dimension_semantics=("parallel",)),
    )(x, g, b, w1, b1, w2, b2)
    return y[:R] if Rp != R else y


def _attn_kernel(q_ref, k_ref, v_ref, x_ref, wo_ref, bo_ref, o_ref, *, num_heads):
    """All heads of one batch element: softmax(QK^T)V, out-proj, residual, fused."""
    q = q_ref[0]
    k = k_ref[0]
    v = v_ref[0]
    Hd = q.shape[-1]
    dh = Hd // num_heads
    scale = 1.0 / math.sqrt(dh)
    acc = None
    for h in range(num_heads):
        lo, hi = h * dh, (h + 1) * dh
        qh = q[:, lo:hi]
        kh = k[:, lo:hi]
        vh = v[:, lo:hi]
        s = jax.lax.dot_general(qh, kh, (((1,), (1,)), ((), ())),
                                preferred_element_type=jnp.float32) * scale
        s = s - jnp.max(s, axis=-1, keepdims=True)
        p = jnp.exp(s)
        p = p * pl.reciprocal(jnp.sum(p, axis=-1, keepdims=True), approx=True)
        ctx_h = jnp.dot(p, vh, preferred_element_type=jnp.float32)          # (T, dh)
        yh = jnp.dot(ctx_h.astype(jnp.bfloat16), wo_ref[lo:hi, :],
                     preferred_element_type=jnp.float32)                     # (T, Hd)
        acc = yh if acc is None else acc + yh
    o_ref[0] = x_ref[0] + acc + bo_ref[...]


def attention_block(q, k, v, x_res, wo, bo, num_heads=NUM_HEADS):
    """q,k,v,x_res: (B, T, Hd); wo: (Hd, Hd) bf16; bo: (1, Hd)."""
    B, T, Hd = q.shape
    spec3 = pl.BlockSpec((1, T, Hd), lambda b: (b, 0, 0))
    return pl.pallas_call(
        functools.partial(_attn_kernel, num_heads=num_heads),
        grid=(B,),
        in_specs=[spec3, spec3, spec3, spec3,
                  pl.BlockSpec((Hd, Hd), lambda b: (0, 0)),
                  pl.BlockSpec((1, Hd), lambda b: (0, 0))],
        out_specs=spec3,
        out_shape=jax.ShapeDtypeStruct((B, T, Hd), jnp.float32),
        compiler_params=pltpu.CompilerParams(dimension_semantics=("parallel",)),
    )(q, k, v, x_res, wo, bo)


# ----------------------------- conv glue (channel-major) --------------------
def _im2col_cm(x_cm, kh, kw, stride):
    """x_cm: (C, N, H, W) -> (C*kh*kw, N*Ho*Wo), Ho, Wo (K ordering = (C, kh, kw))."""
    C, N, H, W = x_cm.shape
    Ho = (H - kh) // stride + 1
    Wo = (W - kw) // stride + 1
    if kh == 1 and kw == 1 and stride == 1:
        return x_cm.reshape(C, N * H * W), Ho, Wo
    taps = []
    for i in range(kh):
        for j in range(kw):
            taps.append(jax.lax.slice(
                x_cm, (0, 0, i, j),
                (C, N, i + stride * (Ho - 1) + 1, j + stride * (Wo - 1) + 1),
                (1, 1, stride, stride)))
    p = jnp.stack(taps, axis=1)                        # (C, kh*kw, N, Ho, Wo)
    return p.reshape(C * kh * kw, N * Ho * Wo), Ho, Wo


def conv_cm(x_cm, w, bias=None, *, kh, kw, stride=1, padding=0, pad_mode="zeros",
            activation="none", pad_hw=None):
    """x_cm: (Cin, N, H, W); w: (Cout, Cin*kh*kw) bf16 -> (Cout, N, Ho, Wo) f32."""
    if pad_hw is None and padding > 0:
        pad_hw = ((padding, padding), (padding, padding))
    if pad_hw is not None:
        mode = "reflect" if pad_mode == "reflect" else "constant"
        x_cm = jnp.pad(x_cm, ((0, 0), (0, 0), pad_hw[0], pad_hw[1]), mode=mode)
    _, N, _, _ = x_cm.shape
    patches, Ho, Wo = _im2col_cm(x_cm, kh, kw, stride)
    y = matmul_cm(w, patches, bias, activation)
    Cout = w.shape[0]
    return y.reshape(Cout, N, Ho, Wo)


def conv_transpose_cm(x_cm, w_phase):
    """ConvTranspose2d(k=3, s=2, p=1, op=1, bias=False) via sub-pixel decomposition.

    w_phase: (4*Cout, Cin*4) bf16, phase filters packed at param-pack time.
    """
    _, N, H, W = x_cm.shape
    y = conv_cm(x_cm, w_phase, None, kh=2, kw=2, pad_hw=((0, 1), (0, 1)))
    Cout = w_phase.shape[0] // 4
    y = y.reshape(4, Cout, N, H, W)
    ee, eo, oe, oo = y[0], y[1], y[2], y[3]
    even = jnp.stack([ee, eo], axis=-1).reshape(Cout, N, H, 2 * W)
    odd = jnp.stack([oe, oo], axis=-1).reshape(Cout, N, H, 2 * W)
    return jnp.stack([even, odd], axis=-2).reshape(Cout, N, 2 * H, 2 * W)


# ----------------------------- transformer encoder --------------------------
def vit_encoder(tokens, enc):
    """tokens: (B, T, HIDDEN) -> (B, T, HIDDEN)."""
    B, T, Hd = tokens.shape
    x2 = tokens.reshape(B * T, Hd)
    for lp in enc["layers"]:
        qkv = ln_matmul(x2, lp["ln1_g"], lp["ln1_b"], lp["wqkv"], lp["bqkv"])
        q = qkv[:, :Hd].reshape(B, T, Hd)
        k = qkv[:, Hd:2 * Hd].reshape(B, T, Hd)
        v = qkv[:, 2 * Hd:].reshape(B, T, Hd)
        x3 = attention_block(q, k, v, x2.reshape(B, T, Hd), lp["wo"], lp["bo"])
        x2 = x3.reshape(B * T, Hd)
        x2 = ln_mlp(x2, lp["ln2_g"], lp["ln2_b"],
                    lp["w1"], lp["b1"], lp["w2"], lp["b2"])
    x2 = layernorm(x2, enc["lnf_g"], enc["lnf_b"])
    return x2.reshape(B, T, Hd)


# ----------------------------- ART block -------------------------------------
def art_block(x_cm, p, enc=None):
    if enc is not None:
        emb = conv_cm(x_cm, p["pe_w"], p["pe_b"], kh=1, kw=1)       # (HIDDEN, N, h, w)
        Hd, N, h, w = emb.shape
        tokens = emb.reshape(Hd, N, h * w).transpose(1, 2, 0) + p["pos"]
        t = vit_encoder(tokens, enc)                                 # (N, T, HIDDEN)
        t = t.transpose(2, 0, 1).reshape(Hd, N, h, w)
        t = conv_cm(t, p["more_w"], None, kh=3, kw=3, padding=1)    # conv_more
        t = batchnorm_relu_cm(t, p["more_g"], p["more_b"], relu=True)
        x_cm = jnp.concatenate([x_cm, t], axis=0)
        x_cm = conv_cm(x_cm, p["comb_w"], p["comb_b"], kh=1, kw=1)  # 1x1 combine
    # ResnetBlock: reflect-pad 3x3 conv, BN, ReLU, reflect-pad 3x3 conv, BN, + skip
    y = conv_cm(x_cm, p["rc1_w"], None, kh=3, kw=3, padding=1, pad_mode="reflect")
    y = batchnorm_relu_cm(y, p["rb1_g"], p["rb1_b"], relu=True)
    y = conv_cm(y, p["rc2_w"], None, kh=3, kw=3, padding=1, pad_mode="reflect")
    y = batchnorm_relu_cm(y, p["rb2_g"], p["rb2_b"], relu=False)
    return x_cm + y


# ----------------------------- full generator --------------------------------
def resvit_generator(x_nchw, P):
    x = jnp.transpose(x_nchw, (1, 0, 2, 3))          # NCHW -> channel-major CNHW
    # encoders
    x = conv_cm(x, P["e1_w"], None, kh=7, kw=7, padding=3, pad_mode="reflect")
    x = batchnorm_relu_cm(x, P["e1_g"], P["e1_b"])
    x = conv_cm(x, P["e2_w"], None, kh=3, kw=3, stride=2, padding=1)
    x = batchnorm_relu_cm(x, P["e2_g"], P["e2_b"])
    x = conv_cm(x, P["e3_w"], None, kh=3, kw=3, stride=2, padding=1)
    x = batchnorm_relu_cm(x, P["e3_g"], P["e3_b"])
    # ART blocks (art_1 / art_6 share the transformer encoder weights)
    x = art_block(x, P["art1"], P["encoder"])
    x = art_block(x, P["art2"], None)
    x = art_block(x, P["art6"], P["encoder"])
    x = art_block(x, P["art9"], None)
    # decoders
    x = conv_transpose_cm(x, P["d1_w"])
    x = batchnorm_relu_cm(x, P["d1_g"], P["d1_b"])
    x = conv_transpose_cm(x, P["d2_w"])
    x = batchnorm_relu_cm(x, P["d2_g"], P["d2_b"])
    x = conv_cm(x, P["d3_w"], P["d3_b"], kh=7, kw=7, padding=3,
                pad_mode="reflect", activation="tanh")
    return jnp.transpose(x, (1, 0, 2, 3))            # back to NCHW


# ----------------------------- parameter init / pack -------------------------
def init_params(key, input_dim, output_dim, img_size):
    """PyTorch-layout float32 parameters (weights as nn.Module would hold them)."""
    c1, c2, c3 = NGF, NGF * 2, NGF * 4
    bott = img_size // 4
    n_patches = bott * bott
    ks = iter(jax.random.split(key, 256))

    def rnd(shape, scale=0.05):
        return jax.random.normal(next(ks), shape, jnp.float32) * scale

    def ones(c):
        return jnp.ones((c,), jnp.float32)

    def zeros(c):
        return jnp.zeros((c,), jnp.float32)

    P = {
        "e1_w": rnd((c1, input_dim, 7, 7)), "e1_g": ones(c1), "e1_b": zeros(c1),
        "e2_w": rnd((c2, c1, 3, 3)), "e2_g": ones(c2), "e2_b": zeros(c2),
        "e3_w": rnd((c3, c2, 3, 3)), "e3_g": ones(c3), "e3_b": zeros(c3),
        # ConvTranspose2d weights in PyTorch layout (Cin, Cout, kh, kw)
        "d1_w": rnd((c3, c2, 3, 3)), "d1_g": ones(c2), "d1_b": zeros(c2),
        "d2_w": rnd((c2, c1, 3, 3)), "d2_g": ones(c1), "d2_b": zeros(c1),
        "d3_w": rnd((output_dim, c1, 7, 7)), "d3_b": zeros(output_dim),
    }

    def art(with_transformer):
        p = {
            "rc1_w": rnd((c3, c3, 3, 3)), "rb1_g": ones(c3), "rb1_b": zeros(c3),
            "rc2_w": rnd((c3, c3, 3, 3)), "rb2_g": ones(c3), "rb2_b": zeros(c3),
        }
        if with_transformer:
            p.update({
                "pe_w": rnd((HIDDEN, c3, 1, 1)), "pe_b": zeros(HIDDEN),
                "pos": jnp.zeros((1, n_patches, HIDDEN), jnp.float32),
                "more_w": rnd((c3, HIDDEN, 3, 3)), "more_g": ones(c3), "more_b": zeros(c3),
                "comb_w": rnd((c3, 2 * c3, 1, 1)), "comb_b": zeros(c3),
            })
        return p

    P["art1"] = art(True)
    P["art2"] = art(False)
    P["art6"] = art(True)
    P["art9"] = art(False)

    layers = []
    for _ in range(NUM_LAYERS):
        layers.append({
            "ln1_g": ones(HIDDEN), "ln1_b": zeros(HIDDEN),
            "wq": rnd((HIDDEN, HIDDEN)), "bq": zeros(HIDDEN),
            "wk": rnd((HIDDEN, HIDDEN)), "bk": zeros(HIDDEN),
            "wv": rnd((HIDDEN, HIDDEN)), "bv": zeros(HIDDEN),
            "wo": rnd((HIDDEN, HIDDEN)), "bo": zeros(HIDDEN),
            "ln2_g": ones(HIDDEN), "ln2_b": zeros(HIDDEN),
            "w1": rnd((HIDDEN, MLP_DIM)), "b1": zeros(MLP_DIM),
            "w2": rnd((MLP_DIM, HIDDEN)), "b2": zeros(HIDDEN),
        })
    P["encoder"] = {"layers": layers, "lnf_g": ones(HIDDEN), "lnf_b": zeros(HIDDEN)}
    return P


def _pack_deconv(w_t):
    """(Cin, Cout, 3, 3) ConvTranspose2d weight -> (4*Cout, Cin*4) bf16 phase filters."""
    wt = jnp.transpose(w_t, (1, 0, 2, 3))            # (Cout, Cin, 3, 3)
    Cout, Cin = wt.shape[:2]
    z = jnp.zeros((Cout, Cin), jnp.float32)

    def k2(t00, t01, t10, t11):                       # build a 2x2 kernel
        r0 = jnp.stack([t00, t01], axis=-1)
        r1 = jnp.stack([t10, t11], axis=-1)
        return jnp.stack([r0, r1], axis=-2)           # (Cout, Cin, 2, 2)

    w_ee = k2(wt[:, :, 1, 1], z, z, z)
    w_eo = k2(wt[:, :, 1, 2], wt[:, :, 1, 0], z, z)
    w_oe = k2(wt[:, :, 2, 1], z, wt[:, :, 0, 1], z)
    w_oo = k2(wt[:, :, 2, 2], wt[:, :, 2, 0], wt[:, :, 0, 2], wt[:, :, 0, 0])
    w_all = jnp.concatenate([w_ee, w_eo, w_oe, w_oo], axis=0)   # (4*Cout, Cin, 2, 2)
    return w_all.reshape(4 * Cout, Cin * 4).astype(jnp.bfloat16)


def pack_params(P0):
    """One-time packing: matmul-layout bf16 weights, column/row-shaped f32 affines."""
    def conv_w(w):
        return w.reshape(w.shape[0], -1).astype(jnp.bfloat16)

    def col(v):
        return v.reshape(-1, 1).astype(jnp.float32)

    def row(v):
        return v.reshape(1, -1).astype(jnp.float32)

    P = {
        "e1_w": conv_w(P0["e1_w"]), "e1_g": col(P0["e1_g"]), "e1_b": col(P0["e1_b"]),
        "e2_w": conv_w(P0["e2_w"]), "e2_g": col(P0["e2_g"]), "e2_b": col(P0["e2_b"]),
        "e3_w": conv_w(P0["e3_w"]), "e3_g": col(P0["e3_g"]), "e3_b": col(P0["e3_b"]),
        "d1_w": _pack_deconv(P0["d1_w"]), "d1_g": col(P0["d1_g"]), "d1_b": col(P0["d1_b"]),
        "d2_w": _pack_deconv(P0["d2_w"]), "d2_g": col(P0["d2_g"]), "d2_b": col(P0["d2_b"]),
        "d3_w": conv_w(P0["d3_w"]), "d3_b": col(P0["d3_b"]),
    }

    def pack_art(a):
        out = {
            "rc1_w": conv_w(a["rc1_w"]), "rb1_g": col(a["rb1_g"]), "rb1_b": col(a["rb1_b"]),
            "rc2_w": conv_w(a["rc2_w"]), "rb2_g": col(a["rb2_g"]), "rb2_b": col(a["rb2_b"]),
        }
        if "pe_w" in a:
            out.update({
                "pe_w": conv_w(a["pe_w"]), "pe_b": col(a["pe_b"]), "pos": a["pos"],
                "more_w": conv_w(a["more_w"]),
                "more_g": col(a["more_g"]), "more_b": col(a["more_b"]),
                "comb_w": conv_w(a["comb_w"]), "comb_b": col(a["comb_b"]),
            })
        return out

    for name in ("art1", "art2", "art6", "art9"):
        P[name] = pack_art(P0[name])

    def pack_layer(l):
        return {
            "ln1_g": row(l["ln1_g"]), "ln1_b": row(l["ln1_b"]),
            "wqkv": jnp.concatenate([l["wq"], l["wk"], l["wv"]], axis=1).astype(jnp.bfloat16),
            "bqkv": jnp.concatenate([l["bq"], l["bk"], l["bv"]]).reshape(1, -1).astype(jnp.float32),
            "wo": l["wo"].astype(jnp.bfloat16), "bo": row(l["bo"]),
            "ln2_g": row(l["ln2_g"]), "ln2_b": row(l["ln2_b"]),
            "w1": l["w1"].astype(jnp.bfloat16), "b1": row(l["b1"]),
            "w2": l["w2"].astype(jnp.bfloat16), "b2": row(l["b2"]),
        }

    P["encoder"] = {
        "layers": [pack_layer(l) for l in P0["encoder"]["layers"]],
        "lnf_g": row(P0["encoder"]["lnf_g"]),
        "lnf_b": row(P0["encoder"]["lnf_b"]),
    }
    return P


# ----------------------------- main ------------------------------------------
if __name__ == "__main__":
    key = jax.random.PRNGKey(0)
    kx, kp = jax.random.split(key)
    B, IN_DIM, OUT_DIM, IMG = 2, 1, 1, 32
    x = jax.random.normal(kx, (B, IN_DIM, IMG, IMG), jnp.float32)
    params = pack_params(init_params(kp, input_dim=IN_DIM, output_dim=OUT_DIM,
                                     img_size=IMG))

    fwd = jax.jit(resvit_generator)
    y = jax.block_until_ready(fwd(x, params))
    assert y.shape == (B, OUT_DIM, IMG, IMG), y.shape
    assert bool(jnp.isfinite(y).all())
    print("KERNEL_OK")
</pallas_src>

<mosaic_0001>
module attributes {stable_mosaic.version = 11 : i64} {
  func.func @_mm_cm_kernel(%arg0: i32, %arg1: memref<4x49xbf16, #tpu.memory_space<vmem>>, %arg2: memref<49x512xbf16, #tpu.memory_space<vmem>>, %arg3: memref<4x512xf32, #tpu.memory_space<vmem>>) attributes {dimension_semantics = [#tpu.dimension_semantics<parallel>], iteration_bounds = array<i64: 4>, scalar_prefetch = 0 : i64, scratch_operands = 0 : i64, tpu.core_type = #tpu.core_type<tc>, window_params = [{pipeline_mode = #tpu.pipeline_mode<synchronous>, transform_indices = @transform_0, window_bounds = array<i64: 4, 49>}, {transform_indices = @transform_1, window_bounds = array<i64: 49, 512>}, {transform_indices = @transform_2, window_bounds = array<i64: 4, 512>}]} {
    %c0 = arith.constant 0 : index
    %c0_0 = arith.constant 0 : index
    %0 = vector.load %arg1[%c0, %c0_0] : memref<4x49xbf16, #tpu.memory_space<vmem>>, vector<4x49xbf16>
    %c0_1 = arith.constant 0 : index
    %c0_2 = arith.constant 0 : index
    %1 = vector.load %arg2[%c0_1, %c0_2] : memref<49x512xbf16, #tpu.memory_space<vmem>>, vector<49x512xbf16>
    %cst = arith.constant dense<0.000000e+00> : vector<4x512xf32>
    %2 = tpu.matmul %0, %1, %cst {dimension_numbers = #tpu.dot_dimension_numbers<[1], [0], [0], [1], [0, 0, 1, 1], [], []>} : vector<4x49xbf16>, vector<49x512xbf16>, vector<4x512xf32> -> vector<4x512xf32>
    %c0_3 = arith.constant 0 : index
    %c0_4 = arith.constant 0 : index
    %3 = vector.load %arg3[%c0_3, %c0_4] : memref<4x512xf32, #tpu.memory_space<vmem>>, vector<4x512xf32>
    tpu.vector_store %arg3[%c0_3, %c0_4], %2 {strides = array<i32>} : memref<4x512xf32, #tpu.memory_space<vmem>>, vector<4x512xf32>,
    return
  }
  func.func @transform_0(%arg0: i32) -> (i32, i32) {
    %c0_i32 = arith.constant 0 : i32
    %c0_i32_0 = arith.constant 0 : i32
    %c0_i32_1 = arith.constant 0 : i32
    return %c0_i32, %c0_i32_0 : i32, i32
  }
  func.func @transform_1(%arg0: i32) -> (i32, i32) {
    %c0_i32 = arith.constant 0 : i32
    %c0_i32_0 = arith.constant 0 : i32
    return %c0_i32, %arg0 : i32, i32
  }
  func.func @transform_2(%arg0: i32) -> (i32, i32) {
    %c0_i32 = arith.constant 0 : i32
    %c0_i32_0 = arith.constant 0 : i32
    return %c0_i32, %arg0 : i32, i32
  }
}

module attributes {stable_mosaic.version = 11 : i64} {
  func.func @_bn_stats_kernel(%arg0: i32, %arg1: memref<4x512xf32, #tpu.memory_space<vmem>>, %arg2: memref<4x1xf32, #tpu.memory_space<vmem>>, %arg3: memref<4x1xf32, #tpu.memory_space<vmem>>) attributes {dimension_semantics = [#tpu.dimension_semantics<arbitrary>], iteration_bounds = array<i64: 4>, scalar_prefetch = 0 : i64, scratch_operands = 0 : i64, tpu.core_type = #tpu.core_type<tc>, window_params = [{transform_indices = @transform_0, window_bounds = array<i64: 4, 512>}, {pipeline_mode = #tpu.pipeline_mode<synchronous>, transform_indices = @transform_1, window_bounds = array<i64: 4, 1>}, {pipeline_mode = #tpu.pipeline_mode<synchronous>, transform_indices = @transform_2, window_bounds = array<i64: 4, 1>}]} {
    %c0_i32 = arith.constant 0 : i32
    %0 = arith.cmpi eq, %arg0, %c0_i32 : i32
    %1 = arith.extui %0 : i1 to i32
    %c0_i32_0 = arith.constant 0 : i32
    %2 = arith.cmpi ne, %1, %c0_i32_0 : i32
    scf.if %2 {
      %cst_12 = arith.constant 0.000000e+00 : f32
      %23 = vector.broadcast %cst_12 : f32 to vector<4x1xf32>
      %c0_13 = arith.constant 0 : index
      %c0_14 = arith.constant 0 : index
      %24 = vector.load %arg2[%c0_13, %c0_14] : memref<4x1xf32, #tpu.memory_space<vmem>>, vector<4x1xf32>
      tpu.vector_store %arg2[%c0_13, %c0_14], %23 {strides = array<i32>} : memref<4x1xf32, #tpu.memory_space<vmem>>, vector<4x1xf32>,
      %cst_15 = arith.constant 0.000000e+00 : f32
      %25 = vector.broadcast %cst_15 : f32 to vector<4x1xf32>
      %c0_16 = arith.constant 0 : index
      %c0_17 = arith.constant 0 : index
      %26 = vector.load %arg3[%c0_16, %c0_17] : memref<4x1xf32, #tpu.memory_space<vmem>>, vector<4x1xf32>
      tpu.vector_store %arg3[%c0_16, %c0_17], %25 {strides = array<i32>} : memref<4x1xf32, #tpu.memory_space<vmem>>, vector<4x1xf32>,
    } else {
    }
    %c0 = arith.constant 0 : index
    %c0_1 = arith.constant 0 : index
    %3 = vector.load %arg1[%c0, %c0_1] : memref<4x512xf32, #tpu.memory_space<vmem>>, vector<4x512xf32>
    %c512_i32 = arith.constant 512 : i32
    %4 = arith.muli %arg0, %c512_i32 : i32
    %5 = tpu.iota {dimensions = array<i32: 1>} : vector<4x512xi32>
    %6 = vector.broadcast %4 : i32 to vector<4x512xi32>
    %7 = arith.addi %6, %5 : vector<4x512xi32>
    %c2048_i32 = arith.constant 2048 : i32
    %8 = vector.broadcast %c2048_i32 : i32 to vector<4x512xi32>
    %9 = arith.cmpi slt, %7, %8 : vector<4x512xi32>
    %cst = arith.constant 0.000000e+00 : f32
    %10 = vector.broadcast %cst : f32 to vector<4x512xf32>
    %11 = arith.select %9, %3, %10 : vector<4x512xi1>, vector<4x512xf32>
    %c0_2 = arith.constant 0 : index
    %c0_3 = arith.constant 0 : index
    %12 = vector.load %arg2[%c0_2, %c0_3] : memref<4x1xf32, #tpu.memory_space<vmem>>, vector<4x1xf32>
    %cst_4 = arith.constant dense<0.000000e+00> : vector<4xf32>
    %13 = vector.multi_reduction <add>, %11, %cst_4 [1] : vector<4x512xf32> to vector<4xf32>
    %14 = vector.shape_cast %13 : vector<4xf32> to vector<4x1xf32>
    %15 = arith.addf %12, %14 : vector<4x1xf32>
    %c0_5 = arith.constant 0 : index
    %c0_6 = arith.constant 0 : index
    %16 = vector.load %arg2[%c0_5, %c0_6] : memref<4x1xf32, #tpu.memory_space<vmem>>, vector<4x1xf32>
    tpu.vector_store %arg2[%c0_5, %c0_6], %15 {strides = array<i32>} : memref<4x1xf32, #tpu.memory_space<vmem>>, vector<4x1xf32>,
    %c0_7 = arith.constant 0 : index
    %c0_8 = arith.constant 0 : index
    %17 = vector.load %arg3[%c0_7, %c0_8] : memref<4x1xf32, #tpu.memory_space<vmem>>, vector<4x1xf32>
    %18 = arith.mulf %11, %11 : vector<4x512xf32>
    %cst_9 = arith.constant dense<0.000000e+00> : vector<4xf32>
    %19 = vector.multi_reduction <add>, %18, %cst_9 [1] : vector<4x512xf32> to vector<4xf32>
    %20 = vector.shape_cast %19 : vector<4xf32> to vector<4x1xf32>
    %21 = arith.addf %17, %20 : vector<4x1xf32>
    %c0_10 = arith.constant 0 : index
    %c0_11 = arith.constant 0 : index
    %22 = vector.load %arg3[%c0_10, %c0_11] : memref<4x1xf32, #tpu.memory_space<vmem>>, vector<4x1xf32>
    tpu.vector_store %arg3[%c0_10, %c0_11], %21 {strides = array<i32>} : memref<4x1xf32, #tpu.memory_space<vmem>>, vector<4x1xf32>,
    return
  }
  func.func @transform_0(%arg0: i32) -> (i32, i32) {
    %c0_i32 = arith.constant 0 : i32
    %c0_i32_0 = arith.constant 0 : i32
    return %c0_i32, %arg0 : i32, i32
  }
  func.func @transform_1(%arg0: i32) -> (i32, i32) {
    %c0_i32 = arith.constant 0 : i32
    %c0_i32_0 = arith.constant 0 : i32
    %c0_i32_1 = arith.constant 0 : i32
    return %c0_i32, %c0_i32_0 : i32, i32
  }
  func.func @transform_2(%arg0: i32) -> (i32, i32) {
    %c0_i32 = arith.constant 0 : i32
    %c0_i32_0 = arith.constant 0 : i32
    %c0_i32_1 = arith.constant 0 : i32
    return %c0_i32, %c0_i32_0 : i32, i32
  }
}

module attributes {stable_mosaic.version = 11 : i64} {
  func.func @_bn_apply_kernel(%arg0: i32, %arg1: memref<4x512xf32, #tpu.memory_space<vmem>>, %arg2: memref<4x1xf32, #tpu.memory_space<vmem>>, %arg3: memref<4x1xf32, #tpu.memory_space<vmem>>, %arg4: memref<4x1xf32, #tpu.memory_space<vmem>>, %arg5: memref<4x1xf32, #tpu.memory_space<vmem>>, %arg6: memref<4x512xf32, #tpu.memory_space<vmem>>) attributes {dimension_semantics = [#tpu.dimension_semantics<parallel>], iteration_bounds = array<i64: 4>, scalar_prefetch = 0 : i64, scratch_operands = 0 : i64, tpu.core_type = #tpu.core_type<tc>, window_params = [{transform_indices = @transform_0, window_bounds = array<i64: 4, 512>}, {pipeline_mode = #tpu.pipeline_mode<synchronous>, transform_indices = @transform_1, window_bounds = array<i64: 4, 1>}, {pipeline_mode = #tpu.pipeline_mode<synchronous>, transform_indices = @transform_2, window_bounds = array<i64: 4, 1>}, {pipeline_mode = #tpu.pipeline_mode<synchronous>, transform_indices = @transform_3, window_bounds = array<i64: 4, 1>}, {pipeline_mode = #tpu.pipeline_mode<synchronous>, transform_indices = @transform_4, window_bounds = array<i64: 4, 1>}, {transform_indices = @transform_5, window_bounds = array<i64: 4, 512>}]} {
    %c0 = arith.constant 0 : index
    %c0_0 = arith.constant 0 : index
    %0 = vector.load %arg2[%c0, %c0_0] : memref<4x1xf32, #tpu.memory_space<vmem>>, vector<4x1xf32>
    %cst = arith.constant 4.8828125E-4 : f32
    %1 = vector.broadcast %cst : f32 to vector<4x1xf32>
    %2 = arith.mulf %0, %1 : vector<4x1xf32>
    %c0_1 = arith.constant 0 : index
    %c0_2 = arith.constant 0 : index
    %3 = vector.load %arg3[%c0_1, %c0_2] : memref<4x1xf32, #tpu.memory_space<vmem>>, vector<4x1xf32>
    %cst_3 = arith.constant 4.8828125E-4 : f32
    %4 = vector.broadcast %cst_3 : f32 to vector<4x1xf32>
    %5 = arith.mulf %3, %4 : vector<4x1xf32>
    %6 = arith.mulf %2, %2 : vector<4x1xf32>
    %7 = arith.subf %5, %6 : vector<4x1xf32>
    %cst_4 = arith.constant 0.000000e+00 : f32
    %8 = vector.broadcast %cst_4 : f32 to vector<4x1xf32>
    %9 = arith.maximumf %7, %8 : vector<4x1xf32>
    %cst_5 = arith.constant 9.99999974E-6 : f32
    %10 = vector.broadcast %cst_5 : f32 to vector<4x1xf32>
    %11 = arith.addf %9, %10 : vector<4x1xf32>
    %12 = math.rsqrt %11 : vector<4x1xf32>
    %c0_6 = arith.constant 0 : index
    %c0_7 = arith.constant 0 : index
    %13 = vector.load %arg4[%c0_6, %c0_7] : memref<4x1xf32, #tpu.memory_space<vmem>>, vector<4x1xf32>
    %14 = arith.mulf %12, %13 : vector<4x1xf32>
    %c0_8 = arith.constant 0 : index
    %c0_9 = arith.constant 0 : index
    %15 = vector.load %arg1[%c0_8, %c0_9] : memref<4x512xf32, #tpu.memory_space<vmem>>, vector<4x512xf32>
    %16 = vector.broadcast %2 : vector<4x1xf32> to vector<4x512xf32>
    %17 = arith.subf %15, %16 : vector<4x512xf32>
    %18 = vector.broadcast %14 : vector<4x1xf32> to vector<4x512xf32>
    %19 = arith.mulf %17, %18 : vector<4x512xf32>
    %c0_10 = arith.constant 0 : index
    %c0_11 = arith.constant 0 : index
    %20 = vector.load %arg5[%c0_10, %c0_11] : memref<4x1xf32, #tpu.memory_space<vmem>>, vector<4x1xf32>
    %21 = vector.broadcast %20 : vector<4x1xf32> to vector<4x512xf32>
    %22 = arith.addf %19, %21 : vector<4x512xf32>
    %cst_12 = arith.constant 0.000000e+00 : f32
    %23 = vector.broadcast %cst_12 : f32 to vector<4x512xf32>
    %24 = arith.maximumf %22, %23 : vector<4x512xf32>
    %c0_13 = arith.constant 0 : index
    %c0_14 = arith.constant 0 : index
    %25 = vector.load %arg6[%c0_13, %c0_14] : memref<4x512xf32, #tpu.memory_space<vmem>>, vector<4x512xf32>
    tpu.vector_store %arg6[%c0_13, %c0_14], %24 {strides = array<i32>} : memref<4x512xf32, #tpu.memory_space<vmem>>, vector<4x512xf32>,
    return
  }
  func.func @transform_0(%arg0: i32) -> (i32, i32) {
    %c0_i32 = arith.constant 0 : i32
    %c0_i32_0 = arith.constant 0 : i32
    return %c0_i32, %arg0 : i32, i32
  }
  func.func @transform_1(%arg0: i32) -> (i32, i32) {
    %c0_i32 = arith.constant 0 : i32
    %c0_i32_0 = arith.constant 0 : i32
    %c0_i32_1 = arith.constant 0 : i32
    return %c0_i32, %c0_i32_0 : i32, i32
  }
  func.func @transform_2(%arg0: i32) -> (i32, i32) {
    %c0_i32 = arith.constant 0 : i32
    %c0_i32_0 = arith.constant 0 : i32
    %c0_i32_1 = arith.constant 0 : i32
    return %c0_i32, %c0_i32_0 : i32, i32
  }
  func.func @transform_3(%arg0: i32) -> (i32, i32) {
    %c0_i32 = arith.constant 0 : i32
    %c0_i32_0 = arith.constant 0 : i32
    %c0_i32_1 = arith.constant 0 : i32
    return %c0_i32, %c0_i32_0 : i32, i32
  }
  func.func @transform_4(%arg0: i32) -> (i32, i32) {
    %c0_i32 = arith.constant 0 : i32
    %c0_i32_0 = arith.constant 0 : i32
    %c0_i32_1 = arith.constant 0 : i32
    return %c0_i32, %c0_i32_0 : i32, i32
  }
  func.func @transform_5(%arg0: i32) -> (i32, i32) {
    %c0_i32 = arith.constant 0 : i32
    %c0_i32_0 = arith.constant 0 : i32
    return %c0_i32, %arg0 : i32, i32
  }
}

module attributes {stable_mosaic.version = 11 : i64} {
  func.func @_mm_cm_kernel(%arg0: i32, %arg1: memref<8x36xbf16, #tpu.memory_space<vmem>>, %arg2: memref<36x512xbf16, #tpu.memory_space<vmem>>, %arg3: memref<8x512xf32, #tpu.memory_space<vmem>>) attributes {dimension_semantics = [#tpu.dimension_semantics<parallel>], iteration_bounds = array<i64: 1>, scalar_prefetch = 0 : i64, scratch_operands = 0 : i64, tpu.core_type = #tpu.core_type<tc>, window_params = [{pipeline_mode = #tpu.pipeline_mode<synchronous>, transform_indices = @transform_0, window_bounds = array<i64: 8, 36>}, {transform_indices = @transform_1, window_bounds = array<i64: 36, 512>}, {transform_indices = @transform_2, window_bounds = array<i64: 8, 512>}]} {
    %c0 = arith.constant 0 : index
    %c0_0 = arith.constant 0 : index
    %0 = vector.load %arg1[%c0, %c0_0] : memref<8x36xbf16, #tpu.memory_space<vmem>>, vector<8x36xbf16>
    %c0_1 = arith.constant 0 : index
    %c0_2 = arith.constant 0 : index
    %1 = vector.load %arg2[%c0_1, %c0_2] : memref<36x512xbf16, #tpu.memory_space<vmem>>, vector<36x512xbf16>
    %cst = arith.constant dense<0.000000e+00> : vector<8x512xf32>
    %2 = tpu.matmul %0, %1, %cst {dimension_numbers = #tpu.dot_dimension_numbers<[1], [0], [0], [1], [0, 0, 1, 1], [], []>} : vector<8x36xbf16>, vector<36x512xbf16>, vector<8x512xf32> -> vector<8x512xf32>
    %c0_3 = arith.constant 0 : index
    %c0_4 = arith.constant 0 : index
    %3 = vector.load %arg3[%c0_3, %c0_4] : memref<8x512xf32, #tpu.memory_space<vmem>>, vector<8x512xf32>
    tpu.vector_store %arg3[%c0_3, %c0_4], %2 {strides = array<i32>} : memref<8x512xf32, #tpu.memory_space<vmem>>, vector<8x512xf32>,
    return
  }
  func.func @transform_0(%arg0: i32) -> (i32, i32) {
    %c0_i32 = arith.constant 0 : i32
    %c0_i32_0 = arith.constant 0 : i32
    %c0_i32_1 = arith.constant 0 : i32
    return %c0_i32, %c0_i32_0 : i32, i32
  }
  func.func @transform_1(%arg0: i32) -> (i32, i32) {
    %c0_i32 = arith.constant 0 : i32
    %c0_i32_0 = arith.constant 0 : i32
    return %c0_i32, %arg0 : i32, i32
  }
  func.func @transform_2(%arg0: i32) -> (i32, i32) {
    %c0_i32 = arith.constant 0 : i32
    %c0_i32_0 = arith.constant 0 : i32
    return %c0_i32, %arg0 : i32, i32
  }
}

module attributes {stable_mosaic.version = 11 : i64} {
  func.func @_bn_stats_kernel(%arg0: i32, %arg1: memref<8x512xf32, #tpu.memory_space<vmem>>, %arg2: memref<8x1xf32, #tpu.memory_space<vmem>>, %arg3: memref<8x1xf32, #tpu.memory_space<vmem>>) attributes {dimension_semantics = [#tpu.dimension_semantics<arbitrary>], iteration_bounds = array<i64: 1>, scalar_prefetch = 0 : i64, scratch_operands = 0 : i64, tpu.core_type = #tpu.core_type<tc>, window_params = [{transform_indices = @transform_0, window_bounds = array<i64: 8, 512>}, {pipeline_mode = #tpu.pipeline_mode<synchronous>, transform_indices = @transform_1, window_bounds = array<i64: 8, 1>}, {pipeline_mode = #tpu.pipeline_mode<synchronous>, transform_indices = @transform_2, window_bounds = array<i64: 8, 1>}]} {
    %c0_i32 = arith.constant 0 : i32
    %0 = arith.cmpi eq, %arg0, %c0_i32 : i32
    %1 = arith.extui %0 : i1 to i32
    %c0_i32_0 = arith.constant 0 : i32
    %2 = arith.cmpi ne, %1, %c0_i32_0 : i32
    scf.if %2 {
      %cst_13 = arith.constant 0.000000e+00 : f32
      %23 = vector.broadcast %cst_13 : f32 to vector<8x1xf32>
      %c0_14 = arith.constant 0 : index
      %c0_15 = arith.constant 0 : index
      %24 = vector.load %arg2[%c0_14, %c0_15] : memref<8x1xf32, #tpu.memory_space<vmem>>, vector<8x1xf32>
      tpu.vector_store %arg2[%c0_14, %c0_15], %23 {strides = array<i32>} : memref<8x1xf32, #tpu.memory_space<vmem>>, vector<8x1xf32>,
      %cst_16 = arith.constant 0.000000e+00 : f32
      %25 = vector.broadcast %cst_16 : f32 to vector<8x1xf32>
      %c0_17 = arith.constant 0 : index
      %c0_18 = arith.constant 0 : index
      %26 = vector.load %arg3[%c0_17, %c0_18] : memref<8x1xf32, #tpu.memory_space<vmem>>, vector<8x1xf32>
      tpu.vector_store %arg3[%c0_17, %c0_18], %25 {strides = array<i32>} : memref<8x1xf32, #tpu.memory_space<vmem>>, vector<8x1xf32>,
    } else {
    }
    %c0 = arith.constant 0 : index
    %c0_1 = arith.constant 0 : index
    %3 = vector.load %arg1[%c0, %c0_1] : memref<8x512xf32, #tpu.memory_space<vmem>>, vector<8x512xf32>
    %c512_i32 = arith.constant 512 : i32
    %4 = arith.muli %arg0, %c512_i32 : i32
    %5 = tpu.iota {dimensions = array<i32: 1>} : vector<8x512xi32>
    %6 = vector.broadcast %4 : i32 to vector<8x512xi32>
    %7 = arith.addi %6, %5 : vector<8x512xi32>
    %c512_i32_2 = arith.constant 512 : i32
    %8 = vector.broadcast %c512_i32_2 : i32 to vector<8x512xi32>
    %9 = arith.cmpi slt, %7, %8 : vector<8x512xi32>
    %cst = arith.constant 0.000000e+00 : f32
    %10 = vector.broadcast %cst : f32 to vector<8x512xf32>
    %11 = arith.select %9, %3, %10 : vector<8x512xi1>, vector<8x512xf32>
    %c0_3 = arith.constant 0 : index
    %c0_4 = arith.constant 0 : index
    %12 = vector.load %arg2[%c0_3, %c0_4] : memref<8x1xf32, #tpu.memory_space<vmem>>, vector<8x1xf32>
    %cst_5 = arith.constant dense<0.000000e+00> : vector<8xf32>
    %13 = vector.multi_reduction <add>, %11, %cst_5 [1] : vector<8x512xf32> to vector<8xf32>
    %14 = vector.shape_cast %13 : vector<8xf32> to vector<8x1xf32>
    %15 = arith.addf %12, %14 : vector<8x1xf32>
    %c0_6 = arith.constant 0 : index
    %c0_7 = arith.constant 0 : index
    %16 = vector.load %arg2[%c0_6, %c0_7] : memref<8x1xf32, #tpu.memory_space<vmem>>, vector<8x1xf32>
    tpu.vector_store %arg2[%c0_6, %c0_7], %15 {strides = array<i32>} : memref<8x1xf32, #tpu.memory_space<vmem>>, vector<8x1xf32>,
    %c0_8 = arith.constant 0 : index
    %c0_9 = arith.constant 0 : index
    %17 = vector.load %arg3[%c0_8, %c0_9] : memref<8x1xf32, #tpu.memory_space<vmem>>, vector<8x1xf32>
    %18 = arith.mulf %11, %11 : vector<8x512xf32>
    %cst_10 = arith.constant dense<0.000000e+00> : vector<8xf32>
    %19 = vector.multi_reduction <add>, %18, %cst_10 [1] : vector<8x512xf32> to vector<8xf32>
    %20 = vector.shape_cast %19 : vector<8xf32> to vector<8x1xf32>
    %21 = arith.addf %17, %20 : vector<8x1xf32>
    %c0_11 = arith.constant 0 : index
    %c0_12 = arith.constant 0 : index
    %22 = vector.load %arg3[%c0_11, %c0_12] : memref<8x1xf32, #tpu.memory_space<vmem>>, vector<8x1xf32>
    tpu.vector_store %arg3[%c0_11, %c0_12], %21 {strides = array<i32>} : memref<8x1xf32, #tpu.memory_space<vmem>>, vector<8x1xf32>,
    return
  }
  func.func @transform_0(%arg0: i32) -> (i32, i32) {
    %c0_i32 = arith.constant 0 : i32
    %c0_i32_0 = arith.constant 0 : i32
    return %c0_i32, %arg0 : i32, i32
  }
  func.func @transform_1(%arg0: i32) -> (i32, i32) {
    %c0_i32 = arith.constant 0 : i32
    %c0_i32_0 = arith.constant 0 : i32
    %c0_i32_1 = arith.constant 0 : i32
    return %c0_i32, %c0_i32_0 : i32, i32
  }
  func.func @transform_2(%arg0: i32) -> (i32, i32) {
    %c0_i32 = arith.constant 0 : i32
    %c0_i32_0 = arith.constant 0 : i32
    %c0_i32_1 = arith.constant 0 : i32
    return %c0_i32, %c0_i32_0 : i32, i32
  }
}

module attributes {stable_mosaic.version = 11 : i64} {
  func.func @_bn_apply_kernel(%arg0: i32, %arg1: memref<8x512xf32, #tpu.memory_space<vmem>>, %arg2: memref<8x1xf32, #tpu.memory_space<vmem>>, %arg3: memref<8x1xf32, #tpu.memory_space<vmem>>, %arg4: memref<8x1xf32, #tpu.memory_space<vmem>>, %arg5: memref<8x1xf32, #tpu.memory_space<vmem>>, %arg6: memref<8x512xf32, #tpu.memory_space<vmem>>) attributes {dimension_semantics = [#tpu.dimension_semantics<parallel>], iteration_bounds = array<i64: 1>, scalar_prefetch = 0 : i64, scratch_operands = 0 : i64, tpu.core_type = #tpu.core_type<tc>, window_params = [{transform_indices = @transform_0, window_bounds = array<i64: 8, 512>}, {pipeline_mode = #tpu.pipeline_mode<synchronous>, transform_indices = @transform_1, window_bounds = array<i64: 8, 1>}, {pipeline_mode = #tpu.pipeline_mode<synchronous>, transform_indices = @transform_2, window_bounds = array<i64: 8, 1>}, {pipeline_mode = #tpu.pipeline_mode<synchronous>, transform_indices = @transform_3, window_bounds = array<i64: 8, 1>}, {pipeline_mode = #tpu.pipeline_mode<synchronous>, transform_indices = @transform_4, window_bounds = array<i64: 8, 1>}, {transform_indices = @transform_5, window_bounds = array<i64: 8, 512>}]} {
    %c0 = arith.constant 0 : index
    %c0_0 = arith.constant 0 : index
    %0 = vector.load %arg2[%c0, %c0_0] : memref<8x1xf32, #tpu.memory_space<vmem>>, vector<8x1xf32>
    %cst = arith.constant 0.001953125 : f32
    %1 = vector.broadcast %cst : f32 to vector<8x1xf32>
    %2 = arith.mulf %0, %1 : vector<8x1xf32>
    %c0_1 = arith.constant 0 : index
    %c0_2 = arith.constant 0 : index
    %3 = vector.load %arg3[%c0_1, %c0_2] : memref<8x1xf32, #tpu.memory_space<vmem>>, vector<8x1xf32>
    %cst_3 = arith.constant 0.001953125 : f32
    %4 = vector.broadcast %cst_3 : f32 to vector<8x1xf32>
    %5 = arith.mulf %3, %4 : vector<8x1xf32>
    %6 = arith.mulf %2, %2 : vector<8x1xf32>
    %7 = arith.subf %5, %6 : vector<8x1xf32>
    %cst_4 = arith.constant 0.000000e+00 : f32
    %8 = vector.broadcast %cst_4 : f32 to vector<8x1xf32>
    %9 = arith.maximumf %7, %8 : vector<8x1xf32>
    %cst_5 = arith.constant 9.99999974E-6 : f32
    %10 = vector.broadcast %cst_5 : f32 to vector<8x1xf32>
    %11 = arith.addf %9, %10 : vector<8x1xf32>
    %12 = math.rsqrt %11 : vector<8x1xf32>
    %c0_6 = arith.constant 0 : index
    %c0_7 = arith.constant 0 : index
    %13 = vector.load %arg4[%c0_6, %c0_7] : memref<8x1xf32, #tpu.memory_space<vmem>>, vector<8x1xf32>
    %14 = arith.mulf %12, %13 : vector<8x1xf32>
    %c0_8 = arith.constant 0 : index
    %c0_9 = arith.constant 0 : index
    %15 = vector.load %arg1[%c0_8, %c0_9] : memref<8x512xf32, #tpu.memory_space<vmem>>, vector<8x512xf32>
    %16 = vector.broadcast %2 : vector<8x1xf32> to vector<8x512xf32>
    %17 = arith.subf %15, %16 : vector<8x512xf32>
    %18 = vector.broadcast %14 : vector<8x1xf32> to vector<8x512xf32>
    %19 = arith.mulf %17, %18 : vector<8x512xf32>
    %c0_10 = arith.constant 0 : index
    %c0_11 = arith.constant 0 : index
    %20 = vector.load %arg5[%c0_10, %c0_11] : memref<8x1xf32, #tpu.memory_space<vmem>>, vector<8x1xf32>
    %21 = vector.broadcast %20 : vector<8x1xf32> to vector<8x512xf32>
    %22 = arith.addf %19, %21 : vector<8x512xf32>
    %cst_12 = arith.constant 0.000000e+00 : f32
    %23 = vector.broadcast %cst_12 : f32 to vector<8x512xf32>
    %24 = arith.maximumf %22, %23 : vector<8x512xf32>
    %c0_13 = arith.constant 0 : index
    %c0_14 = arith.constant 0 : index
    %25 = vector.load %arg6[%c0_13, %c0_14] : memref<8x512xf32, #tpu.memory_space<vmem>>, vector<8x512xf32>
    tpu.vector_store %arg6[%c0_13, %c0_14], %24 {strides = array<i32>} : memref<8x512xf32, #tpu.memory_space<vmem>>, vector<8x512xf32>,
    return
  }
  func.func @transform_0(%arg0: i32) -> (i32, i32) {
    %c0_i32 = arith.constant 0 : i32
    %c0_i32_0 = arith.constant 0 : i32
    return %c0_i32, %arg0 : i32, i32
  }
  func.func @transform_1(%arg0: i32) -> (i32, i32) {
    %c0_i32 = arith.constant 0 : i32
    %c0_i32_0 = arith.constant 0 : i32
    %c0_i32_1 = arith.constant 0 : i32
    return %c0_i32, %c0_i32_0 : i32, i32
  }
  func.func @transform_2(%arg0: i32) -> (i32, i32) {
    %c0_i32 = arith.constant 0 : i32
    %c0_i32_0 = arith.constant 0 : i32
    %c0_i32_1 = arith.constant 0 : i32
    return %c0_i32, %c0_i32_0 : i32, i32
  }
  func.func @transform_3(%arg0: i32) -> (i32, i32) {
    %c0_i32 = arith.constant 0 : i32
    %c0_i32_0 = arith.constant 0 : i32
    %c0_i32_1 = arith.constant 0 : i32
    return %c0_i32, %c0_i32_0 : i32, i32
  }
  func.func @transform_4(%arg0: i32) -> (i32, i32) {
    %c0_i32 = arith.constant 0 : i32
    %c0_i32_0 = arith.constant 0 : i32
    %c0_i32_1 = arith.constant 0 : i32
    return %c0_i32, %c0_i32_0 : i32, i32
  }
  func.func @transform_5(%arg0: i32) -> (i32, i32) {
    %c0_i32 = arith.constant 0 : i32
    %c0_i32_0 = arith.constant 0 : i32
    return %c0_i32, %arg0 : i32, i32
  }
}

module attributes {stable_mosaic.version = 11 : i64} {
  func.func @_mm_cm_kernel(%arg0: i32, %arg1: memref<16x72xbf16, #tpu.memory_space<vmem>>, %arg2: memref<72x128xbf16, #tpu.memory_space<vmem>>, %arg3: memref<16x128xf32, #tpu.memory_space<vmem>>) attributes {dimension_semantics = [#tpu.dimension_semantics<parallel>], iteration_bounds = array<i64: 1>, scalar_prefetch = 0 : i64, scratch_operands = 0 : i64, tpu.core_type = #tpu.core_type<tc>, window_params = [{pipeline_mode = #tpu.pipeline_mode<synchronous>, transform_indices = @transform_0, window_bounds = array<i64: 16, 72>}, {transform_indices = @transform_1, window_bounds = array<i64: 72, 128>}, {transform_indices = @transform_2, window_bounds = array<i64: 16, 128>}]} {
    %c0 = arith.constant 0 : index
    %c0_0 = arith.constant 0 : index
    %0 = vector.load %arg1[%c0, %c0_0] : memref<16x72xbf16, #tpu.memory_space<vmem>>, vector<16x72xbf16>
    %c0_1 = arith.constant 0 : index
    %c0_2 = arith.constant 0 : index
    %1 = vector.load %arg2[%c0_1, %c0_2] : memref<72x128xbf16, #tpu.memory_space<vmem>>, vector<72x128xbf16>
    %cst = arith.constant dense<0.000000e+00> : vector<16x128xf32>
    %2 = tpu.matmul %0, %1, %cst {dimension_numbers = #tpu.dot_dimension_numbers<[1], [0], [0], [1], [0, 0, 1, 1], [], []>} : vector<16x72xbf16>, vector<72x128xbf16>, vector<16x128xf32> -> vector<16x128xf32>
    %c0_3 = arith.constant 0 : index
    %c0_4 = arith.constant 0 : index
    %3 = vector.load %arg3[%c0_3, %c0_4] : memref<16x128xf32, #tpu.memory_space<vmem>>, vector<16x128xf32>
    tpu.vector_store %arg3[%c0_3, %c0_4], %2 {strides = array<i32>} : memref<16x128xf32, #tpu.memory_space<vmem>>, vector<16x128xf32>,
    return
  }
  func.func @transform_0(%arg0: i32) -> (i32, i32) {
    %c0_i32 = arith.constant 0 : i32
    %c0_i32_0 = arith.constant 0 : i32
    %c0_i32_1 = arith.constant 0 : i32
    return %c0_i32, %c0_i32_0 : i32, i32
  }
  func.func @transform_1(%arg0: i32) -> (i32, i32) {
    %c0_i32 = arith.constant 0 : i32
    %c0_i32_0 = arith.constant 0 : i32
    return %c0_i32, %arg0 : i32, i32
  }
  func.func @transform_2(%arg0: i32) -> (i32, i32) {
    %c0_i32 = arith.constant 0 : i32
    %c0_i32_0 = arith.constant 0 : i32
    return %c0_i32, %arg0 : i32, i32
  }
}

module attributes {stable_mosaic.version = 11 : i64} {
  func.func @_bn_stats_kernel(%arg0: i32, %arg1: memref<16x128xf32, #tpu.memory_space<vmem>>, %arg2: memref<16x1xf32, #tpu.memory_space<vmem>>, %arg3: memref<16x1xf32, #tpu.memory_space<vmem>>) attributes {dimension_semantics = [#tpu.dimension_semantics<arbitrary>], iteration_bounds = array<i64: 1>, scalar_prefetch = 0 : i64, scratch_operands = 0 : i64, tpu.core_type = #tpu.core_type<tc>, window_params = [{transform_indices = @transform_0, window_bounds = array<i64: 16, 128>}, {pipeline_mode = #tpu.pipeline_mode<synchronous>, transform_indices = @transform_1, window_bounds = array<i64: 16, 1>}, {pipeline_mode = #tpu.pipeline_mode<synchronous>, transform_indices = @transform_2, window_bounds = array<i64: 16, 1>}]} {
    %c0_i32 = arith.constant 0 : i32
    %0 = arith.cmpi eq, %arg0, %c0_i32 : i32
    %1 = arith.extui %0 : i1 to i32
    %c0_i32_0 = arith.constant 0 : i32
    %2 = arith.cmpi ne, %1, %c0_i32_0 : i32
    scf.if %2 {
      %cst_13 = arith.constant 0.000000e+00 : f32
      %23 = vector.broadcast %cst_13 : f32 to vector<16x1xf32>
      %c0_14 = arith.constant 0 : index
      %c0_15 = arith.constant 0 : index
      %24 = vector.load %arg2[%c0_14, %c0_15] : memref<16x1xf32, #tpu.memory_space<vmem>>, vector<16x1xf32>
      tpu.vector_store %arg2[%c0_14, %c0_15], %23 {strides = array<i32>} : memref<16x1xf32, #tpu.memory_space<vmem>>, vector<16x1xf32>,
      %cst_16 = arith.constant 0.000000e+00 : f32
      %25 = vector.broadcast %cst_16 : f32 to vector<16x1xf32>
      %c0_17 = arith.constant 0 : index
      %c0_18 = arith.constant 0 : index
      %26 = vector.load %arg3[%c0_17, %c0_18] : memref<16x1xf32, #tpu.memory_space<vmem>>, vector<16x1xf32>
      tpu.vector_store %arg3[%c0_17, %c0_18], %25 {strides = array<i32>} : memref<16x1xf32, #tpu.memory_space<vmem>>, vector<16x1xf32>,
    } else {
    }
    %c0 = arith.constant 0 : index
    %c0_1 = arith.constant 0 : index
    %3 = vector.load %arg1[%c0, %c0_1] : memref<16x128xf32, #tpu.memory_space<vmem>>, vector<16x128xf32>
    %c128_i32 = arith.constant 128 : i32
    %4 = arith.muli %arg0, %c128_i32 : i32
    %5 = tpu.iota {dimensions = array<i32: 1>} : vector<16x128xi32>
    %6 = vector.broadcast %4 : i32 to vector<16x128xi32>
    %7 = arith.addi %6, %5 : vector<16x128xi32>
    %c128_i32_2 = arith.constant 128 : i32
    %8 = vector.broadcast %c128_i32_2 : i32 to vector<16x128xi32>
    %9 = arith.cmpi slt, %7, %8 : vector<16x128xi32>
    %cst = arith.constant 0.000000e+00 : f32
    %10 = vector.broadcast %cst : f32 to vector<16x128xf32>
    %11 = arith.select %9, %3, %10 : vector<16x128xi1>, vector<16x128xf32>
    %c0_3 = arith.constant 0 : index
    %c0_4 = arith.constant 0 : index
    %12 = vector.load %arg2[%c0_3, %c0_4] : memref<16x1xf32, #tpu.memory_space<vmem>>, vector<16x1xf32>
    %cst_5 = arith.constant dense<0.000000e+00> : vector<16xf32>
    %13 = vector.multi_reduction <add>, %11, %cst_5 [1] : vector<16x128xf32> to vector<16xf32>
    %14 = vector.shape_cast %13 : vector<16xf32> to vector<16x1xf32>
    %15 = arith.addf %12, %14 : vector<16x1xf32>
    %c0_6 = arith.constant 0 : index
    %c0_7 = arith.constant 0 : index
    %16 = vector.load %arg2[%c0_6, %c0_7] : memref<16x1xf32, #tpu.memory_space<vmem>>, vector<16x1xf32>
    tpu.vector_store %arg2[%c0_6, %c0_7], %15 {strides = array<i32>} : memref<16x1xf32, #tpu.memory_space<vmem>>, vector<16x1xf32>,
    %c0_8 = arith.constant 0 : index
    %c0_9 = arith.constant 0 : index
    %17 = vector.load %arg3[%c0_8, %c0_9] : memref<16x1xf32, #tpu.memory_space<vmem>>, vector<16x1xf32>
    %18 = arith.mulf %11, %11 : vector<16x128xf32>
    %cst_10 = arith.constant dense<0.000000e+00> : vector<16xf32>
    %19 = vector.multi_reduction <add>, %18, %cst_10 [1] : vector<16x128xf32> to vector<16xf32>
    %20 = vector.shape_cast %19 : vector<16xf32> to vector<16x1xf32>
    %21 = arith.addf %17, %20 : vector<16x1xf32>
    %c0_11 = arith.constant 0 : index
    %c0_12 = arith.constant 0 : index
    %22 = vector.load %arg3[%c0_11, %c0_12] : memref<16x1xf32, #tpu.memory_space<vmem>>, vector<16x1xf32>
    tpu.vector_store %arg3[%c0_11, %c0_12], %21 {strides = array<i32>} : memref<16x1xf32, #tpu.memory_space<vmem>>, vector<16x1xf32>,
    return
  }
  func.func @transform_0(%arg0: i32) -> (i32, i32) {
    %c0_i32 = arith.constant 0 : i32
    %c0_i32_0 = arith.constant 0 : i32
    return %c0_i32, %arg0 : i32, i32
  }
  func.func @transform_1(%arg0: i32) -> (i32, i32) {
    %c0_i32 = arith.constant 0 : i32
    %c0_i32_0 = arith.constant 0 : i32
    %c0_i32_1 = arith.constant 0 : i32
    return %c0_i32, %c0_i32_0 : i32, i32
  }
  func.func @transform_2(%arg0: i32) -> (i32, i32) {
    %c0_i32 = arith.constant 0 : i32
    %c0_i32_0 = arith.constant 0 : i32
    %c0_i32_1 = arith.constant 0 : i32
    return %c0_i32, %c0_i32_0 : i32, i32
  }
}

module attributes {stable_mosaic.version = 11 : i64} {
  func.func @_bn_apply_kernel(%arg0: i32, %arg1: memref<16x128xf32, #tpu.memory_space<vmem>>, %arg2: memref<16x1xf32, #tpu.memory_space<vmem>>, %arg3: memref<16x1xf32, #tpu.memory_space<vmem>>, %arg4: memref<16x1xf32, #tpu.memory_space<vmem>>, %arg5: memref<16x1xf32, #tpu.memory_space<vmem>>, %arg6: memref<16x128xf32, #tpu.memory_space<vmem>>) attributes {dimension_semantics = [#tpu.dimension_semantics<parallel>], iteration_bounds = array<i64: 1>, scalar_prefetch = 0 : i64, scratch_operands = 0 : i64, tpu.core_type = #tpu.core_type<tc>, window_params = [{transform_indices = @transform_0, window_bounds = array<i64: 16, 128>}, {pipeline_mode = #tpu.pipeline_mode<synchronous>, transform_indices = @transform_1, window_bounds = array<i64: 16, 1>}, {pipeline_mode = #tpu.pipeline_mode<synchronous>, transform_indices = @transform_2, window_bounds = array<i64: 16, 1>}, {pipeline_mode = #tpu.pipeline_mode<synchronous>, transform_indices = @transform_3, window_bounds = array<i64: 16, 1>}, {pipeline_mode = #tpu.pipeline_mode<synchronous>, transform_indices = @transform_4, window_bounds = array<i64: 16, 1>}, {transform_indices = @transform_5, window_bounds = array<i64: 16, 128>}]} {
    %c0 = arith.constant 0 : index
    %c0_0 = arith.constant 0 : index
    %0 = vector.load %arg2[%c0, %c0_0] : memref<16x1xf32, #tpu.memory_space<vmem>>, vector<16x1xf32>
    %cst = arith.constant 7.812500e-03 : f32
    %1 = vector.broadcast %cst : f32 to vector<16x1xf32>
    %2 = arith.mulf %0, %1 : vector<16x1xf32>
    %c0_1 = arith.constant 0 : index
    %c0_2 = arith.constant 0 : index
    %3 = vector.load %arg3[%c0_1, %c0_2] : memref<16x1xf32, #tpu.memory_space<vmem>>, vector<16x1xf32>
    %cst_3 = arith.constant 7.812500e-03 : f32
    %4 = vector.broadcast %cst_3 : f32 to vector<16x1xf32>
    %5 = arith.mulf %3, %4 : vector<16x1xf32>
    %6 = arith.mulf %2, %2 : vector<16x1xf32>
    %7 = arith.subf %5, %6 : vector<16x1xf32>
    %cst_4 = arith.constant 0.000000e+00 : f32
    %8 = vector.broadcast %cst_4 : f32 to vector<16x1xf32>
    %9 = arith.maximumf %7, %8 : vector<16x1xf32>
    %cst_5 = arith.constant 9.99999974E-6 : f32
    %10 = vector.broadcast %cst_5 : f32 to vector<16x1xf32>
    %11 = arith.addf %9, %10 : vector<16x1xf32>
    %12 = math.rsqrt %11 : vector<16x1xf32>
    %c0_6 = arith.constant 0 : index
    %c0_7 = arith.constant 0 : index
    %13 = vector.load %arg4[%c0_6, %c0_7] : memref<16x1xf32, #tpu.memory_space<vmem>>, vector<16x1xf32>
    %14 = arith.mulf %12, %13 : vector<16x1xf32>
    %c0_8 = arith.constant 0 : index
    %c0_9 = arith.constant 0 : index
    %15 = vector.load %arg1[%c0_8, %c0_9] : memref<16x128xf32, #tpu.memory_space<vmem>>, vector<16x128xf32>
    %16 = vector.broadcast %2 : vector<16x1xf32> to vector<16x128xf32>
    %17 = arith.subf %15, %16 : vector<16x128xf32>
    %18 = vector.broadcast %14 : vector<16x1xf32> to vector<16x128xf32>
    %19 = arith.mulf %17, %18 : vector<16x128xf32>
    %c0_10 = arith.constant 0 : index
    %c0_11 = arith.constant 0 : index
    %20 = vector.load %arg5[%c0_10, %c0_11] : memref<16x1xf32, #tpu.memory_space<vmem>>, vector<16x1xf32>
    %21 = vector.broadcast %20 : vector<16x1xf32> to vector<16x128xf32>
    %22 = arith.addf %19, %21 : vector<16x128xf32>
    %cst_12 = arith.constant 0.000000e+00 : f32
    %23 = vector.broadcast %cst_12 : f32 to vector<16x128xf32>
    %24 = arith.maximumf %22, %23 : vector<16x128xf32>
    %c0_13 = arith.constant 0 : index
    %c0_14 = arith.constant 0 : index
    %25 = vector.load %arg6[%c0_13, %c0_14] : memref<16x128xf32, #tpu.memory_space<vmem>>, vector<16x128xf32>
    tpu.vector_store %arg6[%c0_13, %c0_14], %24 {strides = array<i32>} : memref<16x128xf32, #tpu.memory_space<vmem>>, vector<16x128xf32>,
    return
  }
  func.func @transform_0(%arg0: i32) -> (i32, i32) {
    %c0_i32 = arith.constant 0 : i32
    %c0_i32_0 = arith.constant 0 : i32
    return %c0_i32, %arg0 : i32, i32
  }
  func.func @transform_1(%arg0: i32) -> (i32, i32) {
    %c0_i32 = arith.constant 0 : i32
    %c0_i32_0 = arith.constant 0 : i32
    %c0_i32_1 = arith.constant 0 : i32
    return %c0_i32, %c0_i32_0 : i32, i32
  }
  func.func @transform_2(%arg0: i32) -> (i32, i32) {
    %c0_i32 = arith.constant 0 : i32
    %c0_i32_0 = arith.constant 0 : i32
    %c0_i32_1 = arith.constant 0 : i32
    return %c0_i32, %c0_i32_0 : i32, i32
  }
  func.func @transform_3(%arg0: i32) -> (i32, i32) {
    %c0_i32 = arith.constant 0 : i32
    %c0_i32_0 = arith.constant 0 : i32
    %c0_i32_1 = arith.constant 0 : i32
    return %c0_i32, %c0_i32_0 : i32, i32
  }
  func.func @transform_4(%arg0: i32) -> (i32, i32) {
    %c0_i32 = arith.constant 0 : i32
    %c0_i32_0 = arith.constant 0 : i32
    %c0_i32_1 = arith.constant 0 : i32
    return %c0_i32, %c0_i32_0 : i32, i32
  }
  func.func @transform_5(%arg0: i32) -> (i32, i32) {
    %c0_i32 = arith.constant 0 : i32
    %c0_i32_0 = arith.constant 0 : i32
    return %c0_i32, %arg0 : i32, i32
  }
}

module attributes {stable_mosaic.version = 11 : i64} {
  func.func @_mm_cm_kernel(%arg0: i32, %arg1: memref<32x16xbf16, #tpu.memory_space<vmem>>, %arg2: memref<16x128xbf16, #tpu.memory_space<vmem>>, %arg3: memref<32x1xf32, #tpu.memory_space<vmem>>, %arg4: memref<32x128xf32, #tpu.memory_space<vmem>>) attributes {dimension_semantics = [#tpu.dimension_semantics<parallel>], iteration_bounds = array<i64: 1>, scalar_prefetch = 0 : i64, scratch_operands = 0 : i64, tpu.core_type = #tpu.core_type<tc>, window_params = [{pipeline_mode = #tpu.pipeline_mode<synchronous>, transform_indices = @transform_0, window_bounds = array<i64: 32, 16>}, {transform_indices = @transform_1, window_bounds = array<i64: 16, 128>}, {pipeline_mode = #tpu.pipeline_mode<synchronous>, transform_indices = @transform_2, window_bounds = array<i64: 32, 1>}, {transform_indices = @transform_3, window_bounds = array<i64: 32, 128>}]} {
    %c0 = arith.constant 0 : index
    %c0_0 = arith.constant 0 : index
    %0 = vector.load %arg1[%c0, %c0_0] : memref<32x16xbf16, #tpu.memory_space<vmem>>, vector<32x16xbf16>
    %c0_1 = arith.constant 0 : index
    %c0_2 = arith.constant 0 : index
    %1 = vector.load %arg2[%c0_1, %c0_2] : memref<16x128xbf16, #tpu.memory_space<vmem>>, vector<16x128xbf16>
    %cst = arith.constant dense<0.000000e+00> : vector<32x128xf32>
    %2 = tpu.matmul %0, %1, %cst {dimension_numbers = #tpu.dot_dimension_numbers<[1], [0], [0], [1], [0, 0, 1, 1], [], []>} : vector<32x16xbf16>, vector<16x128xbf16>, vector<32x128xf32> -> vector<32x128xf32>
    %c0_3 = arith.constant 0 : index
    %c0_4 = arith.constant 0 : index
    %3 = vector.load %arg3[%c0_3, %c0_4] : memref<32x1xf32, #tpu.memory_space<vmem>>, vector<32x1xf32>
    %4 = vector.broadcast %3 : vector<32x1xf32> to vector<32x128xf32>
    %5 = arith.addf %2, %4 : vector<32x128xf32>
    %c0_5 = arith.constant 0 : index
    %c0_6 = arith.constant 0 : index
    %6 = vector.load %arg4[%c0_5, %c0_6] : memref<32x128xf32, #tpu.memory_space<vmem>>, vector<32x128xf32>
    tpu.vector_store %arg4[%c0_5, %c0_6], %5 {strides = array<i32>} : memref<32x128xf32, #tpu.memory_space<vmem>>, vector<32x128xf32>,
    return
  }
  func.func @transform_0(%arg0: i32) -> (i32, i32) {
    %c0_i32 = arith.constant 0 : i32
    %c0_i32_0 = arith.constant 0 : i32
    %c0_i32_1 = arith.constant 0 : i32
    return %c0_i32, %c0_i32_0 : i32, i32
  }
  func.func @transform_1(%arg0: i32) -> (i32, i32) {
    %c0_i32 = arith.constant 0 : i32
    %c0_i32_0 = arith.constant 0 : i32
    return %c0_i32, %arg0 : i32, i32
  }
  func.func @transform_2(%arg0: i32) -> (i32, i32) {
    %c0_i32 = arith.constant 0 : i32
    %c0_i32_0 = arith.constant 0 : i32
    %c0_i32_1 = arith.constant 0 : i32
    return %c0_i32, %c0_i32_0 : i32, i32
  }
  func.func @transform_3(%arg0: i32) -> (i32, i32) {
    %c0_i32 = arith.constant 0 : i32
    %c0_i32_0 = arith.constant 0 : i32
    return %c0_i32, %arg0 : i32, i32
  }
}

module attributes {stable_mosaic.version = 11 : i64} {
  func.func @_ln_mm_kernel(%arg0: i32, %arg1: memref<128x32xf32, #tpu.memory_space<vmem>>, %arg2: memref<1x32xf32, #tpu.memory_space<vmem>>, %arg3: memref<1x32xf32, #tpu.memory_space<vmem>>, %arg4: memref<32x96xbf16, #tpu.memory_space<vmem>>, %arg5: memref<1x96xf32, #tpu.memory_space<vmem>>, %arg6: memref<128x96xf32, #tpu.memory_space<vmem>>) attributes {dimension_semantics = [#tpu.dimension_semantics<parallel>], iteration_bounds = array<i64: 1>, scalar_prefetch = 0 : i64, scratch_operands = 0 : i64, tpu.core_type = #tpu.core_type<tc>, window_params = [{transform_indices = @transform_0, window_bounds = array<i64: 128, 32>}, {pipeline_mode = #tpu.pipeline_mode<synchronous>, transform_indices = @transform_1, window_bounds = array<i64: 1, 32>}, {pipeline_mode = #tpu.pipeline_mode<synchronous>, transform_indices = @transform_2, window_bounds = array<i64: 1, 32>}, {pipeline_mode = #tpu.pipeline_mode<synchronous>, transform_indices = @transform_3, window_bounds = array<i64: 32, 96>}, {pipeline_mode = #tpu.pipeline_mode<synchronous>, transform_indices = @transform_4, window_bounds = array<i64: 1, 96>}, {transform_indices = @transform_5, window_bounds = array<i64: 128, 96>}]} {
    %c0 = arith.constant 0 : index
    %c0_0 = arith.constant 0 : index
    %0 = vector.load %arg1[%c0, %c0_0] : memref<128x32xf32, #tpu.memory_space<vmem>>, vector<128x32xf32>
    %cst = arith.constant dense<0.000000e+00> : vector<128xf32>
    %1 = vector.multi_reduction <add>, %0, %cst [1] : vector<128x32xf32> to vector<128xf32>
    %2 = vector.shape_cast %1 : vector<128xf32> to vector<128x1xf32>
    %cst_1 = arith.constant 3.200000e+01 : f32
    %3 = vector.broadcast %cst_1 : f32 to vector<128x1xf32>
    %4 = arith.divf %2, %3 : vector<128x1xf32>
    %5 = vector.broadcast %4 : vector<128x1xf32> to vector<128x32xf32>
    %6 = arith.subf %0, %5 : vector<128x32xf32>
    %7 = arith.mulf %6, %6 : vector<128x32xf32>
    %cst_2 = arith.constant dense<0.000000e+00> : vector<128xf32>
    %8 = vector.multi_reduction <add>, %7, %cst_2 [1] : vector<128x32xf32> to vector<128xf32>
    %9 = vector.shape_cast %8 : vector<128xf32> to vector<128x1xf32>
    %cst_3 = arith.constant 3.200000e+01 : f32
    %10 = vector.broadcast %cst_3 : f32 to vector<128x1xf32>
    %11 = arith.divf %9, %10 : vector<128x1xf32>
    %cst_4 = arith.constant 9.99999997E-7 : f32
    %12 = vector.broadcast %cst_4 : f32 to vector<128x1xf32>
    %13 = arith.addf %11, %12 : vector<128x1xf32>
    %14 = math.rsqrt %13 : vector<128x1xf32>
    %15 = vector.broadcast %14 : vector<128x1xf32> to vector<128x32xf32>
    %16 = arith.mulf %6, %15 : vector<128x32xf32>
    %c0_5 = arith.constant 0 : index
    %c0_6 = arith.constant 0 : index
    %17 = vector.load %arg2[%c0_5, %c0_6] : memref<1x32xf32, #tpu.memory_space<vmem>>, vector<1x32xf32>
    %18 = vector.broadcast %17 : vector<1x32xf32> to vector<128x32xf32>
    %19 = arith.mulf %16, %18 : vector<128x32xf32>
    %c0_7 = arith.constant 0 : index
    %c0_8 = arith.constant 0 : index
    %20 = vector.load %arg3[%c0_7, %c0_8] : memref<1x32xf32, #tpu.memory_space<vmem>>, vector<1x32xf32>
    %21 = vector.broadcast %20 : vector<1x32xf32> to vector<128x32xf32>
    %22 = arith.addf %19, %21 : vector<128x32xf32>
    %23 = arith.truncf %22 : vector<128x32xf32> to vector<128x32xbf16>
    %c0_9 = arith.constant 0 : index
    %c0_10 = arith.constant 0 : index
    %24 = vector.load %arg4[%c0_9, %c0_10] : memref<32x96xbf16, #tpu.memory_space<vmem>>, vector<32x96xbf16>
    %cst_11 = arith.constant dense<0.000000e+00> : vector<128x96xf32>
    %25 = tpu.matmul %23, %24, %cst_11 {dimension_numbers = #tpu.dot_dimension_numbers<[1], [0], [0], [1], [0, 0, 1, 1], [], []>} : vector<128x32xbf16>, vector<32x96xbf16>, vector<128x96xf32> -> vector<128x96xf32>
    %c0_12 = arith.constant 0 : index
    %c0_13 = arith.constant 0 : index
    %26 = vector.load %arg5[%c0_12, %c0_13] : memref<1x96xf32, #tpu.memory_space<vmem>>, vector<1x96xf32>
    %27 = vector.broadcast %26 : vector<1x96xf32> to vector<128x96xf32>
    %28 = arith.addf %25, %27 : vector<128x96xf32>
    %c0_14 = arith.constant 0 : index
    %c0_15 = arith.constant 0 : index
    %29 = vector.load %arg6[%c0_14, %c0_15] : memref<128x96xf32, #tpu.memory_space<vmem>>, vector<128x96xf32>
    tpu.vector_store %arg6[%c0_14, %c0_15], %28 {strides = array<i32>} : memref<128x96xf32, #tpu.memory_space<vmem>>, vector<128x96xf32>,
    return
  }
  func.func @transform_0(%arg0: i32) -> (i32, i32) {
    %c0_i32 = arith.constant 0 : i32
    %c0_i32_0 = arith.constant 0 : i32
    return %arg0, %c0_i32 : i32, i32
  }
  func.func @transform_1(%arg0: i32) -> (i32, i32) {
    %c0_i32 = arith.constant 0 : i32
    %c0_i32_0 = arith.constant 0 : i32
    %c0_i32_1 = arith.constant 0 : i32
    return %c0_i32, %c0_i32_0 : i32, i32
  }
  func.func @transform_2(%arg0: i32) -> (i32, i32) {
    %c0_i32 = arith.constant 0 : i32
    %c0_i32_0 = arith.constant 0 : i32
    %c0_i32_1 = arith.constant 0 : i32
    return %c0_i32, %c0_i32_0 : i32, i32
  }
  func.func @transform_3(%arg0: i32) -> (i32, i32) {
    %c0_i32 = arith.constant 0 : i32
    %c0_i32_0 = arith.constant 0 : i32
    %c0_i32_1 = arith.constant 0 : i32
    return %c0_i32, %c0_i32_0 : i32, i32
  }
  func.func @transform_4(%arg0: i32) -> (i32, i32) {
    %c0_i32 = arith.constant 0 : i32
    %c0_i32_0 = arith.constant 0 : i32
    %c0_i32_1 = arith.constant 0 : i32
    return %c0_i32, %c0_i32_0 : i32, i32
  }
  func.func @transform_5(%arg0: i32) -> (i32, i32) {
    %c0_i32 = arith.constant 0 : i32
    %c0_i32_0 = arith.constant 0 : i32
    return %arg0, %c0_i32 : i32, i32
  }
}

module attributes {stable_mosaic.version = 11 : i64} {
  func.func @_attn_kernel(%arg0: i32, %arg1: memref<1x64x32xf32, #tpu.memory_space<vmem>>, %arg2: memref<1x64x32xf32, #tpu.memory_space<vmem>>, %arg3: memref<1x64x32xf32, #tpu.memory_space<vmem>>, %arg4: memref<1x64x32xf32, #tpu.memory_space<vmem>>, %arg5: memref<32x32xbf16, #tpu.memory_space<vmem>>, %arg6: memref<1x32xf32, #tpu.memory_space<vmem>>, %arg7: memref<1x64x32xf32, #tpu.memory_space<vmem>>) attributes {dimension_semantics = [#tpu.dimension_semantics<parallel>], iteration_bounds = array<i64: 2>, scalar_prefetch = 0 : i64, scratch_operands = 0 : i64, tpu.core_type = #tpu.core_type<tc>, window_params = [{transform_indices = @transform_0, window_bounds = array<i64: 1, 64, 32>}, {transform_indices = @transform_1, window_bounds = array<i64: 1, 64, 32>}, {transform_indices = @transform_2, window_bounds = array<i64: 1, 64, 32>}, {transform_indices = @transform_3, window_bounds = array<i64: 1, 64, 32>}, {pipeline_mode = #tpu.pipeline_mode<synchronous>, transform_indices = @transform_4, window_bounds = array<i64: 32, 32>}, {pipeline_mode = #tpu.pipeline_mode<synchronous>, transform_indices = @transform_5, window_bounds = array<i64: 1, 32>}, {transform_indices = @transform_6, window_bounds = array<i64: 1, 64, 32>}]} {
    %c0 = arith.constant 0 : index
    %c0_0 = arith.constant 0 : index
    %c0_1 = arith.constant 0 : index
    %0 = vector.load %arg1[%c0, %c0_0, %c0_1] : memref<1x64x32xf32, #tpu.memory_space<vmem>>, vector<1x64x32xf32>
    %1 = vector.shape_cast %0 : vector<1x64x32xf32> to vector<64x32xf32>
    %c0_2 = arith.constant 0 : index
    %c0_3 = arith.constant 0 : index
    %c0_4 = arith.constant 0 : index
    %2 = vector.load %arg2[%c0_2, %c0_3, %c0_4] : memref<1x64x32xf32, #tpu.memory_space<vmem>>, vector<1x64x32xf32>
    %3 = vector.shape_cast %2 : vector<1x64x32xf32> to vector<64x32xf32>
    %c0_5 = arith.constant 0 : index
    %c0_6 = arith.constant 0 : index
    %c0_7 = arith.constant 0 : index
    %4 = vector.load %arg3[%c0_5, %c0_6, %c0_7] : memref<1x64x32xf32, #tpu.memory_space<vmem>>, vector<1x64x32xf32>
    %5 = vector.shape_cast %4 : vector<1x64x32xf32> to vector<64x32xf32>
    %6 = vector.extract_strided_slice %1 {offsets = [0, 0], sizes = [64, 8], strides = [1, 1]} : vector<64x32xf32> to vector<64x8xf32>
    %7 = vector.extract_strided_slice %3 {offsets = [0, 0], sizes = [64, 8], strides = [1, 1]} : vector<64x32xf32> to vector<64x8xf32>
    %8 = vector.extract_strided_slice %5 {offsets = [0, 0], sizes = [64, 8], strides = [1, 1]} : vector<64x32xf32> to vector<64x8xf32>
    %cst = arith.constant dense<0.000000e+00> : vector<64x64xf32>
    %9 = tpu.matmul %6, %7, %cst {dimension_numbers = #tpu.dot_dimension_numbers<[1], [1], [0], [0], [0, 0, 1, 0], [], []>} : vector<64x8xf32>, vector<64x8xf32>, vector<64x64xf32> -> vector<64x64xf32>
    %cst_8 = arith.constant 0.353553385 : f32
    %10 = vector.broadcast %cst_8 : f32 to vector<64x64xf32>
    %11 = arith.mulf %9, %10 : vector<64x64xf32>
    %cst_9 = arith.constant dense<0xFF800000> : vector<64xf32>
    %12 = vector.multi_reduction <maximumf>, %11, %cst_9 [1] : vector<64x64xf32> to vector<64xf32>
    %13 = vector.shape_cast %12 : vector<64xf32> to vector<64x1xf32>
    %14 = vector.broadcast %13 : vector<64x1xf32> to vector<64x64xf32>
    %15 = arith.subf %11, %14 : vector<64x64xf32>
    %16 = math.exp %15 : vector<64x64xf32>
    %cst_10 = arith.constant dense<0.000000e+00> : vector<64xf32>
    %17 = vector.multi_reduction <add>, %16, %cst_10 [1] : vector<64x64xf32> to vector<64xf32>
    %18 = vector.shape_cast %17 : vector<64xf32> to vector<64x1xf32>
    %19 = tpu.reciprocal %18 {approx = true} : vector<64x1xf32> -> vector<64x1xf32>
    %20 = vector.broadcast %19 : vector<64x1xf32> to vector<64x64xf32>
    %21 = arith.mulf %16, %20 : vector<64x64xf32>
    %cst_11 = arith.constant dense<0.000000e+00> : vector<64x8xf32>
    %22 = tpu.matmul %21, %8, %cst_11 {dimension_numbers = #tpu.dot_dimension_numbers<[1], [0], [0], [1], [0, 0, 1, 1], [], []>} : vector<64x64xf32>, vector<64x8xf32>, vector<64x8xf32> -> vector<64x8xf32>
    %23 = arith.truncf %22 : vector<64x8xf32> to vector<64x8xbf16>
    %c0_12 = arith.constant 0 : index
    %c0_13 = arith.constant 0 : index
    %24 = vector.load %arg5[%c0_12, %c0_13] : memref<32x32xbf16, #tpu.memory_space<vmem>>, vector<8x32xbf16>
    %cst_14 = arith.constant dense<0.000000e+00> : vector<64x32xf32>
    %25 = tpu.matmul %23, %24, %cst_14 {dimension_numbers = #tpu.dot_dimension_numbers<[1], [0], [0], [1], [0, 0, 1, 1], [], []>} : vector<64x8xbf16>, vector<8x32xbf16>, vector<64x32xf32> -> vector<64x32xf32>
    %26 = vector.extract_strided_slice %1 {offsets = [0, 8], sizes = [64, 8], strides = [1, 1]} : vector<64x32xf32> to vector<64x8xf32>
    %27 = vector.extract_strided_slice %3 {offsets = [0, 8], sizes = [64, 8], strides = [1, 1]} : vector<64x32xf32> to vector<64x8xf32>
    %28 = vector.extract_strided_slice %5 {offsets = [0, 8], sizes = [64, 8], strides = [1, 1]} : vector<64x32xf32> to vector<64x8xf32>
    %cst_15 = arith.constant dense<0.000000e+00> : vector<64x64xf32>
    %29 = tpu.matmul %26, %27, %cst_15 {dimension_numbers = #tpu.dot_dimension_numbers<[1], [1], [0], [0], [0, 0, 1, 0], [], []>} : vector<64x8xf32>, vector<64x8xf32>, vector<64x64xf32> -> vector<64x64xf32>
    %cst_16 = arith.constant 0.353553385 : f32
    %30 = vector.broadcast %cst_16 : f32 to vector<64x64xf32>
    %31 = arith.mulf %29, %30 : vector<64x64xf32>
    %cst_17 = arith.constant dense<0xFF800000> : vector<64xf32>
    %32 = vector.multi_reduction <maximumf>, %31, %cst_17 [1] : vector<64x64xf32> to vector<64xf32>
    %33 = vector.shape_cast %32 : vector<64xf32> to vector<64x1xf32>
    %34 = vector.broadcast %33 : vector<64x1xf32> to vector<64x64xf32>
    %35 = arith.subf %31, %34 : vector<64x64xf32>
    %36 = math.exp %35 : vector<64x64xf32>
    %cst_18 = arith.constant dense<0.000000e+00> : vector<64xf32>
    %37 = vector.multi_reduction <add>, %36, %cst_18 [1] : vector<64x64xf32> to vector<64xf32>
    %38 = vector.shape_cast %37 : vector<64xf32> to vector<64x1xf32>
    %39 = tpu.reciprocal %38 {approx = true} : vector<64x1xf32> -> vector<64x1xf32>
    %40 = vector.broadcast %39 : vector<64x1xf32> to vector<64x64xf32>
    %41 = arith.mulf %36, %40 : vector<64x64xf32>
    %cst_19 = arith.constant dense<0.000000e+00> : vector<64x8xf32>
    %42 = tpu.matmul %41, %28, %cst_19 {dimension_numbers = #tpu.dot_dimension_numbers<[1], [0], [0], [1], [0, 0, 1, 1], [], []>} : vector<64x64xf32>, vector<64x8xf32>, vector<64x8xf32> -> vector<64x8xf32>
    %43 = arith.truncf %42 : vector<64x8xf32> to vector<64x8xbf16>
    %c8 = arith.constant 8 : index
    %c0_20 = arith.constant 0 : index
    %44 = vector.load %arg5[%c8, %c0_20] : memref<32x32xbf16, #tpu.memory_space<vmem>>, vector<8x32xbf16>
    %cst_21 = arith.constant dense<0.000000e+00> : vector<64x32xf32>
    %45 = tpu.matmul %43, %44, %cst_21 {dimension_numbers = #tpu.dot_dimension_numbers<[1], [0], [0], [1], [0, 0, 1, 1], [], []>} : vector<64x8xbf16>, vector<8x32xbf16>, vector<64x32xf32> -> vector<64x32xf32>
    %46 = arith.addf %25, %45 : vector<64x32xf32>
    %47 = vector.extract_strided_slice %1 {offsets = [0, 16], sizes = [64, 8], strides = [1, 1]} : vector<64x32xf32> to vector<64x8xf32>
    %48 = vector.extract_strided_slice %3 {offsets = [0, 16], sizes = [64, 8], strides = [1, 1]} : vector<64x32xf32> to vector<64x8xf32>
    %49 = vector.extract_strided_slice %5 {offsets = [0, 16], sizes = [64, 8], strides = [1, 1]} : vector<64x32xf32> to vector<64x8xf32>
    %cst_22 = arith.constant dense<0.000000e+00> : vector<64x64xf32>
    %50 = tpu.matmul %47, %48, %cst_22 {dimension_numbers = #tpu.dot_dimension_numbers<[1], [1], [0], [0], [0, 0, 1, 0], [], []>} : vector<64x8xf32>, vector<64x8xf32>, vector<64x64xf32> -> vector<64x64xf32>
    %cst_23 = arith.constant 0.353553385 : f32
    %51 = vector.broadcast %cst_23 : f32 to vector<64x64xf32>
    %52 = arith.mulf %50, %51 : vector<64x64xf32>
    %cst_24 = arith.constant dense<0xFF800000> : vector<64xf32>
    %53 = vector.multi_reduction <maximumf>, %52, %cst_24 [1] : vector<64x64xf32> to vector<64xf32>
    %54 = vector.shape_cast %53 : vector<64xf32> to vector<64x1xf32>
    %55 = vector.broadcast %54 : vector<64x1xf32> to vector<64x64xf32>
    %56 = arith.subf %52, %55 : vector<64x64xf32>
    %57 = math.exp %56 : vector<64x64xf32>
    %cst_25 = arith.constant dense<0.000000e+00> : vector<64xf32>
    %58 = vector.multi_reduction <add>, %57, %cst_25 [1] : vector<64x64xf32> to vector<64xf32>
    %59 = vector.shape_cast %58 : vector<64xf32> to vector<64x1xf32>
    %60 = tpu.reciprocal %59 {approx = true} : vector<64x1xf32> -> vector<64x1xf32>
    %61 = vector.broadcast %60 : vector<64x1xf32> to vector<64x64xf32>
    %62 = arith.mulf %57, %61 : vector<64x64xf32>
    %cst_26 = arith.constant dense<0.000000e+00> : vector<64x8xf32>
    %63 = tpu.matmul %62, %49, %cst_26 {dimension_numbers = #tpu.dot_dimension_numbers<[1], [0], [0], [1], [0, 0, 1, 1], [], []>} : vector<64x64xf32>, vector<64x8xf32>, vector<64x8xf32> -> vector<64x8xf32>
    %64 = arith.truncf %63 : vector<64x8xf32> to vector<64x8xbf16>
    %c16 = arith.constant 16 : index
    %c0_27 = arith.constant 0 : index
    %65 = vector.load %arg5[%c16, %c0_27] : memref<32x32xbf16, #tpu.memory_space<vmem>>, vector<8x32xbf16>
    %cst_28 = arith.constant dense<0.000000e+00> : vector<64x32xf32>
    %66 = tpu.matmul %64, %65, %cst_28 {dimension_numbers = #tpu.dot_dimension_numbers<[1], [0], [0], [1], [0, 0, 1, 1], [], []>} : vector<64x8xbf16>, vector<8x32xbf16>, vector<64x32xf32> -> vector<64x32xf32>
    %67 = arith.addf %46, %66 : vector<64x32xf32>
    %68 = vector.extract_strided_slice %1 {offsets = [0, 24], sizes = [64, 8], strides = [1, 1]} : vector<64x32xf32> to vector<64x8xf32>
    %69 = vector.extract_strided_slice %3 {offsets = [0, 24], sizes = [64, 8], strides = [1, 1]} : vector<64x32xf32> to vector<64x8xf32>
    %70 = vector.extract_strided_slice %5 {offsets = [0, 24], sizes = [64, 8], strides = [1, 1]} : vector<64x32xf32> to vector<64x8xf32>
    %cst_29 = arith.constant dense<0.000000e+00> : vector<64x64xf32>
    %71 = tpu.matmul %68, %69, %cst_29 {dimension_numbers = #tpu.dot_dimension_numbers<[1], [1], [0], [0], [0, 0, 1, 0], [], []>} : vector<64x8xf32>, vector<64x8xf32>, vector<64x64xf32> -> vector<64x64xf32>
    %cst_30 = arith.constant 0.353553385 : f32
    %72 = vector.broadcast %cst_30 : f32 to vector<64x64xf32>
    %73 = arith.mulf %71, %72 : vector<64x64xf32>
    %cst_31 = arith.constant dense<0xFF800000> : vector<64xf32>
    %74 = vector.multi_reduction <maximumf>, %73, %cst_31 [1] : vector<64x64xf32> to vector<64xf32>
    %75 = vector.shape_cast %74 : vector<64xf32> to vector<64x1xf32>
    %76 = vector.broadcast %75 : vector<64x1xf32> to vector<64x64xf32>
    %77 = arith.subf %73, %76 : vector<64x64xf32>
    %78 = math.exp %77 : vector<64x64xf32>
    %cst_32 = arith.constant dense<0.000000e+00> : vector<64xf32>
    %79 = vector.multi_reduction <add>, %78, %cst_32 [1] : vector<64x64xf32> to vector<64xf32>
    %80 = vector.shape_cast %79 : vector<64xf32> to vector<64x1xf32>
    %81 = tpu.reciprocal %80 {approx = true} : vector<64x1xf32> -> vector<64x1xf32>
    %82 = vector.broadcast %81 : vector<64x1xf32> to vector<64x64xf32>
    %83 = arith.mulf %78, %82 : vector<64x64xf32>
    %cst_33 = arith.constant dense<0.000000e+00> : vector<64x8xf32>
    %84 = tpu.matmul %83, %70, %cst_33 {dimension_numbers = #tpu.dot_dimension_numbers<[1], [0], [0], [1], [0, 0, 1, 1], [], []>} : vector<64x64xf32>, vector<64x8xf32>, vector<64x8xf32> -> vector<64x8xf32>
    %85 = arith.truncf %84 : vector<64x8xf32> to vector<64x8xbf16>
    %c24 = arith.constant 24 : index
    %c0_34 = arith.constant 0 : index
    %86 = vector.load %arg5[%c24, %c0_34] : memref<32x32xbf16, #tpu.memory_space<vmem>>, vector<8x32xbf16>
    %cst_35 = arith.constant dense<0.000000e+00> : vector<64x32xf32>
    %87 = tpu.matmul %85, %86, %cst_35 {dimension_numbers = #tpu.dot_dimension_numbers<[1], [0], [0], [1], [0, 0, 1, 1], [], []>} : vector<64x8xbf16>, vector<8x32xbf16>, vector<64x32xf32> -> vector<64x32xf32>
    %88 = arith.addf %67, %87 : vector<64x32xf32>
    %c0_36 = arith.constant 0 : index
    %c0_37 = arith.constant 0 : index
    %c0_38 = arith.constant 0 : index
    %89 = vector.load %arg4[%c0_36, %c0_37, %c0_38] : memref<1x64x32xf32, #tpu.memory_space<vmem>>, vector<1x64x32xf32>
    %90 = vector.shape_cast %89 : vector<1x64x32xf32> to vector<64x32xf32>
    %91 = arith.addf %90, %88 : vector<64x32xf32>
    %c0_39 = arith.constant 0 : index
    %c0_40 = arith.constant 0 : index
    %92 = vector.load %arg6[%c0_39, %c0_40] : memref<1x32xf32, #tpu.memory_space<vmem>>, vector<1x32xf32>
    %93 = vector.broadcast %92 : vector<1x32xf32> to vector<64x32xf32>
    %94 = arith.addf %91, %93 : vector<64x32xf32>
    %c0_41 = arith.constant 0 : index
    %c0_42 = arith.constant 0 : index
    %c0_43 = arith.constant 0 : index
    %95 = vector.load %arg7[%c0_41, %c0_42, %c0_43] : memref<1x64x32xf32, #tpu.memory_space<vmem>>, vector<1x64x32xf32>
    %96 = vector.shape_cast %95 : vector<1x64x32xf32> to vector<64x32xf32>
    %97 = vector.shape_cast %94 : vector<64x32xf32> to vector<1x64x32xf32>
    tpu.vector_store %arg7[%c0_41, %c0_42, %c0_43], %97 {strides = array<i32>} : memref<1x64x32xf32, #tpu.memory_space<vmem>>, vector<1x64x32xf32>,
    return
  }
  func.func @transform_0(%arg0: i32) -> (i32, i32, i32) {
    %c0_i32 = arith.constant 0 : i32
    %c0_i32_0 = arith.constant 0 : i32
    %c0_i32_1 = arith.constant 0 : i32
    return %arg0, %c0_i32, %c0_i32_0 : i32, i32, i32
  }
  func.func @transform_1(%arg0: i32) -> (i32, i32, i32) {
    %c0_i32 = arith.constant 0 : i32
    %c0_i32_0 = arith.constant 0 : i32
    %c0_i32_1 = arith.constant 0 : i32
    return %arg0, %c0_i32, %c0_i32_0 : i32, i32, i32
  }
  func.func @transform_2(%arg0: i32) -> (i32, i32, i32) {
    %c0_i32 = arith.constant 0 : i32
    %c0_i32_0 = arith.constant 0 : i32
    %c0_i32_1 = arith.constant 0 : i32
    return %arg0, %c0_i32, %c0_i32_0 : i32, i32, i32
  }
  func.func @transform_3(%arg0: i32) -> (i32, i32, i32) {
    %c0_i32 = arith.constant 0 : i32
    %c0_i32_0 = arith.constant 0 : i32
    %c0_i32_1 = arith.constant 0 : i32
    return %arg0, %c0_i32, %c0_i32_0 : i32, i32, i32
  }
  func.func @transform_4(%arg0: i32) -> (i32, i32) {
    %c0_i32 = arith.constant 0 : i32
    %c0_i32_0 = arith.constant 0 : i32
    %c0_i32_1 = arith.constant 0 : i32
    return %c0_i32, %c0_i32_0 : i32, i32
  }
  func.func @transform_5(%arg0: i32) -> (i32, i32) {
    %c0_i32 = arith.constant 0 : i32
    %c0_i32_0 = arith.constant 0 : i32
    %c0_i32_1 = arith.constant 0 : i32
    return %c0_i32, %c0_i32_0 : i32, i32
  }
  func.func @transform_6(%arg0: i32) -> (i32, i32, i32) {
    %c0_i32 = arith.constant 0 : i32
    %c0_i32_0 = arith.constant 0 : i32
    %c0_i32_1 = arith.constant 0 : i32
    return %arg0, %c0_i32, %c0_i32_0 : i32, i32, i32
  }
}

module attributes {stable_mosaic.version = 11 : i64} {
  func.func @_ln_mlp_kernel(%arg0: i32, %arg1: memref<128x32xf32, #tpu.memory_space<vmem>>, %arg2: memref<1x32xf32, #tpu.memory_space<vmem>>, %arg3: memref<1x32xf32, #tpu.memory_space<vmem>>, %arg4: memref<32x64xbf16, #tpu.memory_space<vmem>>, %arg5: memref<1x64xf32, #tpu.memory_space<vmem>>, %arg6: memref<64x32xbf16, #tpu.memory_space<vmem>>, %arg7: memref<1x32xf32, #tpu.memory_space<vmem>>, %arg8: memref<128x32xf32, #tpu.memory_space<vmem>>) attributes {dimension_semantics = [#tpu.dimension_semantics<parallel>], iteration_bounds = array<i64: 1>, scalar_prefetch = 0 : i64, scratch_operands = 0 : i64, tpu.core_type = #tpu.core_type<tc>, window_params = [{transform_indices = @transform_0, window_bounds = array<i64: 128, 32>}, {pipeline_mode = #tpu.pipeline_mode<synchronous>, transform_indices = @transform_1, window_bounds = array<i64: 1, 32>}, {pipeline_mode = #tpu.pipeline_mode<synchronous>, transform_indices = @transform_2, window_bounds = array<i64: 1, 32>}, {pipeline_mode = #tpu.pipeline_mode<synchronous>, transform_indices = @transform_3, window_bounds = array<i64: 32, 64>}, {pipeline_mode = #tpu.pipeline_mode<synchronous>, transform_indices = @transform_4, window_bounds = array<i64: 1, 64>}, {pipeline_mode = #tpu.pipeline_mode<synchronous>, transform_indices = @transform_5, window_bounds = array<i64: 64, 32>}, {pipeline_mode = #tpu.pipeline_mode<synchronous>, transform_indices = @transform_6, window_bounds = array<i64: 1, 32>}, {transform_indices = @transform_7, window_bounds = array<i64: 128, 32>}]} {
    %c0 = arith.constant 0 : index
    %c0_0 = arith.constant 0 : index
    %0 = vector.load %arg1[%c0, %c0_0] : memref<128x32xf32, #tpu.memory_space<vmem>>, vector<128x32xf32>
    %cst = arith.constant dense<0.000000e+00> : vector<128xf32>
    %1 = vector.multi_reduction <add>, %0, %cst [1] : vector<128x32xf32> to vector<128xf32>
    %2 = vector.shape_cast %1 : vector<128xf32> to vector<128x1xf32>
    %cst_1 = arith.constant 3.200000e+01 : f32
    %3 = vector.broadcast %cst_1 : f32 to vector<128x1xf32>
    %4 = arith.divf %2, %3 : vector<128x1xf32>
    %5 = vector.broadcast %4 : vector<128x1xf32> to vector<128x32xf32>
    %6 = arith.subf %0, %5 : vector<128x32xf32>
    %7 = arith.mulf %6, %6 : vector<128x32xf32>
    %cst_2 = arith.constant dense<0.000000e+00> : vector<128xf32>
    %8 = vector.multi_reduction <add>, %7, %cst_2 [1] : vector<128x32xf32> to vector<128xf32>
    %9 = vector.shape_cast %8 : vector<128xf32> to vector<128x1xf32>
    %cst_3 = arith.constant 3.200000e+01 : f32
    %10 = vector.broadcast %cst_3 : f32 to vector<128x1xf32>
    %11 = arith.divf %9, %10 : vector<128x1xf32>
    %cst_4 = arith.constant 9.99999997E-7 : f32
    %12 = vector.broadcast %cst_4 : f32 to vector<128x1xf32>
    %13 = arith.addf %11, %12 : vector<128x1xf32>
    %14 = math.rsqrt %13 : vector<128x1xf32>
    %15 = vector.broadcast %14 : vector<128x1xf32> to vector<128x32xf32>
    %16 = arith.mulf %6, %15 : vector<128x32xf32>
    %c0_5 = arith.constant 0 : index
    %c0_6 = arith.constant 0 : index
    %17 = vector.load %arg2[%c0_5, %c0_6] : memref<1x32xf32, #tpu.memory_space<vmem>>, vector<1x32xf32>
    %18 = vector.broadcast %17 : vector<1x32xf32> to vector<128x32xf32>
    %19 = arith.mulf %16, %18 : vector<128x32xf32>
    %c0_7 = arith.constant 0 : index
    %c0_8 = arith.constant 0 : index
    %20 = vector.load %arg3[%c0_7, %c0_8] : memref<1x32xf32, #tpu.memory_space<vmem>>, vector<1x32xf32>
    %21 = vector.broadcast %20 : vector<1x32xf32> to vector<128x32xf32>
    %22 = arith.addf %19, %21 : vector<128x32xf32>
    %23 = arith.truncf %22 : vector<128x32xf32> to vector<128x32xbf16>
    %c0_9 = arith.constant 0 : index
    %c0_10 = arith.constant 0 : index
    %24 = vector.load %arg4[%c0_9, %c0_10] : memref<32x64xbf16, #tpu.memory_space<vmem>>, vector<32x64xbf16>
    %cst_11 = arith.constant dense<0.000000e+00> : vector<128x64xf32>
    %25 = tpu.matmul %23, %24, %cst_11 {dimension_numbers = #tpu.dot_dimension_numbers<[1], [0], [0], [1], [0, 0, 1, 1], [], []>} : vector<128x32xbf16>, vector<32x64xbf16>, vector<128x64xf32> -> vector<128x64xf32>
    %c0_12 = arith.constant 0 : index
    %c0_13 = arith.constant 0 : index
    %26 = vector.load %arg5[%c0_12, %c0_13] : memref<1x64xf32, #tpu.memory_space<vmem>>, vector<1x64xf32>
    %27 = vector.broadcast %26 : vector<1x64xf32> to vector<128x64xf32>
    %28 = arith.addf %25, %27 : vector<128x64xf32>
    %cst_14 = arith.constant 5.000000e-01 : f32
    %29 = vector.broadcast %cst_14 : f32 to vector<128x64xf32>
    %30 = arith.mulf %29, %28 : vector<128x64xf32>
    %cst_15 = arith.constant 4.471500e-02 : f32
    %31 = vector.broadcast %cst_15 : f32 to vector<128x64xf32>
    %32 = arith.mulf %31, %28 : vector<128x64xf32>
    %33 = arith.mulf %32, %28 : vector<128x64xf32>
    %34 = arith.mulf %33, %28 : vector<128x64xf32>
    %35 = arith.addf %28, %34 : vector<128x64xf32>
    %cst_16 = arith.constant 0.797884583 : f32
    %36 = vector.broadcast %cst_16 : f32 to vector<128x64xf32>
    %37 = arith.mulf %36, %35 : vector<128x64xf32>
    %38 = math.tanh %37 : vector<128x64xf32>
    %cst_17 = arith.constant 1.000000e+00 : f32
    %39 = vector.broadcast %cst_17 : f32 to vector<128x64xf32>
    %40 = arith.addf %39, %38 : vector<128x64xf32>
    %41 = arith.mulf %30, %40 : vector<128x64xf32>
    %42 = arith.truncf %41 : vector<128x64xf32> to vector<128x64xbf16>
    %c0_18 = arith.constant 0 : index
    %c0_19 = arith.constant 0 : index
    %43 = vector.load %arg6[%c0_18, %c0_19] : memref<64x32xbf16, #tpu.memory_space<vmem>>, vector<64x32xbf16>
    %cst_20 = arith.constant dense<0.000000e+00> : vector<128x32xf32>
    %44 = tpu.matmul %42, %43, %cst_20 {dimension_numbers = #tpu.dot_dimension_numbers<[1], [0], [0], [1], [0, 0, 1, 1], [], []>} : vector<128x64xbf16>, vector<64x32xbf16>, vector<128x32xf32> -> vector<128x32xf32>
    %c0_21 = arith.constant 0 : index
    %c0_22 = arith.constant 0 : index
    %45 = vector.load %arg7[%c0_21, %c0_22] : memref<1x32xf32, #tpu.memory_space<vmem>>, vector<1x32xf32>
    %46 = vector.broadcast %45 : vector<1x32xf32> to vector<128x32xf32>
    %47 = arith.addf %44, %46 : vector<128x32xf32>
    %48 = arith.addf %0, %47 : vector<128x32xf32>
    %c0_23 = arith.constant 0 : index
    %c0_24 = arith.constant 0 : index
    %49 = vector.load %arg8[%c0_23, %c0_24] : memref<128x32xf32, #tpu.memory_space<vmem>>, vector<128x32xf32>
    tpu.vector_store %arg8[%c0_23, %c0_24], %48 {strides = array<i32>} : memref<128x32xf32, #tpu.memory_space<vmem>>, vector<128x32xf32>,
    return
  }
  func.func @transform_0(%arg0: i32) -> (i32, i32) {
    %c0_i32 = arith.constant 0 : i32
    %c0_i32_0 = arith.constant 0 : i32
    return %arg0, %c0_i32 : i32, i32
  }
  func.func @transform_1(%arg0: i32) -> (i32, i32) {
    %c0_i32 = arith.constant 0 : i32
    %c0_i32_0 = arith.constant 0 : i32
    %c0_i32_1 = arith.constant 0 : i32
    return %c0_i32, %c0_i32_0 : i32, i32
  }
  func.func @transform_2(%arg0: i32) -> (i32, i32) {
    %c0_i32 = arith.constant 0 : i32
    %c0_i32_0 = arith.constant 0 : i32
    %c0_i32_1 = arith.constant 0 : i32
    return %c0_i32, %c0_i32_0 : i32, i32
  }
  func.func @transform_3(%arg0: i32) -> (i32, i32) {
    %c0_i32 = arith.constant 0 : i32
    %c0_i32_0 = arith.constant 0 : i32
    %c0_i32_1 = arith.constant 0 : i32
    return %c0_i32, %c0_i32_0 : i32, i32
  }
  func.func @transform_4(%arg0: i32) -> (i32, i32) {
    %c0_i32 = arith.constant 0 : i32
    %c0_i32_0 = arith.constant 0 : i32
    %c0_i32_1 = arith.constant 0 : i32
    return %c0_i32, %c0_i32_0 : i32, i32
  }
  func.func @transform_5(%arg0: i32) -> (i32, i32) {
    %c0_i32 = arith.constant 0 : i32
    %c0_i32_0 = arith.constant 0 : i32
    %c0_i32_1 = arith.constant 0 : i32
    return %c0_i32, %c0_i32_0 : i32, i32
  }
  func.func @transform_6(%arg0: i32) -> (i32, i32) {
    %c0_i32 = arith.constant 0 : i32
    %c0_i32_0 = arith.constant 0 : i32
    %c0_i32_1 = arith.constant 0 : i32
    return %c0_i32, %c0_i32_0 : i32, i32
  }
  func.func @transform_7(%arg0: i32) -> (i32, i32) {
    %c0_i32 = arith.constant 0 : i32
    %c0_i32_0 = arith.constant 0 : i32
    return %arg0, %c0_i32 : i32, i32
  }
}

module attributes {stable_mosaic.version = 11 : i64} {
  func.func @_ln_kernel(%arg0: i32, %arg1: memref<128x32xf32, #tpu.memory_space<vmem>>, %arg2: memref<1x32xf32, #tpu.memory_space<vmem>>, %arg3: memref<1x32xf32, #tpu.memory_space<vmem>>, %arg4: memref<128x32xf32, #tpu.memory_space<vmem>>) attributes {dimension_semantics = [#tpu.dimension_semantics<parallel>], iteration_bounds = array<i64: 1>, scalar_prefetch = 0 : i64, scratch_operands = 0 : i64, tpu.core_type = #tpu.core_type<tc>, window_params = [{transform_indices = @transform_0, window_bounds = array<i64: 128, 32>}, {pipeline_mode = #tpu.pipeline_mode<synchronous>, transform_indices = @transform_1, window_bounds = array<i64: 1, 32>}, {pipeline_mode = #tpu.pipeline_mode<synchronous>, transform_indices = @transform_2, window_bounds = array<i64: 1, 32>}, {transform_indices = @transform_3, window_bounds = array<i64: 128, 32>}]} {
    %c0 = arith.constant 0 : index
    %c0_0 = arith.constant 0 : index
    %0 = vector.load %arg1[%c0, %c0_0] : memref<128x32xf32, #tpu.memory_space<vmem>>, vector<128x32xf32>
    %cst = arith.constant dense<0.000000e+00> : vector<128xf32>
    %1 = vector.multi_reduction <add>, %0, %cst [1] : vector<128x32xf32> to vector<128xf32>
    %2 = vector.shape_cast %1 : vector<128xf32> to vector<128x1xf32>
    %cst_1 = arith.constant 3.200000e+01 : f32
    %3 = vector.broadcast %cst_1 : f32 to vector<128x1xf32>
    %4 = arith.divf %2, %3 : vector<128x1xf32>
    %5 = vector.broadcast %4 : vector<128x1xf32> to vector<128x32xf32>
    %6 = arith.subf %0, %5 : vector<128x32xf32>
    %7 = arith.mulf %6, %6 : vector<128x32xf32>
    %cst_2 = arith.constant dense<0.000000e+00> : vector<128xf32>
    %8 = vector.multi_reduction <add>, %7, %cst_2 [1] : vector<128x32xf32> to vector<128xf32>
    %9 = vector.shape_cast %8 : vector<128xf32> to vector<128x1xf32>
    %cst_3 = arith.constant 3.200000e+01 : f32
    %10 = vector.broadcast %cst_3 : f32 to vector<128x1xf32>
    %11 = arith.divf %9, %10 : vector<128x1xf32>
    %cst_4 = arith.constant 9.99999997E-7 : f32
    %12 = vector.broadcast %cst_4 : f32 to vector<128x1xf32>
    %13 = arith.addf %11, %12 : vector<128x1xf32>
    %14 = math.rsqrt %13 : vector<128x1xf32>
    %15 = vector.broadcast %14 : vector<128x1xf32> to vector<128x32xf32>
    %16 = arith.mulf %6, %15 : vector<128x32xf32>
    %c0_5 = arith.constant 0 : index
    %c0_6 = arith.constant 0 : index
    %17 = vector.load %arg2[%c0_5, %c0_6] : memref<1x32xf32, #tpu.memory_space<vmem>>, vector<1x32xf32>
    %18 = vector.broadcast %17 : vector<1x32xf32> to vector<128x32xf32>
    %19 = arith.mulf %16, %18 : vector<128x32xf32>
    %c0_7 = arith.constant 0 : index
    %c0_8 = arith.constant 0 : index
    %20 = vector.load %arg3[%c0_7, %c0_8] : memref<1x32xf32, #tpu.memory_space<vmem>>, vector<1x32xf32>
    %21 = vector.broadcast %20 : vector<1x32xf32> to vector<128x32xf32>
    %22 = arith.addf %19, %21 : vector<128x32xf32>
    %c0_9 = arith.constant 0 : index
    %c0_10 = arith.constant 0 : index
    %23 = vector.load %arg4[%c0_9, %c0_10] : memref<128x32xf32, #tpu.memory_space<vmem>>, vector<128x32xf32>
    tpu.vector_store %arg4[%c0_9, %c0_10], %22 {strides = array<i32>} : memref<128x32xf32, #tpu.memory_space<vmem>>, vector<128x32xf32>,
    return
  }
  func.func @transform_0(%arg0: i32) -> (i32, i32) {
    %c0_i32 = arith.constant 0 : i32
    %c0_i32_0 = arith.constant 0 : i32
    return %arg0, %c0_i32 : i32, i32
  }
  func.func @transform_1(%arg0: i32) -> (i32, i32) {
    %c0_i32 = arith.constant 0 : i32
    %c0_i32_0 = arith.constant 0 : i32
    %c0_i32_1 = arith.constant 0 : i32
    return %c0_i32, %c0_i32_0 : i32, i32
  }
  func.func @transform_2(%arg0: i32) -> (i32, i32) {
    %c0_i32 = arith.constant 0 : i32
    %c0_i32_0 = arith.constant 0 : i32
    %c0_i32_1 = arith.constant 0 : i32
    return %c0_i32, %c0_i32_0 : i32, i32
  }
  func.func @transform_3(%arg0: i32) -> (i32, i32) {
    %c0_i32 = arith.constant 0 : i32
    %c0_i32_0 = arith.constant 0 : i32
    return %arg0, %c0_i32 : i32, i32
  }
}

module attributes {stable_mosaic.version = 11 : i64} {
  func.func @_mm_cm_kernel(%arg0: i32, %arg1: memref<16x288xbf16, #tpu.memory_space<vmem>>, %arg2: memref<288x128xbf16, #tpu.memory_space<vmem>>, %arg3: memref<16x128xf32, #tpu.memory_space<vmem>>) attributes {dimension_semantics = [#tpu.dimension_semantics<parallel>], iteration_bounds = array<i64: 1>, scalar_prefetch = 0 : i64, scratch_operands = 0 : i64, tpu.core_type = #tpu.core_type<tc>, window_params = [{pipeline_mode = #tpu.pipeline_mode<synchronous>, transform_indices = @transform_0, window_bounds = array<i64: 16, 288>}, {transform_indices = @transform_1, window_bounds = array<i64: 288, 128>}, {transform_indices = @transform_2, window_bounds = array<i64: 16, 128>}]} {
    %c0 = arith.constant 0 : index
    %c0_0 = arith.constant 0 : index
    %0 = vector.load %arg1[%c0, %c0_0] : memref<16x288xbf16, #tpu.memory_space<vmem>>, vector<16x288xbf16>
    %c0_1 = arith.constant 0 : index
    %c0_2 = arith.constant 0 : index
    %1 = vector.load %arg2[%c0_1, %c0_2] : memref<288x128xbf16, #tpu.memory_space<vmem>>, vector<288x128xbf16>
    %cst = arith.constant dense<0.000000e+00> : vector<16x128xf32>
    %2 = tpu.matmul %0, %1, %cst {dimension_numbers = #tpu.dot_dimension_numbers<[1], [0], [0], [1], [0, 0, 1, 1], [], []>} : vector<16x288xbf16>, vector<288x128xbf16>, vector<16x128xf32> -> vector<16x128xf32>
    %c0_3 = arith.constant 0 : index
    %c0_4 = arith.constant 0 : index
    %3 = vector.load %arg3[%c0_3, %c0_4] : memref<16x128xf32, #tpu.memory_space<vmem>>, vector<16x128xf32>
    tpu.vector_store %arg3[%c0_3, %c0_4], %2 {strides = array<i32>} : memref<16x128xf32, #tpu.memory_space<vmem>>, vector<16x128xf32>,
    return
  }
  func.func @transform_0(%arg0: i32) -> (i32, i32) {
    %c0_i32 = arith.constant 0 : i32
    %c0_i32_0 = arith.constant 0 : i32
    %c0_i32_1 = arith.constant 0 : i32
    return %c0_i32, %c0_i32_0 : i32, i32
  }
  func.func @transform_1(%arg0: i32) -> (i32, i32) {
    %c0_i32 = arith.constant 0 : i32
    %c0_i32_0 = arith.constant 0 : i32
    return %c0_i32, %arg0 : i32, i32
  }
  func.func @transform_2(%arg0: i32) -> (i32, i32) {
    %c0_i32 = arith.constant 0 : i32
    %c0_i32_0 = arith.constant 0 : i32
    return %c0_i32, %arg0 : i32, i32
  }
}

module attributes {stable_mosaic.version = 11 : i64} {
  func.func @_mm_cm_kernel(%arg0: i32, %arg1: memref<16x32xbf16, #tpu.memory_space<vmem>>, %arg2: memref<32x128xbf16, #tpu.memory_space<vmem>>, %arg3: memref<16x1xf32, #tpu.memory_space<vmem>>, %arg4: memref<16x128xf32, #tpu.memory_space<vmem>>) attributes {dimension_semantics = [#tpu.dimension_semantics<parallel>], iteration_bounds = array<i64: 1>, scalar_prefetch = 0 : i64, scratch_operands = 0 : i64, tpu.core_type = #tpu.core_type<tc>, window_params = [{pipeline_mode = #tpu.pipeline_mode<synchronous>, transform_indices = @transform_0, window_bounds = array<i64: 16, 32>}, {transform_indices = @transform_1, window_bounds = array<i64: 32, 128>}, {pipeline_mode = #tpu.pipeline_mode<synchronous>, transform_indices = @transform_2, window_bounds = array<i64: 16, 1>}, {transform_indices = @transform_3, window_bounds = array<i64: 16, 128>}]} {
    %c0 = arith.constant 0 : index
    %c0_0 = arith.constant 0 : index
    %0 = vector.load %arg1[%c0, %c0_0] : memref<16x32xbf16, #tpu.memory_space<vmem>>, vector<16x32xbf16>
    %c0_1 = arith.constant 0 : index
    %c0_2 = arith.constant 0 : index
    %1 = vector.load %arg2[%c0_1, %c0_2] : memref<32x128xbf16, #tpu.memory_space<vmem>>, vector<32x128xbf16>
    %cst = arith.constant dense<0.000000e+00> : vector<16x128xf32>
    %2 = tpu.matmul %0, %1, %cst {dimension_numbers = #tpu.dot_dimension_numbers<[1], [0], [0], [1], [0, 0, 1, 1], [], []>} : vector<16x32xbf16>, vector<32x128xbf16>, vector<16x128xf32> -> vector<16x128xf32>
    %c0_3 = arith.constant 0 : index
    %c0_4 = arith.constant 0 : index
    %3 = vector.load %arg3[%c0_3, %c0_4] : memref<16x1xf32, #tpu.memory_space<vmem>>, vector<16x1xf32>
    %4 = vector.broadcast %3 : vector<16x1xf32> to vector<16x128xf32>
    %5 = arith.addf %2, %4 : vector<16x128xf32>
    %c0_5 = arith.constant 0 : index
    %c0_6 = arith.constant 0 : index
    %6 = vector.load %arg4[%c0_5, %c0_6] : memref<16x128xf32, #tpu.memory_space<vmem>>, vector<16x128xf32>
    tpu.vector_store %arg4[%c0_5, %c0_6], %5 {strides = array<i32>} : memref<16x128xf32, #tpu.memory_space<vmem>>, vector<16x128xf32>,
    return
  }
  func.func @transform_0(%arg0: i32) -> (i32, i32) {
    %c0_i32 = arith.constant 0 : i32
    %c0_i32_0 = arith.constant 0 : i32
    %c0_i32_1 = arith.constant 0 : i32
    return %c0_i32, %c0_i32_0 : i32, i32
  }
  func.func @transform_1(%arg0: i32) -> (i32, i32) {
    %c0_i32 = arith.constant 0 : i32
    %c0_i32_0 = arith.constant 0 : i32
    return %c0_i32, %arg0 : i32, i32
  }
  func.func @transform_2(%arg0: i32) -> (i32, i32) {
    %c0_i32 = arith.constant 0 : i32
    %c0_i32_0 = arith.constant 0 : i32
    %c0_i32_1 = arith.constant 0 : i32
    return %c0_i32, %c0_i32_0 : i32, i32
  }
  func.func @transform_3(%arg0: i32) -> (i32, i32) {
    %c0_i32 = arith.constant 0 : i32
    %c0_i32_0 = arith.constant 0 : i32
    return %c0_i32, %arg0 : i32, i32
  }
}

module attributes {stable_mosaic.version = 11 : i64} {
  func.func @_mm_cm_kernel(%arg0: i32, %arg1: memref<16x144xbf16, #tpu.memory_space<vmem>>, %arg2: memref<144x128xbf16, #tpu.memory_space<vmem>>, %arg3: memref<16x128xf32, #tpu.memory_space<vmem>>) attributes {dimension_semantics = [#tpu.dimension_semantics<parallel>], iteration_bounds = array<i64: 1>, scalar_prefetch = 0 : i64, scratch_operands = 0 : i64, tpu.core_type = #tpu.core_type<tc>, window_params = [{pipeline_mode = #tpu.pipeline_mode<synchronous>, transform_indices = @transform_0, window_bounds = array<i64: 16, 144>}, {transform_indices = @transform_1, window_bounds = array<i64: 144, 128>}, {transform_indices = @transform_2, window_bounds = array<i64: 16, 128>}]} {
    %c0 = arith.constant 0 : index
    %c0_0 = arith.constant 0 : index
    %0 = vector.load %arg1[%c0, %c0_0] : memref<16x144xbf16, #tpu.memory_space<vmem>>, vector<16x144xbf16>
    %c0_1 = arith.constant 0 : index
    %c0_2 = arith.constant 0 : index
    %1 = vector.load %arg2[%c0_1, %c0_2] : memref<144x128xbf16, #tpu.memory_space<vmem>>, vector<144x128xbf16>
    %cst = arith.constant dense<0.000000e+00> : vector<16x128xf32>
    %2 = tpu.matmul %0, %1, %cst {dimension_numbers = #tpu.dot_dimension_numbers<[1], [0], [0], [1], [0, 0, 1, 1], [], []>} : vector<16x144xbf16>, vector<144x128xbf16>, vector<16x128xf32> -> vector<16x128xf32>
    %c0_3 = arith.constant 0 : index
    %c0_4 = arith.constant 0 : index
    %3 = vector.load %arg3[%c0_3, %c0_4] : memref<16x128xf32, #tpu.memory_space<vmem>>, vector<16x128xf32>
    tpu.vector_store %arg3[%c0_3, %c0_4], %2 {strides = array<i32>} : memref<16x128xf32, #tpu.memory_space<vmem>>, vector<16x128xf32>,
    return
  }
  func.func @transform_0(%arg0: i32) -> (i32, i32) {
    %c0_i32 = arith.constant 0 : i32
    %c0_i32_0 = arith.constant 0 : i32
    %c0_i32_1 = arith.constant 0 : i32
    return %c0_i32, %c0_i32_0 : i32, i32
  }
  func.func @transform_1(%arg0: i32) -> (i32, i32) {
    %c0_i32 = arith.constant 0 : i32
    %c0_i32_0 = arith.constant 0 : i32
    return %c0_i32, %arg0 : i32, i32
  }
  func.func @transform_2(%arg0: i32) -> (i32, i32) {
    %c0_i32 = arith.constant 0 : i32
    %c0_i32_0 = arith.constant 0 : i32
    return %c0_i32, %arg0 : i32, i32
  }
}

module attributes {stable_mosaic.version = 11 : i64} {
  func.func @_bn_apply_kernel(%arg0: i32, %arg1: memref<16x128xf32, #tpu.memory_space<vmem>>, %arg2: memref<16x1xf32, #tpu.memory_space<vmem>>, %arg3: memref<16x1xf32, #tpu.memory_space<vmem>>, %arg4: memref<16x1xf32, #tpu.memory_space<vmem>>, %arg5: memref<16x1xf32, #tpu.memory_space<vmem>>, %arg6: memref<16x128xf32, #tpu.memory_space<vmem>>) attributes {dimension_semantics = [#tpu.dimension_semantics<parallel>], iteration_bounds = array<i64: 1>, scalar_prefetch = 0 : i64, scratch_operands = 0 : i64, tpu.core_type = #tpu.core_type<tc>, window_params = [{transform_indices = @transform_0, window_bounds = array<i64: 16, 128>}, {pipeline_mode = #tpu.pipeline_mode<synchronous>, transform_indices = @transform_1, window_bounds = array<i64: 16, 1>}, {pipeline_mode = #tpu.pipeline_mode<synchronous>, transform_indices = @transform_2, window_bounds = array<i64: 16, 1>}, {pipeline_mode = #tpu.pipeline_mode<synchronous>, transform_indices = @transform_3, window_bounds = array<i64: 16, 1>}, {pipeline_mode = #tpu.pipeline_mode<synchronous>, transform_indices = @transform_4, window_bounds = array<i64: 16, 1>}, {transform_indices = @transform_5, window_bounds = array<i64: 16, 128>}]} {
    %c0 = arith.constant 0 : index
    %c0_0 = arith.constant 0 : index
    %0 = vector.load %arg2[%c0, %c0_0] : memref<16x1xf32, #tpu.memory_space<vmem>>, vector<16x1xf32>
    %cst = arith.constant 7.812500e-03 : f32
    %1 = vector.broadcast %cst : f32 to vector<16x1xf32>
    %2 = arith.mulf %0, %1 : vector<16x1xf32>
    %c0_1 = arith.constant 0 : index
    %c0_2 = arith.constant 0 : index
    %3 = vector.load %arg3[%c0_1, %c0_2] : memref<16x1xf32, #tpu.memory_space<vmem>>, vector<16x1xf32>
    %cst_3 = arith.constant 7.812500e-03 : f32
    %4 = vector.broadcast %cst_3 : f32 to vector<16x1xf32>
    %5 = arith.mulf %3, %4 : vector<16x1xf32>
    %6 = arith.mulf %2, %2 : vector<16x1xf32>
    %7 = arith.subf %5, %6 : vector<16x1xf32>
    %cst_4 = arith.constant 0.000000e+00 : f32
    %8 = vector.broadcast %cst_4 : f32 to vector<16x1xf32>
    %9 = arith.maximumf %7, %8 : vector<16x1xf32>
    %cst_5 = arith.constant 9.99999974E-6 : f32
    %10 = vector.broadcast %cst_5 : f32 to vector<16x1xf32>
    %11 = arith.addf %9, %10 : vector<16x1xf32>
    %12 = math.rsqrt %11 : vector<16x1xf32>
    %c0_6 = arith.constant 0 : index
    %c0_7 = arith.constant 0 : index
    %13 = vector.load %arg4[%c0_6, %c0_7] : memref<16x1xf32, #tpu.memory_space<vmem>>, vector<16x1xf32>
    %14 = arith.mulf %12, %13 : vector<16x1xf32>
    %c0_8 = arith.constant 0 : index
    %c0_9 = arith.constant 0 : index
    %15 = vector.load %arg1[%c0_8, %c0_9] : memref<16x128xf32, #tpu.memory_space<vmem>>, vector<16x128xf32>
    %16 = vector.broadcast %2 : vector<16x1xf32> to vector<16x128xf32>
    %17 = arith.subf %15, %16 : vector<16x128xf32>
    %18 = vector.broadcast %14 : vector<16x1xf32> to vector<16x128xf32>
    %19 = arith.mulf %17, %18 : vector<16x128xf32>
    %c0_10 = arith.constant 0 : index
    %c0_11 = arith.constant 0 : index
    %20 = vector.load %arg5[%c0_10, %c0_11] : memref<16x1xf32, #tpu.memory_space<vmem>>, vector<16x1xf32>
    %21 = vector.broadcast %20 : vector<16x1xf32> to vector<16x128xf32>
    %22 = arith.addf %19, %21 : vector<16x128xf32>
    %c0_12 = arith.constant 0 : index
    %c0_13 = arith.constant 0 : index
    %23 = vector.load %arg6[%c0_12, %c0_13] : memref<16x128xf32, #tpu.memory_space<vmem>>, vector<16x128xf32>
    tpu.vector_store %arg6[%c0_12, %c0_13], %22 {strides = array<i32>} : memref<16x128xf32, #tpu.memory_space<vmem>>, vector<16x128xf32>,
    return
  }
  func.func @transform_0(%arg0: i32) -> (i32, i32) {
    %c0_i32 = arith.constant 0 : i32
    %c0_i32_0 = arith.constant 0 : i32
    return %c0_i32, %arg0 : i32, i32
  }
  func.func @transform_1(%arg0: i32) -> (i32, i32) {
    %c0_i32 = arith.constant 0 : i32
    %c0_i32_0 = arith.constant 0 : i32
    %c0_i32_1 = arith.constant 0 : i32
    return %c0_i32, %c0_i32_0 : i32, i32
  }
  func.func @transform_2(%arg0: i32) -> (i32, i32) {
    %c0_i32 = arith.constant 0 : i32
    %c0_i32_0 = arith.constant 0 : i32
    %c0_i32_1 = arith.constant 0 : i32
    return %c0_i32, %c0_i32_0 : i32, i32
  }
  func.func @transform_3(%arg0: i32) -> (i32, i32) {
    %c0_i32 = arith.constant 0 : i32
    %c0_i32_0 = arith.constant 0 : i32
    %c0_i32_1 = arith.constant 0 : i32
    return %c0_i32, %c0_i32_0 : i32, i32
  }
  func.func @transform_4(%arg0: i32) -> (i32, i32) {
    %c0_i32 = arith.constant 0 : i32
    %c0_i32_0 = arith.constant 0 : i32
    %c0_i32_1 = arith.constant 0 : i32
    return %c0_i32, %c0_i32_0 : i32, i32
  }
  func.func @transform_5(%arg0: i32) -> (i32, i32) {
    %c0_i32 = arith.constant 0 : i32
    %c0_i32_0 = arith.constant 0 : i32
    return %c0_i32, %arg0 : i32, i32
  }
}

module attributes {stable_mosaic.version = 11 : i64} {
  func.func @_mm_cm_kernel(%arg0: i32, %arg1: memref<32x64xbf16, #tpu.memory_space<vmem>>, %arg2: memref<64x128xbf16, #tpu.memory_space<vmem>>, %arg3: memref<32x128xf32, #tpu.memory_space<vmem>>) attributes {dimension_semantics = [#tpu.dimension_semantics<parallel>], iteration_bounds = array<i64: 1>, scalar_prefetch = 0 : i64, scratch_operands = 0 : i64, tpu.core_type = #tpu.core_type<tc>, window_params = [{pipeline_mode = #tpu.pipeline_mode<synchronous>, transform_indices = @transform_0, window_bounds = array<i64: 32, 64>}, {transform_indices = @transform_1, window_bounds = array<i64: 64, 128>}, {transform_indices = @transform_2, window_bounds = array<i64: 32, 128>}]} {
    %c0 = arith.constant 0 : index
    %c0_0 = arith.constant 0 : index
    %0 = vector.load %arg1[%c0, %c0_0] : memref<32x64xbf16, #tpu.memory_space<vmem>>, vector<32x64xbf16>
    %c0_1 = arith.constant 0 : index
    %c0_2 = arith.constant 0 : index
    %1 = vector.load %arg2[%c0_1, %c0_2] : memref<64x128xbf16, #tpu.memory_space<vmem>>, vector<64x128xbf16>
    %cst = arith.constant dense<0.000000e+00> : vector<32x128xf32>
    %2 = tpu.matmul %0, %1, %cst {dimension_numbers = #tpu.dot_dimension_numbers<[1], [0], [0], [1], [0, 0, 1, 1], [], []>} : vector<32x64xbf16>, vector<64x128xbf16>, vector<32x128xf32> -> vector<32x128xf32>
    %c0_3 = arith.constant 0 : index
    %c0_4 = arith.constant 0 : index
    %3 = vector.load %arg3[%c0_3, %c0_4] : memref<32x128xf32, #tpu.memory_space<vmem>>, vector<32x128xf32>
    tpu.vector_store %arg3[%c0_3, %c0_4], %2 {strides = array<i32>} : memref<32x128xf32, #tpu.memory_space<vmem>>, vector<32x128xf32>,
    return
  }
  func.func @transform_0(%arg0: i32) -> (i32, i32) {
    %c0_i32 = arith.constant 0 : i32
    %c0_i32_0 = arith.constant 0 : i32
    %c0_i32_1 = arith.constant 0 : i32
    return %c0_i32, %c0_i32_0 : i32, i32
  }
  func.func @transform_1(%arg0: i32) -> (i32, i32) {
    %c0_i32 = arith.constant 0 : i32
    %c0_i32_0 = arith.constant 0 : i32
    return %c0_i32, %arg0 : i32, i32
  }
  func.func @transform_2(%arg0: i32) -> (i32, i32) {
    %c0_i32 = arith.constant 0 : i32
    %c0_i32_0 = arith.constant 0 : i32
    return %c0_i32, %arg0 : i32, i32
  }
}

module attributes {stable_mosaic.version = 11 : i64} {
  func.func @_mm_cm_kernel(%arg0: i32, %arg1: memref<16x32xbf16, #tpu.memory_space<vmem>>, %arg2: memref<32x512xbf16, #tpu.memory_space<vmem>>, %arg3: memref<16x512xf32, #tpu.memory_space<vmem>>) attributes {dimension_semantics = [#tpu.dimension_semantics<parallel>], iteration_bounds = array<i64: 1>, scalar_prefetch = 0 : i64, scratch_operands = 0 : i64, tpu.core_type = #tpu.core_type<tc>, window_params = [{pipeline_mode = #tpu.pipeline_mode<synchronous>, transform_indices = @transform_0, window_bounds = array<i64: 16, 32>}, {transform_indices = @transform_1, window_bounds = array<i64: 32, 512>}, {transform_indices = @transform_2, window_bounds = array<i64: 16, 512>}]} {
    %c0 = arith.constant 0 : index
    %c0_0 = arith.constant 0 : index
    %0 = vector.load %arg1[%c0, %c0_0] : memref<16x32xbf16, #tpu.memory_space<vmem>>, vector<16x32xbf16>
    %c0_1 = arith.constant 0 : index
    %c0_2 = arith.constant 0 : index
    %1 = vector.load %arg2[%c0_1, %c0_2] : memref<32x512xbf16, #tpu.memory_space<vmem>>, vector<32x512xbf16>
    %cst = arith.constant dense<0.000000e+00> : vector<16x512xf32>
    %2 = tpu.matmul %0, %1, %cst {dimension_numbers = #tpu.dot_dimension_numbers<[1], [0], [0], [1], [0, 0, 1, 1], [], []>} : vector<16x32xbf16>, vector<32x512xbf16>, vector<16x512xf32> -> vector<16x512xf32>
    %c0_3 = arith.constant 0 : index
    %c0_4 = arith.constant 0 : index
    %3 = vector.load %arg3[%c0_3, %c0_4] : memref<16x512xf32, #tpu.memory_space<vmem>>, vector<16x512xf32>
    tpu.vector_store %arg3[%c0_3, %c0_4], %2 {strides = array<i32>} : memref<16x512xf32, #tpu.memory_space<vmem>>, vector<16x512xf32>,
    return
  }
  func.func @transform_0(%arg0: i32) -> (i32, i32) {
    %c0_i32 = arith.constant 0 : i32
    %c0_i32_0 = arith.constant 0 : i32
    %c0_i32_1 = arith.constant 0 : i32
    return %c0_i32, %c0_i32_0 : i32, i32
  }
  func.func @transform_1(%arg0: i32) -> (i32, i32) {
    %c0_i32 = arith.constant 0 : i32
    %c0_i32_0 = arith.constant 0 : i32
    return %c0_i32, %arg0 : i32, i32
  }
  func.func @transform_2(%arg0: i32) -> (i32, i32) {
    %c0_i32 = arith.constant 0 : i32
    %c0_i32_0 = arith.constant 0 : i32
    return %c0_i32, %arg0 : i32, i32
  }
}

module attributes {stable_mosaic.version = 11 : i64} {
  func.func @_mm_cm_kernel(%arg0: i32, %arg1: memref<1x196xbf16, #tpu.memory_space<vmem>>, %arg2: memref<196x512xbf16, #tpu.memory_space<vmem>>, %arg3: memref<1x1xf32, #tpu.memory_space<vmem>>, %arg4: memref<1x512xf32, #tpu.memory_space<vmem>>) attributes {dimension_semantics = [#tpu.dimension_semantics<parallel>], iteration_bounds = array<i64: 4>, scalar_prefetch = 0 : i64, scratch_operands = 0 : i64, tpu.core_type = #tpu.core_type<tc>, window_params = [{pipeline_mode = #tpu.pipeline_mode<synchronous>, transform_indices = @transform_0, window_bounds = array<i64: 1, 196>}, {transform_indices = @transform_1, window_bounds = array<i64: 196, 512>}, {pipeline_mode = #tpu.pipeline_mode<synchronous>, transform_indices = @transform_2, window_bounds = array<i64: 1, 1>}, {transform_indices = @transform_3, window_bounds = array<i64: 1, 512>}]} {
    %c0 = arith.constant 0 : index
    %c0_0 = arith.constant 0 : index
    %0 = vector.load %arg1[%c0, %c0_0] : memref<1x196xbf16, #tpu.memory_space<vmem>>, vector<1x196xbf16>
    %c0_1 = arith.constant 0 : index
    %c0_2 = arith.constant 0 : index
    %1 = vector.load %arg2[%c0_1, %c0_2] : memref<196x512xbf16, #tpu.memory_space<vmem>>, vector<196x512xbf16>
    %cst = arith.constant dense<0.000000e+00> : vector<1x512xf32>
    %2 = tpu.matmul %0, %1, %cst {dimension_numbers = #tpu.dot_dimension_numbers<[1], [0], [0], [1], [0, 0, 1, 1], [], []>} : vector<1x196xbf16>, vector<196x512xbf16>, vector<1x512xf32> -> vector<1x512xf32>
    %c0_3 = arith.constant 0 : index
    %c0_4 = arith.constant 0 : index
    %3 = vector.load %arg3[%c0_3, %c0_4] : memref<1x1xf32, #tpu.memory_space<vmem>>, vector<1x1xf32>
    %4 = vector.broadcast %3 : vector<1x1xf32> to vector<1x512xf32>
    %5 = arith.addf %2, %4 : vector<1x512xf32>
    %6 = math.tanh %5 : vector<1x512xf32>
    %c0_5 = arith.constant 0 : index
    %c0_6 = arith.constant 0 : index
    %7 = vector.load %arg4[%c0_5, %c0_6] : memref<1x512xf32, #tpu.memory_space<vmem>>, vector<1x512xf32>
    tpu.vector_store %arg4[%c0_5, %c0_6], %6 {strides = array<i32>} : memref<1x512xf32, #tpu.memory_space<vmem>>, vector<1x512xf32>,
    return
  }
  func.func @transform_0(%arg0: i32) -> (i32, i32) {
    %c0_i32 = arith.constant 0 : i32
    %c0_i32_0 = arith.constant 0 : i32
    %c0_i32_1 = arith.constant 0 : i32
    return %c0_i32, %c0_i32_0 : i32, i32
  }
  func.func @transform_1(%arg0: i32) -> (i32, i32) {
    %c0_i32 = arith.constant 0 : i32
    %c0_i32_0 = arith.constant 0 : i32
    return %c0_i32, %arg0 : i32, i32
  }
  func.func @transform_2(%arg0: i32) -> (i32, i32) {
    %c0_i32 = arith.constant 0 : i32
    %c0_i32_0 = arith.constant 0 : i32
    %c0_i32_1 = arith.constant 0 : i32
    return %c0_i32, %c0_i32_0 : i32, i32
  }
  func.func @transform_3(%arg0: i32) -> (i32, i32) {
    %c0_i32 = arith.constant 0 : i32
    %c0_i32_0 = arith.constant 0 : i32
    return %c0_i32, %arg0 : i32, i32
  }
}

</mosaic_0001>

<llo_original>
// kernel: resvit_generator.65
$region0: #{resvit_generator.65}
  #allocation0 [shape = 'u32[]', space=smem, size = 0x4, offset = 0x4, fixed_abs, tag = 'smem constant byte address 0x4 - core index']
  #allocation1 [shape = 'u32[144,128]{1,0:T(1,128)}', space=vmem, size = 0x12000, scoped, tag = 'internal scratch']
  %s0 = inlined_call_operand.vmem [shape: f32[4,2048], index: 0, kind: input, shape index: {}]
  %s1 = inlined_call_operand.vmem [shape: f32[4,1], index: 1, kind: output, shape index: {0}]
  %s2 = inlined_call_operand.vmem [shape: f32[4,1], index: 2, kind: output, shape index: {1}]
  %3 = xla_tuple %s1, %s2
  %s4 = sld [smem:[#allocation0]]
  $region49: #{resvit_generator.65} parent=0
    _
  %s6 = ssub.s32 1, %s4
  %s7 = scalar_select 0, %s6, %s4
  loop: start=0, step=1, limit=6
  $region2: #{resvit_generator.65} parent=0 // loop_pre_header
    _
  $region3: #{resvit_generator.65} parent=0 // loop_header
    %s9 = sphi 0, %s13
    %p10 = scmp.ge.s32.totalorder %s9, 6
    %s19 = sphi 0, %s21
    %s22 = sphi 0, %s19
    %s23 = sphi 0, %s22
    %s39 = sphi 0, %s23
    %s43 = sphi 0, %s43
    %s45 = sphi 0, %s43
    %s46 = sphi 0, %s45
    %s60 = sphi 0, %s46
    %s64 = sphi 0, %s64
    %s66 = sphi 0, %s64
    %s67 = sphi 0, %s66
    %s81 = sphi 0, %s67
  $region4: #{resvit_generator.65} parent=0 // loop_header_branch
    %12 = sbr.rel (%p10) target = $region8
  $region5: #{resvit_generator.65} parent=0 // loop_body
    %s14 = ssub.s32 %s9, 1
    %s15 = ssub.s32 %s9, 2
    %s16 = sadd.s32 %s9, 1
    %s17 = ssub.s32 %s9, %s16
    %p18 = scmp.eq.s32.totalorder %s17, 0
    %s20 = sadd.s32 %s19, 1
    %s21 = scalar_select %p18, %s19, %s20
    %p24 = pneg %p18
    %p25 = scmp.eq.s32.totalorder %s9, 3
    %p26 = por %p24, %p25
    %p27 = scmp.ne.s32.totalorder %s19, %s22
    %p28 = scmp.eq.s32.totalorder %s9, 0
    %p29 = por %p27, %p28
    %p30 = scmp.ne.s32.totalorder %s19, %s22
    %p31 = scmp.eq.s32.totalorder %s14, 3
    %p32 = por %p30, %p31
    %p33 = scmp.ne.s32.totalorder %s22, %s23
    %p34 = scmp.eq.s32.totalorder %s14, 0
    %p35 = por %p33, %p34
    %p36 = scmp.ne.s32.totalorder %s22, %s23
    %p37 = scmp.eq.s32.totalorder %s15, 3
    %p38 = por %p36, %p37
    %p40 = scmp.ne.s32.totalorder %s23, %s39
    %p41 = scmp.eq.s32.totalorder %s15, 0
    %p42 = por %p40, %p41
    %s44 = sadd.s32 %s43, 1
    %p47 = scmp.eq.s32.totalorder %s9, 3
    %p48 = scmp.ne.s32.totalorder %s43, %s45
    %p49 = scmp.eq.s32.totalorder %s9, 0
    %p50 = por %p48, %p49
    %p51 = scmp.ne.s32.totalorder %s43, %s45
    %p52 = scmp.eq.s32.totalorder %s14, 3
    %p53 = por %p51, %p52
    %p54 = scmp.ne.s32.totalorder %s45, %s46
    %p55 = scmp.eq.s32.totalorder %s14, 0
    %p56 = por %p54, %p55
    %p57 = scmp.ne.s32.totalorder %s45, %s46
    %p58 = scmp.eq.s32.totalorder %s15, 3
    %p59 = por %p57, %p58
    %p61 = scmp.ne.s32.totalorder %s46, %s60
    %p62 = scmp.eq.s32.totalorder %s15, 0
    %p63 = por %p61, %p62
    %s65 = sadd.s32 %s64, 1
    %p68 = scmp.eq.s32.totalorder %s9, 3
    %p69 = scmp.ne.s32.totalorder %s64, %s66
    %p70 = scmp.eq.s32.totalorder %s9, 0
    %p71 = por %p69, %p70
    %p72 = scmp.ne.s32.totalorder %s64, %s66
    %p73 = scmp.eq.s32.totalorder %s14, 3
    %p74 = por %p72, %p73
    %p75 = scmp.ne.s32.totalorder %s66, %s67
    %p76 = scmp.eq.s32.totalorder %s14, 0
    %p77 = por %p75, %p76
    %p78 = scmp.ne.s32.totalorder %s66, %s67
    %p79 = scmp.eq.s32.totalorder %s15, 3
    %p80 = por %p78, %p79
    %p82 = scmp.ne.s32.totalorder %s67, %s81
    %p83 = scmp.eq.s32.totalorder %s15, 0
    %p84 = por %p82, %p83
    %p85 = scmp.le.s32.totalorder 1, %s9
    %p86 = scmp.lt.s32.totalorder %s9, 5
    %p87 = pnand %p85, %p86
    %p88 = pneg %p87
    // Predicated region
    $region9: #{resvit_generator.65} parent=5 // pred_check
      _
    $region10: #{resvit_generator.65} parent=5 // pred_check_branch
      %90 = sbr.rel (%p87) target = $region12
    $region11: #{resvit_generator.65} parent=5 // pred_region
      %s91 = ssub.s32 %s9, 1
    $region12: #{resvit_generator.65} parent=5 // pred_fallthru
      _
    %p92 = scmp.lt.s32.totalorder %s9, 4
    // Predicated region
    $region13: #{resvit_generator.65} parent=5 // pred_check
      %p93 = pneg %p92
    $region14: #{resvit_generator.65} parent=5 // pred_check_branch
      %95 = sbr.rel (%p93) target = $region16
    $region15: #{resvit_generator.65} parent=5 // pred_region
      // Predicated region
      $region17: #{resvit_generator.65} parent=15 // pred_check
        %p96 = pneg %p29
      $region18: #{resvit_generator.65} parent=15 // pred_check_branch
        %98 = sbr.rel (%p96) target = $region20
      $region19: #{resvit_generator.65} parent=15 // pred_region
        %s99 = smul.u32 4, %s9
        %p100 = scmp.lt.s32.totalorder %s99, 15
        %s101 = scalar_select %p100, %s99, 15
        %s102 = smul.addr %s101, 4
        %s103 = scalar_lea.vmem %s0, %s102
        %s104 = smul.u32 4, %s9
      $region20: #{resvit_generator.65} parent=15 // pred_fallthru
        _
    $region16: #{resvit_generator.65} parent=5 // pred_fallthru
      _
    %p105 = scmp.le.s32.totalorder 1, %s9
    %p106 = scmp.lt.s32.totalorder %s9, 5
    %p107 = pnand %p105, %p106
    %p108 = pneg %p107
    // Predicated region
    $region21: #{resvit_generator.65} parent=5 // pred_check
      _
    $region22: #{resvit_generator.65} parent=5 // pred_check_branch
      %110 = sbr.rel (%p107) target = $region24
    $region23: #{resvit_generator.65} parent=5 // pred_region
      %s111 = ssub.s32 %s9, 1
      %s112 = smul.u32 4, %s14
      %p113 = scmp.lt.s32.totalorder %s112, 15
      %s114 = scalar_select %p113, %s112, 15
      %s115 = smul.addr %s114, 4
      %s116 = scalar_lea.vmem %s0, %s115
      %p117 = pneg %p35
      %p118 = pneg %p32
      %p119 = pneg %p56
      %p120 = pneg %p53
      %p121 = pneg %p77
      %p122 = pneg %p74
      %s123 = smul.u32 4, %s14
      %p124 = scmp.lt.s32.totalorder %s123, 15
      %s125 = scalar_select %p124, %s123, 15
      %s126 = smul.addr %s125, 4
      %s127 = scalar_lea.vmem %s0, %s126
      %s128 = smul.u32 4, %s14
      %p129 = scmp.eq.s32.totalorder %s14, 0
      // Predicated region
      $region25: #{resvit_generator.65} parent=23 // pred_check
        %p130 = pneg %p129
      $region26: #{resvit_generator.65} parent=23 // pred_check_branch
        %132 = sbr.rel (%p130) target = $region28
      $region27: #{resvit_generator.65} parent=23 // pred_region
        %vm133 = vcmask 3072
        %134 = vst.msk [vmem:[%s1] sm:$0xf] %vm133, 0.0
        %135 = vst.msk [vmem:[%s2] sm:$0xf] %vm133, 0.0
      $region28: #{resvit_generator.65} parent=23 // pred_fallthru
        _
      %v136 = vld [vmem:[%s127] sm:$0xff]
      %v137 = vld [vmem:[%s127 + $0x8] sm:$0xff]
      %s138 = smul.u32 %s14, 512
      %v139 = vlaneseq
      %v140 = vand.u32 %v139, 127
      %v141 = vadd.s32 %v140, 128
      %v142 = vadd.s32 %v140, 256
      %v143 = vadd.s32 %v140, 384
      %v144 = vstv %s138
      %v145 = vadd.s32 %v144, %v140
      %v146 = vadd.s32 %v144, %v141
      %v147 = vadd.s32 %v144, %v142
      %v148 = vadd.s32 %v144, %v143
      %vm149 = vcmp.lt.s32.totalorder %v145, 2048
      %vm150 = vcmp.lt.s32.totalorder %v146, 2048
      %vm151 = vcmp.lt.s32.totalorder %v147, 2048
      %vm152 = vcmp.lt.s32.totalorder %v148, 2048
      %v155 = vcombine.high %v136, %v136
      %v156 = vcombine.high %v137, %v137
      %v159 = vsel %vm149, %v136, 0.0
      %v160 = vsel %vm150, %v155, 0.0
      %v161 = vsel %vm151, %v137, 0.0
      %v162 = vsel %vm152, %v156, 0.0
      %v163 = vld [vmem:[%s1] sm:$0xf]
      %vm164 = vcmask 1043456
      %v165 = vsel %vm164, %v159, 0.0
      %v166 = vsel %vm164, %v160, 0.0
      %v167 = vadd.f32 %v165, %v166
      %v168 = vsel %vm164, %v161, 0.0
      %v169 = vadd.f32 %v167, %v168
      %v170 = vsel %vm164, %v162, 0.0
      %v171 = vadd.f32 %v169, %v170
      %172 = vadd.xlane.f32.xlu0 %v171
      %v173 = vpop.xlane.xlu0 %172
      %v174 = vadd.f32 %v163, %v173
      %vm175 = vcmask 3072
      %176 = vst.msk [vmem:[%s1] sm:$0xf] %vm175, %v174
      %v177 = vld [vmem:[%s2] sm:$0xf]
      %v178 = vmul.f32 %v159, %v159
      %v179 = vmul.f32 %v160, %v160
      %v180 = vmul.f32 %v161, %v161
      %v181 = vmul.f32 %v162, %v162
      %v182 = vsel %vm164, %v178, 0.0
      %v183 = vsel %vm164, %v179, 0.0
      %v184 = vadd.f32 %v182, %v183
      %v185 = vsel %vm164, %v180, 0.0
      %v186 = vadd.f32 %v184, %v185
      %v187 = vsel %vm164, %v181, 0.0
      %v188 = vadd.f32 %v186, %v187
      %189 = vadd.xlane.f32.xlu0 %v188
      %v190 = vpop.xlane.xlu0 %189
      %v191 = vadd.f32 %v177, %v190
      %192 = vst.msk [vmem:[%s2] sm:$0xf] %vm175, %v191
      // Predicated region
      $region29: #{resvit_generator.65} parent=23 // pred_check
        %p193 = pneg %p53
      $region30: #{resvit_generator.65} parent=23 // pred_check_branch
        %195 = sbr.rel (%p193) target = $region32
      $region31: #{resvit_generator.65} parent=23 // pred_region
        _
      $region32: #{resvit_generator.65} parent=23 // pred_fallthru
        _
      // Predicated region
      $region33: #{resvit_generator.65} parent=23 // pred_check
        %p196 = pneg %p74
      $region34: #{resvit_generator.65} parent=23 // pred_check_branch
        %198 = sbr.rel (%p196) target = $region36
      $region35: #{resvit_generator.65} parent=23 // pred_region
        _
      $region36: #{resvit_generator.65} parent=23 // pred_fallthru
        _
      // Predicated region
      $region37: #{resvit_generator.65} parent=23 // pred_check
        %p199 = pneg %p53
      $region38: #{resvit_generator.65} parent=23 // pred_check_branch
        %201 = sbr.rel (%p199) target = $region40
      $region39: #{resvit_generator.65} parent=23 // pred_region
        _
      $region40: #{resvit_generator.65} parent=23 // pred_fallthru
        _
      // Predicated region
      $region41: #{resvit_generator.65} parent=23 // pred_check
        %p202 = pneg %p74
      $region42: #{resvit_generator.65} parent=23 // pred_check_branch
        %204 = sbr.rel (%p202) target = $region44
      $region43: #{resvit_generator.65} parent=23 // pred_region
        _
      $region44: #{resvit_generator.65} parent=23 // pred_fallthru
        _
    $region24: #{resvit_generator.65} parent=5 // pred_fallthru
      _
    %p205 = scmp.le.s32.totalorder 2, %s9
    // Predicated region
    $region45: #{resvit_generator.65} parent=5 // pred_check
      %p206 = pneg %p205
    $region46: #{resvit_generator.65} parent=5 // pred_check_branch
      %208 = sbr.rel (%p206) target = $region48
    $region47: #{resvit_generator.65} parent=5 // pred_region
      %s209 = ssub.s32 %s9, 2
    $region48: #{resvit_generator.65} parent=5 // pred_fallthru
      _
  $region6: #{resvit_generator.65} parent=0 // loop_footer
    %s13 = sadd.s32 1, %s9
  $region7: #{resvit_generator.65} parent=0 // loop_footer_branch
    %8 = sbr.rel target = $region3
  $region8: #{resvit_generator.65} parent=0 // loop_exit
    _

// kernel: resvit_generator.66
$region0: #{resvit_generator.66}
  #allocation0 [shape = 'u32[]', space=smem, size = 0x4, offset = 0x4, fixed_abs, tag = 'smem constant byte address 0x4 - core index']
  #allocation1 [shape = 'u32[144,128]{1,0:T(1,128)}', space=vmem, size = 0x12000, scoped, tag = 'internal scratch']
  %s0 = inlined_call_operand.vmem [shape: f32[4,2048], index: 0, kind: input, shape index: {}]
  %s1 = inlined_call_operand.vmem [shape: f32[4,1], index: 1, kind: input, shape index: {}]
  %s2 = inlined_call_operand.vmem [shape: f32[4,1], index: 2, kind: input, shape index: {}]
  %s3 = inlined_call_operand.vmem [shape: f32[4,1], index: 3, kind: input, shape index: {}]
  %s4 = inlined_call_operand.vmem [shape: f32[4,1], index: 4, kind: input, shape index: {}]
  %s5 = inlined_call_operand.vmem [shape: f32[4,2048], index: 5, kind: output, shape index: {}]
  %s6 = sld [smem:[#allocation0]]
  $region53: #{resvit_generator.66} parent=0
    _
  %s8 = ssub.s32 1, %s6
  %s9 = scalar_select 0, %s8, %s6
  loop: start=0, step=1, limit=6
  $region2: #{resvit_generator.66} parent=0 // loop_pre_header
    _
  $region3: #{resvit_generator.66} parent=0 // loop_header
    %s11 = sphi 0, %s15
    %p12 = scmp.ge.s32.totalorder %s11, 6
    %s21 = sphi 0, %s23
    %s24 = sphi 0, %s21
    %s25 = sphi 0, %s24
    %s41 = sphi 0, %s25
    %s45 = sphi 0, %s45
    %s47 = sphi 0, %s45
    %s48 = sphi 0, %s47
    %s62 = sphi 0, %s48
    %s66 = sphi 0, %s66
    %s68 = sphi 0, %s66
    %s69 = sphi 0, %s68
    %s83 = sphi 0, %s69
    %s87 = sphi 0, %s87
    %s89 = sphi 0, %s87
    %s90 = sphi 0, %s89
    %s104 = sphi 0, %s90
    %s108 = sphi 0, %s108
    %s110 = sphi 0, %s108
    %s111 = sphi 0, %s110
    %s125 = sphi 0, %s111
    %s131 = sphi 0, %s133
    %s134 = sphi 0, %s131
    %s135 = sphi 0, %s134
    %s151 = sphi 0, %s135
  $region4: #{resvit_generator.66} parent=0 // loop_header_branch
    %14 = sbr.rel (%p12) target = $region8
  $region5: #{resvit_generator.66} parent=0 // loop_body
    %s16 = ssub.s32 %s11, 1
    %s17 = ssub.s32 %s11, 2
    %s18 = sadd.s32 %s11, 1
    %s19 = ssub.s32 %s11, %s18
    %p20 = scmp.eq.s32.totalorder %s19, 0
    %s22 = sadd.s32 %s21, 1
    %s23 = scalar_select %p20, %s21, %s22
    %p26 = pneg %p20
    %p27 = scmp.eq.s32.totalorder %s11, 3
    %p28 = por %p26, %p27
    %p29 = scmp.ne.s32.totalorder %s21, %s24
    %p30 = scmp.eq.s32.totalorder %s11, 0
    %p31 = por %p29, %p30
    %p32 = scmp.ne.s32.totalorder %s21, %s24
    %p33 = scmp.eq.s32.totalorder %s16, 3
    %p34 = por %p32, %p33
    %p35 = scmp.ne.s32.totalorder %s24, %s25
    %p36 = scmp.eq.s32.totalorder %s16, 0
    %p37 = por %p35, %p36
    %p38 = scmp.ne.s32.totalorder %s24, %s25
    %p39 = scmp.eq.s32.totalorder %s17, 3
    %p40 = por %p38, %p39
    %p42 = scmp.ne.s32.totalorder %s25, %s41
    %p43 = scmp.eq.s32.totalorder %s17, 0
    %p44 = por %p42, %p43
    %s46 = sadd.s32 %s45, 1
    %p49 = scmp.eq.s32.totalorder %s11, 3
    %p50 = scmp.ne.s32.totalorder %s45, %s47
    %p51 = scmp.eq.s32.totalorder %s11, 0
    %p52 = por %p50, %p51
    %p53 = scmp.ne.s32.totalorder %s45, %s47
    %p54 = scmp.eq.s32.totalorder %s16, 3
    %p55 = por %p53, %p54
    %p56 = scmp.ne.s32.totalorder %s47, %s48
    %p57 = scmp.eq.s32.totalorder %s16, 0
    %p58 = por %p56, %p57
    %p59 = scmp.ne.s32.totalorder %s47, %s48
    %p60 = scmp.eq.s32.totalorder %s17, 3
    %p61 = por %p59, %p60
    %p63 = scmp.ne.s32.totalorder %s48, %s62
    %p64 = scmp.eq.s32.totalorder %s17, 0
    %p65 = por %p63, %p64
    %s67 = sadd.s32 %s66, 1
    %p70 = scmp.eq.s32.totalorder %s11, 3
    %p71 = scmp.ne.s32.totalorder %s66, %s68
    %p72 = scmp.eq.s32.totalorder %s11, 0
    %p73 = por %p71, %p72
    %p74 = scmp.ne.s32.totalorder %s66, %s68
    %p75 = scmp.eq.s32.totalorder %s16, 3
    %p76 = por %p74, %p75
    %p77 = scmp.ne.s32.totalorder %s68, %s69
    %p78 = scmp.eq.s32.totalorder %s16, 0
    %p79 = por %p77, %p78
    %p80 = scmp.ne.s32.totalorder %s68, %s69
    %p81 = scmp.eq.s32.totalorder %s17, 3
    %p82 = por %p80, %p81
    %p84 = scmp.ne.s32.totalorder %s69, %s83
    %p85 = scmp.eq.s32.totalorder %s17, 0
    %p86 = por %p84, %p85
    %s88 = sadd.s32 %s87, 1
    %p91 = scmp.eq.s32.totalorder %s11, 3
    %p92 = scmp.ne.s32.totalorder %s87, %s89
    %p93 = scmp.eq.s32.totalorder %s11, 0
    %p94 = por %p92, %p93
    %p95 = scmp.ne.s32.totalorder %s87, %s89
    %p96 = scmp.eq.s32.totalorder %s16, 3
    %p97 = por %p95, %p96
    %p98 = scmp.ne.s32.totalorder %s89, %s90
    %p99 = scmp.eq.s32.totalorder %s16, 0
    %p100 = por %p98, %p99
    %p101 = scmp.ne.s32.totalorder %s89, %s90
    %p102 = scmp.eq.s32.totalorder %s17, 3
    %p103 = por %p101, %p102
    %p105 = scmp.ne.s32.totalorder %s90, %s104
    %p106 = scmp.eq.s32.totalorder %s17, 0
    %p107 = por %p105, %p106
    %s109 = sadd.s32 %s108, 1
    %p112 = scmp.eq.s32.totalorder %s11, 3
    %p113 = scmp.ne.s32.totalorder %s108, %s110
    %p114 = scmp.eq.s32.totalorder %s11, 0
    %p115 = por %p113, %p114
    %p116 = scmp.ne.s32.totalorder %s108, %s110
    %p117 = scmp.eq.s32.totalorder %s16, 3
    %p118 = por %p116, %p117
    %p119 = scmp.ne.s32.totalorder %s110, %s111
    %p120 = scmp.eq.s32.totalorder %s16, 0
    %p121 = por %p119, %p120
    %p122 = scmp.ne.s32.totalorder %s110, %s111
    %p123 = scmp.eq.s32.totalorder %s17, 3
    %p124 = por %p122, %p123
    %p126 = scmp.ne.s32.totalorder %s111, %s125
    %p127 = scmp.eq.s32.totalorder %s17, 0
    %p128 = por %p126, %p127
    %s129 = ssub.s32 %s11, %s18
    %p130 = scmp.eq.s32.totalorder %s129, 0
    %s132 = sadd.s32 %s131, 1
    %s133 = scalar_select %p130, %s131, %s132
    %p136 = pneg %p130
    %p137 = scmp.eq.s32.totalorder %s11, 3
    %p138 = por %p136, %p137
    %p139 = scmp.ne.s32.totalorder %s131, %s134
    %p140 = scmp.eq.s32.totalorder %s11, 0
    %p141 = por %p139, %p140
    %p142 = scmp.ne.s32.totalorder %s131, %s134
    %p143 = scmp.eq.s32.totalorder %s16, 3
    %p144 = por %p142, %p143
    %p145 = scmp.ne.s32.totalorder %s134, %s135
    %p146 = scmp.eq.s32.totalorder %s16, 0
    %p147 = por %p145, %p146
    %p148 = scmp.ne.s32.totalorder %s134, %s135
    %p149 = scmp.eq.s32.totalorder %s17, 3
    %p150 = por %p148, %p149
    %p152 = scmp.ne.s32.totalorder %s135, %s151
    %p153 = scmp.eq.s32.totalorder %s17, 0
    %p154 = por %p152, %p153
    %p155 = scmp.le.s32.totalorder 1, %s11
    %p156 = scmp.lt.s32.totalorder %s11, 5
    %p157 = pnand %p155, %p156
    %p158 = pneg %p157
    // Predicated region
    $region9: #{resvit_generator.66} parent=5 // pred_check
      _
    $region10: #{resvit_generator.66} parent=5 // pred_check_branch
      %160 = sbr.rel (%p157) target = $region12
    $region11: #{resvit_generator.66} parent=5 // pred_region
      %s161 = ssub.s32 %s11, 1
      // Predicated region
      $region13: #{resvit_generator.66} parent=11 // pred_check
        %p162 = pneg %p58
      $region14: #{resvit_generator.66} parent=11 // pred_check_branch
        %164 = sbr.rel (%p162) target = $region16
      $region15: #{resvit_generator.66} parent=11 // pred_region
        _
      $region16: #{resvit_generator.66} parent=11 // pred_fallthru
        _
      // Predicated region
      $region17: #{resvit_generator.66} parent=11 // pred_check
        %p165 = pneg %p79
      $region18: #{resvit_generator.66} parent=11 // pred_check_branch
        %167 = sbr.rel (%p165) target = $region20
      $region19: #{resvit_generator.66} parent=11 // pred_region
        _
      $region20: #{resvit_generator.66} parent=11 // pred_fallthru
        _
      // Predicated region
      $region21: #{resvit_generator.66} parent=11 // pred_check
        %p168 = pneg %p100
      $region22: #{resvit_generator.66} parent=11 // pred_check_branch
        %170 = sbr.rel (%p168) target = $region24
      $region23: #{resvit_generator.66} parent=11 // pred_region
        _
      $region24: #{resvit_generator.66} parent=11 // pred_fallthru
        _
      // Predicated region
      $region25: #{resvit_generator.66} parent=11 // pred_check
        %p171 = pneg %p121
      $region26: #{resvit_generator.66} parent=11 // pred_check_branch
        %173 = sbr.rel (%p171) target = $region28
      $region27: #{resvit_generator.66} parent=11 // pred_region
        _
      $region28: #{resvit_generator.66} parent=11 // pred_fallthru
        _
    $region12: #{resvit_generator.66} parent=5 // pred_fallthru
      _
    %p174 = scmp.lt.s32.totalorder %s11, 4
    // Predicated region
    $region29: #{resvit_generator.66} parent=5 // pred_check
      %p175 = pneg %p174
    $region30: #{resvit_generator.66} parent=5 // pred_check_branch
      %177 = sbr.rel (%p175) target = $region32
    $region31: #{resvit_generator.66} parent=5 // pred_region
      // Predicated region
      $region33: #{resvit_generator.66} parent=31 // pred_check
        %p178 = pneg %p31
      $region34: #{resvit_generator.66} parent=31 // pred_check_branch
        %180 = sbr.rel (%p178) target = $region36
      $region35: #{resvit_generator.66} parent=31 // pred_region
        %s181 = smul.u32 4, %s11
        %p182 = scmp.lt.s32.totalorder %s181, 15
        %s183 = scalar_select %p182, %s181, 15
        %s184 = smul.addr %s183, 4
        %s185 = scalar_lea.vmem %s0, %s184
        %s186 = smul.u32 4, %s11
      $region36: #{resvit_generator.66} parent=31 // pred_fallthru
        _
    $region32: #{resvit_generator.66} parent=5 // pred_fallthru
      _
    %p187 = scmp.le.s32.totalorder 1, %s11
    %p188 = scmp.lt.s32.totalorder %s11, 5
    %p189 = pnand %p187, %p188
    %p190 = pneg %p189
    // Predicated region
    $region37: #{resvit_generator.66} parent=5 // pred_check
      _
    $region38: #{resvit_generator.66} parent=5 // pred_check_branch
      %192 = sbr.rel (%p189) target = $region40
    $region39: #{resvit_generator.66} parent=5 // pred_region
      %s193 = ssub.s32 %s11, 1
      %s194 = smul.u32 4, %s16
      %p195 = scmp.lt.s32.totalorder %s194, 15
      %s196 = scalar_select %p195, %s194, 15
      %s197 = smul.addr %s196, 4
      %s198 = scalar_lea.vmem %s0, %s197
      %p199 = pneg %p37
      %p200 = pneg %p34
      %p201 = pneg %p58
      %p202 = pneg %p55
      %p203 = pneg %p79
      %p204 = pneg %p76
      %p205 = pneg %p100
      %p206 = pneg %p97
      %p207 = pneg %p121
      %p208 = pneg %p118
      %p209 = pneg %p147
      %p210 = pneg %p144
      %s211 = smul.u32 4, %s16
      %p212 = scmp.lt.s32.totalorder %s211, 15
      %s213 = scalar_select %p212, %s211, 15
      %s214 = smul.addr %s213, 4
      %s215 = scalar_lea.vmem %s5, %s214
      %s216 = smul.u32 4, %s16
      %p217 = scmp.lt.s32.totalorder %s216, 15
      %s218 = scalar_select %p217, %s216, 15
      %s219 = smul.addr %s218, 4
      %s220 = scalar_lea.vmem %s0, %s219
      %s221 = smul.u32 4, %s16
      %s222 = smul.u32 4, %s16
      %p223 = scmp.lt.s32.totalorder %s222, 15
      %s224 = scalar_select %p223, %s222, 15
      %s225 = smul.addr %s224, 4
      %s226 = scalar_lea.vmem %s5, %s225
      %s227 = smul.u32 4, %s16
      %v228 = vld [vmem:[%s1] sm:$0xf]
      %v229 = vmul.f32 %v228, 0.00048828125
      %v230 = vld [vmem:[%s2] sm:$0xf]
      %v231 = vmul.f32 %v230, 0.00048828125
      %v232 = vmul.f32 %v229, %v229
      %v233 = vsub.f32 %v231, %v232
      %v234 = vmax.f32 %v233, 0.0
      %v235 = vadd.f32 %v234, 1e-05
      %v236 = vrsqrt.pop %v235
      %v237 = vld [vmem:[%s3] sm:$0xf]
      %v238 = vmul.f32 %v236, %v237
      %v239 = vld [vmem:[%s220] sm:$0xff]
      %v240 = vld [vmem:[%s220 + $0x8] sm:$0xff]
      %242 = vset.pattern.permute.xlu0 0
      %243 = vperm.xlu0 %242, %v229
      %v244 = vpop.permute.xlu0 %243
      %v246 = vunpack.c.l.s4 839922192
      %v247 = vunpack.c.0.s8 %v246
      %v248 = vlaneseq
      %v249 = vshrl.u32 %v248, 7
      %v250 = vsub.s32 %v247, %v249
      %v251 = vrot.slane %v244, %v250
      %v253 = vsub.f32 %v239, %v251
      %v254 = vsub.f32 %v240, %v251
      %256 = vset.pattern.permute.xlu0 0
      %257 = vperm.xlu0 %256, %v238
      %v258 = vpop.permute.xlu0 %257
      %v260 = vunpack.c.l.s4 839922192
      %v261 = vunpack.c.0.s8 %v260
      %v262 = vlaneseq
      %v263 = vshrl.u32 %v262, 7
      %v264 = vsub.s32 %v261, %v263
      %v265 = vrot.slane %v258, %v264
      %v267 = vmul.f32 %v253, %v265
      %v268 = vmul.f32 %v254, %v265
      %v269 = vld [vmem:[%s4] sm:$0xf]
      %271 = vset.pattern.permute.xlu0 0
      %272 = vperm.xlu0 %271, %v269
      %v273 = vpop.permute.xlu0 %272
      %v275 = vunpack.c.l.s4 839922192
      %v276 = vunpack.c.0.s8 %v275
      %v277 = vlaneseq
      %v278 = vshrl.u32 %v277, 7
      %v279 = vsub.s32 %v276, %v278
      %v280 = vrot.slane %v273, %v279
      %v282 = vadd.f32 %v267, %v280
      %v283 = vadd.f32 %v268, %v280
      %v284 = vmax.f32 %v282, 0.0
      %v285 = vmax.f32 %v283, 0.0
      %286 = vst [vmem:[%s226] sm:$0xff] %v284
      %287 = vst [vmem:[%s226 + $0x8] sm:$0xff] %v285
      %s288 = smul.u32 4, %s16
      %p289 = scmp.lt.s32.totalorder %s288, 15
      %s290 = scalar_select %p289, %s288, 15
      %s291 = smul.addr %s290, 4
      %s292 = scalar_lea.vmem %s5, %s291
      // Predicated region
      $region41: #{resvit_generator.66} parent=39 // pred_check
        %p293 = pneg %p144
      $region42: #{resvit_generator.66} parent=39 // pred_check_branch
        %295 = sbr.rel (%p293) target = $region44
      $region43: #{resvit_generator.66} parent=39 // pred_region
        %s296 = smul.u32 4, %s16
      $region44: #{resvit_generator.66} parent=39 // pred_fallthru
        _
    $region40: #{resvit_generator.66} parent=5 // pred_fallthru
      _
    %p297 = scmp.le.s32.totalorder 2, %s11
    // Predicated region
    $region45: #{resvit_generator.66} parent=5 // pred_check
      %p298 = pneg %p297
    $region46: #{resvit_generator.66} parent=5 // pred_check_branch
      %300 = sbr.rel (%p298) target = $region48
    $region47: #{resvit_generator.66} parent=5 // pred_region
      %s301 = ssub.s32 %s11, 2
      // Predicated region
      $region49: #{resvit_generator.66} parent=47 // pred_check
        %p302 = pneg %p150
      $region50: #{resvit_generator.66} parent=47 // pred_check_branch
        %304 = sbr.rel (%p302) target = $region52
      $region51: #{resvit_generator.66} parent=47 // pred_region
        %s305 = smul.u32 4, %s17
        %p306 = scmp.lt.s32.totalorder %s305, 15
        %s307 = scalar_select %p306, %s305, 15
        %s308 = smul.addr %s307, 4
        %s309 = scalar_lea.vmem %s5, %s308
      $region52: #{resvit_generator.66} parent=47 // pred_fallthru
        _
    $region48: #{resvit_generator.66} parent=5 // pred_fallthru
      _
  $region6: #{resvit_generator.66} parent=0 // loop_footer
    %s15 = sadd.s32 1, %s11
  $region7: #{resvit_generator.66} parent=0 // loop_footer_branch
    %10 = sbr.rel target = $region3
  $region8: #{resvit_generator.66} parent=0 // loop_exit
    _

// kernel: resvit_generator.64
$region0: #{resvit_generator.64}
  #allocation0 [shape = 'u32[]', space=smem, size = 0x4, offset = 0x4, fixed_abs, tag = 'smem constant byte address 0x4 - core index']
  #allocation1 [shape = 'u32[144,128]{1,0:T(1,128)}', space=vmem, size = 0x12000, scoped, tag = 'internal scratch']
  %s0 = inlined_call_operand.vmem [shape: bf16[4,49], index: 0, kind: input, shape index: {}]
  %s1 = inlined_call_operand.vmem [shape: bf16[49,2048], index: 1, kind: input, shape index: {}]
  %s2 = inlined_call_operand.vmem [shape: f32[4,2048], index: 2, kind: output, shape index: {}]
  %s3 = sld [smem:[#allocation0]]
  $region64: #{resvit_generator.64} parent=0
    _
  %s5 = ssub.s32 1, %s3
  %s6 = scalar_select 0, %s5, %s3
  $region1: #{resvit_generator.64} parent=0
    #allocation2 [shape = 'u8[114688]{0}', space=vmem, size = 0x1c000, scoped, tag = 'input window, operand 1']
    loop: start=0, step=1, limit=6
    $region2: #{resvit_generator.64} parent=1 // loop_pre_header
      _
    $region3: #{resvit_generator.64} parent=1 // loop_header
      %s8 = sphi 0, %s12
      %p9 = scmp.ge.s32.totalorder %s8, 6
      %s16 = sphi 0, %s16
      %s18 = sphi 0, %s16
      %s19 = sphi 0, %s18
      %s33 = sphi 0, %s19
      %s39 = sphi 0, %s41
      %s42 = sphi 0, %s39
      %s43 = sphi 0, %s42
      %s59 = sphi 0, %s43
      %s65 = sphi 0, %s67
      %s68 = sphi 0, %s65
      %s69 = sphi 0, %s68
      %s85 = sphi 0, %s69
    $region4: #{resvit_generator.64} parent=1 // loop_header_branch
      %11 = sbr.rel (%p9) target = $region8
    $region5: #{resvit_generator.64} parent=1 // loop_body
      %s13 = ssub.s32 %s8, 1
      %s14 = ssub.s32 %s8, 2
      %s15 = sadd.s32 %s8, 1
      %s17 = sadd.s32 %s16, 1
      %p20 = scmp.eq.s32.totalorder %s8, 3
      %p21 = scmp.ne.s32.totalorder %s16, %s18
      %p22 = scmp.eq.s32.totalorder %s8, 0
      %p23 = por %p21, %p22
      %p24 = scmp.ne.s32.totalorder %s16, %s18
      %p25 = scmp.eq.s32.totalorder %s13, 3
      %p26 = por %p24, %p25
      %p27 = scmp.ne.s32.totalorder %s18, %s19
      %p28 = scmp.eq.s32.totalorder %s13, 0
      %p29 = por %p27, %p28
      %p30 = scmp.ne.s32.totalorder %s18, %s19
      %p31 = scmp.eq.s32.totalorder %s14, 3
      %p32 = por %p30, %p31
      %p34 = scmp.ne.s32.totalorder %s19, %s33
      %p35 = scmp.eq.s32.totalorder %s14, 0
      %p36 = por %p34, %p35
      %s37 = ssub.s32 %s8, %s15
      %p38 = scmp.eq.s32.totalorder %s37, 0
      %s40 = sadd.s32 %s39, 1
      %s41 = scalar_select %p38, %s39, %s40
      %p44 = pneg %p38
      %p45 = scmp.eq.s32.totalorder %s8, 3
      %p46 = por %p44, %p45
      %p47 = scmp.ne.s32.totalorder %s39, %s42
      %p48 = scmp.eq.s32.totalorder %s8, 0
      %p49 = por %p47, %p48
      %p50 = scmp.ne.s32.totalorder %s39, %s42
      %p51 = scmp.eq.s32.totalorder %s13, 3
      %p52 = por %p50, %p51
      %p53 = scmp.ne.s32.totalorder %s42, %s43
      %p54 = scmp.eq.s32.totalorder %s13, 0
      %p55 = por %p53, %p54
      %p56 = scmp.ne.s32.totalorder %s42, %s43
      %p57 = scmp.eq.s32.totalorder %s14, 3
      %p58 = por %p56, %p57
      %p60 = scmp.ne.s32.totalorder %s43, %s59
      %p61 = scmp.eq.s32.totalorder %s14, 0
      %p62 = por %p60, %p61
      %s63 = ssub.s32 %s8, %s15
      %p64 = scmp.eq.s32.totalorder %s63, 0
      %s66 = sadd.s32 %s65, 1
      %s67 = scalar_select %p64, %s65, %s66
      %p70 = pneg %p64
      %p71 = scmp.eq.s32.totalorder %s8, 3
      %p72 = por %p70, %p71
      %p73 = scmp.ne.s32.totalorder %s65, %s68
      %p74 = scmp.eq.s32.totalorder %s8, 0
      %p75 = por %p73, %p74
      %p76 = scmp.ne.s32.totalorder %s65, %s68
      %p77 = scmp.eq.s32.totalorder %s13, 3
      %p78 = por %p76, %p77
      %p79 = scmp.ne.s32.totalorder %s68, %s69
      %p80 = scmp.eq.s32.totalorder %s13, 0
      %p81 = por %p79, %p80
      %p82 = scmp.ne.s32.totalorder %s68, %s69
      %p83 = scmp.eq.s32.totalorder %s14, 3
      %p84 = por %p82, %p83
      %p86 = scmp.ne.s32.totalorder %s69, %s85
      %p87 = scmp.eq.s32.totalorder %s14, 0
      %p88 = por %p86, %p87
      %p89 = scmp.le.s32.totalorder 1, %s8
      %p90 = scmp.lt.s32.totalorder %s8, 5
      %p91 = pnand %p89, %p90
      %p92 = pneg %p91
      // Predicated region
      $region9: #{resvit_generator.64} parent=5 // pred_check
        _
      $region10: #{resvit_generator.64} parent=5 // pred_check_branch
        %94 = sbr.rel (%p91) target = $region12
      $region11: #{resvit_generator.64} parent=5 // pred_region
        %s95 = ssub.s32 %s8, 1
        // Predicated region
        $region13: #{resvit_generator.64} parent=11 // pred_check
          %p96 = pneg %p29
        $region14: #{resvit_generator.64} parent=11 // pred_check_branch
          %98 = sbr.rel (%p96) target = $region16
        $region15: #{resvit_generator.64} parent=11 // pred_region
          _
        $region16: #{resvit_generator.64} parent=11 // pred_fallthru
          _
      $region12: #{resvit_generator.64} parent=5 // pred_fallthru
        _
      %p99 = scmp.lt.s32.totalorder %s8, 4
      // Predicated region
      $region17: #{resvit_generator.64} parent=5 // pred_check
        %p100 = pneg %p99
      $region18: #{resvit_generator.64} parent=5 // pred_check_branch
        %102 = sbr.rel (%p100) target = $region20
      $region19: #{resvit_generator.64} parent=5 // pred_region
        // Predicated region
        $region21: #{resvit_generator.64} parent=19 // pred_check
          %p103 = pneg %p49
        $region22: #{resvit_generator.64} parent=19 // pred_check_branch
          %105 = sbr.rel (%p103) target = $region24
        $region23: #{resvit_generator.64} parent=19 // pred_region
          %s106 = sand.u32 %s39, 1
          %s107 = sand.u32 %s39, 1
          %s108 = smul.addr %s107, 112
          %s109 = scalar_lea.vmem [#allocation2], %s108
          %s110 = smul.u32 4, %s8
          %s111 = smul.addr %s110, 4
          %s112 = scalar_lea.vmem %s1, %s111
          // Predicated region
          $region25: #{resvit_generator.64} parent=23 // pred_check
            _
          $region26: #{resvit_generator.64} parent=23 // pred_check_branch
            %114 = sbr.rel (0) target = $region28
          $region27: #{resvit_generator.64} parent=23 // pred_region
            // Predicated region
            $region29: #{resvit_generator.64} parent=27 // pred_check
              _
            $region30: #{resvit_generator.64} parent=27 // pred_check_branch
              %116 = sbr.rel (0) target = $region32
            $region31: #{resvit_generator.64} parent=27 // pred_region
              loop: start=0, step=1, limit=1
              $region33: #{resvit_generator.64} parent=31 // loop_pre_header
                _
              $region34: #{resvit_generator.64} parent=31 // loop_header
                %s118 = sphi 0, %s122
                %p119 = scmp.ge.s32.totalorder %s118, 1
                %s123 = sphi %s112, %s112
                %s124 = sphi %s109, %s109
              $region35: #{resvit_generator.64} parent=31 // loop_header_branch
                %121 = sbr.rel (%p119) target = $region39
              $region36: #{resvit_generator.64} parent=31 // loop_body
                %v125 = vld [vmem:[%s123] sm:$0xff]
                %126 = vst [vmem:[%s124] sm:$0xff] %v125
                %v127 = vld [vmem:[%s123 + $0x8] sm:$0xff]
                %128 = vst [vmem:[%s124 + $0x8] sm:$0xff] %v127
                %v129 = vld [vmem:[%s123 + $0x40] sm:$0xff]
                %130 = vst [vmem:[%s124 + $0x10] sm:$0xff] %v129
                %v131 = vld [vmem:[%s123 + $0x48] sm:$0xff]
                %132 = vst [vmem:[%s124 + $0x18] sm:$0xff] %v131
                %v133 = vld [vmem:[%s123 + $0x80] sm:$0xff]
                %134 = vst [vmem:[%s124 + $0x20] sm:$0xff] %v133
                %v135 = vld [vmem:[%s123 + $0x88] sm:$0xff]
                %136 = vst [vmem:[%s124 + $0x28] sm:$0xff] %v135
                %v137 = vld [vmem:[%s123 + $0xc0] sm:$0xff]
                %138 = vst [vmem:[%s124 + $0x30] sm:$0xff] %v137
                %v139 = vld [vmem:[%s123 + $0xc8] sm:$0xff]
                %140 = vst [vmem:[%s124 + $0x38] sm:$0xff] %v139
                %v141 = vld [vmem:[%s123 + $0x100] sm:$0xff]
                %142 = vst [vmem:[%s124 + $0x40] sm:$0xff] %v141
                %v143 = vld [vmem:[%s123 + $0x108] sm:$0xff]
                %144 = vst [vmem:[%s124 + $0x48] sm:$0xff] %v143
                %v145 = vld [vmem:[%s123 + $0x140] sm:$0xff]
                %146 = vst [vmem:[%s124 + $0x50] sm:$0xff] %v145
                %v147 = vld [vmem:[%s123 + $0x148] sm:$0xff]
                %148 = vst [vmem:[%s124 + $0x58] sm:$0xff] %v147
                %v149 = vld [vmem:[%s123 + $0x180] sm:$0xff]
                %150 = vst [vmem:[%s124 + $0x60] sm:$0xff] %v149
                %v151 = vld [vmem:[%s123 + $0x188] sm:$0xff]
                %152 = vst [vmem:[%s124 + $0x68] sm:$0xff] %v151
              $region37: #{resvit_generator.64} parent=31 // loop_footer
                %s122 = sadd.s32 1, %s118
              $region38: #{resvit_generator.64} parent=31 // loop_footer_branch
                %117 = sbr.rel target = $region34
              $region39: #{resvit_generator.64} parent=31 // loop_exit
                _
            $region32: #{resvit_generator.64} parent=27 // pred_fallthru
              _
            // Predicated region
            $region40: #{resvit_generator.64} parent=27 // pred_check
              _
            $region41: #{resvit_generator.64} parent=27 // pred_check_branch
              %154 = sbr.rel target = $region43
            $region42: #{resvit_generator.64} parent=27 // pred_region
              _
            $region43: #{resvit_generator.64} parent=27 // pred_fallthru
              _
          $region28: #{resvit_generator.64} parent=23 // pred_fallthru
            _
          %155 = vnop
        $region24: #{resvit_generator.64} parent=19 // pred_fallthru
          _
      $region20: #{resvit_generator.64} parent=5 // pred_fallthru
        _
      %p156 = scmp.le.s32.totalorder 1, %s8
      %p157 = scmp.lt.s32.totalorder %s8, 5
      %p158 = pnand %p156, %p157
      %p159 = pneg %p158
      // Predicated region
      $region44: #{resvit_generator.64} parent=5 // pred_check
        _
      $region45: #{resvit_generator.64} parent=5 // pred_check_branch
        %161 = sbr.rel (%p158) target = $region47
      $region46: #{resvit_generator.64} parent=5 // pred_region
        %s162 = ssub.s32 %s8, 1
        %s163 = sand.u32 %s42, 1
        %s164 = sand.u32 %s42, 1
        %s165 = smul.addr %s164, 112
        %s166 = scalar_lea.vmem [#allocation2], %s165
        // Predicated region
        $region48: #{resvit_generator.64} parent=46 // pred_check
          %p167 = pneg %p55
        $region49: #{resvit_generator.64} parent=46 // pred_check_branch
          %169 = sbr.rel (%p167) target = $region51
        $region50: #{resvit_generator.64} parent=46 // pred_region
          _
        $region51: #{resvit_generator.64} parent=46 // pred_fallthru
          _
        %p170 = pneg %p29
        %p171 = pneg %p26
        %s172 = sand.u32 %s42, 1
        %s173 = sand.u32 %s42, 1
        %s174 = smul.addr %s173, 112
        %s175 = scalar_lea.vmem [#allocation2], %s174
        %p176 = pneg %p55
        %p177 = pneg %p52
        %p178 = pneg %p81
        %p179 = pneg %p78
        %s180 = smul.u32 4, %s13
        %p181 = scmp.lt.s32.totalorder %s180, 15
        %s182 = scalar_select %p181, %s180, 15
        %s183 = smul.addr %s182, 4
        %s184 = scalar_lea.vmem %s2, %s183
        %s185 = smul.u32 4, %s13
        %s186 = smul.u32 4, %s13
        %p187 = scmp.lt.s32.totalorder %s186, 15
        %s188 = scalar_select %p187, %s186, 15
        %s189 = smul.addr %s188, 4
        %s190 = scalar_lea.vmem %s2, %s189
        %s191 = smul.u32 4, %s13
        %v193 = vld [vmem:[%s0] sm:$0x3]
        %v194 = vld [vmem:[%s166] sm:$0xff]
        %v195 = vld [vmem:[%s166 + $0x8] sm:$0xff]
        %v196 = vld [vmem:[%s166 + $0x10] sm:$0xff]
        %v197 = vld [vmem:[%s166 + $0x18] sm:$0xff]
        %v198 = vld [vmem:[%s166 + $0x20] sm:$0xff]
        %v199 = vld [vmem:[%s166 + $0x28] sm:$0xff]
        %v200 = vld [vmem:[%s166 + $0x30] sm:$0xff]
        %v201 = vld [vmem:[%s166 + $0x38] sm:$0xff]
        %v202 = vld [vmem:[%s166 + $0x40] sm:$0xff]
        %v203 = vld [vmem:[%s166 + $0x48] sm:$0xff]
        %v204 = vld [vmem:[%s166 + $0x50] sm:$0xff]
        %v205 = vld [vmem:[%s166 + $0x58] sm:$0xff]
        %v206 = vld [vmem:[%s166 + $0x60] sm:$0x11]
        %v207 = vld [vmem:[%s166 + $0x68] sm:$0x11]
        %v222 = vunpack.c.l.b16 %v194
        %v223 = vunpack.c.h.b16 %v194
        %v224 = vunpack.c.l.b16 %v195
        %v225 = vunpack.c.h.b16 %v195
        %v226 = vunpack.c.l.b16 %v196
        %v227 = vunpack.c.h.b16 %v196
        %v228 = vunpack.c.l.b16 %v197
        %v229 = vunpack.c.h.b16 %v197
        %v230 = vunpack.c.l.b16 %v198
        %v231 = vunpack.c.h.b16 %v198
        %v232 = vunpack.c.l.b16 %v199
        %v233 = vunpack.c.h.b16 %v199
        %v234 = vunpack.c.l.b16 %v200
        %v235 = vunpack.c.h.b16 %v200
        %v236 = vunpack.c.l.b16 %v201
        %v237 = vunpack.c.h.b16 %v201
        %v238 = vunpack.c.l.b16 %v202
        %v239 = vunpack.c.h.b16 %v202
        %v240 = vunpack.c.l.b16 %v203
        %v241 = vunpack.c.h.b16 %v203
        %v242 = vunpack.c.l.b16 %v204
        %v243 = vunpack.c.h.b16 %v204
        %v244 = vunpack.c.l.b16 %v205
        %v245 = vunpack.c.h.b16 %v205
        %v246 = vunpack.c.l.b16 %v206
        %v247 = vunpack.c.h.b16 %v206
        %v248 = vunpack.c.l.b16 %v207
        %v249 = vunpack.c.h.b16 %v207
        %v250 = vpack.c.b16 %v226, %v222
        %v251 = vpack.c.b16 %v227, %v223
        %v252 = vpack.c.b16 %v228, %v224
        %v253 = vpack.c.b16 %v229, %v225
        %v254 = vpack.c.b16 %v234, %v230
        %v255 = vpack.c.b16 %v235, %v231
        %v256 = vpack.c.b16 %v236, %v232
        %v257 = vpack.c.b16 %v237, %v233
        %v258 = vpack.c.b16 %v242, %v238
        %v259 = vpack.c.b16 %v243, %v239
        %v260 = vpack.c.b16 %v244, %v240
        %v261 = vpack.c.b16 %v245, %v241
        %v262 = vpack.c.b16 %v246, %v246
        %v263 = vpack.c.b16 %v247, %v247
        %v264 = vpack.c.b16 %v248, %v248
        %v265 = vpack.c.b16 %v249, %v249
        %vm278 = vcmask 400384
        %v280 = vsel %vm278, %v193, 0
        %vm282 = vcmask 1040384
        %v283 = vsel 0, 4294967295, 65535
        %v284 = vsel %vm282, %v283, 0
        %v286 = vand.u32 %v262, %v284
        %v289 = vand.u32 %v263, %v284
        %v292 = vand.u32 %v264, %v284
        %v295 = vand.u32 %v265, %v284
        %297 = vmatprep.subr.bf16.mxu0 %v251
        %298 = vmatpush1.bf16.msra.mxu0 %v250
        %299 = vmatprep.subr.bf16.mxu0 %v255
        %300 = vmatpush1.bf16.msra.mxu0 %v254
        %301 = vmatprep.subr.bf16.mxu0 %v259
        %302 = vmatpush1.bf16.msra.mxu0 %v258
        %303 = vmatprep.subr.bf16.mxu0 %v289
        %304 = vmatpush1.bf16.msra.mxu0 %v286
        %305 = vmatprep.subr.bf16.mxu0 0
        %306 = vmatpush1.bf16.msra.mxu0 0
        %307 = vmatprep.subr.bf16.mxu0 0
        %308 = vmatpush1.bf16.msra.mxu0 0
        %309 = vmatprep.subr.bf16.mxu0 0
        %310 = vmatpush1.bf16.msra.mxu0 0
        %311 = vmatprep.subr.bf16.mxu0 0
        %312 = vmatpush1.bf16.msra.mxu0 0
        %313 = vmatprep.subr.bf16.mxu0 0
        %314 = vmatpush1.bf16.msra.mxu0 0
        %315 = vmatprep.subr.bf16.mxu0 0
        %316 = vmatpush1.bf16.msra.mxu0 0
        %317 = vmatprep.subr.bf16.mxu0 0
        %318 = vmatpush1.bf16.msra.mxu0 0
        %319 = vmatprep.subr.bf16.mxu0 0
        %320 = vmatpush1.bf16.msra.mxu0 0
        %321 = vmatprep.subr.bf16.mxu0 0
        %322 = vmatpush1.bf16.msra.mxu0 0
        %323 = vmatprep.subr.bf16.mxu0 0
        %324 = vmatpush1.bf16.msra.mxu0 0
        %325 = vmatprep.subr.bf16.mxu0 0
        %326 = vmatpush1.bf16.msra.mxu0 0
        %327 = vmatprep.subr.bf16.mxu0 0
        %328 = vmatpush1.bf16.msra.mxu0 0
        %329 = vmatprep.mubr.bf16.mxu0 0
        %330 = vmatmul.mubr.bf16.gmra.mrb[0].mxu0 %v280
        %v331 = vpop.f32.mrb[0].mxu0
        %v332 = vadd.f32 0.0, %v331
        %v333 = vpop.f32.mrb[0].mxu0
        %v334 = vadd.f32 0.0, %v333
        %v335 = vpop.f32.mrb[0].mxu0
        %v336 = vpop.f32.mrb[0].mxu0
        %337 = vdwg.mxu0
        %338 = vmatprep.subr.bf16.mxu0 %v253
        %339 = vmatpush1.bf16.msra.mxu0 %v252
        %340 = vmatprep.subr.bf16.mxu0 %v257
        %341 = vmatpush1.bf16.msra.mxu0 %v256
        %342 = vmatprep.subr.bf16.mxu0 %v261
        %343 = vmatpush1.bf16.msra.mxu0 %v260
        %344 = vmatprep.subr.bf16.mxu0 %v295
        %345 = vmatpush1.bf16.msra.mxu0 %v292
        %346 = vmatprep.subr.bf16.mxu0 0
        %347 = vmatpush1.bf16.msra.mxu0 0
        %348 = vmatprep.subr.bf16.mxu0 0
        %349 = vmatpush1.bf16.msra.mxu0 0
        %350 = vmatprep.subr.bf16.mxu0 0
        %351 = vmatpush1.bf16.msra.mxu0 0
        %352 = vmatprep.subr.bf16.mxu0 0
        %353 = vmatpush1.bf16.msra.mxu0 0
        %354 = vmatprep.subr.bf16.mxu0 0
        %355 = vmatpush1.bf16.msra.mxu0 0
        %356 = vmatprep.subr.bf16.mxu0 0
        %357 = vmatpush1.bf16.msra.mxu0 0
        %358 = vmatprep.subr.bf16.mxu0 0
        %359 = vmatpush1.bf16.msra.mxu0 0
        %360 = vmatprep.subr.bf16.mxu0 0
        %361 = vmatpush1.bf16.msra.mxu0 0
        %362 = vmatprep.subr.bf16.mxu0 0
        %363 = vmatpush1.bf16.msra.mxu0 0
        %364 = vmatprep.subr.bf16.mxu0 0
        %365 = vmatpush1.bf16.msra.mxu0 0
        %366 = vmatprep.subr.bf16.mxu0 0
        %367 = vmatpush1.bf16.msra.mxu0 0
        %368 = vmatprep.subr.bf16.mxu0 0
        %369 = vmatpush1.bf16.msra.mxu0 0
        %370 = vmatprep.mubr.bf16.mxu0 0
        %371 = vmatmul.mubr.bf16.gmra.mrb[0].mxu0 %v280
        %v372 = vpop.f32.mrb[0].mxu0
        %v373 = vadd.f32 0.0, %v372
        %v374 = vpop.f32.mrb[0].mxu0
        %v375 = vadd.f32 0.0, %v374
        %v376 = vpop.f32.mrb[0].mxu0
        %v377 = vpop.f32.mrb[0].mxu0
        %378 = vdwg.mxu0
        %v383 = vcombine.low %v332, %v334
        %v384 = vcombine.low %v373, %v375
        %387 = vst [vmem:[%s190] sm:$0xff] %v383
        %388 = vst [vmem:[%s190 + $0x8] sm:$0xff] %v384
        %s389 = smul.u32 4, %s13
        %p390 = scmp.lt.s32.totalorder %s389, 15
        %s391 = scalar_select %p390, %s389, 15
        %s392 = smul.addr %s391, 4
        %s393 = scalar_lea.vmem %s2, %s392
        // Predicated region
        $region52: #{resvit_generator.64} parent=46 // pred_check
          %p394 = pneg %p78
        $region53: #{resvit_generator.64} parent=46 // pred_check_branch
          %396 = sbr.rel (%p394) target = $region55
        $region54: #{resvit_generator.64} parent=46 // pred_region
          %s397 = smul.u32 4, %s13
        $region55: #{resvit_generator.64} parent=46 // pred_fallthru
          _
      $region47: #{resvit_generator.64} parent=5 // pred_fallthru
        _
      %p398 = scmp.le.s32.totalorder 2, %s8
      // Predicated region
      $region56: #{resvit_generator.64} parent=5 // pred_check
        %p399 = pneg %p398
      $region57: #{resvit_generator.64} parent=5 // pred_check_branch
        %401 = sbr.rel (%p399) target = $region59
      $region58: #{resvit_generator.64} parent=5 // pred_region
        %s402 = ssub.s32 %s8, 2
        // Predicated region
        $region60: #{resvit_generator.64} parent=58 // pred_check
          %p403 = pneg %p84
        $region61: #{resvit_generator.64} parent=58 // pred_check_branch
          %405 = sbr.rel (%p403) target = $region63
        $region62: #{resvit_generator.64} parent=58 // pred_region
          %s406 = smul.u32 4, %s14
          %p407 = scmp.lt.s32.totalorder %s406, 15
          %s408 = scalar_select %p407, %s406, 15
          %s409 = smul.addr %s408, 4
          %s410 = scalar_lea.vmem %s2, %s409
        $region63: #{resvit_generator.64} parent=58 // pred_fallthru
          _
      $region59: #{resvit_generator.64} parent=5 // pred_fallthru
        _
    $region6: #{resvit_generator.64} parent=1 // loop_footer
      %s12 = sadd.s32 1, %s8
    $region7: #{resvit_generator.64} parent=1 // loop_footer_branch
      %7 = sbr.rel target = $region3
    $region8: #{resvit_generator.64} parent=1 // loop_exit
      _

// kernel: resvit_generator.68
$region0: #{resvit_generator.68}
  #allocation0 [shape = 'u32[]', space=smem, size = 0x4, offset = 0x4, fixed_abs, tag = 'smem constant byte address 0x4 - core index']
  #allocation1 [shape = 'u32[144,128]{1,0:T(1,128)}', space=vmem, size = 0x12000, scoped, tag = 'internal scratch']
  %s0 = inlined_call_operand.vmem [shape: f32[8,512], index: 0, kind: input, shape index: {}]
  %s1 = inlined_call_operand.vmem [shape: f32[8,1], index: 1, kind: output, shape index: {0}]
  %s2 = inlined_call_operand.vmem [shape: f32[8,1], index: 2, kind: output, shape index: {1}]
  %3 = xla_tuple %s1, %s2
  %s4 = sld [smem:[#allocation0]]
  $region26: #{resvit_generator.68} parent=0
    _
  %s6 = ssub.s32 1, %s4
  %s7 = scalar_select 0, %s6, %s4
  // Predicated region
  $region2: #{resvit_generator.68} parent=0 // pred_check
    _
  $region3: #{resvit_generator.68} parent=0 // pred_check_branch
    %9 = sbr.rel (0) target = $region5
  $region4: #{resvit_generator.68} parent=0 // pred_region
    _
  $region5: #{resvit_generator.68} parent=0 // pred_fallthru
    _
  %p10 = scmp.eq.s32.totalorder 0, 0
  // Predicated region
  $region6: #{resvit_generator.68} parent=0 // pred_check
    %p11 = pneg %p10
  $region7: #{resvit_generator.68} parent=0 // pred_check_branch
    %13 = sbr.rel (%p11) target = $region9
  $region8: #{resvit_generator.68} parent=0 // pred_region
    %vm14 = vcmask 7168
    %15 = vst.msk [vmem:[%s1] sm:$0xff] %vm14, 0.0
    %16 = vst.msk [vmem:[%s2] sm:$0xff] %vm14, 0.0
  $region9: #{resvit_generator.68} parent=0 // pred_fallthru
    _
  %v17 = vld [vmem:[%s0] sm:$0xff]
  %v18 = vld [vmem:[%s0 + $0x8] sm:$0xff]
  %v19 = vld [vmem:[%s0 + $0x10] sm:$0xff]
  %v20 = vld [vmem:[%s0 + $0x18] sm:$0xff]
  %s21 = smul.u32 0, 512
  %v22 = vlaneseq
  %v23 = vand.u32 %v22, 127
  %v24 = vadd.s32 %v23, 128
  %v25 = vadd.s32 %v23, 256
  %v26 = vadd.s32 %v23, 384
  %v27 = vstv %s21
  %v28 = vadd.s32 %v27, %v23
  %v29 = vadd.s32 %v27, %v24
  %v30 = vadd.s32 %v27, %v25
  %v31 = vadd.s32 %v27, %v26
  %vm32 = vcmp.lt.s32.totalorder %v28, 512
  %vm33 = vcmp.lt.s32.totalorder %v29, 512
  %vm34 = vcmp.lt.s32.totalorder %v30, 512
  %vm35 = vcmp.lt.s32.totalorder %v31, 512
  %v36 = vsel %vm32, %v17, 0.0
  %v37 = vsel %vm33, %v18, 0.0
  %v38 = vsel %vm34, %v19, 0.0
  %v39 = vsel %vm35, %v20, 0.0
  %v40 = vld [vmem:[%s1] sm:$0xff]
  %v41 = vadd.f32 %v36, %v37
  %v42 = vadd.f32 %v41, %v38
  %v43 = vadd.f32 %v42, %v39
  %44 = vadd.xlane.f32.xlu0 %v43
  %v45 = vpop.xlane.xlu0 %44
  %v46 = vadd.f32 %v40, %v45
  %vm47 = vcmask 7168
  %48 = vst.msk [vmem:[%s1] sm:$0xff] %vm47, %v46
  %v49 = vld [vmem:[%s2] sm:$0xff]
  %v50 = vmul.f32 %v36, %v36
  %v51 = vmul.f32 %v37, %v37
  %v52 = vmul.f32 %v38, %v38
  %v53 = vmul.f32 %v39, %v39
  %v54 = vadd.f32 %v50, %v51
  %v55 = vadd.f32 %v54, %v52
  %v56 = vadd.f32 %v55, %v53
  %57 = vadd.xlane.f32.xlu0 %v56
  %v58 = vpop.xlane.xlu0 %57
  %v59 = vadd.f32 %v49, %v58
  %60 = vst.msk [vmem:[%s2] sm:$0xff] %vm47, %v59
  // Predicated region
  $region10: #{resvit_generator.68} parent=0 // pred_check
    _
  $region11: #{resvit_generator.68} parent=0 // pred_check_branch
    %62 = sbr.rel (0) target = $region13
  $region12: #{resvit_generator.68} parent=0 // pred_region
    _
  $region13: #{resvit_generator.68} parent=0 // pred_fallthru
    _
  // Predicated region
  $region14: #{resvit_generator.68} parent=0 // pred_check
    _
  $region15: #{resvit_generator.68} parent=0 // pred_check_branch
    %64 = sbr.rel (0) target = $region17
  $region16: #{resvit_generator.68} parent=0 // pred_region
    _
  $region17: #{resvit_generator.68} parent=0 // pred_fallthru
    _
  // Predicated region
  $region18: #{resvit_generator.68} parent=0 // pred_check
    _
  $region19: #{resvit_generator.68} parent=0 // pred_check_branch
    %66 = sbr.rel (0) target = $region21
  $region20: #{resvit_generator.68} parent=0 // pred_region
    _
  $region21: #{resvit_generator.68} parent=0 // pred_fallthru
    _
  // Predicated region
  $region22: #{resvit_generator.68} parent=0 // pred_check
    _
  $region23: #{resvit_generator.68} parent=0 // pred_check_branch
    %68 = sbr.rel (0) target = $region25
  $region24: #{resvit_generator.68} parent=0 // pred_region
    _
  $region25: #{resvit_generator.68} parent=0 // pred_fallthru
    _

// kernel: resvit_generator.67
$region0: #{resvit_generator.67}
  #allocation0 [shape = 'u32[]', space=smem, size = 0x4, offset = 0x4, fixed_abs, tag = 'smem constant byte address 0x4 - core index']
  #allocation1 [shape = 'u32[144,128]{1,0:T(1,128)}', space=vmem, size = 0x12000, scoped, tag = 'internal scratch']
  %s0 = inlined_call_operand.vmem [shape: bf16[8,36], index: 0, kind: input, shape index: {}]
  %s1 = inlined_call_operand.vmem [shape: bf16[36,512], index: 1, kind: input, shape index: {}]
  %s2 = inlined_call_operand.vmem [shape: f32[8,512], index: 2, kind: output, shape index: {}]
  %s3 = sld [smem:[#allocation0]]
  $region18: #{resvit_generator.67} parent=0
    _
  %s5 = ssub.s32 1, %s3
  %s6 = scalar_select 0, %s5, %s3
  // Predicated region
  $region2: #{resvit_generator.67} parent=0 // pred_check
    _
  $region3: #{resvit_generator.67} parent=0 // pred_check_branch
    %8 = sbr.rel (0) target = $region5
  $region4: #{resvit_generator.67} parent=0 // pred_region
    _
  $region5: #{resvit_generator.67} parent=0 // pred_fallthru
    _
  // Predicated region
  $region6: #{resvit_generator.67} parent=0 // pred_check
    _
  $region7: #{resvit_generator.67} parent=0 // pred_check_branch
    %10 = sbr.rel (0) target = $region9
  $region8: #{resvit_generator.67} parent=0 // pred_region
    _
  $region9: #{resvit_generator.67} parent=0 // pred_fallthru
    _
  %v12 = vld [vmem:[%s0] sm:$0xf]
  %v13 = vld [vmem:[%s1] sm:$0xff]
  %v14 = vld [vmem:[%s1 + $0x8] sm:$0xff]
  %v15 = vld [vmem:[%s1 + $0x10] sm:$0xff]
  %v16 = vld [vmem:[%s1 + $0x18] sm:$0xff]
  %v17 = vld [vmem:[%s1 + $0x20] sm:$0xff]
  %v18 = vld [vmem:[%s1 + $0x28] sm:$0xff]
  %v19 = vld [vmem:[%s1 + $0x30] sm:$0xff]
  %v20 = vld [vmem:[%s1 + $0x38] sm:$0xff]
  %v21 = vld [vmem:[%s1 + $0x40] sm:$0x33]
  %v22 = vld [vmem:[%s1 + $0x48] sm:$0x33]
  %v33 = vunpack.c.l.b16 %v13
  %v34 = vunpack.c.h.b16 %v13
  %v35 = vunpack.c.l.b16 %v14
  %v36 = vunpack.c.h.b16 %v14
  %v37 = vunpack.c.l.b16 %v15
  %v38 = vunpack.c.h.b16 %v15
  %v39 = vunpack.c.l.b16 %v16
  %v40 = vunpack.c.h.b16 %v16
  %v41 = vunpack.c.l.b16 %v17
  %v42 = vunpack.c.h.b16 %v17
  %v43 = vunpack.c.l.b16 %v18
  %v44 = vunpack.c.h.b16 %v18
  %v45 = vunpack.c.l.b16 %v19
  %v46 = vunpack.c.h.b16 %v19
  %v47 = vunpack.c.l.b16 %v20
  %v48 = vunpack.c.h.b16 %v20
  %v49 = vunpack.c.l.b16 %v21
  %v50 = vunpack.c.h.b16 %v21
  %v51 = vunpack.c.l.b16 %v22
  %v52 = vunpack.c.h.b16 %v22
  %v53 = vpack.c.b16 %v37, %v33
  %v54 = vpack.c.b16 %v38, %v34
  %v55 = vpack.c.b16 %v39, %v35
  %v56 = vpack.c.b16 %v40, %v36
  %v57 = vpack.c.b16 %v45, %v41
  %v58 = vpack.c.b16 %v46, %v42
  %v59 = vpack.c.b16 %v47, %v43
  %v60 = vpack.c.b16 %v48, %v44
  %v61 = vpack.c.b16 %v49, %v49
  %v62 = vpack.c.b16 %v50, %v50
  %v63 = vpack.c.b16 %v51, %v51
  %v64 = vpack.c.b16 %v52, %v52
  %vm73 = vcmask 293888
  %v75 = vsel %vm73, %v12, 0
  %vm77 = vcmask 1041408
  %v79 = vsel %vm77, %v61, 0
  %v82 = vsel %vm77, %v62, 0
  %v85 = vsel %vm77, %v63, 0
  %v88 = vsel %vm77, %v64, 0
  %90 = vmatprep.subr.bf16.mxu0 %v54
  %91 = vmatpush1.bf16.msra.mxu0 %v53
  %92 = vmatprep.subr.bf16.mxu0 %v58
  %93 = vmatpush1.bf16.msra.mxu0 %v57
  %94 = vmatprep.subr.bf16.mxu0 %v82
  %95 = vmatpush1.bf16.msra.mxu0 %v79
  %96 = vmatprep.subr.bf16.mxu0 0
  %97 = vmatpush1.bf16.msra.mxu0 0
  %98 = vmatprep.subr.bf16.mxu0 0
  %99 = vmatpush1.bf16.msra.mxu0 0
  %100 = vmatprep.subr.bf16.mxu0 0
  %101 = vmatpush1.bf16.msra.mxu0 0
  %102 = vmatprep.subr.bf16.mxu0 0
  %103 = vmatpush1.bf16.msra.mxu0 0
  %104 = vmatprep.subr.bf16.mxu0 0
  %105 = vmatpush1.bf16.msra.mxu0 0
  %106 = vmatprep.subr.bf16.mxu0 0
  %107 = vmatpush1.bf16.msra.mxu0 0
  %108 = vmatprep.subr.bf16.mxu0 0
  %109 = vmatpush1.bf16.msra.mxu0 0
  %110 = vmatprep.subr.bf16.mxu0 0
  %111 = vmatpush1.bf16.msra.mxu0 0
  %112 = vmatprep.subr.bf16.mxu0 0
  %113 = vmatpush1.bf16.msra.mxu0 0
  %114 = vmatprep.subr.bf16.mxu0 0
  %115 = vmatpush1.bf16.msra.mxu0 0
  %116 = vmatprep.subr.bf16.mxu0 0
  %117 = vmatpush1.bf16.msra.mxu0 0
  %118 = vmatprep.subr.bf16.mxu0 0
  %119 = vmatpush1.bf16.msra.mxu0 0
  %120 = vmatprep.subr.bf16.mxu0 0
  %121 = vmatpush1.bf16.msra.mxu0 0
  %122 = vmatprep.mubr.bf16.mxu0 0
  %123 = vmatmul.mubr.bf16.gmra.mrb[0].mxu0 %v75
  %v124 = vpop.f32.mrb[0].mxu0
  %v125 = vadd.f32 0.0, %v124
  %v126 = vpop.f32.mrb[0].mxu0
  %v127 = vadd.f32 0.0, %v126
  %v128 = vpop.f32.mrb[0].mxu0
  %v129 = vpop.f32.mrb[0].mxu0
  %130 = vdwg.mxu0
  %131 = vmatprep.subr.bf16.mxu0 %v56
  %132 = vmatpush1.bf16.msra.mxu0 %v55
  %133 = vmatprep.subr.bf16.mxu0 %v60
  %134 = vmatpush1.bf16.msra.mxu0 %v59
  %135 = vmatprep.subr.bf16.mxu0 %v88
  %136 = vmatpush1.bf16.msra.mxu0 %v85
  %137 = vmatprep.subr.bf16.mxu0 0
  %138 = vmatpush1.bf16.msra.mxu0 0
  %139 = vmatprep.subr.bf16.mxu0 0
  %140 = vmatpush1.bf16.msra.mxu0 0
  %141 = vmatprep.subr.bf16.mxu0 0
  %142 = vmatpush1.bf16.msra.mxu0 0
  %143 = vmatprep.subr.bf16.mxu0 0
  %144 = vmatpush1.bf16.msra.mxu0 0
  %145 = vmatprep.subr.bf16.mxu0 0
  %146 = vmatpush1.bf16.msra.mxu0 0
  %147 = vmatprep.subr.bf16.mxu0 0
  %148 = vmatpush1.bf16.msra.mxu0 0
  %149 = vmatprep.subr.bf16.mxu0 0
  %150 = vmatpush1.bf16.msra.mxu0 0
  %151 = vmatprep.subr.bf16.mxu0 0
  %152 = vmatpush1.bf16.msra.mxu0 0
  %153 = vmatprep.subr.bf16.mxu0 0
  %154 = vmatpush1.bf16.msra.mxu0 0
  %155 = vmatprep.subr.bf16.mxu0 0
  %156 = vmatpush1.bf16.msra.mxu0 0
  %157 = vmatprep.subr.bf16.mxu0 0
  %158 = vmatpush1.bf16.msra.mxu0 0
  %159 = vmatprep.subr.bf16.mxu0 0
  %160 = vmatpush1.bf16.msra.mxu0 0
  %161 = vmatprep.subr.bf16.mxu0 0
  %162 = vmatpush1.bf16.msra.mxu0 0
  %163 = vmatprep.mubr.bf16.mxu0 0
  %164 = vmatmul.mubr.bf16.gmra.mrb[0].mxu0 %v75
  %v165 = vpop.f32.mrb[0].mxu0
  %v166 = vadd.f32 0.0, %v165
  %v167 = vpop.f32.mrb[0].mxu0
  %v168 = vadd.f32 0.0, %v167
  %v169 = vpop.f32.mrb[0].mxu0
  %v170 = vpop.f32.mrb[0].mxu0
  %171 = vdwg.mxu0
  %172 = vst [vmem:[%s2] sm:$0xff] %v125
  %173 = vst [vmem:[%s2 + $0x8] sm:$0xff] %v127
  %174 = vst [vmem:[%s2 + $0x10] sm:$0xff] %v166
  %175 = vst [vmem:[%s2 + $0x18] sm:$0xff] %v168
  // Predicated region
  $region10: #{resvit_generator.67} parent=0 // pred_check
    _
  $region11: #{resvit_generator.67} parent=0 // pred_check_branch
    %177 = sbr.rel (0) target = $region13
  $region12: #{resvit_generator.67} parent=0 // pred_region
    _
  $region13: #{resvit_generator.67} parent=0 // pred_fallthru
    _
  // Predicated region
  $region14: #{resvit_generator.67} parent=0 // pred_check
    _
  $region15: #{resvit_generator.67} parent=0 // pred_check_branch
    %179 = sbr.rel (0) target = $region17
  $region16: #{resvit_generator.67} parent=0 // pred_region
    _
  $region17: #{resvit_generator.67} parent=0 // pred_fallthru
    _

// kernel: resvit_generator.69
$region0: #{resvit_generator.69}
  #allocation0 [shape = 'u32[]', space=smem, size = 0x4, offset = 0x4, fixed_abs, tag = 'smem constant byte address 0x4 - core index']
  #allocation1 [shape = 'u32[144,128]{1,0:T(1,128)}', space=vmem, size = 0x12000, scoped, tag = 'internal scratch']
  %s0 = inlined_call_operand.vmem [shape: f32[8,512], index: 0, kind: input, shape index: {}]
  %s1 = inlined_call_operand.vmem [shape: f32[8,1], index: 1, kind: input, shape index: {}]
  %s2 = inlined_call_operand.vmem [shape: f32[8,1], index: 2, kind: input, shape index: {}]
  %s3 = inlined_call_operand.vmem [shape: f32[8,1], index: 3, kind: input, shape index: {}]
  %s4 = inlined_call_operand.vmem [shape: f32[8,1], index: 4, kind: input, shape index: {}]
  %s5 = inlined_call_operand.vmem [shape: f32[8,512], index: 5, kind: output, shape index: {}]
  %s6 = sld [smem:[#allocation0]]
  $region30: #{resvit_generator.69} parent=0
    _
  %s8 = ssub.s32 1, %s6
  %s9 = scalar_select 0, %s8, %s6
  // Predicated region
  $region2: #{resvit_generator.69} parent=0 // pred_check
    _
  $region3: #{resvit_generator.69} parent=0 // pred_check_branch
    %11 = sbr.rel (0) target = $region5
  $region4: #{resvit_generator.69} parent=0 // pred_region
    _
  $region5: #{resvit_generator.69} parent=0 // pred_fallthru
    _
  // Predicated region
  $region6: #{resvit_generator.69} parent=0 // pred_check
    _
  $region7: #{resvit_generator.69} parent=0 // pred_check_branch
    %13 = sbr.rel (0) target = $region9
  $region8: #{resvit_generator.69} parent=0 // pred_region
    _
  $region9: #{resvit_generator.69} parent=0 // pred_fallthru
    _
  // Predicated region
  $region10: #{resvit_generator.69} parent=0 // pred_check
    _
  $region11: #{resvit_generator.69} parent=0 // pred_check_branch
    %15 = sbr.rel (0) target = $region13
  $region12: #{resvit_generator.69} parent=0 // pred_region
    _
  $region13: #{resvit_generator.69} parent=0 // pred_fallthru
    _
  // Predicated region
  $region14: #{resvit_generator.69} parent=0 // pred_check
    _
  $region15: #{resvit_generator.69} parent=0 // pred_check_branch
    %17 = sbr.rel (0) target = $region17
  $region16: #{resvit_generator.69} parent=0 // pred_region
    _
  $region17: #{resvit_generator.69} parent=0 // pred_fallthru
    _
  // Predicated region
  $region18: #{resvit_generator.69} parent=0 // pred_check
    _
  $region19: #{resvit_generator.69} parent=0 // pred_check_branch
    %19 = sbr.rel (0) target = $region21
  $region20: #{resvit_generator.69} parent=0 // pred_region
    _
  $region21: #{resvit_generator.69} parent=0 // pred_fallthru
    _
  %v20 = vld [vmem:[%s1] sm:$0xff]
  %v21 = vmul.f32 %v20, 0.001953125
  %v22 = vld [vmem:[%s2] sm:$0xff]
  %v23 = vmul.f32 %v22, 0.001953125
  %v24 = vmul.f32 %v21, %v21
  %v25 = vsub.f32 %v23, %v24
  %v26 = vmax.f32 %v25, 0.0
  %v27 = vadd.f32 %v26, 1e-05
  %v28 = vrsqrt.pop %v27
  %v29 = vld [vmem:[%s3] sm:$0xff]
  %v30 = vmul.f32 %v28, %v29
  %v31 = vld [vmem:[%s0] sm:$0xff]
  %v32 = vld [vmem:[%s0 + $0x8] sm:$0xff]
  %v33 = vld [vmem:[%s0 + $0x10] sm:$0xff]
  %v34 = vld [vmem:[%s0 + $0x18] sm:$0xff]
  %36 = vset.pattern.permute.xlu0 0
  %37 = vperm.xlu0 %36, %v21
  %v38 = vpop.permute.xlu0 %37
  %v40 = vsub.f32 %v31, %v38
  %v41 = vsub.f32 %v32, %v38
  %v42 = vsub.f32 %v33, %v38
  %v43 = vsub.f32 %v34, %v38
  %45 = vset.pattern.permute.xlu0 0
  %46 = vperm.xlu0 %45, %v30
  %v47 = vpop.permute.xlu0 %46
  %v49 = vmul.f32 %v40, %v47
  %v50 = vmul.f32 %v41, %v47
  %v51 = vmul.f32 %v42, %v47
  %v52 = vmul.f32 %v43, %v47
  %v53 = vld [vmem:[%s4] sm:$0xff]
  %55 = vset.pattern.permute.xlu0 0
  %56 = vperm.xlu0 %55, %v53
  %v57 = vpop.permute.xlu0 %56
  %v59 = vadd.f32 %v49, %v57
  %v60 = vadd.f32 %v50, %v57
  %v61 = vadd.f32 %v51, %v57
  %v62 = vadd.f32 %v52, %v57
  %v63 = vmax.f32 %v59, 0.0
  %v64 = vmax.f32 %v60, 0.0
  %v65 = vmax.f32 %v61, 0.0
  %v66 = vmax.f32 %v62, 0.0
  %67 = vst [vmem:[%s5] sm:$0xff] %v63
  %68 = vst [vmem:[%s5 + $0x8] sm:$0xff] %v64
  %69 = vst [vmem:[%s5 + $0x10] sm:$0xff] %v65
  %70 = vst [vmem:[%s5 + $0x18] sm:$0xff] %v66
  // Predicated region
  $region22: #{resvit_generator.69} parent=0 // pred_check
    _
  $region23: #{resvit_generator.69} parent=0 // pred_check_branch
    %72 = sbr.rel (0) target = $region25
  $region24: #{resvit_generator.69} parent=0 // pred_region
    _
  $region25: #{resvit_generator.69} parent=0 // pred_fallthru
    _
  // Predicated region
  $region26: #{resvit_generator.69} parent=0 // pred_check
    _
  $region27: #{resvit_generator.69} parent=0 // pred_check_branch
    %74 = sbr.rel (0) target = $region29
  $region28: #{resvit_generator.69} parent=0 // pred_region
    _
  $region29: #{resvit_generator.69} parent=0 // pred_fallthru
    _

// kernel: resvit_generator.70
$region0: #{resvit_generator.70}
  #allocation0 [shape = 'u32[]', space=smem, size = 0x4, offset = 0x4, fixed_abs, tag = 'smem constant byte address 0x4 - core index']
  #allocation1 [shape = 'u32[144,128]{1,0:T(1,128)}', space=vmem, size = 0x12000, scoped, tag = 'internal scratch']
  %s0 = inlined_call_operand.vmem [shape: bf16[16,72], index: 0, kind: input, shape index: {}]
  %s1 = inlined_call_operand.vmem [shape: bf16[72,128], index: 1, kind: input, shape index: {}]
  %s2 = inlined_call_operand.vmem [shape: f32[16,128], index: 2, kind: output, shape index: {}]
  %s3 = sld [smem:[#allocation0]]
  $region18: #{resvit_generator.70} parent=0
    _
  %s5 = ssub.s32 1, %s3
  %s6 = scalar_select 0, %s5, %s3
  // Predicated region
  $region2: #{resvit_generator.70} parent=0 // pred_check
    _
  $region3: #{resvit_generator.70} parent=0 // pred_check_branch
    %8 = sbr.rel (0) target = $region5
  $region4: #{resvit_generator.70} parent=0 // pred_region
    _
  $region5: #{resvit_generator.70} parent=0 // pred_fallthru
    _
  // Predicated region
  $region6: #{resvit_generator.70} parent=0 // pred_check
    _
  $region7: #{resvit_generator.70} parent=0 // pred_check_branch
    %10 = sbr.rel (0) target = $region9
  $region8: #{resvit_generator.70} parent=0 // pred_region
    _
  $region9: #{resvit_generator.70} parent=0 // pred_fallthru
    _
  %v12 = vld [vmem:[%s0] sm:$0xf]
  %v13 = vld [vmem:[%s0 + $0x4] sm:$0xf]
  %v14 = vld [vmem:[%s1] sm:$0xf]
  %v15 = vld [vmem:[%s1 + $0x4] sm:$0xf]
  %v16 = vld [vmem:[%s1 + $0x8] sm:$0xf]
  %v17 = vld [vmem:[%s1 + $0xc] sm:$0xf]
  %v18 = vld [vmem:[%s1 + $0x10] sm:$0xf]
  %v19 = vld [vmem:[%s1 + $0x14] sm:$0xf]
  %v20 = vld [vmem:[%s1 + $0x18] sm:$0xf]
  %v21 = vld [vmem:[%s1 + $0x1c] sm:$0xf]
  %v22 = vld [vmem:[%s1 + $0x20] sm:$0xf]
  %v25 = vunpack.c.l.b16 %v12
  %v26 = vunpack.c.l.b16 %v13
  %v27 = vpack.c.b16 %v26, %v25
  %v37 = vunpack.c.l.b16 %v14
  %v38 = vunpack.c.l.b16 %v15
  %v39 = vunpack.c.l.b16 %v16
  %v40 = vunpack.c.l.b16 %v17
  %v41 = vunpack.c.l.b16 %v18
  %v42 = vunpack.c.l.b16 %v19
  %v43 = vunpack.c.l.b16 %v20
  %v44 = vunpack.c.l.b16 %v21
  %v45 = vunpack.c.l.b16 %v22
  %v46 = vpack.c.b16 %v38, %v37
  %v47 = vpack.c.b16 %v40, %v39
  %v48 = vpack.c.b16 %v42, %v41
  %v49 = vpack.c.b16 %v44, %v43
  %v50 = vpack.c.b16 %v45, %v45
  %vm55 = vcmask 588800
  %v57 = vsel %vm55, %v27, 0
  %vm59 = vcmask 1043456
  %v61 = vsel %vm59, %v50, 0
  %63 = vmatprep.subr.bf16.mxu0 0
  %64 = vmatpush1.bf16.msra.mxu0 %v46
  %65 = vmatprep.subr.bf16.mxu0 0
  %66 = vmatpush1.bf16.msra.mxu0 %v47
  %67 = vmatprep.subr.bf16.mxu0 0
  %68 = vmatpush1.bf16.msra.mxu0 %v48
  %69 = vmatprep.subr.bf16.mxu0 0
  %70 = vmatpush1.bf16.msra.mxu0 %v49
  %71 = vmatprep.subr.bf16.mxu0 0
  %72 = vmatpush1.bf16.msra.mxu0 %v61
  %73 = vmatprep.subr.bf16.mxu0 0
  %74 = vmatpush1.bf16.msra.mxu0 0
  %75 = vmatprep.subr.bf16.mxu0 0
  %76 = vmatpush1.bf16.msra.mxu0 0
  %77 = vmatprep.subr.bf16.mxu0 0
  %78 = vmatpush1.bf16.msra.mxu0 0
  %79 = vmatprep.subr.bf16.mxu0 0
  %80 = vmatpush1.bf16.msra.mxu0 0
  %81 = vmatprep.subr.bf16.mxu0 0
  %82 = vmatpush1.bf16.msra.mxu0 0
  %83 = vmatprep.subr.bf16.mxu0 0
  %84 = vmatpush1.bf16.msra.mxu0 0
  %85 = vmatprep.subr.bf16.mxu0 0
  %86 = vmatpush1.bf16.msra.mxu0 0
  %87 = vmatprep.subr.bf16.mxu0 0
  %88 = vmatpush1.bf16.msra.mxu0 0
  %89 = vmatprep.subr.bf16.mxu0 0
  %90 = vmatpush1.bf16.msra.mxu0 0
  %91 = vmatprep.subr.bf16.mxu0 0
  %92 = vmatpush1.bf16.msra.mxu0 0
  %93 = vmatprep.subr.bf16.mxu0 0
  %94 = vmatpush1.bf16.msra.mxu0 0
  %95 = vmatprep.mubr.bf16.mxu0 0
  %96 = vmatmul.mubr.bf16.gmra.mrb[0].mxu0 %v57
  %v97 = vpop.f32.mrb[0].mxu0
  %v98 = vadd.f32 0.0, %v97
  %v99 = vpop.f32.mrb[0].mxu0
  %v100 = vpop.f32.mrb[0].mxu0
  %v101 = vadd.f32 0.0, %v100
  %v102 = vpop.f32.mrb[0].mxu0
  %103 = vdwg.mxu0
  %104 = vst [vmem:[%s2] sm:$0xff] %v98
  %105 = vst [vmem:[%s2 + $0x8] sm:$0xff] %v101
  // Predicated region
  $region10: #{resvit_generator.70} parent=0 // pred_check
    _
  $region11: #{resvit_generator.70} parent=0 // pred_check_branch
    %107 = sbr.rel (0) target = $region13
  $region12: #{resvit_generator.70} parent=0 // pred_region
    _
  $region13: #{resvit_generator.70} parent=0 // pred_fallthru
    _
  // Predicated region
  $region14: #{resvit_generator.70} parent=0 // pred_check
    _
  $region15: #{resvit_generator.70} parent=0 // pred_check_branch
    %109 = sbr.rel (0) target = $region17
  $region16: #{resvit_generator.70} parent=0 // pred_region
    _
  $region17: #{resvit_generator.70} parent=0 // pred_fallthru
    _

// kernel: resvit_generator.71
$region0: #{resvit_generator.71}
  #allocation0 [shape = 'u32[]', space=smem, size = 0x4, offset = 0x4, fixed_abs, tag = 'smem constant byte address 0x4 - core index']
  #allocation1 [shape = 'u32[144,128]{1,0:T(1,128)}', space=vmem, size = 0x12000, scoped, tag = 'internal scratch']
  %s0 = inlined_call_operand.vmem [shape: f32[16,128], index: 0, kind: input, shape index: {}]
  %s1 = inlined_call_operand.vmem [shape: f32[16,1], index: 1, kind: output, shape index: {0}]
  %s2 = inlined_call_operand.vmem [shape: f32[16,1], index: 2, kind: output, shape index: {1}]
  %3 = xla_tuple %s1, %s2
  %s4 = sld [smem:[#allocation0]]
  $region26: #{resvit_generator.71} parent=0
    _
  %s6 = ssub.s32 1, %s4
  %s7 = scalar_select 0, %s6, %s4
  // Predicated region
  $region2: #{resvit_generator.71} parent=0 // pred_check
    _
  $region3: #{resvit_generator.71} parent=0 // pred_check_branch
    %9 = sbr.rel (0) target = $region5
  $region4: #{resvit_generator.71} parent=0 // pred_region
    _
  $region5: #{resvit_generator.71} parent=0 // pred_fallthru
    _
  %p10 = scmp.eq.s32.totalorder 0, 0
  // Predicated region
  $region6: #{resvit_generator.71} parent=0 // pred_check
    %p11 = pneg %p10
  $region7: #{resvit_generator.71} parent=0 // pred_check_branch
    %13 = sbr.rel (%p11) target = $region9
  $region8: #{resvit_generator.71} parent=0 // pred_region
    %vm14 = vcmask 7168
    %15 = vst.msk [vmem:[%s1] sm:$0xff] %vm14, 0.0
    %16 = vst.msk [vmem:[%s1 + $0x8] sm:$0xff] %vm14, 0.0
    %17 = vst.msk [vmem:[%s2] sm:$0xff] %vm14, 0.0
    %18 = vst.msk [vmem:[%s2 + $0x8] sm:$0xff] %vm14, 0.0
  $region9: #{resvit_generator.71} parent=0 // pred_fallthru
    _
  %v19 = vld [vmem:[%s0] sm:$0xff]
  %v20 = vld [vmem:[%s0 + $0x8] sm:$0xff]
  %s21 = smul.u32 0, 128
  %v22 = vlaneseq
  %v23 = vand.u32 %v22, 127
  %v24 = vstv %s21
  %v25 = vadd.s32 %v24, %v23
  %vm26 = vcmp.lt.s32.totalorder %v25, 128
  %v27 = vsel %vm26, %v19, 0.0
  %v28 = vsel %vm26, %v20, 0.0
  %v29 = vld [vmem:[%s1] sm:$0xff]
  %v30 = vld [vmem:[%s1 + $0x8] sm:$0xff]
  %31 = vadd.xlane.f32.xlu0 %v27
  %v32 = vpop.xlane.xlu0 %31
  %33 = vadd.xlane.f32.xlu0 %v28
  %v34 = vpop.xlane.xlu0 %33
  %v35 = vadd.f32 %v29, %v32
  %v36 = vadd.f32 %v30, %v34
  %vm37 = vcmask 7168
  %38 = vst.msk [vmem:[%s1] sm:$0xff] %vm37, %v35
  %39 = vst.msk [vmem:[%s1 + $0x8] sm:$0xff] %vm37, %v36
  %v40 = vld [vmem:[%s2] sm:$0xff]
  %v41 = vld [vmem:[%s2 + $0x8] sm:$0xff]
  %v42 = vmul.f32 %v27, %v27
  %v43 = vmul.f32 %v28, %v28
  %44 = vadd.xlane.f32.xlu0 %v42
  %v45 = vpop.xlane.xlu0 %44
  %46 = vadd.xlane.f32.xlu0 %v43
  %v47 = vpop.xlane.xlu0 %46
  %v48 = vadd.f32 %v40, %v45
  %v49 = vadd.f32 %v41, %v47
  %50 = vst.msk [vmem:[%s2] sm:$0xff] %vm37, %v48
  %51 = vst.msk [vmem:[%s2 + $0x8] sm:$0xff] %vm37, %v49
  // Predicated region
  $region10: #{resvit_generator.71} parent=0 // pred_check
    _
  $region11: #{resvit_generator.71} parent=0 // pred_check_branch
    %53 = sbr.rel (0) target = $region13
  $region12: #{resvit_generator.71} parent=0 // pred_region
    _
  $region13: #{resvit_generator.71} parent=0 // pred_fallthru
    _
  // Predicated region
  $region14: #{resvit_generator.71} parent=0 // pred_check
    _
  $region15: #{resvit_generator.71} parent=0 // pred_check_branch
    %55 = sbr.rel (0) target = $region17
  $region16: #{resvit_generator.71} parent=0 // pred_region
    _
  $region17: #{resvit_generator.71} parent=0 // pred_fallthru
    _
  // Predicated region
  $region18: #{resvit_generator.71} parent=0 // pred_check
    _
  $region19: #{resvit_generator.71} parent=0 // pred_check_branch
    %57 = sbr.rel (0) target = $region21
  $region20: #{resvit_generator.71} parent=0 // pred_region
    _
  $region21: #{resvit_generator.71} parent=0 // pred_fallthru
    _
  // Predicated region
  $region22: #{resvit_generator.71} parent=0 // pred_check
    _
  $region23: #{resvit_generator.71} parent=0 // pred_check_branch
    %59 = sbr.rel (0) target = $region25
  $region24: #{resvit_generator.71} parent=0 // pred_region
    _
  $region25: #{resvit_generator.71} parent=0 // pred_fallthru
    _

// kernel: resvit_generator.72
$region0: #{resvit_generator.72}
  #allocation0 [shape = 'u32[]', space=smem, size = 0x4, offset = 0x4, fixed_abs, tag = 'smem constant byte address 0x4 - core index']
  #allocation1 [shape = 'u32[144,128]{1,0:T(1,128)}', space=vmem, size = 0x12000, scoped, tag = 'internal scratch']
  %s0 = inlined_call_operand.vmem [shape: f32[16,128], index: 0, kind: input, shape index: {}]
  %s1 = inlined_call_operand.vmem [shape: f32[16,1], index: 1, kind: input, shape index: {}]
  %s2 = inlined_call_operand.vmem [shape: f32[16,1], index: 2, kind: input, shape index: {}]
  %s3 = inlined_call_operand.vmem [shape: f32[16,1], index: 3, kind: input, shape index: {}]
  %s4 = inlined_call_operand.vmem [shape: f32[16,1], index: 4, kind: input, shape index: {}]
  %s5 = inlined_call_operand.vmem [shape: f32[16,128], index: 5, kind: output, shape index: {}]
  %s6 = sld [smem:[#allocation0]]
  $region30: #{resvit_generator.72} parent=0
    _
  %s8 = ssub.s32 1, %s6
  %s9 = scalar_select 0, %s8, %s6
  // Predicated region
  $region2: #{resvit_generator.72} parent=0 // pred_check
    _
  $region3: #{resvit_generator.72} parent=0 // pred_check_branch
    %11 = sbr.rel (0) target = $region5
  $region4: #{resvit_generator.72} parent=0 // pred_region
    _
  $region5: #{resvit_generator.72} parent=0 // pred_fallthru
    _
  // Predicated region
  $region6: #{resvit_generator.72} parent=0 // pred_check
    _
  $region7: #{resvit_generator.72} parent=0 // pred_check_branch
    %13 = sbr.rel (0) target = $region9
  $region8: #{resvit_generator.72} parent=0 // pred_region
    _
  $region9: #{resvit_generator.72} parent=0 // pred_fallthru
    _
  // Predicated region
  $region10: #{resvit_generator.72} parent=0 // pred_check
    _
  $region11: #{resvit_generator.72} parent=0 // pred_check_branch
    %15 = sbr.rel (0) target = $region13
  $region12: #{resvit_generator.72} parent=0 // pred_region
    _
  $region13: #{resvit_generator.72} parent=0 // pred_fallthru
    _
  // Predicated region
  $region14: #{resvit_generator.72} parent=0 // pred_check
    _
  $region15: #{resvit_generator.72} parent=0 // pred_check_branch
    %17 = sbr.rel (0) target = $region17
  $region16: #{resvit_generator.72} parent=0 // pred_region
    _
  $region17: #{resvit_generator.72} parent=0 // pred_fallthru
    _
  // Predicated region
  $region18: #{resvit_generator.72} parent=0 // pred_check
    _
  $region19: #{resvit_generator.72} parent=0 // pred_check_branch
    %19 = sbr.rel (0) target = $region21
  $region20: #{resvit_generator.72} parent=0 // pred_region
    _
  $region21: #{resvit_generator.72} parent=0 // pred_fallthru
    _
  %v20 = vld [vmem:[%s1] sm:$0xff]
  %v21 = vld [vmem:[%s1 + $0x8] sm:$0xff]
  %v22 = vmul.f32 %v20, 0.0078125
  %v23 = vmul.f32 %v21, 0.0078125
  %v24 = vld [vmem:[%s2] sm:$0xff]
  %v25 = vld [vmem:[%s2 + $0x8] sm:$0xff]
  %v26 = vmul.f32 %v24, 0.0078125
  %v27 = vmul.f32 %v25, 0.0078125
  %v28 = vmul.f32 %v22, %v22
  %v29 = vmul.f32 %v23, %v23
  %v30 = vsub.f32 %v26, %v28
  %v31 = vsub.f32 %v27, %v29
  %v32 = vmax.f32 %v30, 0.0
  %v33 = vmax.f32 %v31, 0.0
  %v34 = vadd.f32 %v32, 1e-05
  %v35 = vadd.f32 %v33, 1e-05
  %v36 = vrsqrt.pop %v34
  %v37 = vrsqrt.pop %v35
  %v38 = vld [vmem:[%s3] sm:$0xff]
  %v39 = vld [vmem:[%s3 + $0x8] sm:$0xff]
  %v40 = vmul.f32 %v36, %v38
  %v41 = vmul.f32 %v37, %v39
  %v42 = vld [vmem:[%s0] sm:$0xff]
  %v43 = vld [vmem:[%s0 + $0x8] sm:$0xff]
  %45 = vset.pattern.permute.xlu0 0
  %46 = vperm.xlu0 %45, %v22
  %v47 = vpop.permute.xlu0 %46
  %50 = vset.pattern.permute.xlu0 0
  %51 = vperm.xlu0 %50, %v23
  %v52 = vpop.permute.xlu0 %51
  %v54 = vsub.f32 %v42, %v47
  %v55 = vsub.f32 %v43, %v52
  %57 = vset.pattern.permute.xlu0 0
  %58 = vperm.xlu0 %57, %v40
  %v59 = vpop.permute.xlu0 %58
  %62 = vset.pattern.permute.xlu0 0
  %63 = vperm.xlu0 %62, %v41
  %v64 = vpop.permute.xlu0 %63
  %v66 = vmul.f32 %v54, %v59
  %v67 = vmul.f32 %v55, %v64
  %v68 = vld [vmem:[%s4] sm:$0xff]
  %v69 = vld [vmem:[%s4 + $0x8] sm:$0xff]
  %71 = vset.pattern.permute.xlu0 0
  %72 = vperm.xlu0 %71, %v68
  %v73 = vpop.permute.xlu0 %72
  %76 = vset.pattern.permute.xlu0 0
  %77 = vperm.xlu0 %76, %v69
  %v78 = vpop.permute.xlu0 %77
  %v80 = vadd.f32 %v66, %v73
  %v81 = vadd.f32 %v67, %v78
  %v82 = vmax.f32 %v80, 0.0
  %v83 = vmax.f32 %v81, 0.0
  %84 = vst [vmem:[%s5] sm:$0xff] %v82
  %85 = vst [vmem:[%s5 + $0x8] sm:$0xff] %v83
  // Predicated region
  $region22: #{resvit_generator.72} parent=0 // pred_check
    _
  $region23: #{resvit_generator.72} parent=0 // pred_check_branch
    %87 = sbr.rel (0) target = $region25
  $region24: #{resvit_generator.72} parent=0 // pred_region
    _
  $region25: #{resvit_generator.72} parent=0 // pred_fallthru
    _
  // Predicated region
  $region26: #{resvit_generator.72} parent=0 // pred_check
    _
  $region27: #{resvit_generator.72} parent=0 // pred_check_branch
    %89 = sbr.rel (0) target = $region29
  $region28: #{resvit_generator.72} parent=0 // pred_region
    _
  $region29: #{resvit_generator.72} parent=0 // pred_fallthru
    _

// kernel: resvit_generator.73
$region0: #{resvit_generator.73}
  #allocation0 [shape = 'u32[]', space=smem, size = 0x4, offset = 0x4, fixed_abs, tag = 'smem constant byte address 0x4 - core index']
  #allocation1 [shape = 'u32[144,128]{1,0:T(1,128)}', space=vmem, size = 0x12000, scoped, tag = 'internal scratch']
  %s0 = inlined_call_operand.vmem [shape: bf16[32,16], index: 0, kind: input, shape index: {}]
  %s1 = inlined_call_operand.vmem [shape: bf16[16,128], index: 1, kind: input, shape index: {}]
  %s2 = inlined_call_operand.vmem [shape: f32[32,1], index: 2, kind: input, shape index: {}]
  %s3 = inlined_call_operand.vmem [shape: f32[32,128], index: 3, kind: output, shape index: {}]
  %s4 = sld [smem:[#allocation0]]
  $region22: #{resvit_generator.73} parent=0
    _
  %s6 = ssub.s32 1, %s4
  %s7 = scalar_select 0, %s6, %s4
  // Predicated region
  $region2: #{resvit_generator.73} parent=0 // pred_check
    _
  $region3: #{resvit_generator.73} parent=0 // pred_check_branch
    %9 = sbr.rel (0) target = $region5
  $region4: #{resvit_generator.73} parent=0 // pred_region
    _
  $region5: #{resvit_generator.73} parent=0 // pred_fallthru
    _
  // Predicated region
  $region6: #{resvit_generator.73} parent=0 // pred_check
    _
  $region7: #{resvit_generator.73} parent=0 // pred_check_branch
    %11 = sbr.rel (0) target = $region9
  $region8: #{resvit_generator.73} parent=0 // pred_region
    _
  $region9: #{resvit_generator.73} parent=0 // pred_fallthru
    _
  // Predicated region
  $region10: #{resvit_generator.73} parent=0 // pred_check
    _
  $region11: #{resvit_generator.73} parent=0 // pred_check_branch
    %13 = sbr.rel (0) target = $region13
  $region12: #{resvit_generator.73} parent=0 // pred_region
    _
  $region13: #{resvit_generator.73} parent=0 // pred_fallthru
    _
  %v15 = vld [vmem:[%s0] sm:$0xf]
  %v16 = vld [vmem:[%s0 + $0x4] sm:$0xf]
  %v17 = vld [vmem:[%s0 + $0x8] sm:$0xf]
  %v18 = vld [vmem:[%s0 + $0xc] sm:$0xf]
  %v19 = vld [vmem:[%s1] sm:$0xf]
  %v20 = vld [vmem:[%s1 + $0x4] sm:$0xf]
  %v21 = vld [vmem:[%s2] sm:$0xff]
  %v22 = vld [vmem:[%s2 + $0x8] sm:$0xff]
  %v23 = vld [vmem:[%s2 + $0x10] sm:$0xff]
  %v24 = vld [vmem:[%s2 + $0x18] sm:$0xff]
  %26 = vset.pattern.permute.xlu0 0
  %27 = vperm.xlu0 %26, %v21
  %v28 = vpop.permute.xlu0 %27
  %31 = vset.pattern.permute.xlu0 0
  %32 = vperm.xlu0 %31, %v22
  %v33 = vpop.permute.xlu0 %32
  %36 = vset.pattern.permute.xlu0 0
  %37 = vperm.xlu0 %36, %v23
  %v38 = vpop.permute.xlu0 %37
  %41 = vset.pattern.permute.xlu0 0
  %42 = vperm.xlu0 %41, %v24
  %v43 = vpop.permute.xlu0 %42
  %v49 = vunpack.c.l.b16 %v15
  %v50 = vunpack.c.l.b16 %v16
  %v51 = vunpack.c.l.b16 %v17
  %v52 = vunpack.c.l.b16 %v18
  %v53 = vpack.c.b16 %v50, %v49
  %v54 = vpack.c.b16 %v52, %v51
  %v57 = vunpack.c.l.b16 %v19
  %v58 = vunpack.c.l.b16 %v20
  %v59 = vpack.c.b16 %v58, %v57
  %vm61 = vcmask 130048
  %v63 = vsel %vm61, %v53, 0
  %v66 = vsel %vm61, %v54, 0
  %68 = vmatprep.subr.bf16.mxu0 0
  %69 = vmatpush1.bf16.msra.mxu0 %v59
  %70 = vmatprep.subr.bf16.mxu0 0
  %71 = vmatpush1.bf16.msra.mxu0 0
  %72 = vmatprep.subr.bf16.mxu0 0
  %73 = vmatpush1.bf16.msra.mxu0 0
  %74 = vmatprep.subr.bf16.mxu0 0
  %75 = vmatpush1.bf16.msra.mxu0 0
  %76 = vmatprep.subr.bf16.mxu0 0
  %77 = vmatpush1.bf16.msra.mxu0 0
  %78 = vmatprep.subr.bf16.mxu0 0
  %79 = vmatpush1.bf16.msra.mxu0 0
  %80 = vmatprep.subr.bf16.mxu0 0
  %81 = vmatpush1.bf16.msra.mxu0 0
  %82 = vmatprep.subr.bf16.mxu0 0
  %83 = vmatpush1.bf16.msra.mxu0 0
  %84 = vmatprep.subr.bf16.mxu0 0
  %85 = vmatpush1.bf16.msra.mxu0 0
  %86 = vmatprep.subr.bf16.mxu0 0
  %87 = vmatpush1.bf16.msra.mxu0 0
  %88 = vmatprep.subr.bf16.mxu0 0
  %89 = vmatpush1.bf16.msra.mxu0 0
  %90 = vmatprep.subr.bf16.mxu0 0
  %91 = vmatpush1.bf16.msra.mxu0 0
  %92 = vmatprep.subr.bf16.mxu0 0
  %93 = vmatpush1.bf16.msra.mxu0 0
  %94 = vmatprep.subr.bf16.mxu0 0
  %95 = vmatpush1.bf16.msra.mxu0 0
  %96 = vmatprep.subr.bf16.mxu0 0
  %97 = vmatpush1.bf16.msra.mxu0 0
  %98 = vmatprep.subr.bf16.mxu0 0
  %99 = vmatpush1.bf16.msra.mxu0 0
  %100 = vmatprep.mubr.bf16.mxu0 0
  %101 = vmatmul.mubr.bf16.gmra.mrb[0].mxu0 %v63
  %v102 = vpop.f32.mrb[0].mxu0
  %v103 = vadd.f32 %v28, %v102
  %v104 = vpop.f32.mrb[0].mxu0
  %v105 = vpop.f32.mrb[0].mxu0
  %v106 = vadd.f32 %v33, %v105
  %v107 = vpop.f32.mrb[0].mxu0
  %108 = vmatprep.mubr.bf16.mxu0 0
  %109 = vmatmul.mubr.bf16.gmra.mrb[0].mxu0 %v66
  %v110 = vpop.f32.mrb[0].mxu0
  %v111 = vadd.f32 %v38, %v110
  %v112 = vpop.f32.mrb[0].mxu0
  %v113 = vpop.f32.mrb[0].mxu0
  %v114 = vadd.f32 %v43, %v113
  %v115 = vpop.f32.mrb[0].mxu0
  %116 = vdwg.mxu0
  %117 = vst [vmem:[%s3] sm:$0xff] %v103
  %118 = vst [vmem:[%s3 + $0x8] sm:$0xff] %v106
  %119 = vst [vmem:[%s3 + $0x10] sm:$0xff] %v111
  %120 = vst [vmem:[%s3 + $0x18] sm:$0xff] %v114
  // Predicated region
  $region14: #{resvit_generator.73} parent=0 // pred_check
    _
  $region15: #{resvit_generator.73} parent=0 // pred_check_branch
    %122 = sbr.rel (0) target = $region17
  $region16: #{resvit_generator.73} parent=0 // pred_region
    _
  $region17: #{resvit_generator.73} parent=0 // pred_fallthru
    _
  // Predicated region
  $region18: #{resvit_generator.73} parent=0 // pred_check
    _
  $region19: #{resvit_generator.73} parent=0 // pred_check_branch
    %124 = sbr.rel (0) target = $region21
  $region20: #{resvit_generator.73} parent=0 // pred_region
    _
  $region21: #{resvit_generator.73} parent=0 // pred_fallthru
    _

// kernel: resvit_generator.74
$region0: #{resvit_generator.74}
  #allocation0 [shape = 'u32[]', space=smem, size = 0x4, offset = 0x4, fixed_abs, tag = 'smem constant byte address 0x4 - core index']
  #allocation1 [shape = 'u32[144,128]{1,0:T(1,128)}', space=vmem, size = 0x12000, scoped, tag = 'internal scratch']
  %s0 = inlined_call_operand.vmem [shape: f32[128,32], index: 0, kind: input, shape index: {}]
  %s1 = inlined_call_operand.vmem [shape: f32[1,32], index: 1, kind: input, shape index: {}]
  %s2 = inlined_call_operand.vmem [shape: f32[1,32], index: 2, kind: input, shape index: {}]
  %s3 = inlined_call_operand.vmem [shape: bf16[32,96], index: 3, kind: input, shape index: {}]
  %s4 = inlined_call_operand.vmem [shape: f32[1,96], index: 4, kind: input, shape index: {}]
  %s5 = inlined_call_operand.vmem [shape: f32[128,96], index: 5, kind: output, shape index: {}]
  %s6 = sld [smem:[#allocation0]]
  $region30: #{resvit_generator.74} parent=0
    _
  %s8 = ssub.s32 1, %s6
  %s9 = scalar_select 0, %s8, %s6
  // Predicated region
  $region2: #{resvit_generator.74} parent=0 // pred_check
    _
  $region3: #{resvit_generator.74} parent=0 // pred_check_branch
    %11 = sbr.rel (0) target = $region5
  $region4: #{resvit_generator.74} parent=0 // pred_region
    _
  $region5: #{resvit_generator.74} parent=0 // pred_fallthru
    _
  // Predicated region
  $region6: #{resvit_generator.74} parent=0 // pred_check
    _
  $region7: #{resvit_generator.74} parent=0 // pred_check_branch
    %13 = sbr.rel (0) target = $region9
  $region8: #{resvit_generator.74} parent=0 // pred_region
    _
  $region9: #{resvit_generator.74} parent=0 // pred_fallthru
    _
  // Predicated region
  $region10: #{resvit_generator.74} parent=0 // pred_check
    _
  $region11: #{resvit_generator.74} parent=0 // pred_check_branch
    %15 = sbr.rel (0) target = $region13
  $region12: #{resvit_generator.74} parent=0 // pred_region
    _
  $region13: #{resvit_generator.74} parent=0 // pred_fallthru
    _
  // Predicated region
  $region14: #{resvit_generator.74} parent=0 // pred_check
    _
  $region15: #{resvit_generator.74} parent=0 // pred_check_branch
    %17 = sbr.rel (0) target = $region17
  $region16: #{resvit_generator.74} parent=0 // pred_region
    _
  $region17: #{resvit_generator.74} parent=0 // pred_fallthru
    _
  // Predicated region
  $region18: #{resvit_generator.74} parent=0 // pred_check
    _
  $region19: #{resvit_generator.74} parent=0 // pred_check_branch
    %19 = sbr.rel (0) target = $region21
  $region20: #{resvit_generator.74} parent=0 // pred_region
    _
  $region21: #{resvit_generator.74} parent=0 // pred_fallthru
    _
  %v21 = vld [vmem:[%s0] sm:$0xff]
  %v22 = vld [vmem:[%s0 + $0x8] sm:$0xff]
  %v23 = vld [vmem:[%s0 + $0x10] sm:$0xff]
  %v24 = vld [vmem:[%s0 + $0x18] sm:$0xff]
  %v25 = vld [vmem:[%s0 + $0x20] sm:$0xff]
  %v26 = vld [vmem:[%s0 + $0x28] sm:$0xff]
  %v27 = vld [vmem:[%s0 + $0x30] sm:$0xff]
  %v28 = vld [vmem:[%s0 + $0x38] sm:$0xff]
  %v29 = vld [vmem:[%s0 + $0x40] sm:$0xff]
  %v30 = vld [vmem:[%s0 + $0x48] sm:$0xff]
  %v31 = vld [vmem:[%s0 + $0x50] sm:$0xff]
  %v32 = vld [vmem:[%s0 + $0x58] sm:$0xff]
  %v33 = vld [vmem:[%s0 + $0x60] sm:$0xff]
  %v34 = vld [vmem:[%s0 + $0x68] sm:$0xff]
  %v35 = vld [vmem:[%s0 + $0x70] sm:$0xff]
  %v36 = vld [vmem:[%s0 + $0x78] sm:$0xff]
  %vm37 = vcmask 261120
  %v38 = vsel %vm37, %v21, 0.0
  %39 = vadd.xlane.f32.xlu0 %v38
  %v40 = vpop.xlane.xlu0 %39
  %v41 = vsel %vm37, %v22, 0.0
  %42 = vadd.xlane.f32.xlu0 %v41
  %v43 = vpop.xlane.xlu0 %42
  %v44 = vsel %vm37, %v23, 0.0
  %45 = vadd.xlane.f32.xlu0 %v44
  %v46 = vpop.xlane.xlu0 %45
  %v47 = vsel %vm37, %v24, 0.0
  %48 = vadd.xlane.f32.xlu0 %v47
  %v49 = vpop.xlane.xlu0 %48
  %v50 = vsel %vm37, %v25, 0.0
  %51 = vadd.xlane.f32.xlu0 %v50
  %v52 = vpop.xlane.xlu0 %51
  %v53 = vsel %vm37, %v26, 0.0
  %54 = vadd.xlane.f32.xlu0 %v53
  %v55 = vpop.xlane.xlu0 %54
  %v56 = vsel %vm37, %v27, 0.0
  %57 = vadd.xlane.f32.xlu0 %v56
  %v58 = vpop.xlane.xlu0 %57
  %v59 = vsel %vm37, %v28, 0.0
  %60 = vadd.xlane.f32.xlu0 %v59
  %v61 = vpop.xlane.xlu0 %60
  %v62 = vsel %vm37, %v29, 0.0
  %63 = vadd.xlane.f32.xlu0 %v62
  %v64 = vpop.xlane.xlu0 %63
  %v65 = vsel %vm37, %v30, 0.0
  %66 = vadd.xlane.f32.xlu0 %v65
  %v67 = vpop.xlane.xlu0 %66
  %v68 = vsel %vm37, %v31, 0.0
  %69 = vadd.xlane.f32.xlu0 %v68
  %v70 = vpop.xlane.xlu0 %69
  %v71 = vsel %vm37, %v32, 0.0
  %72 = vadd.xlane.f32.xlu0 %v71
  %v73 = vpop.xlane.xlu0 %72
  %v74 = vsel %vm37, %v33, 0.0
  %75 = vadd.xlane.f32.xlu0 %v74
  %v76 = vpop.xlane.xlu0 %75
  %v77 = vsel %vm37, %v34, 0.0
  %78 = vadd.xlane.f32.xlu0 %v77
  %v79 = vpop.xlane.xlu0 %78
  %v80 = vsel %vm37, %v35, 0.0
  %81 = vadd.xlane.f32.xlu0 %v80
  %v82 = vpop.xlane.xlu0 %81
  %v83 = vsel %vm37, %v36, 0.0
  %84 = vadd.xlane.f32.xlu0 %v83
  %v85 = vpop.xlane.xlu0 %84
  %v86 = vrcp.pop 32.0
  %v87 = vmul.f32 %v40, %v86
  %v88 = vmul.f32 %v43, %v86
  %v89 = vmul.f32 %v46, %v86
  %v90 = vmul.f32 %v49, %v86
  %v91 = vmul.f32 %v52, %v86
  %v92 = vmul.f32 %v55, %v86
  %v93 = vmul.f32 %v58, %v86
  %v94 = vmul.f32 %v61, %v86
  %v95 = vmul.f32 %v64, %v86
  %v96 = vmul.f32 %v67, %v86
  %v97 = vmul.f32 %v70, %v86
  %v98 = vmul.f32 %v73, %v86
  %v99 = vmul.f32 %v76, %v86
  %v100 = vmul.f32 %v79, %v86
  %v101 = vmul.f32 %v82, %v86
  %v102 = vmul.f32 %v85, %v86
  %v103 = vsub.f32 %v21, %v87
  %v104 = vsub.f32 %v22, %v88
  %v105 = vsub.f32 %v23, %v89
  %v106 = vsub.f32 %v24, %v90
  %v107 = vsub.f32 %v25, %v91
  %v108 = vsub.f32 %v26, %v92
  %v109 = vsub.f32 %v27, %v93
  %v110 = vsub.f32 %v28, %v94
  %v111 = vsub.f32 %v29, %v95
  %v112 = vsub.f32 %v30, %v96
  %v113 = vsub.f32 %v31, %v97
  %v114 = vsub.f32 %v32, %v98
  %v115 = vsub.f32 %v33, %v99
  %v116 = vsub.f32 %v34, %v100
  %v117 = vsub.f32 %v35, %v101
  %v118 = vsub.f32 %v36, %v102
  %v119 = vmul.f32 %v103, %v103
  %v120 = vmul.f32 %v104, %v104
  %v121 = vmul.f32 %v105, %v105
  %v122 = vmul.f32 %v106, %v106
  %v123 = vmul.f32 %v107, %v107
  %v124 = vmul.f32 %v108, %v108
  %v125 = vmul.f32 %v109, %v109
  %v126 = vmul.f32 %v110, %v110
  %v127 = vmul.f32 %v111, %v111
  %v128 = vmul.f32 %v112, %v112
  %v129 = vmul.f32 %v113, %v113
  %v130 = vmul.f32 %v114, %v114
  %v131 = vmul.f32 %v115, %v115
  %v132 = vmul.f32 %v116, %v116
  %v133 = vmul.f32 %v117, %v117
  %v134 = vmul.f32 %v118, %v118
  %v135 = vsel %vm37, %v119, 0.0
  %136 = vadd.xlane.f32.xlu0 %v135
  %v137 = vpop.xlane.xlu0 %136
  %v138 = vsel %vm37, %v120, 0.0
  %139 = vadd.xlane.f32.xlu0 %v138
  %v140 = vpop.xlane.xlu0 %139
  %v141 = vsel %vm37, %v121, 0.0
  %142 = vadd.xlane.f32.xlu0 %v141
  %v143 = vpop.xlane.xlu0 %142
  %v144 = vsel %vm37, %v122, 0.0
  %145 = vadd.xlane.f32.xlu0 %v144
  %v146 = vpop.xlane.xlu0 %145
  %v147 = vsel %vm37, %v123, 0.0
  %148 = vadd.xlane.f32.xlu0 %v147
  %v149 = vpop.xlane.xlu0 %148
  %v150 = vsel %vm37, %v124, 0.0
  %151 = vadd.xlane.f32.xlu0 %v150
  %v152 = vpop.xlane.xlu0 %151
  %v153 = vsel %vm37, %v125, 0.0
  %154 = vadd.xlane.f32.xlu0 %v153
  %v155 = vpop.xlane.xlu0 %154
  %v156 = vsel %vm37, %v126, 0.0
  %157 = vadd.xlane.f32.xlu0 %v156
  %v158 = vpop.xlane.xlu0 %157
  %v159 = vsel %vm37, %v127, 0.0
  %160 = vadd.xlane.f32.xlu0 %v159
  %v161 = vpop.xlane.xlu0 %160
  %v162 = vsel %vm37, %v128, 0.0
  %163 = vadd.xlane.f32.xlu0 %v162
  %v164 = vpop.xlane.xlu0 %163
  %v165 = vsel %vm37, %v129, 0.0
  %166 = vadd.xlane.f32.xlu0 %v165
  %v167 = vpop.xlane.xlu0 %166
  %v168 = vsel %vm37, %v130, 0.0
  %169 = vadd.xlane.f32.xlu0 %v168
  %v170 = vpop.xlane.xlu0 %169
  %v171 = vsel %vm37, %v131, 0.0
  %172 = vadd.xlane.f32.xlu0 %v171
  %v173 = vpop.xlane.xlu0 %172
  %v174 = vsel %vm37, %v132, 0.0
  %175 = vadd.xlane.f32.xlu0 %v174
  %v176 = vpop.xlane.xlu0 %175
  %v177 = vsel %vm37, %v133, 0.0
  %178 = vadd.xlane.f32.xlu0 %v177
  %v179 = vpop.xlane.xlu0 %178
  %v180 = vsel %vm37, %v134, 0.0
  %181 = vadd.xlane.f32.xlu0 %v180
  %v182 = vpop.xlane.xlu0 %181
  %v183 = vmul.f32 %v137, %v86
  %v184 = vmul.f32 %v140, %v86
  %v185 = vmul.f32 %v143, %v86
  %v186 = vmul.f32 %v146, %v86
  %v187 = vmul.f32 %v149, %v86
  %v188 = vmul.f32 %v152, %v86
  %v189 = vmul.f32 %v155, %v86
  %v190 = vmul.f32 %v158, %v86
  %v191 = vmul.f32 %v161, %v86
  %v192 = vmul.f32 %v164, %v86
  %v193 = vmul.f32 %v167, %v86
  %v194 = vmul.f32 %v170, %v86
  %v195 = vmul.f32 %v173, %v86
  %v196 = vmul.f32 %v176, %v86
  %v197 = vmul.f32 %v179, %v86
  %v198 = vmul.f32 %v182, %v86
  %v199 = vadd.f32 %v183, 1e-06
  %v200 = vadd.f32 %v184, 1e-06
  %v201 = vadd.f32 %v185, 1e-06
  %v202 = vadd.f32 %v186, 1e-06
  %v203 = vadd.f32 %v187, 1e-06
  %v204 = vadd.f32 %v188, 1e-06
  %v205 = vadd.f32 %v189, 1e-06
  %v206 = vadd.f32 %v190, 1e-06
  %v207 = vadd.f32 %v191, 1e-06
  %v208 = vadd.f32 %v192, 1e-06
  %v209 = vadd.f32 %v193, 1e-06
  %v210 = vadd.f32 %v194, 1e-06
  %v211 = vadd.f32 %v195, 1e-06
  %v212 = vadd.f32 %v196, 1e-06
  %v213 = vadd.f32 %v197, 1e-06
  %v214 = vadd.f32 %v198, 1e-06
  %v215 = vrsqrt.pop %v199
  %v216 = vrsqrt.pop %v200
  %v217 = vrsqrt.pop %v201
  %v218 = vrsqrt.pop %v202
  %v219 = vrsqrt.pop %v203
  %v220 = vrsqrt.pop %v204
  %v221 = vrsqrt.pop %v205
  %v222 = vrsqrt.pop %v206
  %v223 = vrsqrt.pop %v207
  %v224 = vrsqrt.pop %v208
  %v225 = vrsqrt.pop %v209
  %v226 = vrsqrt.pop %v210
  %v227 = vrsqrt.pop %v211
  %v228 = vrsqrt.pop %v212
  %v229 = vrsqrt.pop %v213
  %v230 = vrsqrt.pop %v214
  %v231 = vmul.f32 %v103, %v215
  %v232 = vmul.f32 %v104, %v216
  %v233 = vmul.f32 %v105, %v217
  %v234 = vmul.f32 %v106, %v218
  %v235 = vmul.f32 %v107, %v219
  %v236 = vmul.f32 %v108, %v220
  %v237 = vmul.f32 %v109, %v221
  %v238 = vmul.f32 %v110, %v222
  %v239 = vmul.f32 %v111, %v223
  %v240 = vmul.f32 %v112, %v224
  %v241 = vmul.f32 %v113, %v225
  %v242 = vmul.f32 %v114, %v226
  %v243 = vmul.f32 %v115, %v227
  %v244 = vmul.f32 %v116, %v228
  %v245 = vmul.f32 %v117, %v229
  %v246 = vmul.f32 %v118, %v230
  %v247 = vld [vmem:[%s1] sm:$0x1]
  %v249 = vlaneseq
  %v250 = vshrl.u32 %v249, 7
  %v251 = vsub.s32 0, %v250
  %v252 = vrot.slane %v247, %v251
  %v254 = vmul.f32 %v231, %v252
  %v255 = vmul.f32 %v232, %v252
  %v256 = vmul.f32 %v233, %v252
  %v257 = vmul.f32 %v234, %v252
  %v258 = vmul.f32 %v235, %v252
  %v259 = vmul.f32 %v236, %v252
  %v260 = vmul.f32 %v237, %v252
  %v261 = vmul.f32 %v238, %v252
  %v262 = vmul.f32 %v239, %v252
  %v263 = vmul.f32 %v240, %v252
  %v264 = vmul.f32 %v241, %v252
  %v265 = vmul.f32 %v242, %v252
  %v266 = vmul.f32 %v243, %v252
  %v267 = vmul.f32 %v244, %v252
  %v268 = vmul.f32 %v245, %v252
  %v269 = vmul.f32 %v246, %v252
  %v270 = vld [vmem:[%s2] sm:$0x1]
  %v272 = vlaneseq
  %v273 = vshrl.u32 %v272, 7
  %v274 = vsub.s32 0, %v273
  %v275 = vrot.slane %v270, %v274
  %v277 = vadd.f32 %v254, %v275
  %v278 = vadd.f32 %v255, %v275
  %v279 = vadd.f32 %v256, %v275
  %v280 = vadd.f32 %v257, %v275
  %v281 = vadd.f32 %v258, %v275
  %v282 = vadd.f32 %v259, %v275
  %v283 = vadd.f32 %v260, %v275
  %v284 = vadd.f32 %v261, %v275
  %v285 = vadd.f32 %v262, %v275
  %v286 = vadd.f32 %v263, %v275
  %v287 = vadd.f32 %v264, %v275
  %v288 = vadd.f32 %v265, %v275
  %v289 = vadd.f32 %v266, %v275
  %v290 = vadd.f32 %v267, %v275
  %v291 = vadd.f32 %v268, %v275
  %v292 = vadd.f32 %v269, %v275
  %v293 = vpack.c.bf16 %v278, %v277
  %v294 = vpack.c.bf16 %v280, %v279
  %v295 = vpack.c.bf16 %v282, %v281
  %v296 = vpack.c.bf16 %v284, %v283
  %v297 = vpack.c.bf16 %v286, %v285
  %v298 = vpack.c.bf16 %v288, %v287
  %v299 = vpack.c.bf16 %v290, %v289
  %v300 = vpack.c.bf16 %v292, %v291
  %v301 = vld [vmem:[%s3] sm:$0xf]
  %v302 = vld [vmem:[%s3 + $0x4] sm:$0xf]
  %v303 = vld [vmem:[%s3 + $0x8] sm:$0xf]
  %v304 = vld [vmem:[%s3 + $0xc] sm:$0xf]
  %v305 = vld [vmem:[%s4] sm:$0x1]
  %v307 = vlaneseq
  %v308 = vshrl.u32 %v307, 7
  %v309 = vsub.s32 0, %v308
  %v310 = vrot.slane %v305, %v309
  %v316 = vunpack.c.l.b16 %v301
  %v317 = vunpack.c.l.b16 %v302
  %v318 = vunpack.c.l.b16 %v303
  %v319 = vunpack.c.l.b16 %v304
  %v320 = vpack.c.b16 %v317, %v316
  %v321 = vpack.c.b16 %v319, %v318
  %v325 = vsel %vm37, %v293, 0
  %v328 = vsel %vm37, %v294, 0
  %v331 = vsel %vm37, %v295, 0
  %v334 = vsel %vm37, %v296, 0
  %v337 = vsel %vm37, %v297, 0
  %v340 = vsel %vm37, %v298, 0
  %v343 = vsel %vm37, %v299, 0
  %v346 = vsel %vm37, %v300, 0
  %348 = vmatprep.subr.bf16.mxu0 0
  %349 = vmatpush1.bf16.msra.mxu0 %v320
  %350 = vmatprep.subr.bf16.mxu0 0
  %351 = vmatpush1.bf16.msra.mxu0 %v321
  %352 = vmatprep.subr.bf16.mxu0 0
  %353 = vmatpush1.bf16.msra.mxu0 0
  %354 = vmatprep.subr.bf16.mxu0 0
  %355 = vmatpush1.bf16.msra.mxu0 0
  %356 = vmatprep.subr.bf16.mxu0 0
  %357 = vmatpush1.bf16.msra.mxu0 0
  %358 = vmatprep.subr.bf16.mxu0 0
  %359 = vmatpush1.bf16.msra.mxu0 0
  %360 = vmatprep.subr.bf16.mxu0 0
  %361 = vmatpush1.bf16.msra.mxu0 0
  %362 = vmatprep.subr.bf16.mxu0 0
  %363 = vmatpush1.bf16.msra.mxu0 0
  %364 = vmatprep.subr.bf16.mxu0 0
  %365 = vmatpush1.bf16.msra.mxu0 0
  %366 = vmatprep.subr.bf16.mxu0 0
  %367 = vmatpush1.bf16.msra.mxu0 0
  %368 = vmatprep.subr.bf16.mxu0 0
  %369 = vmatpush1.bf16.msra.mxu0 0
  %370 = vmatprep.subr.bf16.mxu0 0
  %371 = vmatpush1.bf16.msra.mxu0 0
  %372 = vmatprep.subr.bf16.mxu0 0
  %373 = vmatpush1.bf16.msra.mxu0 0
  %374 = vmatprep.subr.bf16.mxu0 0
  %375 = vmatpush1.bf16.msra.mxu0 0
  %376 = vmatprep.subr.bf16.mxu0 0
  %377 = vmatpush1.bf16.msra.mxu0 0
  %378 = vmatprep.subr.bf16.mxu0 0
  %379 = vmatpush1.bf16.msra.mxu0 0
  %380 = vmatprep.mubr.bf16.mxu0 0
  %381 = vmatmul.mubr.bf16.gmra.mrb[0].mxu0 %v325
  %v382 = vpop.f32.mrb[0].mxu0
  %v383 = vadd.f32 %v310, %v382
  %v384 = vpop.f32.mrb[0].mxu0
  %v385 = vpop.f32.mrb[0].mxu0
  %v386 = vadd.f32 %v310, %v385
  %v387 = vpop.f32.mrb[0].mxu0
  %388 = vmatprep.mubr.bf16.mxu0 0
  %389 = vmatmul.mubr.bf16.gmra.mrb[0].mxu0 %v328
  %v390 = vpop.f32.mrb[0].mxu0
  %v391 = vadd.f32 %v310, %v390
  %v392 = vpop.f32.mrb[0].mxu0
  %v393 = vpop.f32.mrb[0].mxu0
  %v394 = vadd.f32 %v310, %v393
  %v395 = vpop.f32.mrb[0].mxu0
  %396 = vmatprep.mubr.bf16.mxu0 0
  %397 = vmatmul.mubr.bf16.gmra.mrb[0].mxu0 %v331
  %v398 = vpop.f32.mrb[0].mxu0
  %v399 = vadd.f32 %v310, %v398
  %v400 = vpop.f32.mrb[0].mxu0
  %v401 = vpop.f32.mrb[0].mxu0
  %v402 = vadd.f32 %v310, %v401
  %v403 = vpop.f32.mrb[0].mxu0
  %404 = vmatprep.mubr.bf16.mxu0 0
  %405 = vmatmul.mubr.bf16.gmra.mrb[0].mxu0 %v334
  %v406 = vpop.f32.mrb[0].mxu0
  %v407 = vadd.f32 %v310, %v406
  %v408 = vpop.f32.mrb[0].mxu0
  %v409 = vpop.f32.mrb[0].mxu0
  %v410 = vadd.f32 %v310, %v409
  %v411 = vpop.f32.mrb[0].mxu0
  %412 = vmatprep.mubr.bf16.mxu0 0
  %413 = vmatmul.mubr.bf16.gmra.mrb[0].mxu0 %v337
  %v414 = vpop.f32.mrb[0].mxu0
  %v415 = vadd.f32 %v310, %v414
  %v416 = vpop.f32.mrb[0].mxu0
  %v417 = vpop.f32.mrb[0].mxu0
  %v418 = vadd.f32 %v310, %v417
  %v419 = vpop.f32.mrb[0].mxu0
  %420 = vmatprep.mubr.bf16.mxu0 0
  %421 = vmatmul.mubr.bf16.gmra.mrb[0].mxu0 %v340
  %v422 = vpop.f32.mrb[0].mxu0
  %v423 = vadd.f32 %v310, %v422
  %v424 = vpop.f32.mrb[0].mxu0
  %v425 = vpop.f32.mrb[0].mxu0
  %v426 = vadd.f32 %v310, %v425
  %v427 = vpop.f32.mrb[0].mxu0
  %428 = vmatprep.mubr.bf16.mxu0 0
  %429 = vmatmul.mubr.bf16.gmra.mrb[0].mxu0 %v343
  %v430 = vpop.f32.mrb[0].mxu0
  %v431 = vadd.f32 %v310, %v430
  %v432 = vpop.f32.mrb[0].mxu0
  %v433 = vpop.f32.mrb[0].mxu0
  %v434 = vadd.f32 %v310, %v433
  %v435 = vpop.f32.mrb[0].mxu0
  %436 = vmatprep.mubr.bf16.mxu0 0
  %437 = vmatmul.mubr.bf16.gmra.mrb[0].mxu0 %v346
  %v438 = vpop.f32.mrb[0].mxu0
  %v439 = vadd.f32 %v310, %v438
  %v440 = vpop.f32.mrb[0].mxu0
  %v441 = vpop.f32.mrb[0].mxu0
  %v442 = vadd.f32 %v310, %v441
  %v443 = vpop.f32.mrb[0].mxu0
  %444 = vdwg.mxu0
  %vm445 = vcmask 785408
  %446 = vst.msk [vmem:[%s5] sm:$0xff] %vm445, %v383
  %447 = vst.msk [vmem:[%s5 + $0x8] sm:$0xff] %vm445, %v386
  %448 = vst.msk [vmem:[%s5 + $0x10] sm:$0xff] %vm445, %v391
  %449 = vst.msk [vmem:[%s5 + $0x18] sm:$0xff] %vm445, %v394
  %450 = vst.msk [vmem:[%s5 + $0x20] sm:$0xff] %vm445, %v399
  %451 = vst.msk [vmem:[%s5 + $0x28] sm:$0xff] %vm445, %v402
  %452 = vst.msk [vmem:[%s5 + $0x30] sm:$0xff] %vm445, %v407
  %453 = vst.msk [vmem:[%s5 + $0x38] sm:$0xff] %vm445, %v410
  %454 = vst.msk [vmem:[%s5 + $0x40] sm:$0xff] %vm445, %v415
  %455 = vst.msk [vmem:[%s5 + $0x48] sm:$0xff] %vm445, %v418
  %456 = vst.msk [vmem:[%s5 + $0x50] sm:$0xff] %vm445, %v423
  %457 = vst.msk [vmem:[%s5 + $0x58] sm:$0xff] %vm445, %v426
  %458 = vst.msk [vmem:[%s5 + $0x60] sm:$0xff] %vm445, %v431
  %459 = vst.msk [vmem:[%s5 + $0x68] sm:$0xff] %vm445, %v434
  %460 = vst.msk [vmem:[%s5 + $0x70] sm:$0xff] %vm445, %v439
  %461 = vst.msk [vmem:[%s5 + $0x78] sm:$0xff] %vm445, %v442
  // Predicated region
  $region22: #{resvit_generator.74} parent=0 // pred_check
    _
  $region23: #{resvit_generator.74} parent=0 // pred_check_branch
    %463 = sbr.rel (0) target = $region25
  $region24: #{resvit_generator.74} parent=0 // pred_region
    _
  $region25: #{resvit_generator.74} parent=0 // pred_fallthru
    _
  // Predicated region
  $region26: #{resvit_generator.74} parent=0 // pred_check
    _
  $region27: #{resvit_generator.74} parent=0 // pred_check_branch
    %465 = sbr.rel (0) target = $region29
  $region28: #{resvit_generator.74} parent=0 // pred_region
    _
  $region29: #{resvit_generator.74} parent=0 // pred_fallthru
    _

// kernel: resvit_generator.76
$region0: #{resvit_generator.76}
  #allocation0 [shape = 'u32[]', space=smem, size = 0x4, offset = 0x4, fixed_abs, tag = 'smem constant byte address 0x4 - core index']
  #allocation1 [shape = 'u32[144,128]{1,0:T(1,128)}', space=vmem, size = 0x12000, scoped, tag = 'internal scratch']
  %s0 = inlined_call_operand.vmem [shape: f32[128,32], index: 0, kind: input, shape index: {}]
  %s1 = inlined_call_operand.vmem [shape: f32[1,32], index: 1, kind: input, shape index: {}]
  %s2 = inlined_call_operand.vmem [shape: f32[1,32], index: 2, kind: input, shape index: {}]
  %s3 = inlined_call_operand.vmem [shape: bf16[32,64], index: 3, kind: input, shape index: {}]
  %s4 = inlined_call_operand.vmem [shape: f32[1,64], index: 4, kind: input, shape index: {}]
  %s5 = inlined_call_operand.vmem [shape: bf16[64,32], index: 5, kind: input, shape index: {}]
  %s6 = inlined_call_operand.vmem [shape: f32[1,32], index: 6, kind: input, shape index: {}]
  %s7 = inlined_call_operand.vmem [shape: f32[128,32], index: 7, kind: output, shape index: {}]
  %s8 = sld [smem:[#allocation0]]
  $region38: #{resvit_generator.76} parent=0
    _
  %s10 = ssub.s32 1, %s8
  %s11 = scalar_select 0, %s10, %s8
  // Predicated region
  $region2: #{resvit_generator.76} parent=0 // pred_check
    _
  $region3: #{resvit_generator.76} parent=0 // pred_check_branch
    %13 = sbr.rel (0) target = $region5
  $region4: #{resvit_generator.76} parent=0 // pred_region
    _
  $region5: #{resvit_generator.76} parent=0 // pred_fallthru
    _
  // Predicated region
  $region6: #{resvit_generator.76} parent=0 // pred_check
    _
  $region7: #{resvit_generator.76} parent=0 // pred_check_branch
    %15 = sbr.rel (0) target = $region9
  $region8: #{resvit_generator.76} parent=0 // pred_region
    _
  $region9: #{resvit_generator.76} parent=0 // pred_fallthru
    _
  // Predicated region
  $region10: #{resvit_generator.76} parent=0 // pred_check
    _
  $region11: #{resvit_generator.76} parent=0 // pred_check_branch
    %17 = sbr.rel (0) target = $region13
  $region12: #{resvit_generator.76} parent=0 // pred_region
    _
  $region13: #{resvit_generator.76} parent=0 // pred_fallthru
    _
  // Predicated region
  $region14: #{resvit_generator.76} parent=0 // pred_check
    _
  $region15: #{resvit_generator.76} parent=0 // pred_check_branch
    %19 = sbr.rel (0) target = $region17
  $region16: #{resvit_generator.76} parent=0 // pred_region
    _
  $region17: #{resvit_generator.76} parent=0 // pred_fallthru
    _
  // Predicated region
  $region18: #{resvit_generator.76} parent=0 // pred_check
    _
  $region19: #{resvit_generator.76} parent=0 // pred_check_branch
    %21 = sbr.rel (0) target = $region21
  $region20: #{resvit_generator.76} parent=0 // pred_region
    _
  $region21: #{resvit_generator.76} parent=0 // pred_fallthru
    _
  // Predicated region
  $region22: #{resvit_generator.76} parent=0 // pred_check
    _
  $region23: #{resvit_generator.76} parent=0 // pred_check_branch
    %23 = sbr.rel (0) target = $region25
  $region24: #{resvit_generator.76} parent=0 // pred_region
    _
  $region25: #{resvit_generator.76} parent=0 // pred_fallthru
    _
  // Predicated region
  $region26: #{resvit_generator.76} parent=0 // pred_check
    _
  $region27: #{resvit_generator.76} parent=0 // pred_check_branch
    %25 = sbr.rel (0) target = $region29
  $region28: #{resvit_generator.76} parent=0 // pred_region
    _
  $region29: #{resvit_generator.76} parent=0 // pred_fallthru
    _
  %v27 = vld [vmem:[%s0] sm:$0xff]
  %v28 = vld [vmem:[%s0 + $0x8] sm:$0xff]
  %v29 = vld [vmem:[%s0 + $0x10] sm:$0xff]
  %v30 = vld [vmem:[%s0 + $0x18] sm:$0xff]
  %v31 = vld [vmem:[%s0 + $0x20] sm:$0xff]
  %v32 = vld [vmem:[%s0 + $0x28] sm:$0xff]
  %v33 = vld [vmem:[%s0 + $0x30] sm:$0xff]
  %v34 = vld [vmem:[%s0 + $0x38] sm:$0xff]
  %v35 = vld [vmem:[%s0 + $0x40] sm:$0xff]
  %v36 = vld [vmem:[%s0 + $0x48] sm:$0xff]
  %v37 = vld [vmem:[%s0 + $0x50] sm:$0xff]
  %v38 = vld [vmem:[%s0 + $0x58] sm:$0xff]
  %v39 = vld [vmem:[%s0 + $0x60] sm:$0xff]
  %v40 = vld [vmem:[%s0 + $0x68] sm:$0xff]
  %v41 = vld [vmem:[%s0 + $0x70] sm:$0xff]
  %v42 = vld [vmem:[%s0 + $0x78] sm:$0xff]
  %vm43 = vcmask 261120
  %v44 = vsel %vm43, %v27, 0.0
  %45 = vadd.xlane.f32.xlu0 %v44
  %v46 = vpop.xlane.xlu0 %45
  %v47 = vsel %vm43, %v28, 0.0
  %48 = vadd.xlane.f32.xlu0 %v47
  %v49 = vpop.xlane.xlu0 %48
  %v50 = vsel %vm43, %v29, 0.0
  %51 = vadd.xlane.f32.xlu0 %v50
  %v52 = vpop.xlane.xlu0 %51
  %v53 = vsel %vm43, %v30, 0.0
  %54 = vadd.xlane.f32.xlu0 %v53
  %v55 = vpop.xlane.xlu0 %54
  %v56 = vsel %vm43, %v31, 0.0
  %57 = vadd.xlane.f32.xlu0 %v56
  %v58 = vpop.xlane.xlu0 %57
  %v59 = vsel %vm43, %v32, 0.0
  %60 = vadd.xlane.f32.xlu0 %v59
  %v61 = vpop.xlane.xlu0 %60
  %v62 = vsel %vm43, %v33, 0.0
  %63 = vadd.xlane.f32.xlu0 %v62
  %v64 = vpop.xlane.xlu0 %63
  %v65 = vsel %vm43, %v34, 0.0
  %66 = vadd.xlane.f32.xlu0 %v65
  %v67 = vpop.xlane.xlu0 %66
  %v68 = vsel %vm43, %v35, 0.0
  %69 = vadd.xlane.f32.xlu0 %v68
  %v70 = vpop.xlane.xlu0 %69
  %v71 = vsel %vm43, %v36, 0.0
  %72 = vadd.xlane.f32.xlu0 %v71
  %v73 = vpop.xlane.xlu0 %72
  %v74 = vsel %vm43, %v37, 0.0
  %75 = vadd.xlane.f32.xlu0 %v74
  %v76 = vpop.xlane.xlu0 %75
  %v77 = vsel %vm43, %v38, 0.0
  %78 = vadd.xlane.f32.xlu0 %v77
  %v79 = vpop.xlane.xlu0 %78
  %v80 = vsel %vm43, %v39, 0.0
  %81 = vadd.xlane.f32.xlu0 %v80
  %v82 = vpop.xlane.xlu0 %81
  %v83 = vsel %vm43, %v40, 0.0
  %84 = vadd.xlane.f32.xlu0 %v83
  %v85 = vpop.xlane.xlu0 %84
  %v86 = vsel %vm43, %v41, 0.0
  %87 = vadd.xlane.f32.xlu0 %v86
  %v88 = vpop.xlane.xlu0 %87
  %v89 = vsel %vm43, %v42, 0.0
  %90 = vadd.xlane.f32.xlu0 %v89
  %v91 = vpop.xlane.xlu0 %90
  %v92 = vrcp.pop 32.0
  %v93 = vmul.f32 %v46, %v92
  %v94 = vmul.f32 %v49, %v92
  %v95 = vmul.f32 %v52, %v92
  %v96 = vmul.f32 %v55, %v92
  %v97 = vmul.f32 %v58, %v92
  %v98 = vmul.f32 %v61, %v92
  %v99 = vmul.f32 %v64, %v92
  %v100 = vmul.f32 %v67, %v92
  %v101 = vmul.f32 %v70, %v92
  %v102 = vmul.f32 %v73, %v92
  %v103 = vmul.f32 %v76, %v92
  %v104 = vmul.f32 %v79, %v92
  %v105 = vmul.f32 %v82, %v92
  %v106 = vmul.f32 %v85, %v92
  %v107 = vmul.f32 %v88, %v92
  %v108 = vmul.f32 %v91, %v92
  %v109 = vsub.f32 %v27, %v93
  %v110 = vsub.f32 %v28, %v94
  %v111 = vsub.f32 %v29, %v95
  %v112 = vsub.f32 %v30, %v96
  %v113 = vsub.f32 %v31, %v97
  %v114 = vsub.f32 %v32, %v98
  %v115 = vsub.f32 %v33, %v99
  %v116 = vsub.f32 %v34, %v100
  %v117 = vsub.f32 %v35, %v101
  %v118 = vsub.f32 %v36, %v102
  %v119 = vsub.f32 %v37, %v103
  %v120 = vsub.f32 %v38, %v104
  %v121 = vsub.f32 %v39, %v105
  %v122 = vsub.f32 %v40, %v106
  %v123 = vsub.f32 %v41, %v107
  %v124 = vsub.f32 %v42, %v108
  %v125 = vmul.f32 %v109, %v109
  %v126 = vmul.f32 %v110, %v110
  %v127 = vmul.f32 %v111, %v111
  %v128 = vmul.f32 %v112, %v112
  %v129 = vmul.f32 %v113, %v113
  %v130 = vmul.f32 %v114, %v114
  %v131 = vmul.f32 %v115, %v115
  %v132 = vmul.f32 %v116, %v116
  %v133 = vmul.f32 %v117, %v117
  %v134 = vmul.f32 %v118, %v118
  %v135 = vmul.f32 %v119, %v119
  %v136 = vmul.f32 %v120, %v120
  %v137 = vmul.f32 %v121, %v121
  %v138 = vmul.f32 %v122, %v122
  %v139 = vmul.f32 %v123, %v123
  %v140 = vmul.f32 %v124, %v124
  %v141 = vsel %vm43, %v125, 0.0
  %142 = vadd.xlane.f32.xlu0 %v141
  %v143 = vpop.xlane.xlu0 %142
  %v144 = vsel %vm43, %v126, 0.0
  %145 = vadd.xlane.f32.xlu0 %v144
  %v146 = vpop.xlane.xlu0 %145
  %v147 = vsel %vm43, %v127, 0.0
  %148 = vadd.xlane.f32.xlu0 %v147
  %v149 = vpop.xlane.xlu0 %148
  %v150 = vsel %vm43, %v128, 0.0
  %151 = vadd.xlane.f32.xlu0 %v150
  %v152 = vpop.xlane.xlu0 %151
  %v153 = vsel %vm43, %v129, 0.0
  %154 = vadd.xlane.f32.xlu0 %v153
  %v155 = vpop.xlane.xlu0 %154
  %v156 = vsel %vm43, %v130, 0.0
  %157 = vadd.xlane.f32.xlu0 %v156
  %v158 = vpop.xlane.xlu0 %157
  %v159 = vsel %vm43, %v131, 0.0
  %160 = vadd.xlane.f32.xlu0 %v159
  %v161 = vpop.xlane.xlu0 %160
  %v162 = vsel %vm43, %v132, 0.0
  %163 = vadd.xlane.f32.xlu0 %v162
  %v164 = vpop.xlane.xlu0 %163
  %v165 = vsel %vm43, %v133, 0.0
  %166 = vadd.xlane.f32.xlu0 %v165
  %v167 = vpop.xlane.xlu0 %166
  %v168 = vsel %vm43, %v134, 0.0
  %169 = vadd.xlane.f32.xlu0 %v168
  %v170 = vpop.xlane.xlu0 %169
  %v171 = vsel %vm43, %v135, 0.0
  %172 = vadd.xlane.f32.xlu0 %v171
  %v173 = vpop.xlane.xlu0 %172
  %v174 = vsel %vm43, %v136, 0.0
  %175 = vadd.xlane.f32.xlu0 %v174
  %v176 = vpop.xlane.xlu0 %175
  %v177 = vsel %vm43, %v137, 0.0
  %178 = vadd.xlane.f32.xlu0 %v177
  %v179 = vpop.xlane.xlu0 %178
  %v180 = vsel %vm43, %v138, 0.0
  %181 = vadd.xlane.f32.xlu0 %v180
  %v182 = vpop.xlane.xlu0 %181
  %v183 = vsel %vm43, %v139, 0.0
  %184 = vadd.xlane.f32.xlu0 %v183
  %v185 = vpop.xlane.xlu0 %184
  %v186 = vsel %vm43, %v140, 0.0
  %187 = vadd.xlane.f32.xlu0 %v186
  %v188 = vpop.xlane.xlu0 %187
  %v189 = vmul.f32 %v143, %v92
  %v190 = vmul.f32 %v146, %v92
  %v191 = vmul.f32 %v149, %v92
  %v192 = vmul.f32 %v152, %v92
  %v193 = vmul.f32 %v155, %v92
  %v194 = vmul.f32 %v158, %v92
  %v195 = vmul.f32 %v161, %v92
  %v196 = vmul.f32 %v164, %v92
  %v197 = vmul.f32 %v167, %v92
  %v198 = vmul.f32 %v170, %v92
  %v199 = vmul.f32 %v173, %v92
  %v200 = vmul.f32 %v176, %v92
  %v201 = vmul.f32 %v179, %v92
  %v202 = vmul.f32 %v182, %v92
  %v203 = vmul.f32 %v185, %v92
  %v204 = vmul.f32 %v188, %v92
  %v205 = vadd.f32 %v189, 1e-06
  %v206 = vadd.f32 %v190, 1e-06
  %v207 = vadd.f32 %v191, 1e-06
  %v208 = vadd.f32 %v192, 1e-06
  %v209 = vadd.f32 %v193, 1e-06
  %v210 = vadd.f32 %v194, 1e-06
  %v211 = vadd.f32 %v195, 1e-06
  %v212 = vadd.f32 %v196, 1e-06
  %v213 = vadd.f32 %v197, 1e-06
  %v214 = vadd.f32 %v198, 1e-06
  %v215 = vadd.f32 %v199, 1e-06
  %v216 = vadd.f32 %v200, 1e-06
  %v217 = vadd.f32 %v201, 1e-06
  %v218 = vadd.f32 %v202, 1e-06
  %v219 = vadd.f32 %v203, 1e-06
  %v220 = vadd.f32 %v204, 1e-06
  %v221 = vrsqrt.pop %v205
  %v222 = vrsqrt.pop %v206
  %v223 = vrsqrt.pop %v207
  %v224 = vrsqrt.pop %v208
  %v225 = vrsqrt.pop %v209
  %v226 = vrsqrt.pop %v210
  %v227 = vrsqrt.pop %v211
  %v228 = vrsqrt.pop %v212
  %v229 = vrsqrt.pop %v213
  %v230 = vrsqrt.pop %v214
  %v231 = vrsqrt.pop %v215
  %v232 = vrsqrt.pop %v216
  %v233 = vrsqrt.pop %v217
  %v234 = vrsqrt.pop %v218
  %v235 = vrsqrt.pop %v219
  %v236 = vrsqrt.pop %v220
  %v237 = vmul.f32 %v109, %v221
  %v238 = vmul.f32 %v110, %v222
  %v239 = vmul.f32 %v111, %v223
  %v240 = vmul.f32 %v112, %v224
  %v241 = vmul.f32 %v113, %v225
  %v242 = vmul.f32 %v114, %v226
  %v243 = vmul.f32 %v115, %v227
  %v244 = vmul.f32 %v116, %v228
  %v245 = vmul.f32 %v117, %v229
  %v246 = vmul.f32 %v118, %v230
  %v247 = vmul.f32 %v119, %v231
  %v248 = vmul.f32 %v120, %v232
  %v249 = vmul.f32 %v121, %v233
  %v250 = vmul.f32 %v122, %v234
  %v251 = vmul.f32 %v123, %v235
  %v252 = vmul.f32 %v124, %v236
  %v253 = vld [vmem:[%s1] sm:$0x1]
  %v255 = vlaneseq
  %v256 = vshrl.u32 %v255, 7
  %v257 = vsub.s32 0, %v256
  %v258 = vrot.slane %v253, %v257
  %v260 = vmul.f32 %v237, %v258
  %v261 = vmul.f32 %v238, %v258
  %v262 = vmul.f32 %v239, %v258
  %v263 = vmul.f32 %v240, %v258
  %v264 = vmul.f32 %v241, %v258
  %v265 = vmul.f32 %v242, %v258
  %v266 = vmul.f32 %v243, %v258
  %v267 = vmul.f32 %v244, %v258
  %v268 = vmul.f32 %v245, %v258
  %v269 = vmul.f32 %v246, %v258
  %v270 = vmul.f32 %v247, %v258
  %v271 = vmul.f32 %v248, %v258
  %v272 = vmul.f32 %v249, %v258
  %v273 = vmul.f32 %v250, %v258
  %v274 = vmul.f32 %v251, %v258
  %v275 = vmul.f32 %v252, %v258
  %v276 = vld [vmem:[%s2] sm:$0x1]
  %v278 = vlaneseq
  %v279 = vshrl.u32 %v278, 7
  %v280 = vsub.s32 0, %v279
  %v281 = vrot.slane %v276, %v280
  %v283 = vadd.f32 %v260, %v281
  %v284 = vadd.f32 %v261, %v281
  %v285 = vadd.f32 %v262, %v281
  %v286 = vadd.f32 %v263, %v281
  %v287 = vadd.f32 %v264, %v281
  %v288 = vadd.f32 %v265, %v281
  %v289 = vadd.f32 %v266, %v281
  %v290 = vadd.f32 %v267, %v281
  %v291 = vadd.f32 %v268, %v281
  %v292 = vadd.f32 %v269, %v281
  %v293 = vadd.f32 %v270, %v281
  %v294 = vadd.f32 %v271, %v281
  %v295 = vadd.f32 %v272, %v281
  %v296 = vadd.f32 %v273, %v281
  %v297 = vadd.f32 %v274, %v281
  %v298 = vadd.f32 %v275, %v281
  %v299 = vpack.c.bf16 %v284, %v283
  %v300 = vpack.c.bf16 %v286, %v285
  %v301 = vpack.c.bf16 %v288, %v287
  %v302 = vpack.c.bf16 %v290, %v289
  %v303 = vpack.c.bf16 %v292, %v291
  %v304 = vpack.c.bf16 %v294, %v293
  %v305 = vpack.c.bf16 %v296, %v295
  %v306 = vpack.c.bf16 %v298, %v297
  %v307 = vld [vmem:[%s3] sm:$0xf]
  %v308 = vld [vmem:[%s3 + $0x4] sm:$0xf]
  %v309 = vld [vmem:[%s3 + $0x8] sm:$0xf]
  %v310 = vld [vmem:[%s3 + $0xc] sm:$0xf]
  %v311 = vld [vmem:[%s4] sm:$0x1]
  %v313 = vlaneseq
  %v314 = vshrl.u32 %v313, 7
  %v315 = vsub.s32 0, %v314
  %v316 = vrot.slane %v311, %v315
  %v322 = vunpack.c.l.b16 %v307
  %v323 = vunpack.c.l.b16 %v308
  %v324 = vunpack.c.l.b16 %v309
  %v325 = vunpack.c.l.b16 %v310
  %v326 = vpack.c.b16 %v323, %v322
  %v327 = vpack.c.b16 %v325, %v324
  %v331 = vsel %vm43, %v299, 0
  %v334 = vsel %vm43, %v300, 0
  %v337 = vsel %vm43, %v301, 0
  %v340 = vsel %vm43, %v302, 0
  %v343 = vsel %vm43, %v303, 0
  %v346 = vsel %vm43, %v304, 0
  %v349 = vsel %vm43, %v305, 0
  %v352 = vsel %vm43, %v306, 0
  %354 = vmatprep.subr.bf16.mxu0 0
  %355 = vmatpush1.bf16.msra.mxu0 %v326
  %356 = vmatprep.subr.bf16.mxu0 0
  %357 = vmatpush1.bf16.msra.mxu0 %v327
  %358 = vmatprep.subr.bf16.mxu0 0
  %359 = vmatpush1.bf16.msra.mxu0 0
  %360 = vmatprep.subr.bf16.mxu0 0
  %361 = vmatpush1.bf16.msra.mxu0 0
  %362 = vmatprep.subr.bf16.mxu0 0
  %363 = vmatpush1.bf16.msra.mxu0 0
  %364 = vmatprep.subr.bf16.mxu0 0
  %365 = vmatpush1.bf16.msra.mxu0 0
  %366 = vmatprep.subr.bf16.mxu0 0
  %367 = vmatpush1.bf16.msra.mxu0 0
  %368 = vmatprep.subr.bf16.mxu0 0
  %369 = vmatpush1.bf16.msra.mxu0 0
  %370 = vmatprep.subr.bf16.mxu0 0
  %371 = vmatpush1.bf16.msra.mxu0 0
  %372 = vmatprep.subr.bf16.mxu0 0
  %373 = vmatpush1.bf16.msra.mxu0 0
  %374 = vmatprep.subr.bf16.mxu0 0
  %375 = vmatpush1.bf16.msra.mxu0 0
  %376 = vmatprep.subr.bf16.mxu0 0
  %377 = vmatpush1.bf16.msra.mxu0 0
  %378 = vmatprep.subr.bf16.mxu0 0
  %379 = vmatpush1.bf16.msra.mxu0 0
  %380 = vmatprep.subr.bf16.mxu0 0
  %381 = vmatpush1.bf16.msra.mxu0 0
  %382 = vmatprep.subr.bf16.mxu0 0
  %383 = vmatpush1.bf16.msra.mxu0 0
  %384 = vmatprep.subr.bf16.mxu0 0
  %385 = vmatpush1.bf16.msra.mxu0 0
  %386 = vmatprep.mubr.bf16.mxu0 0
  %387 = vmatmul.mubr.bf16.gmra.mrb[0].mxu0 %v331
  %v388 = vpop.f32.mrb[0].mxu0
  %v389 = vadd.f32 %v316, %v388
  %v390 = vpop.f32.mrb[0].mxu0
  %v391 = vpop.f32.mrb[0].mxu0
  %v392 = vadd.f32 %v316, %v391
  %v393 = vpop.f32.mrb[0].mxu0
  %394 = vmatprep.mubr.bf16.mxu0 0
  %395 = vmatmul.mubr.bf16.gmra.mrb[0].mxu0 %v334
  %v396 = vpop.f32.mrb[0].mxu0
  %v397 = vadd.f32 %v316, %v396
  %v398 = vpop.f32.mrb[0].mxu0
  %v399 = vpop.f32.mrb[0].mxu0
  %v400 = vadd.f32 %v316, %v399
  %v401 = vpop.f32.mrb[0].mxu0
  %402 = vmatprep.mubr.bf16.mxu0 0
  %403 = vmatmul.mubr.bf16.gmra.mrb[0].mxu0 %v337
  %v404 = vpop.f32.mrb[0].mxu0
  %v405 = vadd.f32 %v316, %v404
  %v406 = vpop.f32.mrb[0].mxu0
  %v407 = vpop.f32.mrb[0].mxu0
  %v408 = vadd.f32 %v316, %v407
  %v409 = vpop.f32.mrb[0].mxu0
  %410 = vmatprep.mubr.bf16.mxu0 0
  %411 = vmatmul.mubr.bf16.gmra.mrb[0].mxu0 %v340
  %v412 = vpop.f32.mrb[0].mxu0
  %v413 = vadd.f32 %v316, %v412
  %v414 = vpop.f32.mrb[0].mxu0
  %v415 = vpop.f32.mrb[0].mxu0
  %v416 = vadd.f32 %v316, %v415
  %v417 = vpop.f32.mrb[0].mxu0
  %418 = vmatprep.mubr.bf16.mxu0 0
  %419 = vmatmul.mubr.bf16.gmra.mrb[0].mxu0 %v343
  %v420 = vpop.f32.mrb[0].mxu0
  %v421 = vadd.f32 %v316, %v420
  %v422 = vpop.f32.mrb[0].mxu0
  %v423 = vpop.f32.mrb[0].mxu0
  %v424 = vadd.f32 %v316, %v423
  %v425 = vpop.f32.mrb[0].mxu0
  %426 = vmatprep.mubr.bf16.mxu0 0
  %427 = vmatmul.mubr.bf16.gmra.mrb[0].mxu0 %v346
  %v428 = vpop.f32.mrb[0].mxu0
  %v429 = vadd.f32 %v316, %v428
  %v430 = vpop.f32.mrb[0].mxu0
  %v431 = vpop.f32.mrb[0].mxu0
  %v432 = vadd.f32 %v316, %v431
  %v433 = vpop.f32.mrb[0].mxu0
  %434 = vmatprep.mubr.bf16.mxu0 0
  %435 = vmatmul.mubr.bf16.gmra.mrb[0].mxu0 %v349
  %v436 = vpop.f32.mrb[0].mxu0
  %v437 = vadd.f32 %v316, %v436
  %v438 = vpop.f32.mrb[0].mxu0
  %v439 = vpop.f32.mrb[0].mxu0
  %v440 = vadd.f32 %v316, %v439
  %v441 = vpop.f32.mrb[0].mxu0
  %442 = vmatprep.mubr.bf16.mxu0 0
  %443 = vmatmul.mubr.bf16.gmra.mrb[0].mxu0 %v352
  %v444 = vpop.f32.mrb[0].mxu0
  %v445 = vadd.f32 %v316, %v444
  %v446 = vpop.f32.mrb[0].mxu0
  %v447 = vpop.f32.mrb[0].mxu0
  %v448 = vadd.f32 %v316, %v447
  %v449 = vpop.f32.mrb[0].mxu0
  %450 = vdwg.mxu0
  %v451 = vmul.f32 %v389, 0.5
  %v452 = vmul.f32 %v392, 0.5
  %v453 = vmul.f32 %v397, 0.5
  %v454 = vmul.f32 %v400, 0.5
  %v455 = vmul.f32 %v405, 0.5
  %v456 = vmul.f32 %v408, 0.5
  %v457 = vmul.f32 %v413, 0.5
  %v458 = vmul.f32 %v416, 0.5
  %v459 = vmul.f32 %v421, 0.5
  %v460 = vmul.f32 %v424, 0.5
  %v461 = vmul.f32 %v429, 0.5
  %v462 = vmul.f32 %v432, 0.5
  %v463 = vmul.f32 %v437, 0.5
  %v464 = vmul.f32 %v440, 0.5
  %v465 = vmul.f32 %v445, 0.5
  %v466 = vmul.f32 %v448, 0.5
  %v467 = vmul.f32 %v389, 0.044715
  %v468 = vmul.f32 %v392, 0.044715
  %v469 = vmul.f32 %v397, 0.044715
  %v470 = vmul.f32 %v400, 0.044715
  %v471 = vmul.f32 %v405, 0.044715
  %v472 = vmul.f32 %v408, 0.044715
  %v473 = vmul.f32 %v413, 0.044715
  %v474 = vmul.f32 %v416, 0.044715
  %v475 = vmul.f32 %v421, 0.044715
  %v476 = vmul.f32 %v424, 0.044715
  %v477 = vmul.f32 %v429, 0.044715
  %v478 = vmul.f32 %v432, 0.044715
  %v479 = vmul.f32 %v437, 0.044715
  %v480 = vmul.f32 %v440, 0.044715
  %v481 = vmul.f32 %v445, 0.044715
  %v482 = vmul.f32 %v448, 0.044715
  %v483 = vmul.f32 %v467, %v389
  %v484 = vmul.f32 %v468, %v392
  %v485 = vmul.f32 %v469, %v397
  %v486 = vmul.f32 %v470, %v400
  %v487 = vmul.f32 %v471, %v405
  %v488 = vmul.f32 %v472, %v408
  %v489 = vmul.f32 %v473, %v413
  %v490 = vmul.f32 %v474, %v416
  %v491 = vmul.f32 %v475, %v421
  %v492 = vmul.f32 %v476, %v424
  %v493 = vmul.f32 %v477, %v429
  %v494 = vmul.f32 %v478, %v432
  %v495 = vmul.f32 %v479, %v437
  %v496 = vmul.f32 %v480, %v440
  %v497 = vmul.f32 %v481, %v445
  %v498 = vmul.f32 %v482, %v448
  %v499 = vmul.f32 %v483, %v389
  %v500 = vmul.f32 %v484, %v392
  %v501 = vmul.f32 %v485, %v397
  %v502 = vmul.f32 %v486, %v400
  %v503 = vmul.f32 %v487, %v405
  %v504 = vmul.f32 %v488, %v408
  %v505 = vmul.f32 %v489, %v413
  %v506 = vmul.f32 %v490, %v416
  %v507 = vmul.f32 %v491, %v421
  %v508 = vmul.f32 %v492, %v424
  %v509 = vmul.f32 %v493, %v429
  %v510 = vmul.f32 %v494, %v432
  %v511 = vmul.f32 %v495, %v437
  %v512 = vmul.f32 %v496, %v440
  %v513 = vmul.f32 %v497, %v445
  %v514 = vmul.f32 %v498, %v448
  %v515 = vadd.f32 %v389, %v499
  %v516 = vadd.f32 %v392, %v500
  %v517 = vadd.f32 %v397, %v501
  %v518 = vadd.f32 %v400, %v502
  %v519 = vadd.f32 %v405, %v503
  %v520 = vadd.f32 %v408, %v504
  %v521 = vadd.f32 %v413, %v505
  %v522 = vadd.f32 %v416, %v506
  %v523 = vadd.f32 %v421, %v507
  %v524 = vadd.f32 %v424, %v508
  %v525 = vadd.f32 %v429, %v509
  %v526 = vadd.f32 %v432, %v510
  %v527 = vadd.f32 %v437, %v511
  %v528 = vadd.f32 %v440, %v512
  %v529 = vadd.f32 %v445, %v513
  %v530 = vadd.f32 %v448, %v514
  %v531 = vmul.f32 %v515, 0.7978846
  %v532 = vmul.f32 %v516, 0.7978846
  %v533 = vmul.f32 %v517, 0.7978846
  %v534 = vmul.f32 %v518, 0.7978846
  %v535 = vmul.f32 %v519, 0.7978846
  %v536 = vmul.f32 %v520, 0.7978846
  %v537 = vmul.f32 %v521, 0.7978846
  %v538 = vmul.f32 %v522, 0.7978846
  %v539 = vmul.f32 %v523, 0.7978846
  %v540 = vmul.f32 %v524, 0.7978846
  %v541 = vmul.f32 %v525, 0.7978846
  %v542 = vmul.f32 %v526, 0.7978846
  %v543 = vmul.f32 %v527, 0.7978846
  %v544 = vmul.f32 %v528, 0.7978846
  %v545 = vmul.f32 %v529, 0.7978846
  %v546 = vmul.f32 %v530, 0.7978846
  %v547 = vtanh.pop %v531
  %v548 = vtanh.pop %v532
  %v549 = vtanh.pop %v533
  %v550 = vtanh.pop %v534
  %v551 = vtanh.pop %v535
  %v552 = vtanh.pop %v536
  %v553 = vtanh.pop %v537
  %v554 = vtanh.pop %v538
  %v555 = vtanh.pop %v539
  %v556 = vtanh.pop %v540
  %v557 = vtanh.pop %v541
  %v558 = vtanh.pop %v542
  %v559 = vtanh.pop %v543
  %v560 = vtanh.pop %v544
  %v561 = vtanh.pop %v545
  %v562 = vtanh.pop %v546
  %v563 = vadd.f32 %v547, 1.0
  %v564 = vadd.f32 %v548, 1.0
  %v565 = vadd.f32 %v549, 1.0
  %v566 = vadd.f32 %v550, 1.0
  %v567 = vadd.f32 %v551, 1.0
  %v568 = vadd.f32 %v552, 1.0
  %v569 = vadd.f32 %v553, 1.0
  %v570 = vadd.f32 %v554, 1.0
  %v571 = vadd.f32 %v555, 1.0
  %v572 = vadd.f32 %v556, 1.0
  %v573 = vadd.f32 %v557, 1.0
  %v574 = vadd.f32 %v558, 1.0
  %v575 = vadd.f32 %v559, 1.0
  %v576 = vadd.f32 %v560, 1.0
  %v577 = vadd.f32 %v561, 1.0
  %v578 = vadd.f32 %v562, 1.0
  %v579 = vmul.f32 %v451, %v563
  %v580 = vmul.f32 %v452, %v564
  %v581 = vmul.f32 %v453, %v565
  %v582 = vmul.f32 %v454, %v566
  %v583 = vmul.f32 %v455, %v567
  %v584 = vmul.f32 %v456, %v568
  %v585 = vmul.f32 %v457, %v569
  %v586 = vmul.f32 %v458, %v570
  %v587 = vmul.f32 %v459, %v571
  %v588 = vmul.f32 %v460, %v572
  %v589 = vmul.f32 %v461, %v573
  %v590 = vmul.f32 %v462, %v574
  %v591 = vmul.f32 %v463, %v575
  %v592 = vmul.f32 %v464, %v576
  %v593 = vmul.f32 %v465, %v577
  %v594 = vmul.f32 %v466, %v578
  %v595 = vpack.c.bf16 %v580, %v579
  %v596 = vpack.c.bf16 %v582, %v581
  %v597 = vpack.c.bf16 %v584, %v583
  %v598 = vpack.c.bf16 %v586, %v585
  %v599 = vpack.c.bf16 %v588, %v587
  %v600 = vpack.c.bf16 %v590, %v589
  %v601 = vpack.c.bf16 %v592, %v591
  %v602 = vpack.c.bf16 %v594, %v593
  %v603 = vld [vmem:[%s5] sm:$0xf]
  %v604 = vld [vmem:[%s5 + $0x4] sm:$0xf]
  %v605 = vld [vmem:[%s5 + $0x8] sm:$0xf]
  %v606 = vld [vmem:[%s5 + $0xc] sm:$0xf]
  %v607 = vld [vmem:[%s5 + $0x10] sm:$0xf]
  %v608 = vld [vmem:[%s5 + $0x14] sm:$0xf]
  %v609 = vld [vmem:[%s5 + $0x18] sm:$0xf]
  %v610 = vld [vmem:[%s5 + $0x1c] sm:$0xf]
  %v611 = vld [vmem:[%s6] sm:$0x1]
  %v613 = vlaneseq
  %v614 = vshrl.u32 %v613, 7
  %v615 = vsub.s32 0, %v614
  %v616 = vrot.slane %v611, %v615
  %v626 = vunpack.c.l.b16 %v603
  %v627 = vunpack.c.l.b16 %v604
  %v628 = vunpack.c.l.b16 %v605
  %v629 = vunpack.c.l.b16 %v606
  %v630 = vunpack.c.l.b16 %v607
  %v631 = vunpack.c.l.b16 %v608
  %v632 = vunpack.c.l.b16 %v609
  %v633 = vunpack.c.l.b16 %v610
  %v634 = vpack.c.b16 %v627, %v626
  %v635 = vpack.c.b16 %v629, %v628
  %v636 = vpack.c.b16 %v631, %v630
  %v637 = vpack.c.b16 %v633, %v632
  %vm642 = vcmask 523264
  %v644 = vsel %vm642, %v595, 0
  %v647 = vsel %vm642, %v596, 0
  %v650 = vsel %vm642, %v597, 0
  %v653 = vsel %vm642, %v598, 0
  %v656 = vsel %vm642, %v599, 0
  %v659 = vsel %vm642, %v600, 0
  %v662 = vsel %vm642, %v601, 0
  %v665 = vsel %vm642, %v602, 0
  %667 = vmatprep.subr.bf16.mxu0 0
  %668 = vmatpush1.bf16.msra.mxu0 %v634
  %669 = vmatprep.subr.bf16.mxu0 0
  %670 = vmatpush1.bf16.msra.mxu0 %v635
  %671 = vmatprep.subr.bf16.mxu0 0
  %672 = vmatpush1.bf16.msra.mxu0 %v636
  %673 = vmatprep.subr.bf16.mxu0 0
  %674 = vmatpush1.bf16.msra.mxu0 %v637
  %675 = vmatprep.subr.bf16.mxu0 0
  %676 = vmatpush1.bf16.msra.mxu0 0
  %677 = vmatprep.subr.bf16.mxu0 0
  %678 = vmatpush1.bf16.msra.mxu0 0
  %679 = vmatprep.subr.bf16.mxu0 0
  %680 = vmatpush1.bf16.msra.mxu0 0
  %681 = vmatprep.subr.bf16.mxu0 0
  %682 = vmatpush1.bf16.msra.mxu0 0
  %683 = vmatprep.subr.bf16.mxu0 0
  %684 = vmatpush1.bf16.msra.mxu0 0
  %685 = vmatprep.subr.bf16.mxu0 0
  %686 = vmatpush1.bf16.msra.mxu0 0
  %687 = vmatprep.subr.bf16.mxu0 0
  %688 = vmatpush1.bf16.msra.mxu0 0
  %689 = vmatprep.subr.bf16.mxu0 0
  %690 = vmatpush1.bf16.msra.mxu0 0
  %691 = vmatprep.subr.bf16.mxu0 0
  %692 = vmatpush1.bf16.msra.mxu0 0
  %693 = vmatprep.subr.bf16.mxu0 0
  %694 = vmatpush1.bf16.msra.mxu0 0
  %695 = vmatprep.subr.bf16.mxu0 0
  %696 = vmatpush1.bf16.msra.mxu0 0
  %697 = vmatprep.subr.bf16.mxu0 0
  %698 = vmatpush1.bf16.msra.mxu0 0
  %699 = vmatprep.mubr.bf16.mxu0 0
  %700 = vmatmul.mubr.bf16.gmra.mrb[0].mxu0 %v644
  %v701 = vpop.f32.mrb[0].mxu0
  %v702 = vadd.f32 %v616, %v701
  %v703 = vpop.f32.mrb[0].mxu0
  %v704 = vpop.f32.mrb[0].mxu0
  %v705 = vadd.f32 %v616, %v704
  %v706 = vpop.f32.mrb[0].mxu0
  %707 = vmatprep.mubr.bf16.mxu0 0
  %708 = vmatmul.mubr.bf16.gmra.mrb[0].mxu0 %v647
  %v709 = vpop.f32.mrb[0].mxu0
  %v710 = vadd.f32 %v616, %v709
  %v711 = vpop.f32.mrb[0].mxu0
  %v712 = vpop.f32.mrb[0].mxu0
  %v713 = vadd.f32 %v616, %v712
  %v714 = vpop.f32.mrb[0].mxu0
  %715 = vmatprep.mubr.bf16.mxu0 0
  %716 = vmatmul.mubr.bf16.gmra.mrb[0].mxu0 %v650
  %v717 = vpop.f32.mrb[0].mxu0
  %v718 = vadd.f32 %v616, %v717
  %v719 = vpop.f32.mrb[0].mxu0
  %v720 = vpop.f32.mrb[0].mxu0
  %v721 = vadd.f32 %v616, %v720
  %v722 = vpop.f32.mrb[0].mxu0
  %723 = vmatprep.mubr.bf16.mxu0 0
  %724 = vmatmul.mubr.bf16.gmra.mrb[0].mxu0 %v653
  %v725 = vpop.f32.mrb[0].mxu0
  %v726 = vadd.f32 %v616, %v725
  %v727 = vpop.f32.mrb[0].mxu0
  %v728 = vpop.f32.mrb[0].mxu0
  %v729 = vadd.f32 %v616, %v728
  %v730 = vpop.f32.mrb[0].mxu0
  %731 = vmatprep.mubr.bf16.mxu0 0
  %732 = vmatmul.mubr.bf16.gmra.mrb[0].mxu0 %v656
  %v733 = vpop.f32.mrb[0].mxu0
  %v734 = vadd.f32 %v616, %v733
  %v735 = vpop.f32.mrb[0].mxu0
  %v736 = vpop.f32.mrb[0].mxu0
  %v737 = vadd.f32 %v616, %v736
  %v738 = vpop.f32.mrb[0].mxu0
  %739 = vmatprep.mubr.bf16.mxu0 0
  %740 = vmatmul.mubr.bf16.gmra.mrb[0].mxu0 %v659
  %v741 = vpop.f32.mrb[0].mxu0
  %v742 = vadd.f32 %v616, %v741
  %v743 = vpop.f32.mrb[0].mxu0
  %v744 = vpop.f32.mrb[0].mxu0
  %v745 = vadd.f32 %v616, %v744
  %v746 = vpop.f32.mrb[0].mxu0
  %747 = vmatprep.mubr.bf16.mxu0 0
  %748 = vmatmul.mubr.bf16.gmra.mrb[0].mxu0 %v662
  %v749 = vpop.f32.mrb[0].mxu0
  %v750 = vadd.f32 %v616, %v749
  %v751 = vpop.f32.mrb[0].mxu0
  %v752 = vpop.f32.mrb[0].mxu0
  %v753 = vadd.f32 %v616, %v752
  %v754 = vpop.f32.mrb[0].mxu0
  %755 = vmatprep.mubr.bf16.mxu0 0
  %756 = vmatmul.mubr.bf16.gmra.mrb[0].mxu0 %v665
  %v757 = vpop.f32.mrb[0].mxu0
  %v758 = vadd.f32 %v616, %v757
  %v759 = vpop.f32.mrb[0].mxu0
  %v760 = vpop.f32.mrb[0].mxu0
  %v761 = vadd.f32 %v616, %v760
  %v762 = vpop.f32.mrb[0].mxu0
  %763 = vdwg.mxu0
  %v764 = vadd.f32 %v27, %v702
  %v765 = vadd.f32 %v28, %v705
  %v766 = vadd.f32 %v29, %v710
  %v767 = vadd.f32 %v30, %v713
  %v768 = vadd.f32 %v31, %v718
  %v769 = vadd.f32 %v32, %v721
  %v770 = vadd.f32 %v33, %v726
  %v771 = vadd.f32 %v34, %v729
  %v772 = vadd.f32 %v35, %v734
  %v773 = vadd.f32 %v36, %v737
  %v774 = vadd.f32 %v37, %v742
  %v775 = vadd.f32 %v38, %v745
  %v776 = vadd.f32 %v39, %v750
  %v777 = vadd.f32 %v40, %v753
  %v778 = vadd.f32 %v41, %v758
  %v779 = vadd.f32 %v42, %v761
  %780 = vst.msk [vmem:[%s7] sm:$0xff] %vm43, %v764
  %781 = vst.msk [vmem:[%s7 + $0x8] sm:$0xff] %vm43, %v765
  %782 = vst.msk [vmem:[%s7 + $0x10] sm:$0xff] %vm43, %v766
  %783 = vst.msk [vmem:[%s7 + $0x18] sm:$0xff] %vm43, %v767
  %784 = vst.msk [vmem:[%s7 + $0x20] sm:$0xff] %vm43, %v768
  %785 = vst.msk [vmem:[%s7 + $0x28] sm:$0xff] %vm43, %v769
  %786 = vst.msk [vmem:[%s7 + $0x30] sm:$0xff] %vm43, %v770
  %787 = vst.msk [vmem:[%s7 + $0x38] sm:$0xff] %vm43, %v771
  %788 = vst.msk [vmem:[%s7 + $0x40] sm:$0xff] %vm43, %v772
  %789 = vst.msk [vmem:[%s7 + $0x48] sm:$0xff] %vm43, %v773
  %790 = vst.msk [vmem:[%s7 + $0x50] sm:$0xff] %vm43, %v774
  %791 = vst.msk [vmem:[%s7 + $0x58] sm:$0xff] %vm43, %v775
  %792 = vst.msk [vmem:[%s7 + $0x60] sm:$0xff] %vm43, %v776
  %793 = vst.msk [vmem:[%s7 + $0x68] sm:$0xff] %vm43, %v777
  %794 = vst.msk [vmem:[%s7 + $0x70] sm:$0xff] %vm43, %v778
  %795 = vst.msk [vmem:[%s7 + $0x78] sm:$0xff] %vm43, %v779
  // Predicated region
  $region30: #{resvit_generator.76} parent=0 // pred_check
    _
  $region31: #{resvit_generator.76} parent=0 // pred_check_branch
    %797 = sbr.rel (0) target = $region33
  $region32: #{resvit_generator.76} parent=0 // pred_region
    _
  $region33: #{resvit_generator.76} parent=0 // pred_fallthru
    _
  // Predicated region
  $region34: #{resvit_generator.76} parent=0 // pred_check
    _
  $region35: #{resvit_generator.76} parent=0 // pred_check_branch
    %799 = sbr.rel (0) target = $region37
  $region36: #{resvit_generator.76} parent=0 // pred_region
    _
  $region37: #{resvit_generator.76} parent=0 // pred_fallthru
    _

// kernel: resvit_generator.80
$region0: #{resvit_generator.80}
  #allocation0 [shape = 'u32[]', space=smem, size = 0x4, offset = 0x4, fixed_abs, tag = 'smem constant byte address 0x4 - core index']
  #allocation1 [shape = 'u32[144,128]{1,0:T(1,128)}', space=vmem, size = 0x12000, scoped, tag = 'internal scratch']
  %s0 = inlined_call_operand.vmem [shape: f32[128,32], index: 0, kind: input, shape index: {}]
  %s1 = inlined_call_operand.vmem [shape: f32[1,32], index: 1, kind: input, shape index: {}]
  %s2 = inlined_call_operand.vmem [shape: f32[1,32], index: 2, kind: input, shape index: {}]
  %s3 = inlined_call_operand.vmem [shape: f32[128,32], index: 3, kind: output, shape index: {}]
  %s4 = sld [smem:[#allocation0]]
  $region22: #{resvit_generator.80} parent=0
    _
  %s6 = ssub.s32 1, %s4
  %s7 = scalar_select 0, %s6, %s4
  // Predicated region
  $region2: #{resvit_generator.80} parent=0 // pred_check
    _
  $region3: #{resvit_generator.80} parent=0 // pred_check_branch
    %9 = sbr.rel (0) target = $region5
  $region4: #{resvit_generator.80} parent=0 // pred_region
    _
  $region5: #{resvit_generator.80} parent=0 // pred_fallthru
    _
  // Predicated region
  $region6: #{resvit_generator.80} parent=0 // pred_check
    _
  $region7: #{resvit_generator.80} parent=0 // pred_check_branch
    %11 = sbr.rel (0) target = $region9
  $region8: #{resvit_generator.80} parent=0 // pred_region
    _
  $region9: #{resvit_generator.80} parent=0 // pred_fallthru
    _
  // Predicated region
  $region10: #{resvit_generator.80} parent=0 // pred_check
    _
  $region11: #{resvit_generator.80} parent=0 // pred_check_branch
    %13 = sbr.rel (0) target = $region13
  $region12: #{resvit_generator.80} parent=0 // pred_region
    _
  $region13: #{resvit_generator.80} parent=0 // pred_fallthru
    _
  %v14 = vld [vmem:[%s0] sm:$0xff]
  %v15 = vld [vmem:[%s0 + $0x8] sm:$0xff]
  %v16 = vld [vmem:[%s0 + $0x10] sm:$0xff]
  %v17 = vld [vmem:[%s0 + $0x18] sm:$0xff]
  %v18 = vld [vmem:[%s0 + $0x20] sm:$0xff]
  %v19 = vld [vmem:[%s0 + $0x28] sm:$0xff]
  %v20 = vld [vmem:[%s0 + $0x30] sm:$0xff]
  %v21 = vld [vmem:[%s0 + $0x38] sm:$0xff]
  %v22 = vld [vmem:[%s0 + $0x40] sm:$0xff]
  %v23 = vld [vmem:[%s0 + $0x48] sm:$0xff]
  %v24 = vld [vmem:[%s0 + $0x50] sm:$0xff]
  %v25 = vld [vmem:[%s0 + $0x58] sm:$0xff]
  %v26 = vld [vmem:[%s0 + $0x60] sm:$0xff]
  %v27 = vld [vmem:[%s0 + $0x68] sm:$0xff]
  %v28 = vld [vmem:[%s0 + $0x70] sm:$0xff]
  %v29 = vld [vmem:[%s0 + $0x78] sm:$0xff]
  %vm30 = vcmask 261120
  %v31 = vsel %vm30, %v14, 0.0
  %32 = vadd.xlane.f32.xlu0 %v31
  %v33 = vpop.xlane.xlu0 %32
  %v34 = vsel %vm30, %v15, 0.0
  %35 = vadd.xlane.f32.xlu0 %v34
  %v36 = vpop.xlane.xlu0 %35
  %v37 = vsel %vm30, %v16, 0.0
  %38 = vadd.xlane.f32.xlu0 %v37
  %v39 = vpop.xlane.xlu0 %38
  %v40 = vsel %vm30, %v17, 0.0
  %41 = vadd.xlane.f32.xlu0 %v40
  %v42 = vpop.xlane.xlu0 %41
  %v43 = vsel %vm30, %v18, 0.0
  %44 = vadd.xlane.f32.xlu0 %v43
  %v45 = vpop.xlane.xlu0 %44
  %v46 = vsel %vm30, %v19, 0.0
  %47 = vadd.xlane.f32.xlu0 %v46
  %v48 = vpop.xlane.xlu0 %47
  %v49 = vsel %vm30, %v20, 0.0
  %50 = vadd.xlane.f32.xlu0 %v49
  %v51 = vpop.xlane.xlu0 %50
  %v52 = vsel %vm30, %v21, 0.0
  %53 = vadd.xlane.f32.xlu0 %v52
  %v54 = vpop.xlane.xlu0 %53
  %v55 = vsel %vm30, %v22, 0.0
  %56 = vadd.xlane.f32.xlu0 %v55
  %v57 = vpop.xlane.xlu0 %56
  %v58 = vsel %vm30, %v23, 0.0
  %59 = vadd.xlane.f32.xlu0 %v58
  %v60 = vpop.xlane.xlu0 %59
  %v61 = vsel %vm30, %v24, 0.0
  %62 = vadd.xlane.f32.xlu0 %v61
  %v63 = vpop.xlane.xlu0 %62
  %v64 = vsel %vm30, %v25, 0.0
  %65 = vadd.xlane.f32.xlu0 %v64
  %v66 = vpop.xlane.xlu0 %65
  %v67 = vsel %vm30, %v26, 0.0
  %68 = vadd.xlane.f32.xlu0 %v67
  %v69 = vpop.xlane.xlu0 %68
  %v70 = vsel %vm30, %v27, 0.0
  %71 = vadd.xlane.f32.xlu0 %v70
  %v72 = vpop.xlane.xlu0 %71
  %v73 = vsel %vm30, %v28, 0.0
  %74 = vadd.xlane.f32.xlu0 %v73
  %v75 = vpop.xlane.xlu0 %74
  %v76 = vsel %vm30, %v29, 0.0
  %77 = vadd.xlane.f32.xlu0 %v76
  %v78 = vpop.xlane.xlu0 %77
  %v79 = vrcp.pop 32.0
  %v80 = vmul.f32 %v33, %v79
  %v81 = vmul.f32 %v36, %v79
  %v82 = vmul.f32 %v39, %v79
  %v83 = vmul.f32 %v42, %v79
  %v84 = vmul.f32 %v45, %v79
  %v85 = vmul.f32 %v48, %v79
  %v86 = vmul.f32 %v51, %v79
  %v87 = vmul.f32 %v54, %v79
  %v88 = vmul.f32 %v57, %v79
  %v89 = vmul.f32 %v60, %v79
  %v90 = vmul.f32 %v63, %v79
  %v91 = vmul.f32 %v66, %v79
  %v92 = vmul.f32 %v69, %v79
  %v93 = vmul.f32 %v72, %v79
  %v94 = vmul.f32 %v75, %v79
  %v95 = vmul.f32 %v78, %v79
  %v96 = vsub.f32 %v14, %v80
  %v97 = vsub.f32 %v15, %v81
  %v98 = vsub.f32 %v16, %v82
  %v99 = vsub.f32 %v17, %v83
  %v100 = vsub.f32 %v18, %v84
  %v101 = vsub.f32 %v19, %v85
  %v102 = vsub.f32 %v20, %v86
  %v103 = vsub.f32 %v21, %v87
  %v104 = vsub.f32 %v22, %v88
  %v105 = vsub.f32 %v23, %v89
  %v106 = vsub.f32 %v24, %v90
  %v107 = vsub.f32 %v25, %v91
  %v108 = vsub.f32 %v26, %v92
  %v109 = vsub.f32 %v27, %v93
  %v110 = vsub.f32 %v28, %v94
  %v111 = vsub.f32 %v29, %v95
  %v112 = vmul.f32 %v96, %v96
  %v113 = vmul.f32 %v97, %v97
  %v114 = vmul.f32 %v98, %v98
  %v115 = vmul.f32 %v99, %v99
  %v116 = vmul.f32 %v100, %v100
  %v117 = vmul.f32 %v101, %v101
  %v118 = vmul.f32 %v102, %v102
  %v119 = vmul.f32 %v103, %v103
  %v120 = vmul.f32 %v104, %v104
  %v121 = vmul.f32 %v105, %v105
  %v122 = vmul.f32 %v106, %v106
  %v123 = vmul.f32 %v107, %v107
  %v124 = vmul.f32 %v108, %v108
  %v125 = vmul.f32 %v109, %v109
  %v126 = vmul.f32 %v110, %v110
  %v127 = vmul.f32 %v111, %v111
  %v128 = vsel %vm30, %v112, 0.0
  %129 = vadd.xlane.f32.xlu0 %v128
  %v130 = vpop.xlane.xlu0 %129
  %v131 = vsel %vm30, %v113, 0.0
  %132 = vadd.xlane.f32.xlu0 %v131
  %v133 = vpop.xlane.xlu0 %132
  %v134 = vsel %vm30, %v114, 0.0
  %135 = vadd.xlane.f32.xlu0 %v134
  %v136 = vpop.xlane.xlu0 %135
  %v137 = vsel %vm30, %v115, 0.0
  %138 = vadd.xlane.f32.xlu0 %v137
  %v139 = vpop.xlane.xlu0 %138
  %v140 = vsel %vm30, %v116, 0.0
  %141 = vadd.xlane.f32.xlu0 %v140
  %v142 = vpop.xlane.xlu0 %141
  %v143 = vsel %vm30, %v117, 0.0
  %144 = vadd.xlane.f32.xlu0 %v143
  %v145 = vpop.xlane.xlu0 %144
  %v146 = vsel %vm30, %v118, 0.0
  %147 = vadd.xlane.f32.xlu0 %v146
  %v148 = vpop.xlane.xlu0 %147
  %v149 = vsel %vm30, %v119, 0.0
  %150 = vadd.xlane.f32.xlu0 %v149
  %v151 = vpop.xlane.xlu0 %150
  %v152 = vsel %vm30, %v120, 0.0
  %153 = vadd.xlane.f32.xlu0 %v152
  %v154 = vpop.xlane.xlu0 %153
  %v155 = vsel %vm30, %v121, 0.0
  %156 = vadd.xlane.f32.xlu0 %v155
  %v157 = vpop.xlane.xlu0 %156
  %v158 = vsel %vm30, %v122, 0.0
  %159 = vadd.xlane.f32.xlu0 %v158
  %v160 = vpop.xlane.xlu0 %159
  %v161 = vsel %vm30, %v123, 0.0
  %162 = vadd.xlane.f32.xlu0 %v161
  %v163 = vpop.xlane.xlu0 %162
  %v164 = vsel %vm30, %v124, 0.0
  %165 = vadd.xlane.f32.xlu0 %v164
  %v166 = vpop.xlane.xlu0 %165
  %v167 = vsel %vm30, %v125, 0.0
  %168 = vadd.xlane.f32.xlu0 %v167
  %v169 = vpop.xlane.xlu0 %168
  %v170 = vsel %vm30, %v126, 0.0
  %171 = vadd.xlane.f32.xlu0 %v170
  %v172 = vpop.xlane.xlu0 %171
  %v173 = vsel %vm30, %v127, 0.0
  %174 = vadd.xlane.f32.xlu0 %v173
  %v175 = vpop.xlane.xlu0 %174
  %v176 = vmul.f32 %v130, %v79
  %v177 = vmul.f32 %v133, %v79
  %v178 = vmul.f32 %v136, %v79
  %v179 = vmul.f32 %v139, %v79
  %v180 = vmul.f32 %v142, %v79
  %v181 = vmul.f32 %v145, %v79
  %v182 = vmul.f32 %v148, %v79
  %v183 = vmul.f32 %v151, %v79
  %v184 = vmul.f32 %v154, %v79
  %v185 = vmul.f32 %v157, %v79
  %v186 = vmul.f32 %v160, %v79
  %v187 = vmul.f32 %v163, %v79
  %v188 = vmul.f32 %v166, %v79
  %v189 = vmul.f32 %v169, %v79
  %v190 = vmul.f32 %v172, %v79
  %v191 = vmul.f32 %v175, %v79
  %v192 = vadd.f32 %v176, 1e-06
  %v193 = vadd.f32 %v177, 1e-06
  %v194 = vadd.f32 %v178, 1e-06
  %v195 = vadd.f32 %v179, 1e-06
  %v196 = vadd.f32 %v180, 1e-06
  %v197 = vadd.f32 %v181, 1e-06
  %v198 = vadd.f32 %v182, 1e-06
  %v199 = vadd.f32 %v183, 1e-06
  %v200 = vadd.f32 %v184, 1e-06
  %v201 = vadd.f32 %v185, 1e-06
  %v202 = vadd.f32 %v186, 1e-06
  %v203 = vadd.f32 %v187, 1e-06
  %v204 = vadd.f32 %v188, 1e-06
  %v205 = vadd.f32 %v189, 1e-06
  %v206 = vadd.f32 %v190, 1e-06
  %v207 = vadd.f32 %v191, 1e-06
  %v208 = vrsqrt.pop %v192
  %v209 = vrsqrt.pop %v193
  %v210 = vrsqrt.pop %v194
  %v211 = vrsqrt.pop %v195
  %v212 = vrsqrt.pop %v196
  %v213 = vrsqrt.pop %v197
  %v214 = vrsqrt.pop %v198
  %v215 = vrsqrt.pop %v199
  %v216 = vrsqrt.pop %v200
  %v217 = vrsqrt.pop %v201
  %v218 = vrsqrt.pop %v202
  %v219 = vrsqrt.pop %v203
  %v220 = vrsqrt.pop %v204
  %v221 = vrsqrt.pop %v205
  %v222 = vrsqrt.pop %v206
  %v223 = vrsqrt.pop %v207
  %v224 = vmul.f32 %v96, %v208
  %v225 = vmul.f32 %v97, %v209
  %v226 = vmul.f32 %v98, %v210
  %v227 = vmul.f32 %v99, %v211
  %v228 = vmul.f32 %v100, %v212
  %v229 = vmul.f32 %v101, %v213
  %v230 = vmul.f32 %v102, %v214
  %v231 = vmul.f32 %v103, %v215
  %v232 = vmul.f32 %v104, %v216
  %v233 = vmul.f32 %v105, %v217
  %v234 = vmul.f32 %v106, %v218
  %v235 = vmul.f32 %v107, %v219
  %v236 = vmul.f32 %v108, %v220
  %v237 = vmul.f32 %v109, %v221
  %v238 = vmul.f32 %v110, %v222
  %v239 = vmul.f32 %v111, %v223
  %v240 = vld [vmem:[%s1] sm:$0x1]
  %v242 = vlaneseq
  %v243 = vshrl.u32 %v242, 7
  %v244 = vsub.s32 0, %v243
  %v245 = vrot.slane %v240, %v244
  %v247 = vmul.f32 %v224, %v245
  %v248 = vmul.f32 %v225, %v245
  %v249 = vmul.f32 %v226, %v245
  %v250 = vmul.f32 %v227, %v245
  %v251 = vmul.f32 %v228, %v245
  %v252 = vmul.f32 %v229, %v245
  %v253 = vmul.f32 %v230, %v245
  %v254 = vmul.f32 %v231, %v245
  %v255 = vmul.f32 %v232, %v245
  %v256 = vmul.f32 %v233, %v245
  %v257 = vmul.f32 %v234, %v245
  %v258 = vmul.f32 %v235, %v245
  %v259 = vmul.f32 %v236, %v245
  %v260 = vmul.f32 %v237, %v245
  %v261 = vmul.f32 %v238, %v245
  %v262 = vmul.f32 %v239, %v245
  %v263 = vld [vmem:[%s2] sm:$0x1]
  %v265 = vlaneseq
  %v266 = vshrl.u32 %v265, 7
  %v267 = vsub.s32 0, %v266
  %v268 = vrot.slane %v263, %v267
  %v270 = vadd.f32 %v247, %v268
  %v271 = vadd.f32 %v248, %v268
  %v272 = vadd.f32 %v249, %v268
  %v273 = vadd.f32 %v250, %v268
  %v274 = vadd.f32 %v251, %v268
  %v275 = vadd.f32 %v252, %v268
  %v276 = vadd.f32 %v253, %v268
  %v277 = vadd.f32 %v254, %v268
  %v278 = vadd.f32 %v255, %v268
  %v279 = vadd.f32 %v256, %v268
  %v280 = vadd.f32 %v257, %v268
  %v281 = vadd.f32 %v258, %v268
  %v282 = vadd.f32 %v259, %v268
  %v283 = vadd.f32 %v260, %v268
  %v284 = vadd.f32 %v261, %v268
  %v285 = vadd.f32 %v262, %v268
  %286 = vst.msk [vmem:[%s3] sm:$0xff] %vm30, %v270
  %287 = vst.msk [vmem:[%s3 + $0x8] sm:$0xff] %vm30, %v271
  %288 = vst.msk [vmem:[%s3 + $0x10] sm:$0xff] %vm30, %v272
  %289 = vst.msk [vmem:[%s3 + $0x18] sm:$0xff] %vm30, %v273
  %290 = vst.msk [vmem:[%s3 + $0x20] sm:$0xff] %vm30, %v274
  %291 = vst.msk [vmem:[%s3 + $0x28] sm:$0xff] %vm30, %v275
  %292 = vst.msk [vmem:[%s3 + $0x30] sm:$0xff] %vm30, %v276
  %293 = vst.msk [vmem:[%s3 + $0x38] sm:$0xff] %vm30, %v277
  %294 = vst.msk [vmem:[%s3 + $0x40] sm:$0xff] %vm30, %v278
  %295 = vst.msk [vmem:[%s3 + $0x48] sm:$0xff] %vm30, %v279
  %296 = vst.msk [vmem:[%s3 + $0x50] sm:$0xff] %vm30, %v280
  %297 = vst.msk [vmem:[%s3 + $0x58] sm:$0xff] %vm30, %v281
  %298 = vst.msk [vmem:[%s3 + $0x60] sm:$0xff] %vm30, %v282
  %299 = vst.msk [vmem:[%s3 + $0x68] sm:$0xff] %vm30, %v283
  %300 = vst.msk [vmem:[%s3 + $0x70] sm:$0xff] %vm30, %v284
  %301 = vst.msk [vmem:[%s3 + $0x78] sm:$0xff] %vm30, %v285
  // Predicated region
  $region14: #{resvit_generator.80} parent=0 // pred_check
    _
  $region15: #{resvit_generator.80} parent=0 // pred_check_branch
    %303 = sbr.rel (0) target = $region17
  $region16: #{resvit_generator.80} parent=0 // pred_region
    _
  $region17: #{resvit_generator.80} parent=0 // pred_fallthru
    _
  // Predicated region
  $region18: #{resvit_generator.80} parent=0 // pred_check
    _
  $region19: #{resvit_generator.80} parent=0 // pred_check_branch
    %305 = sbr.rel (0) target = $region21
  $region20: #{resvit_generator.80} parent=0 // pred_region
    _
  $region21: #{resvit_generator.80} parent=0 // pred_fallthru
    _

// kernel: resvit_generator.75
$region0: #{resvit_generator.75}
  #allocation0 [shape = 'u32[]', space=smem, size = 0x4, offset = 0x4, fixed_abs, tag = 'smem constant byte address 0x4 - core index']
  #allocation1 [shape = 'u32[144,128]{1,0:T(1,128)}', space=vmem, size = 0x12000, scoped, tag = 'internal scratch']
  %s0 = inlined_call_operand.vmem [shape: f32[2,64,32], index: 0, kind: input, shape index: {}]
  %s1 = inlined_call_operand.vmem [shape: f32[2,64,32], index: 1, kind: input, shape index: {}]
  %s2 = inlined_call_operand.vmem [shape: f32[2,64,32], index: 2, kind: input, shape index: {}]
  %s3 = inlined_call_operand.vmem [shape: f32[2,64,32], index: 3, kind: input, shape index: {}]
  %s4 = inlined_call_operand.vmem [shape: bf16[32,32], index: 4, kind: input, shape index: {}]
  %s5 = inlined_call_operand.vmem [shape: f32[1,32], index: 5, kind: input, shape index: {}]
  %s6 = inlined_call_operand.vmem [shape: f32[2,64,32], index: 6, kind: output, shape index: {}]
  %s7 = sld [smem:[#allocation0]]
  $region57: #{resvit_generator.75} parent=0
    _
  %s9 = ssub.s32 1, %s7
  %s10 = scalar_select 0, %s9, %s7
  loop: start=0, step=1, limit=4
  $region2: #{resvit_generator.75} parent=0 // loop_pre_header
    _
  $region3: #{resvit_generator.75} parent=0 // loop_header
    %s12 = sphi 0, %s16
    %p13 = scmp.ge.s32.totalorder %s12, 4
    %s22 = sphi 0, %s24
    %s25 = sphi 0, %s22
    %s26 = sphi 0, %s25
    %s42 = sphi 0, %s26
    %s48 = sphi 0, %s50
    %s51 = sphi 0, %s48
    %s52 = sphi 0, %s51
    %s68 = sphi 0, %s52
    %s74 = sphi 0, %s76
    %s77 = sphi 0, %s74
    %s78 = sphi 0, %s77
    %s94 = sphi 0, %s78
    %s100 = sphi 0, %s102
    %s103 = sphi 0, %s100
    %s104 = sphi 0, %s103
    %s120 = sphi 0, %s104
    %s124 = sphi 0, %s124
    %s126 = sphi 0, %s124
    %s127 = sphi 0, %s126
    %s141 = sphi 0, %s127
    %s145 = sphi 0, %s145
    %s147 = sphi 0, %s145
    %s148 = sphi 0, %s147
    %s162 = sphi 0, %s148
    %s168 = sphi 0, %s170
    %s171 = sphi 0, %s168
    %s172 = sphi 0, %s171
    %s188 = sphi 0, %s172
  $region4: #{resvit_generator.75} parent=0 // loop_header_branch
    %15 = sbr.rel (%p13) target = $region8
  $region5: #{resvit_generator.75} parent=0 // loop_body
    %s17 = ssub.s32 %s12, 1
    %s18 = ssub.s32 %s12, 2
    %s19 = sadd.s32 %s12, 1
    %s20 = ssub.s32 %s12, %s19
    %p21 = scmp.eq.s32.totalorder %s20, 0
    %s23 = sadd.s32 %s22, 1
    %s24 = scalar_select %p21, %s22, %s23
    %p27 = pneg %p21
    %p28 = scmp.eq.s32.totalorder %s12, 1
    %p29 = por %p27, %p28
    %p30 = scmp.ne.s32.totalorder %s22, %s25
    %p31 = scmp.eq.s32.totalorder %s12, 0
    %p32 = por %p30, %p31
    %p33 = scmp.ne.s32.totalorder %s22, %s25
    %p34 = scmp.eq.s32.totalorder %s17, 1
    %p35 = por %p33, %p34
    %p36 = scmp.ne.s32.totalorder %s25, %s26
    %p37 = scmp.eq.s32.totalorder %s17, 0
    %p38 = por %p36, %p37
    %p39 = scmp.ne.s32.totalorder %s25, %s26
    %p40 = scmp.eq.s32.totalorder %s18, 1
    %p41 = por %p39, %p40
    %p43 = scmp.ne.s32.totalorder %s26, %s42
    %p44 = scmp.eq.s32.totalorder %s18, 0
    %p45 = por %p43, %p44
    %s46 = ssub.s32 %s12, %s19
    %p47 = scmp.eq.s32.totalorder %s46, 0
    %s49 = sadd.s32 %s48, 1
    %s50 = scalar_select %p47, %s48, %s49
    %p53 = pneg %p47
    %p54 = scmp.eq.s32.totalorder %s12, 1
    %p55 = por %p53, %p54
    %p56 = scmp.ne.s32.totalorder %s48, %s51
    %p57 = scmp.eq.s32.totalorder %s12, 0
    %p58 = por %p56, %p57
    %p59 = scmp.ne.s32.totalorder %s48, %s51
    %p60 = scmp.eq.s32.totalorder %s17, 1
    %p61 = por %p59, %p60
    %p62 = scmp.ne.s32.totalorder %s51, %s52
    %p63 = scmp.eq.s32.totalorder %s17, 0
    %p64 = por %p62, %p63
    %p65 = scmp.ne.s32.totalorder %s51, %s52
    %p66 = scmp.eq.s32.totalorder %s18, 1
    %p67 = por %p65, %p66
    %p69 = scmp.ne.s32.totalorder %s52, %s68
    %p70 = scmp.eq.s32.totalorder %s18, 0
    %p71 = por %p69, %p70
    %s72 = ssub.s32 %s12, %s19
    %p73 = scmp.eq.s32.totalorder %s72, 0
    %s75 = sadd.s32 %s74, 1
    %s76 = scalar_select %p73, %s74, %s75
    %p79 = pneg %p73
    %p80 = scmp.eq.s32.totalorder %s12, 1
    %p81 = por %p79, %p80
    %p82 = scmp.ne.s32.totalorder %s74, %s77
    %p83 = scmp.eq.s32.totalorder %s12, 0
    %p84 = por %p82, %p83
    %p85 = scmp.ne.s32.totalorder %s74, %s77
    %p86 = scmp.eq.s32.totalorder %s17, 1
    %p87 = por %p85, %p86
    %p88 = scmp.ne.s32.totalorder %s77, %s78
    %p89 = scmp.eq.s32.totalorder %s17, 0
    %p90 = por %p88, %p89
    %p91 = scmp.ne.s32.totalorder %s77, %s78
    %p92 = scmp.eq.s32.totalorder %s18, 1
    %p93 = por %p91, %p92
    %p95 = scmp.ne.s32.totalorder %s78, %s94
    %p96 = scmp.eq.s32.totalorder %s18, 0
    %p97 = por %p95, %p96
    %s98 = ssub.s32 %s12, %s19
    %p99 = scmp.eq.s32.totalorder %s98, 0
    %s101 = sadd.s32 %s100, 1
    %s102 = scalar_select %p99, %s100, %s101
    %p105 = pneg %p99
    %p106 = scmp.eq.s32.totalorder %s12, 1
    %p107 = por %p105, %p106
    %p108 = scmp.ne.s32.totalorder %s100, %s103
    %p109 = scmp.eq.s32.totalorder %s12, 0
    %p110 = por %p108, %p109
    %p111 = scmp.ne.s32.totalorder %s100, %s103
    %p112 = scmp.eq.s32.totalorder %s17, 1
    %p113 = por %p111, %p112
    %p114 = scmp.ne.s32.totalorder %s103, %s104
    %p115 = scmp.eq.s32.totalorder %s17, 0
    %p116 = por %p114, %p115
    %p117 = scmp.ne.s32.totalorder %s103, %s104
    %p118 = scmp.eq.s32.totalorder %s18, 1
    %p119 = por %p117, %p118
    %p121 = scmp.ne.s32.totalorder %s104, %s120
    %p122 = scmp.eq.s32.totalorder %s18, 0
    %p123 = por %p121, %p122
    %s125 = sadd.s32 %s124, 1
    %p128 = scmp.eq.s32.totalorder %s12, 1
    %p129 = scmp.ne.s32.totalorder %s124, %s126
    %p130 = scmp.eq.s32.totalorder %s12, 0
    %p131 = por %p129, %p130
    %p132 = scmp.ne.s32.totalorder %s124, %s126
    %p133 = scmp.eq.s32.totalorder %s17, 1
    %p134 = por %p132, %p133
    %p135 = scmp.ne.s32.totalorder %s126, %s127
    %p136 = scmp.eq.s32.totalorder %s17, 0
    %p137 = por %p135, %p136
    %p138 = scmp.ne.s32.totalorder %s126, %s127
    %p139 = scmp.eq.s32.totalorder %s18, 1
    %p140 = por %p138, %p139
    %p142 = scmp.ne.s32.totalorder %s127, %s141
    %p143 = scmp.eq.s32.totalorder %s18, 0
    %p144 = por %p142, %p143
    %s146 = sadd.s32 %s145, 1
    %p149 = scmp.eq.s32.totalorder %s12, 1
    %p150 = scmp.ne.s32.totalorder %s145, %s147
    %p151 = scmp.eq.s32.totalorder %s12, 0
    %p152 = por %p150, %p151
    %p153 = scmp.ne.s32.totalorder %s145, %s147
    %p154 = scmp.eq.s32.totalorder %s17, 1
    %p155 = por %p153, %p154
    %p156 = scmp.ne.s32.totalorder %s147, %s148
    %p157 = scmp.eq.s32.totalorder %s17, 0
    %p158 = por %p156, %p157
    %p159 = scmp.ne.s32.totalorder %s147, %s148
    %p160 = scmp.eq.s32.totalorder %s18, 1
    %p161 = por %p159, %p160
    %p163 = scmp.ne.s32.totalorder %s148, %s162
    %p164 = scmp.eq.s32.totalorder %s18, 0
    %p165 = por %p163, %p164
    %s166 = ssub.s32 %s12, %s19
    %p167 = scmp.eq.s32.totalorder %s166, 0
    %s169 = sadd.s32 %s168, 1
    %s170 = scalar_select %p167, %s168, %s169
    %p173 = pneg %p167
    %p174 = scmp.eq.s32.totalorder %s12, 1
    %p175 = por %p173, %p174
    %p176 = scmp.ne.s32.totalorder %s168, %s171
    %p177 = scmp.eq.s32.totalorder %s12, 0
    %p178 = por %p176, %p177
    %p179 = scmp.ne.s32.totalorder %s168, %s171
    %p180 = scmp.eq.s32.totalorder %s17, 1
    %p181 = por %p179, %p180
    %p182 = scmp.ne.s32.totalorder %s171, %s172
    %p183 = scmp.eq.s32.totalorder %s17, 0
    %p184 = por %p182, %p183
    %p185 = scmp.ne.s32.totalorder %s171, %s172
    %p186 = scmp.eq.s32.totalorder %s18, 1
    %p187 = por %p185, %p186
    %p189 = scmp.ne.s32.totalorder %s172, %s188
    %p190 = scmp.eq.s32.totalorder %s18, 0
    %p191 = por %p189, %p190
    %p192 = scmp.le.s32.totalorder 1, %s12
    %p193 = scmp.lt.s32.totalorder %s12, 3
    %p194 = pnand %p192, %p193
    %p195 = pneg %p194
    // Predicated region
    $region9: #{resvit_generator.75} parent=5 // pred_check
      _
    $region10: #{resvit_generator.75} parent=5 // pred_check_branch
      %197 = sbr.rel (%p194) target = $region12
    $region11: #{resvit_generator.75} parent=5 // pred_region
      %s198 = ssub.s32 %s12, 1
      // Predicated region
      $region13: #{resvit_generator.75} parent=11 // pred_check
        %p199 = pneg %p137
      $region14: #{resvit_generator.75} parent=11 // pred_check_branch
        %201 = sbr.rel (%p199) target = $region16
      $region15: #{resvit_generator.75} parent=11 // pred_region
        _
      $region16: #{resvit_generator.75} parent=11 // pred_fallthru
        _
      // Predicated region
      $region17: #{resvit_generator.75} parent=11 // pred_check
        %p202 = pneg %p158
      $region18: #{resvit_generator.75} parent=11 // pred_check_branch
        %204 = sbr.rel (%p202) target = $region20
      $region19: #{resvit_generator.75} parent=11 // pred_region
        _
      $region20: #{resvit_generator.75} parent=11 // pred_fallthru
        _
    $region12: #{resvit_generator.75} parent=5 // pred_fallthru
      _
    %p205 = scmp.lt.s32.totalorder %s12, 2
    // Predicated region
    $region21: #{resvit_generator.75} parent=5 // pred_check
      %p206 = pneg %p205
    $region22: #{resvit_generator.75} parent=5 // pred_check_branch
      %208 = sbr.rel (%p206) target = $region24
    $region23: #{resvit_generator.75} parent=5 // pred_region
      // Predicated region
      $region25: #{resvit_generator.75} parent=23 // pred_check
        %p209 = pneg %p32
      $region26: #{resvit_generator.75} parent=23 // pred_check_branch
        %211 = sbr.rel (%p209) target = $region28
      $region27: #{resvit_generator.75} parent=23 // pred_region
        %p212 = scmp.lt.s32.totalorder %s12, 1
        %s213 = scalar_select %p212, %s12, 1
        %s214 = smul.addr %s213, 8
        %s215 = smul.addr %s214, 8
        %s216 = scalar_lea.vmem %s0, %s215
      $region28: #{resvit_generator.75} parent=23 // pred_fallthru
        _
      // Predicated region
      $region29: #{resvit_generator.75} parent=23 // pred_check
        %p217 = pneg %p58
      $region30: #{resvit_generator.75} parent=23 // pred_check_branch
        %219 = sbr.rel (%p217) target = $region32
      $region31: #{resvit_generator.75} parent=23 // pred_region
        %p220 = scmp.lt.s32.totalorder %s12, 1
        %s221 = scalar_select %p220, %s12, 1
        %s222 = smul.addr %s221, 8
        %s223 = smul.addr %s222, 8
        %s224 = scalar_lea.vmem %s1, %s223
      $region32: #{resvit_generator.75} parent=23 // pred_fallthru
        _
      // Predicated region
      $region33: #{resvit_generator.75} parent=23 // pred_check
        %p225 = pneg %p84
      $region34: #{resvit_generator.75} parent=23 // pred_check_branch
        %227 = sbr.rel (%p225) target = $region36
      $region35: #{resvit_generator.75} parent=23 // pred_region
        %p228 = scmp.lt.s32.totalorder %s12, 1
        %s229 = scalar_select %p228, %s12, 1
        %s230 = smul.addr %s229, 8
        %s231 = smul.addr %s230, 8
        %s232 = scalar_lea.vmem %s2, %s231
      $region36: #{resvit_generator.75} parent=23 // pred_fallthru
        _
      // Predicated region
      $region37: #{resvit_generator.75} parent=23 // pred_check
        %p233 = pneg %p110
      $region38: #{resvit_generator.75} parent=23 // pred_check_branch
        %235 = sbr.rel (%p233) target = $region40
      $region39: #{resvit_generator.75} parent=23 // pred_region
        %p236 = scmp.lt.s32.totalorder %s12, 1
        %s237 = scalar_select %p236, %s12, 1
        %s238 = smul.addr %s237, 8
        %s239 = smul.addr %s238, 8
        %s240 = scalar_lea.vmem %s3, %s239
      $region40: #{resvit_generator.75} parent=23 // pred_fallthru
        _
    $region24: #{resvit_generator.75} parent=5 // pred_fallthru
      _
    %p241 = scmp.le.s32.totalorder 1, %s12
    %p242 = scmp.lt.s32.totalorder %s12, 3
    %p243 = pnand %p241, %p242
    %p244 = pneg %p243
    // Predicated region
    $region41: #{resvit_generator.75} parent=5 // pred_check
      _
    $region42: #{resvit_generator.75} parent=5 // pred_check_branch
      %246 = sbr.rel (%p243) target = $region44
    $region43: #{resvit_generator.75} parent=5 // pred_region
      %s247 = ssub.s32 %s12, 1
      %p248 = scmp.lt.s32.totalorder %s17, 1
      %s249 = scalar_select %p248, %s17, 1
      %s250 = smul.addr %s249, 8
      %s251 = smul.addr %s250, 8
      %s252 = scalar_lea.vmem %s0, %s251
      %p253 = pneg %p38
      %p254 = pneg %p35
      %p255 = scmp.lt.s32.totalorder %s17, 1
      %s256 = scalar_select %p255, %s17, 1
      %s257 = smul.addr %s256, 8
      %s258 = smul.addr %s257, 8
      %s259 = scalar_lea.vmem %s1, %s258
      %p260 = pneg %p64
      %p261 = pneg %p61
      %p262 = scmp.lt.s32.totalorder %s17, 1
      %s263 = scalar_select %p262, %s17, 1
      %s264 = smul.addr %s263, 8
      %s265 = smul.addr %s264, 8
      %s266 = scalar_lea.vmem %s2, %s265
      %p267 = pneg %p90
      %p268 = pneg %p87
      %p269 = scmp.lt.s32.totalorder %s17, 1
      %s270 = scalar_select %p269, %s17, 1
      %s271 = smul.addr %s270, 8
      %s272 = smul.addr %s271, 8
      %s273 = scalar_lea.vmem %s3, %s272
      %p274 = pneg %p116
      %p275 = pneg %p113
      %p276 = pneg %p137
      %p277 = pneg %p134
      %p278 = pneg %p158
      %p279 = pneg %p155
      %p280 = pneg %p184
      %p281 = pneg %p181
      %p282 = scmp.lt.s32.totalorder %s17, 1
      %s283 = scalar_select %p282, %s17, 1
      %s284 = smul.addr %s283, 8
      %s285 = smul.addr %s284, 8
      %s286 = scalar_lea.vmem %s6, %s285
      %p287 = scmp.lt.s32.totalorder %s17, 1
      %s288 = scalar_select %p287, %s17, 1
      %s289 = smul.addr %s288, 8
      %s290 = smul.addr %s289, 8
      %s291 = scalar_lea.vmem %s0, %s290
      %p292 = scmp.lt.s32.totalorder %s17, 1
      %s293 = scalar_select %p292, %s17, 1
      %s294 = smul.addr %s293, 8
      %s295 = smul.addr %s294, 8
      %s296 = scalar_lea.vmem %s1, %s295
      %p297 = scmp.lt.s32.totalorder %s17, 1
      %s298 = scalar_select %p297, %s17, 1
      %s299 = smul.addr %s298, 8
      %s300 = smul.addr %s299, 8
      %s301 = scalar_lea.vmem %s2, %s300
      %p302 = scmp.lt.s32.totalorder %s17, 1
      %s303 = scalar_select %p302, %s17, 1
      %s304 = smul.addr %s303, 8
      %s305 = smul.addr %s304, 8
      %s306 = scalar_lea.vmem %s3, %s305
      %p307 = scmp.lt.s32.totalorder %s17, 1
      %s308 = scalar_select %p307, %s17, 1
      %s309 = smul.addr %s308, 8
      %s310 = smul.addr %s309, 8
      %s311 = scalar_lea.vmem %s6, %s310
      %v313 = vld [vmem:[%s291] sm:$0xff]
      %v314 = vld [vmem:[%s291 + $0x8] sm:$0xff]
      %v315 = vld [vmem:[%s291 + $0x10] sm:$0xff]
      %v316 = vld [vmem:[%s291 + $0x18] sm:$0xff]
      %v317 = vld [vmem:[%s291 + $0x20] sm:$0xff]
      %v318 = vld [vmem:[%s291 + $0x28] sm:$0xff]
      %v319 = vld [vmem:[%s291 + $0x30] sm:$0xff]
      %v320 = vld [vmem:[%s291 + $0x38] sm:$0xff]
      %v321 = vld [vmem:[%s296] sm:$0xff]
      %v322 = vld [vmem:[%s296 + $0x8] sm:$0xff]
      %v323 = vld [vmem:[%s296 + $0x10] sm:$0xff]
      %v324 = vld [vmem:[%s296 + $0x18] sm:$0xff]
      %v325 = vld [vmem:[%s296 + $0x20] sm:$0xff]
      %v326 = vld [vmem:[%s296 + $0x28] sm:$0xff]
      %v327 = vld [vmem:[%s296 + $0x30] sm:$0xff]
      %v328 = vld [vmem:[%s296 + $0x38] sm:$0xff]
      %v329 = vld [vmem:[%s301] sm:$0xff]
      %v330 = vld [vmem:[%s301 + $0x8] sm:$0xff]
      %v331 = vld [vmem:[%s301 + $0x10] sm:$0xff]
      %v332 = vld [vmem:[%s301 + $0x18] sm:$0xff]
      %v333 = vld [vmem:[%s301 + $0x20] sm:$0xff]
      %v334 = vld [vmem:[%s301 + $0x28] sm:$0xff]
      %v335 = vld [vmem:[%s301 + $0x30] sm:$0xff]
      %v336 = vld [vmem:[%s301 + $0x38] sm:$0xff]
      %vm337 = vcmask 64512
      %v339 = vsel %vm337, %v313, 0
      %v342 = vsel %vm337, %v314, 0
      %v345 = vsel %vm337, %v315, 0
      %v348 = vsel %vm337, %v316, 0
      %v351 = vsel %vm337, %v317, 0
      %v354 = vsel %vm337, %v318, 0
      %v357 = vsel %vm337, %v319, 0
      %v360 = vsel %vm337, %v320, 0
      %v363 = vsel %vm337, %v321, 0
      %v366 = vsel %vm337, %v322, 0
      %v369 = vsel %vm337, %v323, 0
      %v372 = vsel %vm337, %v324, 0
      %v375 = vsel %vm337, %v325, 0
      %v378 = vsel %vm337, %v326, 0
      %v381 = vsel %vm337, %v327, 0
      %v384 = vsel %vm337, %v328, 0
      %386 = vmatprep.subr.mxu0 0.0
      %387 = vmatpush1.xpose.msra.mxu0 %v363
      %388 = vmatprep.subr.mxu0 0.0
      %389 = vmatpush1.xpose.msra.mxu0 %v366
      %390 = vmatprep.subr.mxu0 0.0
      %391 = vmatpush1.xpose.msra.mxu0 %v369
      %392 = vmatprep.subr.mxu0 0.0
      %393 = vmatpush1.xpose.msra.mxu0 %v372
      %394 = vmatprep.subr.mxu0 0.0
      %395 = vmatpush1.xpose.msra.mxu0 %v375
      %396 = vmatprep.subr.mxu0 0.0
      %397 = vmatpush1.xpose.msra.mxu0 %v378
      %398 = vmatprep.subr.mxu0 0.0
      %399 = vmatpush1.xpose.msra.mxu0 %v381
      %400 = vmatprep.subr.mxu0 0.0
      %401 = vmatpush1.xpose.msra.mxu0 %v384
      %402 = vmatprep.subr.mxu0 0.0
      %403 = vmatpush1.xpose.msra.mxu0 0.0
      %404 = vmatprep.subr.mxu0 0.0
      %405 = vmatpush1.xpose.msra.mxu0 0.0
      %406 = vmatprep.subr.mxu0 0.0
      %407 = vmatpush1.xpose.msra.mxu0 0.0
      %408 = vmatprep.subr.mxu0 0.0
      %409 = vmatpush1.xpose.msra.mxu0 0.0
      %410 = vmatprep.subr.mxu0 0.0
      %411 = vmatpush1.xpose.msra.mxu0 0.0
      %412 = vmatprep.subr.mxu0 0.0
      %413 = vmatpush1.xpose.msra.mxu0 0.0
      %414 = vmatprep.subr.mxu0 0.0
      %415 = vmatpush1.xpose.msra.mxu0 0.0
      %416 = vmatprep.subr.mxu0 0.0
      %417 = vmatpush1.xpose.msra.mxu0 0.0
      %418 = vmatprep.subr.mxu0 0.0
      %419 = vmatpush1.xpose.msra.mxu0 0.0
      %420 = vmatprep.subr.mxu0 0.0
      %421 = vmatpush1.xpose.msra.mxu0 0.0
      %422 = vmatprep.subr.mxu0 0.0
      %423 = vmatpush1.xpose.msra.mxu0 0.0
      %424 = vmatprep.subr.mxu0 0.0
      %425 = vmatpush1.xpose.msra.mxu0 0.0
      %426 = vmatprep.subr.mxu0 0.0
      %427 = vmatpush1.xpose.msra.mxu0 0.0
      %428 = vmatprep.subr.mxu0 0.0
      %429 = vmatpush1.xpose.msra.mxu0 0.0
      %430 = vmatprep.subr.mxu0 0.0
      %431 = vmatpush1.xpose.msra.mxu0 0.0
      %432 = vmatprep.subr.mxu0 0.0
      %433 = vmatpush1.xpose.msra.mxu0 0.0
      %434 = vmatprep.subr.mxu0 0.0
      %435 = vmatpush1.xpose.msra.mxu0 0.0
      %436 = vmatprep.subr.mxu0 0.0
      %437 = vmatpush1.xpose.msra.mxu0 0.0
      %438 = vmatprep.subr.mxu0 0.0
      %439 = vmatpush1.xpose.msra.mxu0 0.0
      %440 = vmatprep.subr.mxu0 0.0
      %441 = vmatpush1.xpose.msra.mxu0 0.0
      %442 = vmatprep.subr.mxu0 0.0
      %443 = vmatpush1.xpose.msra.mxu0 0.0
      %444 = vmatprep.subr.mxu0 0.0
      %445 = vmatpush1.xpose.msra.mxu0 0.0
      %446 = vmatprep.subr.mxu0 0.0
      %447 = vmatpush1.xpose.msra.mxu0 0.0
      %448 = vmatprep.subr.mxu0 0.0
      %449 = vmatpush1.xpose.msra.mxu0 0.0
      %450 = vmatprep.mubr.f32.mxu0 0.0
      %451 = vmatmul.mubr.f32.gmra.mrb[0].mxu0 %v339
      %v452 = vpop.f32.mrb[0].mxu0
      %v453 = vadd.f32 0.0, %v452
      %v454 = vpop.f32.mrb[0].mxu0
      %455 = vmatprep.mubr.f32.mxu0 0.0
      %456 = vmatmul.mubr.f32.gmra.mrb[0].mxu0 %v342
      %v457 = vpop.f32.mrb[0].mxu0
      %v458 = vadd.f32 0.0, %v457
      %v459 = vpop.f32.mrb[0].mxu0
      %460 = vmatprep.mubr.f32.mxu0 0.0
      %461 = vmatmul.mubr.f32.gmra.mrb[0].mxu0 %v345
      %v462 = vpop.f32.mrb[0].mxu0
      %v463 = vadd.f32 0.0, %v462
      %v464 = vpop.f32.mrb[0].mxu0
      %465 = vmatprep.mubr.f32.mxu0 0.0
      %466 = vmatmul.mubr.f32.gmra.mrb[0].mxu0 %v348
      %v467 = vpop.f32.mrb[0].mxu0
      %v468 = vadd.f32 0.0, %v467
      %v469 = vpop.f32.mrb[0].mxu0
      %470 = vmatprep.mubr.f32.mxu0 0.0
      %471 = vmatmul.mubr.f32.gmra.mrb[0].mxu0 %v351
      %v472 = vpop.f32.mrb[0].mxu0
      %v473 = vadd.f32 0.0, %v472
      %v474 = vpop.f32.mrb[0].mxu0
      %475 = vmatprep.mubr.f32.mxu0 0.0
      %476 = vmatmul.mubr.f32.gmra.mrb[0].mxu0 %v354
      %v477 = vpop.f32.mrb[0].mxu0
      %v478 = vadd.f32 0.0, %v477
      %v479 = vpop.f32.mrb[0].mxu0
      %480 = vmatprep.mubr.f32.mxu0 0.0
      %481 = vmatmul.mubr.f32.gmra.mrb[0].mxu0 %v357
      %v482 = vpop.f32.mrb[0].mxu0
      %v483 = vadd.f32 0.0, %v482
      %v484 = vpop.f32.mrb[0].mxu0
      %485 = vmatprep.mubr.f32.mxu0 0.0
      %486 = vmatmul.mubr.f32.gmra.mrb[0].mxu0 %v360
      %v487 = vpop.f32.mrb[0].mxu0
      %v488 = vadd.f32 0.0, %v487
      %v489 = vpop.f32.mrb[0].mxu0
      %490 = vdwg.mxu0
      %v491 = vmul.f32 %v453, 0.35355338
      %v492 = vmul.f32 %v458, 0.35355338
      %v493 = vmul.f32 %v463, 0.35355338
      %v494 = vmul.f32 %v468, 0.35355338
      %v495 = vmul.f32 %v473, 0.35355338
      %v496 = vmul.f32 %v478, 0.35355338
      %v497 = vmul.f32 %v483, 0.35355338
      %v498 = vmul.f32 %v488, 0.35355338
      %vm499 = vcmask 523264
      %v500 = vsel %vm499, %v491, -inf
      %501 = vmax.xlane.f32.xlu0 %v500
      %v502 = vpop.xlane.xlu0 %501
      %v503 = vsel %vm499, %v492, -inf
      %504 = vmax.xlane.f32.xlu0 %v503
      %v505 = vpop.xlane.xlu0 %504
      %v506 = vsel %vm499, %v493, -inf
      %507 = vmax.xlane.f32.xlu0 %v506
      %v508 = vpop.xlane.xlu0 %507
      %v509 = vsel %vm499, %v494, -inf
      %510 = vmax.xlane.f32.xlu0 %v509
      %v511 = vpop.xlane.xlu0 %510
      %v512 = vsel %vm499, %v495, -inf
      %513 = vmax.xlane.f32.xlu0 %v512
      %v514 = vpop.xlane.xlu0 %513
      %v515 = vsel %vm499, %v496, -inf
      %516 = vmax.xlane.f32.xlu0 %v515
      %v517 = vpop.xlane.xlu0 %516
      %v518 = vsel %vm499, %v497, -inf
      %519 = vmax.xlane.f32.xlu0 %v518
      %v520 = vpop.xlane.xlu0 %519
      %v521 = vsel %vm499, %v498, -inf
      %522 = vmax.xlane.f32.xlu0 %v521
      %v523 = vpop.xlane.xlu0 %522
      %v524 = vsub.f32 %v491, %v502
      %v525 = vsub.f32 %v492, %v505
      %v526 = vsub.f32 %v493, %v508
      %v527 = vsub.f32 %v494, %v511
      %v528 = vsub.f32 %v495, %v514
      %v529 = vsub.f32 %v496, %v517
      %v530 = vsub.f32 %v497, %v520
      %v531 = vsub.f32 %v498, %v523
      %v532 = vmul.f32 %v524, 1.442695
      %v533 = vpow.pop %v532
      %v534 = vmul.f32 %v525, 1.442695
      %v535 = vpow.pop %v534
      %v536 = vmul.f32 %v526, 1.442695
      %v537 = vpow.pop %v536
      %v538 = vmul.f32 %v527, 1.442695
      %v539 = vpow.pop %v538
      %v540 = vmul.f32 %v528, 1.442695
      %v541 = vpow.pop %v540
      %v542 = vmul.f32 %v529, 1.442695
      %v543 = vpow.pop %v542
      %v544 = vmul.f32 %v530, 1.442695
      %v545 = vpow.pop %v544
      %v546 = vmul.f32 %v531, 1.442695
      %v547 = vpow.pop %v546
      %v548 = vsel %vm499, %v533, 0.0
      %549 = vadd.xlane.f32.xlu0 %v548
      %v550 = vpop.xlane.xlu0 %549
      %v551 = vsel %vm499, %v535, 0.0
      %552 = vadd.xlane.f32.xlu0 %v551
      %v553 = vpop.xlane.xlu0 %552
      %v554 = vsel %vm499, %v537, 0.0
      %555 = vadd.xlane.f32.xlu0 %v554
      %v556 = vpop.xlane.xlu0 %555
      %v557 = vsel %vm499, %v539, 0.0
      %558 = vadd.xlane.f32.xlu0 %v557
      %v559 = vpop.xlane.xlu0 %558
      %v560 = vsel %vm499, %v541, 0.0
      %561 = vadd.xlane.f32.xlu0 %v560
      %v562 = vpop.xlane.xlu0 %561
      %v563 = vsel %vm499, %v543, 0.0
      %564 = vadd.xlane.f32.xlu0 %v563
      %v565 = vpop.xlane.xlu0 %564
      %v566 = vsel %vm499, %v545, 0.0
      %567 = vadd.xlane.f32.xlu0 %v566
      %v568 = vpop.xlane.xlu0 %567
      %v569 = vsel %vm499, %v547, 0.0
      %570 = vadd.xlane.f32.xlu0 %v569
      %v571 = vpop.xlane.xlu0 %570
      %v572 = vrcp.pop %v550
      %v573 = vrcp.pop %v553
      %v574 = vrcp.pop %v556
      %v575 = vrcp.pop %v559
      %v576 = vrcp.pop %v562
      %v577 = vrcp.pop %v565
      %v578 = vrcp.pop %v568
      %v579 = vrcp.pop %v571
      %v580 = vmul.f32 %v533, %v572
      %v581 = vmul.f32 %v535, %v573
      %v582 = vmul.f32 %v537, %v574
      %v583 = vmul.f32 %v539, %v575
      %v584 = vmul.f32 %v541, %v576
      %v585 = vmul.f32 %v543, %v577
      %v586 = vmul.f32 %v545, %v578
      %v587 = vmul.f32 %v547, %v579
      %v589 = vsel %vm499, %v580, 0
      %v592 = vsel %vm499, %v581, 0
      %v595 = vsel %vm499, %v582, 0
      %v598 = vsel %vm499, %v583, 0
      %v601 = vsel %vm499, %v584, 0
      %v604 = vsel %vm499, %v585, 0
      %v607 = vsel %vm499, %v586, 0
      %v610 = vsel %vm499, %v587, 0
      %612 = vmatprep.subr.mxu0 0.0
      %613 = vmatpush1.msra.mxu0 %v329
      %614 = vmatprep.subr.mxu0 0.0
      %615 = vmatpush1.msra.mxu0 %v330
      %616 = vmatprep.subr.mxu0 0.0
      %617 = vmatpush1.msra.mxu0 %v331
      %618 = vmatprep.subr.mxu0 0.0
      %619 = vmatpush1.msra.mxu0 %v332
      %620 = vmatprep.subr.mxu0 0.0
      %621 = vmatpush1.msra.mxu0 %v333
      %622 = vmatprep.subr.mxu0 0.0
      %623 = vmatpush1.msra.mxu0 %v334
      %624 = vmatprep.subr.mxu0 0.0
      %625 = vmatpush1.msra.mxu0 %v335
      %626 = vmatprep.subr.mxu0 0.0
      %627 = vmatpush1.msra.mxu0 %v336
      %628 = vmatprep.subr.mxu0 0.0
      %629 = vmatpush1.msra.mxu0 0.0
      %630 = vmatprep.subr.mxu0 0.0
      %631 = vmatpush1.msra.mxu0 0.0
      %632 = vmatprep.subr.mxu0 0.0
      %633 = vmatpush1.msra.mxu0 0.0
      %634 = vmatprep.subr.mxu0 0.0
      %635 = vmatpush1.msra.mxu0 0.0
      %636 = vmatprep.subr.mxu0 0.0
      %637 = vmatpush1.msra.mxu0 0.0
      %638 = vmatprep.subr.mxu0 0.0
      %639 = vmatpush1.msra.mxu0 0.0
      %640 = vmatprep.subr.mxu0 0.0
      %641 = vmatpush1.msra.mxu0 0.0
      %642 = vmatprep.subr.mxu0 0.0
      %643 = vmatpush1.msra.mxu0 0.0
      %644 = vmatprep.subr.mxu0 0.0
      %645 = vmatpush1.msra.mxu0 0.0
      %646 = vmatprep.subr.mxu0 0.0
      %647 = vmatpush1.msra.mxu0 0.0
      %648 = vmatprep.subr.mxu0 0.0
      %649 = vmatpush1.msra.mxu0 0.0
      %650 = vmatprep.subr.mxu0 0.0
      %651 = vmatpush1.msra.mxu0 0.0
      %652 = vmatprep.subr.mxu0 0.0
      %653 = vmatpush1.msra.mxu0 0.0
      %654 = vmatprep.subr.mxu0 0.0
      %655 = vmatpush1.msra.mxu0 0.0
      %656 = vmatprep.subr.mxu0 0.0
      %657 = vmatpush1.msra.mxu0 0.0
      %658 = vmatprep.subr.mxu0 0.0
      %659 = vmatpush1.msra.mxu0 0.0
      %660 = vmatprep.subr.mxu0 0.0
      %661 = vmatpush1.msra.mxu0 0.0
      %662 = vmatprep.subr.mxu0 0.0
      %663 = vmatpush1.msra.mxu0 0.0
      %664 = vmatprep.subr.mxu0 0.0
      %665 = vmatpush1.msra.mxu0 0.0
      %666 = vmatprep.subr.mxu0 0.0
      %667 = vmatpush1.msra.mxu0 0.0
      %668 = vmatprep.subr.mxu0 0.0
      %669 = vmatpush1.msra.mxu0 0.0
      %670 = vmatprep.subr.mxu0 0.0
      %671 = vmatpush1.msra.mxu0 0.0
      %672 = vmatprep.subr.mxu0 0.0
      %673 = vmatpush1.msra.mxu0 0.0
      %674 = vmatprep.subr.mxu0 0.0
      %675 = vmatpush1.msra.mxu0 0.0
      %676 = vmatprep.mubr.f32.mxu0 0.0
      %677 = vmatmul.mubr.f32.gmra.mrb[0].mxu0 %v589
      %v678 = vpop.f32.mrb[0].mxu0
      %v679 = vadd.f32 0.0, %v678
      %v680 = vpop.f32.mrb[0].mxu0
      %681 = vmatprep.mubr.f32.mxu0 0.0
      %682 = vmatmul.mubr.f32.gmra.mrb[0].mxu0 %v592
      %v683 = vpop.f32.mrb[0].mxu0
      %v684 = vadd.f32 0.0, %v683
      %v685 = vpop.f32.mrb[0].mxu0
      %686 = vmatprep.mubr.f32.mxu0 0.0
      %687 = vmatmul.mubr.f32.gmra.mrb[0].mxu0 %v595
      %v688 = vpop.f32.mrb[0].mxu0
      %v689 = vadd.f32 0.0, %v688
      %v690 = vpop.f32.mrb[0].mxu0
      %691 = vmatprep.mubr.f32.mxu0 0.0
      %692 = vmatmul.mubr.f32.gmra.mrb[0].mxu0 %v598
      %v693 = vpop.f32.mrb[0].mxu0
      %v694 = vadd.f32 0.0, %v693
      %v695 = vpop.f32.mrb[0].mxu0
      %696 = vmatprep.mubr.f32.mxu0 0.0
      %697 = vmatmul.mubr.f32.gmra.mrb[0].mxu0 %v601
      %v698 = vpop.f32.mrb[0].mxu0
      %v699 = vadd.f32 0.0, %v698
      %v700 = vpop.f32.mrb[0].mxu0
      %701 = vmatprep.mubr.f32.mxu0 0.0
      %702 = vmatmul.mubr.f32.gmra.mrb[0].mxu0 %v604
      %v703 = vpop.f32.mrb[0].mxu0
      %v704 = vadd.f32 0.0, %v703
      %v705 = vpop.f32.mrb[0].mxu0
      %706 = vmatprep.mubr.f32.mxu0 0.0
      %707 = vmatmul.mubr.f32.gmra.mrb[0].mxu0 %v607
      %v708 = vpop.f32.mrb[0].mxu0
      %v709 = vadd.f32 0.0, %v708
      %v710 = vpop.f32.mrb[0].mxu0
      %711 = vmatprep.mubr.f32.mxu0 0.0
      %712 = vmatmul.mubr.f32.gmra.mrb[0].mxu0 %v610
      %v713 = vpop.f32.mrb[0].mxu0
      %v714 = vadd.f32 0.0, %v713
      %v715 = vpop.f32.mrb[0].mxu0
      %716 = vdwg.mxu0
      %v717 = vpack.c.bf16 %v684, %v679
      %v718 = vpack.c.bf16 %v694, %v689
      %v719 = vpack.c.bf16 %v704, %v699
      %v720 = vpack.c.bf16 %v714, %v709
      %v721 = vld [vmem:[%s4] sm:$0xf]
      %722 = vrot.lane.b32.xlu0 %v313, 120
      %v723 = vpop.permute.xlu0 %722
      %724 = vrot.lane.b32.xlu0 %v314, 120
      %v725 = vpop.permute.xlu0 %724
      %726 = vrot.lane.b32.xlu0 %v315, 120
      %v727 = vpop.permute.xlu0 %726
      %728 = vrot.lane.b32.xlu0 %v316, 120
      %v729 = vpop.permute.xlu0 %728
      %730 = vrot.lane.b32.xlu0 %v317, 120
      %v731 = vpop.permute.xlu0 %730
      %732 = vrot.lane.b32.xlu0 %v318, 120
      %v733 = vpop.permute.xlu0 %732
      %734 = vrot.lane.b32.xlu0 %v319, 120
      %v735 = vpop.permute.xlu0 %734
      %736 = vrot.lane.b32.xlu0 %v320, 120
      %v737 = vpop.permute.xlu0 %736
      %738 = vrot.lane.b32.xlu0 %v321, 120
      %v739 = vpop.permute.xlu0 %738
      %740 = vrot.lane.b32.xlu0 %v322, 120
      %v741 = vpop.permute.xlu0 %740
      %742 = vrot.lane.b32.xlu0 %v323, 120
      %v743 = vpop.permute.xlu0 %742
      %744 = vrot.lane.b32.xlu0 %v324, 120
      %v745 = vpop.permute.xlu0 %744
      %746 = vrot.lane.b32.xlu0 %v325, 120
      %v747 = vpop.permute.xlu0 %746
      %748 = vrot.lane.b32.xlu0 %v326, 120
      %v749 = vpop.permute.xlu0 %748
      %750 = vrot.lane.b32.xlu0 %v327, 120
      %v751 = vpop.permute.xlu0 %750
      %752 = vrot.lane.b32.xlu0 %v328, 120
      %v753 = vpop.permute.xlu0 %752
      %v754 = vsel %vm337, %v723, 0
      %v756 = vsel %vm337, %v725, 0
      %v758 = vsel %vm337, %v727, 0
      %v760 = vsel %vm337, %v729, 0
      %v762 = vsel %vm337, %v731, 0
      %v764 = vsel %vm337, %v733, 0
      %v766 = vsel %vm337, %v735, 0
      %v768 = vsel %vm337, %v737, 0
      %v770 = vsel %vm337, %v739, 0
      %v772 = vsel %vm337, %v741, 0
      %v774 = vsel %vm337, %v743, 0
      %v776 = vsel %vm337, %v745, 0
      %v778 = vsel %vm337, %v747, 0
      %v780 = vsel %vm337, %v749, 0
      %v782 = vsel %vm337, %v751, 0
      %v784 = vsel %vm337, %v753, 0
      %786 = vmatprep.subr.mxu0 0.0
      %787 = vmatpush1.xpose.msra.mxu0 %v770
      %788 = vmatprep.subr.mxu0 0.0
      %789 = vmatpush1.xpose.msra.mxu0 %v772
      %790 = vmatprep.subr.mxu0 0.0
      %791 = vmatpush1.xpose.msra.mxu0 %v774
      %792 = vmatprep.subr.mxu0 0.0
      %793 = vmatpush1.xpose.msra.mxu0 %v776
      %794 = vmatprep.subr.mxu0 0.0
      %795 = vmatpush1.xpose.msra.mxu0 %v778
      %796 = vmatprep.subr.mxu0 0.0
      %797 = vmatpush1.xpose.msra.mxu0 %v780
      %798 = vmatprep.subr.mxu0 0.0
      %799 = vmatpush1.xpose.msra.mxu0 %v782
      %800 = vmatprep.subr.mxu0 0.0
      %801 = vmatpush1.xpose.msra.mxu0 %v784
      %802 = vmatprep.subr.mxu0 0.0
      %803 = vmatpush1.xpose.msra.mxu0 0.0
      %804 = vmatprep.subr.mxu0 0.0
      %805 = vmatpush1.xpose.msra.mxu0 0.0
      %806 = vmatprep.subr.mxu0 0.0
      %807 = vmatpush1.xpose.msra.mxu0 0.0
      %808 = vmatprep.subr.mxu0 0.0
      %809 = vmatpush1.xpose.msra.mxu0 0.0
      %810 = vmatprep.subr.mxu0 0.0
      %811 = vmatpush1.xpose.msra.mxu0 0.0
      %812 = vmatprep.subr.mxu0 0.0
      %813 = vmatpush1.xpose.msra.mxu0 0.0
      %814 = vmatprep.subr.mxu0 0.0
      %815 = vmatpush1.xpose.msra.mxu0 0.0
      %816 = vmatprep.subr.mxu0 0.0
      %817 = vmatpush1.xpose.msra.mxu0 0.0
      %818 = vmatprep.subr.mxu0 0.0
      %819 = vmatpush1.xpose.msra.mxu0 0.0
      %820 = vmatprep.subr.mxu0 0.0
      %821 = vmatpush1.xpose.msra.mxu0 0.0
      %822 = vmatprep.subr.mxu0 0.0
      %823 = vmatpush1.xpose.msra.mxu0 0.0
      %824 = vmatprep.subr.mxu0 0.0
      %825 = vmatpush1.xpose.msra.mxu0 0.0
      %826 = vmatprep.subr.mxu0 0.0
      %827 = vmatpush1.xpose.msra.mxu0 0.0
      %828 = vmatprep.subr.mxu0 0.0
      %829 = vmatpush1.xpose.msra.mxu0 0.0
      %830 = vmatprep.subr.mxu0 0.0
      %831 = vmatpush1.xpose.msra.mxu0 0.0
      %832 = vmatprep.subr.mxu0 0.0
      %833 = vmatpush1.xpose.msra.mxu0 0.0
      %834 = vmatprep.subr.mxu0 0.0
      %835 = vmatpush1.xpose.msra.mxu0 0.0
      %836 = vmatprep.subr.mxu0 0.0
      %837 = vmatpush1.xpose.msra.mxu0 0.0
      %838 = vmatprep.subr.mxu0 0.0
      %839 = vmatpush1.xpose.msra.mxu0 0.0
      %840 = vmatprep.subr.mxu0 0.0
      %841 = vmatpush1.xpose.msra.mxu0 0.0
      %842 = vmatprep.subr.mxu0 0.0
      %843 = vmatpush1.xpose.msra.mxu0 0.0
      %844 = vmatprep.subr.mxu0 0.0
      %845 = vmatpush1.xpose.msra.mxu0 0.0
      %846 = vmatprep.subr.mxu0 0.0
      %847 = vmatpush1.xpose.msra.mxu0 0.0
      %848 = vmatprep.subr.mxu0 0.0
      %849 = vmatpush1.xpose.msra.mxu0 0.0
      %850 = vmatprep.mubr.f32.mxu0 0.0
      %851 = vmatmul.mubr.f32.gmra.mrb[0].mxu0 %v754
      %v852 = vpop.f32.mrb[0].mxu0
      %v853 = vadd.f32 0.0, %v852
      %v854 = vpop.f32.mrb[0].mxu0
      %855 = vmatprep.mubr.f32.mxu0 0.0
      %856 = vmatmul.mubr.f32.gmra.mrb[0].mxu0 %v756
      %v857 = vpop.f32.mrb[0].mxu0
      %v858 = vadd.f32 0.0, %v857
      %v859 = vpop.f32.mrb[0].mxu0
      %860 = vmatprep.mubr.f32.mxu0 0.0
      %861 = vmatmul.mubr.f32.gmra.mrb[0].mxu0 %v758
      %v862 = vpop.f32.mrb[0].mxu0
      %v863 = vadd.f32 0.0, %v862
      %v864 = vpop.f32.mrb[0].mxu0
      %865 = vmatprep.mubr.f32.mxu0 0.0
      %866 = vmatmul.mubr.f32.gmra.mrb[0].mxu0 %v760
      %v867 = vpop.f32.mrb[0].mxu0
      %v868 = vadd.f32 0.0, %v867
      %v869 = vpop.f32.mrb[0].mxu0
      %870 = vmatprep.mubr.f32.mxu0 0.0
      %871 = vmatmul.mubr.f32.gmra.mrb[0].mxu0 %v762
      %v872 = vpop.f32.mrb[0].mxu0
      %v873 = vadd.f32 0.0, %v872
      %v874 = vpop.f32.mrb[0].mxu0
      %875 = vmatprep.mubr.f32.mxu0 0.0
      %876 = vmatmul.mubr.f32.gmra.mrb[0].mxu0 %v764
      %v877 = vpop.f32.mrb[0].mxu0
      %v878 = vadd.f32 0.0, %v877
      %v879 = vpop.f32.mrb[0].mxu0
      %880 = vmatprep.mubr.f32.mxu0 0.0
      %881 = vmatmul.mubr.f32.gmra.mrb[0].mxu0 %v766
      %v882 = vpop.f32.mrb[0].mxu0
      %v883 = vadd.f32 0.0, %v882
      %v884 = vpop.f32.mrb[0].mxu0
      %885 = vmatprep.mubr.f32.mxu0 0.0
      %886 = vmatmul.mubr.f32.gmra.mrb[0].mxu0 %v768
      %v887 = vpop.f32.mrb[0].mxu0
      %v888 = vadd.f32 0.0, %v887
      %v889 = vpop.f32.mrb[0].mxu0
      %890 = vdwg.mxu0
      %v891 = vmul.f32 %v853, 0.35355338
      %v892 = vmul.f32 %v858, 0.35355338
      %v893 = vmul.f32 %v863, 0.35355338
      %v894 = vmul.f32 %v868, 0.35355338
      %v895 = vmul.f32 %v873, 0.35355338
      %v896 = vmul.f32 %v878, 0.35355338
      %v897 = vmul.f32 %v883, 0.35355338
      %v898 = vmul.f32 %v888, 0.35355338
      %v899 = vsel %vm499, %v891, -inf
      %900 = vmax.xlane.f32.xlu0 %v899
      %v901 = vpop.xlane.xlu0 %900
      %v902 = vsel %vm499, %v892, -inf
      %903 = vmax.xlane.f32.xlu0 %v902
      %v904 = vpop.xlane.xlu0 %903
      %v905 = vsel %vm499, %v893, -inf
      %906 = vmax.xlane.f32.xlu0 %v905
      %v907 = vpop.xlane.xlu0 %906
      %v908 = vsel %vm499, %v894, -inf
      %909 = vmax.xlane.f32.xlu0 %v908
      %v910 = vpop.xlane.xlu0 %909
      %v911 = vsel %vm499, %v895, -inf
      %912 = vmax.xlane.f32.xlu0 %v911
      %v913 = vpop.xlane.xlu0 %912
      %v914 = vsel %vm499, %v896, -inf
      %915 = vmax.xlane.f32.xlu0 %v914
      %v916 = vpop.xlane.xlu0 %915
      %v917 = vsel %vm499, %v897, -inf
      %918 = vmax.xlane.f32.xlu0 %v917
      %v919 = vpop.xlane.xlu0 %918
      %v920 = vsel %vm499, %v898, -inf
      %921 = vmax.xlane.f32.xlu0 %v920
      %v922 = vpop.xlane.xlu0 %921
      %v923 = vsub.f32 %v891, %v901
      %v924 = vsub.f32 %v892, %v904
      %v925 = vsub.f32 %v893, %v907
      %v926 = vsub.f32 %v894, %v910
      %v927 = vsub.f32 %v895, %v913
      %v928 = vsub.f32 %v896, %v916
      %v929 = vsub.f32 %v897, %v919
      %v930 = vsub.f32 %v898, %v922
      %v931 = vmul.f32 %v923, 1.442695
      %v932 = vpow.pop %v931
      %v933 = vmul.f32 %v924, 1.442695
      %v934 = vpow.pop %v933
      %v935 = vmul.f32 %v925, 1.442695
      %v936 = vpow.pop %v935
      %v937 = vmul.f32 %v926, 1.442695
      %v938 = vpow.pop %v937
      %v939 = vmul.f32 %v927, 1.442695
      %v940 = vpow.pop %v939
      %v941 = vmul.f32 %v928, 1.442695
      %v942 = vpow.pop %v941
      %v943 = vmul.f32 %v929, 1.442695
      %v944 = vpow.pop %v943
      %v945 = vmul.f32 %v930, 1.442695
      %v946 = vpow.pop %v945
      %v947 = vsel %vm499, %v932, 0.0
      %948 = vadd.xlane.f32.xlu0 %v947
      %v949 = vpop.xlane.xlu0 %948
      %v950 = vsel %vm499, %v934, 0.0
      %951 = vadd.xlane.f32.xlu0 %v950
      %v952 = vpop.xlane.xlu0 %951
      %v953 = vsel %vm499, %v936, 0.0
      %954 = vadd.xlane.f32.xlu0 %v953
      %v955 = vpop.xlane.xlu0 %954
      %v956 = vsel %vm499, %v938, 0.0
      %957 = vadd.xlane.f32.xlu0 %v956
      %v958 = vpop.xlane.xlu0 %957
      %v959 = vsel %vm499, %v940, 0.0
      %960 = vadd.xlane.f32.xlu0 %v959
      %v961 = vpop.xlane.xlu0 %960
      %v962 = vsel %vm499, %v942, 0.0
      %963 = vadd.xlane.f32.xlu0 %v962
      %v964 = vpop.xlane.xlu0 %963
      %v965 = vsel %vm499, %v944, 0.0
      %966 = vadd.xlane.f32.xlu0 %v965
      %v967 = vpop.xlane.xlu0 %966
      %v968 = vsel %vm499, %v946, 0.0
      %969 = vadd.xlane.f32.xlu0 %v968
      %v970 = vpop.xlane.xlu0 %969
      %v971 = vrcp.pop %v949
      %v972 = vrcp.pop %v952
      %v973 = vrcp.pop %v955
      %v974 = vrcp.pop %v958
      %v975 = vrcp.pop %v961
      %v976 = vrcp.pop %v964
      %v977 = vrcp.pop %v967
      %v978 = vrcp.pop %v970
      %v979 = vmul.f32 %v932, %v971
      %v980 = vmul.f32 %v934, %v972
      %v981 = vmul.f32 %v936, %v973
      %v982 = vmul.f32 %v938, %v974
      %v983 = vmul.f32 %v940, %v975
      %v984 = vmul.f32 %v942, %v976
      %v985 = vmul.f32 %v944, %v977
      %v986 = vmul.f32 %v946, %v978
      %995 = vrot.lane.b32.xlu0 %v329, 120
      %v996 = vpop.permute.xlu0 %995
      %997 = vrot.lane.b32.xlu0 %v330, 120
      %v998 = vpop.permute.xlu0 %997
      %999 = vrot.lane.b32.xlu0 %v331, 120
      %v1000 = vpop.permute.xlu0 %999
      %1001 = vrot.lane.b32.xlu0 %v332, 120
      %v1002 = vpop.permute.xlu0 %1001
      %1003 = vrot.lane.b32.xlu0 %v333, 120
      %v1004 = vpop.permute.xlu0 %1003
      %1005 = vrot.lane.b32.xlu0 %v334, 120
      %v1006 = vpop.permute.xlu0 %1005
      %1007 = vrot.lane.b32.xlu0 %v335, 120
      %v1008 = vpop.permute.xlu0 %1007
      %1009 = vrot.lane.b32.xlu0 %v336, 120
      %v1010 = vpop.permute.xlu0 %1009
      %v1020 = vsel %vm499, %v979, 0
      %v1023 = vsel %vm499, %v980, 0
      %v1026 = vsel %vm499, %v981, 0
      %v1029 = vsel %vm499, %v982, 0
      %v1032 = vsel %vm499, %v983, 0
      %v1035 = vsel %vm499, %v984, 0
      %v1038 = vsel %vm499, %v985, 0
      %v1041 = vsel %vm499, %v986, 0
      %1043 = vmatprep.subr.mxu0 0.0
      %1044 = vmatpush1.msra.mxu0 %v996
      %1045 = vmatprep.subr.mxu0 0.0
      %1046 = vmatpush1.msra.mxu0 %v998
      %1047 = vmatprep.subr.mxu0 0.0
      %1048 = vmatpush1.msra.mxu0 %v1000
      %1049 = vmatprep.subr.mxu0 0.0
      %1050 = vmatpush1.msra.mxu0 %v1002
      %1051 = vmatprep.subr.mxu0 0.0
      %1052 = vmatpush1.msra.mxu0 %v1004
      %1053 = vmatprep.subr.mxu0 0.0
      %1054 = vmatpush1.msra.mxu0 %v1006
      %1055 = vmatprep.subr.mxu0 0.0
      %1056 = vmatpush1.msra.mxu0 %v1008
      %1057 = vmatprep.subr.mxu0 0.0
      %1058 = vmatpush1.msra.mxu0 %v1010
      %1059 = vmatprep.subr.mxu0 0.0
      %1060 = vmatpush1.msra.mxu0 0.0
      %1061 = vmatprep.subr.mxu0 0.0
      %1062 = vmatpush1.msra.mxu0 0.0
      %1063 = vmatprep.subr.mxu0 0.0
      %1064 = vmatpush1.msra.mxu0 0.0
      %1065 = vmatprep.subr.mxu0 0.0
      %1066 = vmatpush1.msra.mxu0 0.0
      %1067 = vmatprep.subr.mxu0 0.0
      %1068 = vmatpush1.msra.mxu0 0.0
      %1069 = vmatprep.subr.mxu0 0.0
      %1070 = vmatpush1.msra.mxu0 0.0
      %1071 = vmatprep.subr.mxu0 0.0
      %1072 = vmatpush1.msra.mxu0 0.0
      %1073 = vmatprep.subr.mxu0 0.0
      %1074 = vmatpush1.msra.mxu0 0.0
      %1075 = vmatprep.subr.mxu0 0.0
      %1076 = vmatpush1.msra.mxu0 0.0
      %1077 = vmatprep.subr.mxu0 0.0
      %1078 = vmatpush1.msra.mxu0 0.0
      %1079 = vmatprep.subr.mxu0 0.0
      %1080 = vmatpush1.msra.mxu0 0.0
      %1081 = vmatprep.subr.mxu0 0.0
      %1082 = vmatpush1.msra.mxu0 0.0
      %1083 = vmatprep.subr.mxu0 0.0
      %1084 = vmatpush1.msra.mxu0 0.0
      %1085 = vmatprep.subr.mxu0 0.0
      %1086 = vmatpush1.msra.mxu0 0.0
      %1087 = vmatprep.subr.mxu0 0.0
      %1088 = vmatpush1.msra.mxu0 0.0
      %1089 = vmatprep.subr.mxu0 0.0
      %1090 = vmatpush1.msra.mxu0 0.0
      %1091 = vmatprep.subr.mxu0 0.0
      %1092 = vmatpush1.msra.mxu0 0.0
      %1093 = vmatprep.subr.mxu0 0.0
      %1094 = vmatpush1.msra.mxu0 0.0
      %1095 = vmatprep.subr.mxu0 0.0
      %1096 = vmatpush1.msra.mxu0 0.0
      %1097 = vmatprep.subr.mxu0 0.0
      %1098 = vmatpush1.msra.mxu0 0.0
      %1099 = vmatprep.subr.mxu0 0.0
      %1100 = vmatpush1.msra.mxu0 0.0
      %1101 = vmatprep.subr.mxu0 0.0
      %1102 = vmatpush1.msra.mxu0 0.0
      %1103 = vmatprep.subr.mxu0 0.0
      %1104 = vmatpush1.msra.mxu0 0.0
      %1105 = vmatprep.subr.mxu0 0.0
      %1106 = vmatpush1.msra.mxu0 0.0
      %1107 = vmatprep.mubr.f32.mxu0 0.0
      %1108 = vmatmul.mubr.f32.gmra.mrb[0].mxu0 %v1020
      %v1109 = vpop.f32.mrb[0].mxu0
      %v1110 = vadd.f32 0.0, %v1109
      %v1111 = vpop.f32.mrb[0].mxu0
      %1112 = vmatprep.mubr.f32.mxu0 0.0
      %1113 = vmatmul.mubr.f32.gmra.mrb[0].mxu0 %v1023
      %v1114 = vpop.f32.mrb[0].mxu0
      %v1115 = vadd.f32 0.0, %v1114
      %v1116 = vpop.f32.mrb[0].mxu0
      %1117 = vmatprep.mubr.f32.mxu0 0.0
      %1118 = vmatmul.mubr.f32.gmra.mrb[0].mxu0 %v1026
      %v1119 = vpop.f32.mrb[0].mxu0
      %v1120 = vadd.f32 0.0, %v1119
      %v1121 = vpop.f32.mrb[0].mxu0
      %1122 = vmatprep.mubr.f32.mxu0 0.0
      %1123 = vmatmul.mubr.f32.gmra.mrb[0].mxu0 %v1029
      %v1124 = vpop.f32.mrb[0].mxu0
      %v1125 = vadd.f32 0.0, %v1124
      %v1126 = vpop.f32.mrb[0].mxu0
      %1127 = vmatprep.mubr.f32.mxu0 0.0
      %1128 = vmatmul.mubr.f32.gmra.mrb[0].mxu0 %v1032
      %v1129 = vpop.f32.mrb[0].mxu0
      %v1130 = vadd.f32 0.0, %v1129
      %v1131 = vpop.f32.mrb[0].mxu0
      %1132 = vmatprep.mubr.f32.mxu0 0.0
      %1133 = vmatmul.mubr.f32.gmra.mrb[0].mxu0 %v1035
      %v1134 = vpop.f32.mrb[0].mxu0
      %v1135 = vadd.f32 0.0, %v1134
      %v1136 = vpop.f32.mrb[0].mxu0
      %1137 = vmatprep.mubr.f32.mxu0 0.0
      %1138 = vmatmul.mubr.f32.gmra.mrb[0].mxu0 %v1038
      %v1139 = vpop.f32.mrb[0].mxu0
      %v1140 = vadd.f32 0.0, %v1139
      %v1141 = vpop.f32.mrb[0].mxu0
      %1142 = vmatprep.mubr.f32.mxu0 0.0
      %1143 = vmatmul.mubr.f32.gmra.mrb[0].mxu0 %v1041
      %v1144 = vpop.f32.mrb[0].mxu0
      %v1145 = vadd.f32 0.0, %v1144
      %v1146 = vpop.f32.mrb[0].mxu0
      %1147 = vdwg.mxu0
      %v1148 = vpack.c.bf16 %v1115, %v1110
      %v1149 = vpack.c.bf16 %v1125, %v1120
      %v1150 = vpack.c.bf16 %v1135, %v1130
      %v1151 = vpack.c.bf16 %v1145, %v1140
      %v1152 = vld [vmem:[%s4 + $0x4] sm:$0xf]
      %v1154 = vsel %vm337, %v1148, 0
      %v1157 = vsel %vm337, %v1149, 0
      %v1160 = vsel %vm337, %v1150, 0
      %v1163 = vsel %vm337, %v1151, 0
      %vm1165 = vcmask 1043456
      %v1167 = vsel %vm1165, %v1152, 0
      %1169 = vmatprep.subr.bf16.mxu0 0
      %1170 = vmatpush1.bf16.msra.mxu0 %v1167
      %1171 = vmatprep.subr.bf16.mxu0 0
      %1172 = vmatpush1.bf16.msra.mxu0 0
      %1173 = vmatprep.subr.bf16.mxu0 0
      %1174 = vmatpush1.bf16.msra.mxu0 0
      %1175 = vmatprep.subr.bf16.mxu0 0
      %1176 = vmatpush1.bf16.msra.mxu0 0
      %1177 = vmatprep.subr.bf16.mxu0 0
      %1178 = vmatpush1.bf16.msra.mxu0 0
      %1179 = vmatprep.subr.bf16.mxu0 0
      %1180 = vmatpush1.bf16.msra.mxu0 0
      %1181 = vmatprep.subr.bf16.mxu0 0
      %1182 = vmatpush1.bf16.msra.mxu0 0
      %1183 = vmatprep.subr.bf16.mxu0 0
      %1184 = vmatpush1.bf16.msra.mxu0 0
      %1185 = vmatprep.subr.bf16.mxu0 0
      %1186 = vmatpush1.bf16.msra.mxu0 0
      %1187 = vmatprep.subr.bf16.mxu0 0
      %1188 = vmatpush1.bf16.msra.mxu0 0
      %1189 = vmatprep.subr.bf16.mxu0 0
      %1190 = vmatpush1.bf16.msra.mxu0 0
      %1191 = vmatprep.subr.bf16.mxu0 0
      %1192 = vmatpush1.bf16.msra.mxu0 0
      %1193 = vmatprep.subr.bf16.mxu0 0
      %1194 = vmatpush1.bf16.msra.mxu0 0
      %1195 = vmatprep.subr.bf16.mxu0 0
      %1196 = vmatpush1.bf16.msra.mxu0 0
      %1197 = vmatprep.subr.bf16.mxu0 0
      %1198 = vmatpush1.bf16.msra.mxu0 0
      %1199 = vmatprep.subr.bf16.mxu0 0
      %1200 = vmatpush1.bf16.msra.mxu0 0
      %1201 = vmatprep.mubr.bf16.mxu0 0
      %1202 = vmatmul.mubr.bf16.gmra.mrb[0].mxu0 %v1154
      %v1203 = vpop.f32.mrb[0].mxu0
      %v1204 = vadd.f32 0.0, %v1203
      %v1205 = vpop.f32.mrb[0].mxu0
      %v1206 = vpop.f32.mrb[0].mxu0
      %v1207 = vadd.f32 0.0, %v1206
      %v1208 = vpop.f32.mrb[0].mxu0
      %1209 = vmatprep.mubr.bf16.mxu0 0
      %1210 = vmatmul.mubr.bf16.gmra.mrb[0].mxu0 %v1157
      %v1211 = vpop.f32.mrb[0].mxu0
      %v1212 = vadd.f32 0.0, %v1211
      %v1213 = vpop.f32.mrb[0].mxu0
      %v1214 = vpop.f32.mrb[0].mxu0
      %v1215 = vadd.f32 0.0, %v1214
      %v1216 = vpop.f32.mrb[0].mxu0
      %1217 = vmatprep.mubr.bf16.mxu0 0
      %1218 = vmatmul.mubr.bf16.gmra.mrb[0].mxu0 %v1160
      %v1219 = vpop.f32.mrb[0].mxu0
      %v1220 = vadd.f32 0.0, %v1219
      %v1221 = vpop.f32.mrb[0].mxu0
      %v1222 = vpop.f32.mrb[0].mxu0
      %v1223 = vadd.f32 0.0, %v1222
      %v1224 = vpop.f32.mrb[0].mxu0
      %1225 = vmatprep.mubr.bf16.mxu0 0
      %1226 = vmatmul.mubr.bf16.gmra.mrb[0].mxu0 %v1163
      %v1227 = vpop.f32.mrb[0].mxu0
      %v1228 = vadd.f32 0.0, %v1227
      %v1229 = vpop.f32.mrb[0].mxu0
      %v1230 = vpop.f32.mrb[0].mxu0
      %v1231 = vadd.f32 0.0, %v1230
      %v1232 = vpop.f32.mrb[0].mxu0
      %1233 = vdwg.mxu0
      %v1235 = vsel %vm337, %v717, 0
      %v1238 = vsel %vm337, %v718, 0
      %v1241 = vsel %vm337, %v719, 0
      %v1244 = vsel %vm337, %v720, 0
      %v1247 = vsel %vm1165, %v721, 0
      %1249 = vmatprep.subr.bf16.mxu0 0
      %1250 = vmatpush1.bf16.msra.mxu0 %v1247
      %1251 = vmatprep.subr.bf16.mxu0 0
      %1252 = vmatpush1.bf16.msra.mxu0 0
      %1253 = vmatprep.subr.bf16.mxu0 0
      %1254 = vmatpush1.bf16.msra.mxu0 0
      %1255 = vmatprep.subr.bf16.mxu0 0
      %1256 = vmatpush1.bf16.msra.mxu0 0
      %1257 = vmatprep.subr.bf16.mxu0 0
      %1258 = vmatpush1.bf16.msra.mxu0 0
      %1259 = vmatprep.subr.bf16.mxu0 0
      %1260 = vmatpush1.bf16.msra.mxu0 0
      %1261 = vmatprep.subr.bf16.mxu0 0
      %1262 = vmatpush1.bf16.msra.mxu0 0
      %1263 = vmatprep.subr.bf16.mxu0 0
      %1264 = vmatpush1.bf16.msra.mxu0 0
      %1265 = vmatprep.subr.bf16.mxu0 0
      %1266 = vmatpush1.bf16.msra.mxu0 0
      %1267 = vmatprep.subr.bf16.mxu0 0
      %1268 = vmatpush1.bf16.msra.mxu0 0
      %1269 = vmatprep.subr.bf16.mxu0 0
      %1270 = vmatpush1.bf16.msra.mxu0 0
      %1271 = vmatprep.subr.bf16.mxu0 0
      %1272 = vmatpush1.bf16.msra.mxu0 0
      %1273 = vmatprep.subr.bf16.mxu0 0
      %1274 = vmatpush1.bf16.msra.mxu0 0
      %1275 = vmatprep.subr.bf16.mxu0 0
      %1276 = vmatpush1.bf16.msra.mxu0 0
      %1277 = vmatprep.subr.bf16.mxu0 0
      %1278 = vmatpush1.bf16.msra.mxu0 0
      %1279 = vmatprep.subr.bf16.mxu0 0
      %1280 = vmatpush1.bf16.msra.mxu0 0
      %1281 = vmatprep.mubr.bf16.mxu0 0
      %1282 = vmatmul.mubr.bf16.gmra.mrb[0].mxu0 %v1235
      %v1283 = vpop.f32.mrb[0].mxu0
      %v1284 = vadd.f32 %v1204, %v1283
      %v1285 = vpop.f32.mrb[0].mxu0
      %v1286 = vpop.f32.mrb[0].mxu0
      %v1287 = vadd.f32 %v1207, %v1286
      %v1288 = vpop.f32.mrb[0].mxu0
      %1289 = vmatprep.mubr.bf16.mxu0 0
      %1290 = vmatmul.mubr.bf16.gmra.mrb[0].mxu0 %v1238
      %v1291 = vpop.f32.mrb[0].mxu0
      %v1292 = vadd.f32 %v1212, %v1291
      %v1293 = vpop.f32.mrb[0].mxu0
      %v1294 = vpop.f32.mrb[0].mxu0
      %v1295 = vadd.f32 %v1215, %v1294
      %v1296 = vpop.f32.mrb[0].mxu0
      %1297 = vmatprep.mubr.bf16.mxu0 0
      %1298 = vmatmul.mubr.bf16.gmra.mrb[0].mxu0 %v1241
      %v1299 = vpop.f32.mrb[0].mxu0
      %v1300 = vadd.f32 %v1220, %v1299
      %v1301 = vpop.f32.mrb[0].mxu0
      %v1302 = vpop.f32.mrb[0].mxu0
      %v1303 = vadd.f32 %v1223, %v1302
      %v1304 = vpop.f32.mrb[0].mxu0
      %1305 = vmatprep.mubr.bf16.mxu0 0
      %1306 = vmatmul.mubr.bf16.gmra.mrb[0].mxu0 %v1244
      %v1307 = vpop.f32.mrb[0].mxu0
      %v1308 = vadd.f32 %v1228, %v1307
      %v1309 = vpop.f32.mrb[0].mxu0
      %v1310 = vpop.f32.mrb[0].mxu0
      %v1311 = vadd.f32 %v1231, %v1310
      %v1312 = vpop.f32.mrb[0].mxu0
      %1313 = vdwg.mxu0
      %1314 = vrot.lane.b32.xlu0 %v313, 112
      %v1315 = vpop.permute.xlu0 %1314
      %1316 = vrot.lane.b32.xlu0 %v314, 112
      %v1317 = vpop.permute.xlu0 %1316
      %1318 = vrot.lane.b32.xlu0 %v315, 112
      %v1319 = vpop.permute.xlu0 %1318
      %1320 = vrot.lane.b32.xlu0 %v316, 112
      %v1321 = vpop.permute.xlu0 %1320
      %1322 = vrot.lane.b32.xlu0 %v317, 112
      %v1323 = vpop.permute.xlu0 %1322
      %1324 = vrot.lane.b32.xlu0 %v318, 112
      %v1325 = vpop.permute.xlu0 %1324
      %1326 = vrot.lane.b32.xlu0 %v319, 112
      %v1327 = vpop.permute.xlu0 %1326
      %1328 = vrot.lane.b32.xlu0 %v320, 112
      %v1329 = vpop.permute.xlu0 %1328
      %1330 = vrot.lane.b32.xlu0 %v321, 112
      %v1331 = vpop.permute.xlu0 %1330
      %1332 = vrot.lane.b32.xlu0 %v322, 112
      %v1333 = vpop.permute.xlu0 %1332
      %1334 = vrot.lane.b32.xlu0 %v323, 112
      %v1335 = vpop.permute.xlu0 %1334
      %1336 = vrot.lane.b32.xlu0 %v324, 112
      %v1337 = vpop.permute.xlu0 %1336
      %1338 = vrot.lane.b32.xlu0 %v325, 112
      %v1339 = vpop.permute.xlu0 %1338
      %1340 = vrot.lane.b32.xlu0 %v326, 112
      %v1341 = vpop.permute.xlu0 %1340
      %1342 = vrot.lane.b32.xlu0 %v327, 112
      %v1343 = vpop.permute.xlu0 %1342
      %1344 = vrot.lane.b32.xlu0 %v328, 112
      %v1345 = vpop.permute.xlu0 %1344
      %v1346 = vsel %vm337, %v1315, 0
      %v1348 = vsel %vm337, %v1317, 0
      %v1350 = vsel %vm337, %v1319, 0
      %v1352 = vsel %vm337, %v1321, 0
      %v1354 = vsel %vm337, %v1323, 0
      %v1356 = vsel %vm337, %v1325, 0
      %v1358 = vsel %vm337, %v1327, 0
      %v1360 = vsel %vm337, %v1329, 0
      %v1362 = vsel %vm337, %v1331, 0
      %v1364 = vsel %vm337, %v1333, 0
      %v1366 = vsel %vm337, %v1335, 0
      %v1368 = vsel %vm337, %v1337, 0
      %v1370 = vsel %vm337, %v1339, 0
      %v1372 = vsel %vm337, %v1341, 0
      %v1374 = vsel %vm337, %v1343, 0
      %v1376 = vsel %vm337, %v1345, 0
      %1378 = vmatprep.subr.mxu0 0.0
      %1379 = vmatpush1.xpose.msra.mxu0 %v1362
      %1380 = vmatprep.subr.mxu0 0.0
      %1381 = vmatpush1.xpose.msra.mxu0 %v1364
      %1382 = vmatprep.subr.mxu0 0.0
      %1383 = vmatpush1.xpose.msra.mxu0 %v1366
      %1384 = vmatprep.subr.mxu0 0.0
      %1385 = vmatpush1.xpose.msra.mxu0 %v1368
      %1386 = vmatprep.subr.mxu0 0.0
      %1387 = vmatpush1.xpose.msra.mxu0 %v1370
      %1388 = vmatprep.subr.mxu0 0.0
      %1389 = vmatpush1.xpose.msra.mxu0 %v1372
      %1390 = vmatprep.subr.mxu0 0.0
      %1391 = vmatpush1.xpose.msra.mxu0 %v1374
      %1392 = vmatprep.subr.mxu0 0.0
      %1393 = vmatpush1.xpose.msra.mxu0 %v1376
      %1394 = vmatprep.subr.mxu0 0.0
      %1395 = vmatpush1.xpose.msra.mxu0 0.0
      %1396 = vmatprep.subr.mxu0 0.0
      %1397 = vmatpush1.xpose.msra.mxu0 0.0
      %1398 = vmatprep.subr.mxu0 0.0
      %1399 = vmatpush1.xpose.msra.mxu0 0.0
      %1400 = vmatprep.subr.mxu0 0.0
      %1401 = vmatpush1.xpose.msra.mxu0 0.0
      %1402 = vmatprep.subr.mxu0 0.0
      %1403 = vmatpush1.xpose.msra.mxu0 0.0
      %1404 = vmatprep.subr.mxu0 0.0
      %1405 = vmatpush1.xpose.msra.mxu0 0.0
      %1406 = vmatprep.subr.mxu0 0.0
      %1407 = vmatpush1.xpose.msra.mxu0 0.0
      %1408 = vmatprep.subr.mxu0 0.0
      %1409 = vmatpush1.xpose.msra.mxu0 0.0
      %1410 = vmatprep.subr.mxu0 0.0
      %1411 = vmatpush1.xpose.msra.mxu0 0.0
      %1412 = vmatprep.subr.mxu0 0.0
      %1413 = vmatpush1.xpose.msra.mxu0 0.0
      %1414 = vmatprep.subr.mxu0 0.0
      %1415 = vmatpush1.xpose.msra.mxu0 0.0
      %1416 = vmatprep.subr.mxu0 0.0
      %1417 = vmatpush1.xpose.msra.mxu0 0.0
      %1418 = vmatprep.subr.mxu0 0.0
      %1419 = vmatpush1.xpose.msra.mxu0 0.0
      %1420 = vmatprep.subr.mxu0 0.0
      %1421 = vmatpush1.xpose.msra.mxu0 0.0
      %1422 = vmatprep.subr.mxu0 0.0
      %1423 = vmatpush1.xpose.msra.mxu0 0.0
      %1424 = vmatprep.subr.mxu0 0.0
      %1425 = vmatpush1.xpose.msra.mxu0 0.0
      %1426 = vmatprep.subr.mxu0 0.0
      %1427 = vmatpush1.xpose.msra.mxu0 0.0
      %1428 = vmatprep.subr.mxu0 0.0
      %1429 = vmatpush1.xpose.msra.mxu0 0.0
      %1430 = vmatprep.subr.mxu0 0.0
      %1431 = vmatpush1.xpose.msra.mxu0 0.0
      %1432 = vmatprep.subr.mxu0 0.0
      %1433 = vmatpush1.xpose.msra.mxu0 0.0
      %1434 = vmatprep.subr.mxu0 0.0
      %1435 = vmatpush1.xpose.msra.mxu0 0.0
      %1436 = vmatprep.subr.mxu0 0.0
      %1437 = vmatpush1.xpose.msra.mxu0 0.0
      %1438 = vmatprep.subr.mxu0 0.0
      %1439 = vmatpush1.xpose.msra.mxu0 0.0
      %1440 = vmatprep.subr.mxu0 0.0
      %1441 = vmatpush1.xpose.msra.mxu0 0.0
      %1442 = vmatprep.mubr.f32.mxu0 0.0
      %1443 = vmatmul.mubr.f32.gmra.mrb[0].mxu0 %v1346
      %v1444 = vpop.f32.mrb[0].mxu0
      %v1445 = vadd.f32 0.0, %v1444
      %v1446 = vpop.f32.mrb[0].mxu0
      %1447 = vmatprep.mubr.f32.mxu0 0.0
      %1448 = vmatmul.mubr.f32.gmra.mrb[0].mxu0 %v1348
      %v1449 = vpop.f32.mrb[0].mxu0
      %v1450 = vadd.f32 0.0, %v1449
      %v1451 = vpop.f32.mrb[0].mxu0
      %1452 = vmatprep.mubr.f32.mxu0 0.0
      %1453 = vmatmul.mubr.f32.gmra.mrb[0].mxu0 %v1350
      %v1454 = vpop.f32.mrb[0].mxu0
      %v1455 = vadd.f32 0.0, %v1454
      %v1456 = vpop.f32.mrb[0].mxu0
      %1457 = vmatprep.mubr.f32.mxu0 0.0
      %1458 = vmatmul.mubr.f32.gmra.mrb[0].mxu0 %v1352
      %v1459 = vpop.f32.mrb[0].mxu0
      %v1460 = vadd.f32 0.0, %v1459
      %v1461 = vpop.f32.mrb[0].mxu0
      %1462 = vmatprep.mubr.f32.mxu0 0.0
      %1463 = vmatmul.mubr.f32.gmra.mrb[0].mxu0 %v1354
      %v1464 = vpop.f32.mrb[0].mxu0
      %v1465 = vadd.f32 0.0, %v1464
      %v1466 = vpop.f32.mrb[0].mxu0
      %1467 = vmatprep.mubr.f32.mxu0 0.0
      %1468 = vmatmul.mubr.f32.gmra.mrb[0].mxu0 %v1356
      %v1469 = vpop.f32.mrb[0].mxu0
      %v1470 = vadd.f32 0.0, %v1469
      %v1471 = vpop.f32.mrb[0].mxu0
      %1472 = vmatprep.mubr.f32.mxu0 0.0
      %1473 = vmatmul.mubr.f32.gmra.mrb[0].mxu0 %v1358
      %v1474 = vpop.f32.mrb[0].mxu0
      %v1475 = vadd.f32 0.0, %v1474
      %v1476 = vpop.f32.mrb[0].mxu0
      %1477 = vmatprep.mubr.f32.mxu0 0.0
      %1478 = vmatmul.mubr.f32.gmra.mrb[0].mxu0 %v1360
      %v1479 = vpop.f32.mrb[0].mxu0
      %v1480 = vadd.f32 0.0, %v1479
      %v1481 = vpop.f32.mrb[0].mxu0
      %1482 = vdwg.mxu0
      %v1483 = vmul.f32 %v1445, 0.35355338
      %v1484 = vmul.f32 %v1450, 0.35355338
      %v1485 = vmul.f32 %v1455, 0.35355338
      %v1486 = vmul.f32 %v1460, 0.35355338
      %v1487 = vmul.f32 %v1465, 0.35355338
      %v1488 = vmul.f32 %v1470, 0.35355338
      %v1489 = vmul.f32 %v1475, 0.35355338
      %v1490 = vmul.f32 %v1480, 0.35355338
      %v1491 = vsel %vm499, %v1483, -inf
      %1492 = vmax.xlane.f32.xlu0 %v1491
      %v1493 = vpop.xlane.xlu0 %1492
      %v1494 = vsel %vm499, %v1484, -inf
      %1495 = vmax.xlane.f32.xlu0 %v1494
      %v1496 = vpop.xlane.xlu0 %1495
      %v1497 = vsel %vm499, %v1485, -inf
      %1498 = vmax.xlane.f32.xlu0 %v1497
      %v1499 = vpop.xlane.xlu0 %1498
      %v1500 = vsel %vm499, %v1486, -inf
      %1501 = vmax.xlane.f32.xlu0 %v1500
      %v1502 = vpop.xlane.xlu0 %1501
      %v1503 = vsel %vm499, %v1487, -inf
      %1504 = vmax.xlane.f32.xlu0 %v1503
      %v1505 = vpop.xlane.xlu0 %1504
      %v1506 = vsel %vm499, %v1488, -inf
      %1507 = vmax.xlane.f32.xlu0 %v1506
      %v1508 = vpop.xlane.xlu0 %1507
      %v1509 = vsel %vm499, %v1489, -inf
      %1510 = vmax.xlane.f32.xlu0 %v1509
      %v1511 = vpop.xlane.xlu0 %1510
      %v1512 = vsel %vm499, %v1490, -inf
      %1513 = vmax.xlane.f32.xlu0 %v1512
      %v1514 = vpop.xlane.xlu0 %1513
      %v1515 = vsub.f32 %v1483, %v1493
      %v1516 = vsub.f32 %v1484, %v1496
      %v1517 = vsub.f32 %v1485, %v1499
      %v1518 = vsub.f32 %v1486, %v1502
      %v1519 = vsub.f32 %v1487, %v1505
      %v1520 = vsub.f32 %v1488, %v1508
      %v1521 = vsub.f32 %v1489, %v1511
      %v1522 = vsub.f32 %v1490, %v1514
      %v1523 = vmul.f32 %v1515, 1.442695
      %v1524 = vpow.pop %v1523
      %v1525 = vmul.f32 %v1516, 1.442695
      %v1526 = vpow.pop %v1525
      %v1527 = vmul.f32 %v1517, 1.442695
      %v1528 = vpow.pop %v1527
      %v1529 = vmul.f32 %v1518, 1.442695
      %v1530 = vpow.pop %v1529
      %v1531 = vmul.f32 %v1519, 1.442695
      %v1532 = vpow.pop %v1531
      %v1533 = vmul.f32 %v1520, 1.442695
      %v1534 = vpow.pop %v1533
      %v1535 = vmul.f32 %v1521, 1.442695
      %v1536 = vpow.pop %v1535
      %v1537 = vmul.f32 %v1522, 1.442695
      %v1538 = vpow.pop %v1537
      %v1539 = vsel %vm499, %v1524, 0.0
      %1540 = vadd.xlane.f32.xlu0 %v1539
      %v1541 = vpop.xlane.xlu0 %1540
      %v1542 = vsel %vm499, %v1526, 0.0
      %1543 = vadd.xlane.f32.xlu0 %v1542
      %v1544 = vpop.xlane.xlu0 %1543
      %v1545 = vsel %vm499, %v1528, 0.0
      %1546 = vadd.xlane.f32.xlu0 %v1545
      %v1547 = vpop.xlane.xlu0 %1546
      %v1548 = vsel %vm499, %v1530, 0.0
      %1549 = vadd.xlane.f32.xlu0 %v1548
      %v1550 = vpop.xlane.xlu0 %1549
      %v1551 = vsel %vm499, %v1532, 0.0
      %1552 = vadd.xlane.f32.xlu0 %v1551
      %v1553 = vpop.xlane.xlu0 %1552
      %v1554 = vsel %vm499, %v1534, 0.0
      %1555 = vadd.xlane.f32.xlu0 %v1554
      %v1556 = vpop.xlane.xlu0 %1555
      %v1557 = vsel %vm499, %v1536, 0.0
      %1558 = vadd.xlane.f32.xlu0 %v1557
      %v1559 = vpop.xlane.xlu0 %1558
      %v1560 = vsel %vm499, %v1538, 0.0
      %1561 = vadd.xlane.f32.xlu0 %v1560
      %v1562 = vpop.xlane.xlu0 %1561
      %v1563 = vrcp.pop %v1541
      %v1564 = vrcp.pop %v1544
      %v1565 = vrcp.pop %v1547
      %v1566 = vrcp.pop %v1550
      %v1567 = vrcp.pop %v1553
      %v1568 = vrcp.pop %v1556
      %v1569 = vrcp.pop %v1559
      %v1570 = vrcp.pop %v1562
      %v1571 = vmul.f32 %v1524, %v1563
      %v1572 = vmul.f32 %v1526, %v1564
      %v1573 = vmul.f32 %v1528, %v1565
      %v1574 = vmul.f32 %v1530, %v1566
      %v1575 = vmul.f32 %v1532, %v1567
      %v1576 = vmul.f32 %v1534, %v1568
      %v1577 = vmul.f32 %v1536, %v1569
      %v1578 = vmul.f32 %v1538, %v1570
      %1579 = vrot.lane.b32.xlu0 %v329, 112
      %v1580 = vpop.permute.xlu0 %1579
      %1581 = vrot.lane.b32.xlu0 %v330, 112
      %v1582 = vpop.permute.xlu0 %1581
      %1583 = vrot.lane.b32.xlu0 %v331, 112
      %v1584 = vpop.permute.xlu0 %1583
      %1585 = vrot.lane.b32.xlu0 %v332, 112
      %v1586 = vpop.permute.xlu0 %1585
      %1587 = vrot.lane.b32.xlu0 %v333, 112
      %v1588 = vpop.permute.xlu0 %1587
      %1589 = vrot.lane.b32.xlu0 %v334, 112
      %v1590 = vpop.permute.xlu0 %1589
      %1591 = vrot.lane.b32.xlu0 %v335, 112
      %v1592 = vpop.permute.xlu0 %1591
      %1593 = vrot.lane.b32.xlu0 %v336, 112
      %v1594 = vpop.permute.xlu0 %1593
      %v1604 = vsel %vm499, %v1571, 0
      %v1607 = vsel %vm499, %v1572, 0
      %v1610 = vsel %vm499, %v1573, 0
      %v1613 = vsel %vm499, %v1574, 0
      %v1616 = vsel %vm499, %v1575, 0
      %v1619 = vsel %vm499, %v1576, 0
      %v1622 = vsel %vm499, %v1577, 0
      %v1625 = vsel %vm499, %v1578, 0
      %1627 = vmatprep.subr.mxu0 0.0
      %1628 = vmatpush1.msra.mxu0 %v1580
      %1629 = vmatprep.subr.mxu0 0.0
      %1630 = vmatpush1.msra.mxu0 %v1582
      %1631 = vmatprep.subr.mxu0 0.0
      %1632 = vmatpush1.msra.mxu0 %v1584
      %1633 = vmatprep.subr.mxu0 0.0
      %1634 = vmatpush1.msra.mxu0 %v1586
      %1635 = vmatprep.subr.mxu0 0.0
      %1636 = vmatpush1.msra.mxu0 %v1588
      %1637 = vmatprep.subr.mxu0 0.0
      %1638 = vmatpush1.msra.mxu0 %v1590
      %1639 = vmatprep.subr.mxu0 0.0
      %1640 = vmatpush1.msra.mxu0 %v1592
      %1641 = vmatprep.subr.mxu0 0.0
      %1642 = vmatpush1.msra.mxu0 %v1594
      %1643 = vmatprep.subr.mxu0 0.0
      %1644 = vmatpush1.msra.mxu0 0.0
      %1645 = vmatprep.subr.mxu0 0.0
      %1646 = vmatpush1.msra.mxu0 0.0
      %1647 = vmatprep.subr.mxu0 0.0
      %1648 = vmatpush1.msra.mxu0 0.0
      %1649 = vmatprep.subr.mxu0 0.0
      %1650 = vmatpush1.msra.mxu0 0.0
      %1651 = vmatprep.subr.mxu0 0.0
      %1652 = vmatpush1.msra.mxu0 0.0
      %1653 = vmatprep.subr.mxu0 0.0
      %1654 = vmatpush1.msra.mxu0 0.0
      %1655 = vmatprep.subr.mxu0 0.0
      %1656 = vmatpush1.msra.mxu0 0.0
      %1657 = vmatprep.subr.mxu0 0.0
      %1658 = vmatpush1.msra.mxu0 0.0
      %1659 = vmatprep.subr.mxu0 0.0
      %1660 = vmatpush1.msra.mxu0 0.0
      %1661 = vmatprep.subr.mxu0 0.0
      %1662 = vmatpush1.msra.mxu0 0.0
      %1663 = vmatprep.subr.mxu0 0.0
      %1664 = vmatpush1.msra.mxu0 0.0
      %1665 = vmatprep.subr.mxu0 0.0
      %1666 = vmatpush1.msra.mxu0 0.0
      %1667 = vmatprep.subr.mxu0 0.0
      %1668 = vmatpush1.msra.mxu0 0.0
      %1669 = vmatprep.subr.mxu0 0.0
      %1670 = vmatpush1.msra.mxu0 0.0
      %1671 = vmatprep.subr.mxu0 0.0
      %1672 = vmatpush1.msra.mxu0 0.0
      %1673 = vmatprep.subr.mxu0 0.0
      %1674 = vmatpush1.msra.mxu0 0.0
      %1675 = vmatprep.subr.mxu0 0.0
      %1676 = vmatpush1.msra.mxu0 0.0
      %1677 = vmatprep.subr.mxu0 0.0
      %1678 = vmatpush1.msra.mxu0 0.0
      %1679 = vmatprep.subr.mxu0 0.0
      %1680 = vmatpush1.msra.mxu0 0.0
      %1681 = vmatprep.subr.mxu0 0.0
      %1682 = vmatpush1.msra.mxu0 0.0
      %1683 = vmatprep.subr.mxu0 0.0
      %1684 = vmatpush1.msra.mxu0 0.0
      %1685 = vmatprep.subr.mxu0 0.0
      %1686 = vmatpush1.msra.mxu0 0.0
      %1687 = vmatprep.subr.mxu0 0.0
      %1688 = vmatpush1.msra.mxu0 0.0
      %1689 = vmatprep.subr.mxu0 0.0
      %1690 = vmatpush1.msra.mxu0 0.0
      %1691 = vmatprep.mubr.f32.mxu0 0.0
      %1692 = vmatmul.mubr.f32.gmra.mrb[0].mxu0 %v1604
      %v1693 = vpop.f32.mrb[0].mxu0
      %v1694 = vadd.f32 0.0, %v1693
      %v1695 = vpop.f32.mrb[0].mxu0
      %1696 = vmatprep.mubr.f32.mxu0 0.0
      %1697 = vmatmul.mubr.f32.gmra.mrb[0].mxu0 %v1607
      %v1698 = vpop.f32.mrb[0].mxu0
      %v1699 = vadd.f32 0.0, %v1698
      %v1700 = vpop.f32.mrb[0].mxu0
      %1701 = vmatprep.mubr.f32.mxu0 0.0
      %1702 = vmatmul.mubr.f32.gmra.mrb[0].mxu0 %v1610
      %v1703 = vpop.f32.mrb[0].mxu0
      %v1704 = vadd.f32 0.0, %v1703
      %v1705 = vpop.f32.mrb[0].mxu0
      %1706 = vmatprep.mubr.f32.mxu0 0.0
      %1707 = vmatmul.mubr.f32.gmra.mrb[0].mxu0 %v1613
      %v1708 = vpop.f32.mrb[0].mxu0
      %v1709 = vadd.f32 0.0, %v1708
      %v1710 = vpop.f32.mrb[0].mxu0
      %1711 = vmatprep.mubr.f32.mxu0 0.0
      %1712 = vmatmul.mubr.f32.gmra.mrb[0].mxu0 %v1616
      %v1713 = vpop.f32.mrb[0].mxu0
      %v1714 = vadd.f32 0.0, %v1713
      %v1715 = vpop.f32.mrb[0].mxu0
      %1716 = vmatprep.mubr.f32.mxu0 0.0
      %1717 = vmatmul.mubr.f32.gmra.mrb[0].mxu0 %v1619
      %v1718 = vpop.f32.mrb[0].mxu0
      %v1719 = vadd.f32 0.0, %v1718
      %v1720 = vpop.f32.mrb[0].mxu0
      %1721 = vmatprep.mubr.f32.mxu0 0.0
      %1722 = vmatmul.mubr.f32.gmra.mrb[0].mxu0 %v1622
      %v1723 = vpop.f32.mrb[0].mxu0
      %v1724 = vadd.f32 0.0, %v1723
      %v1725 = vpop.f32.mrb[0].mxu0
      %1726 = vmatprep.mubr.f32.mxu0 0.0
      %1727 = vmatmul.mubr.f32.gmra.mrb[0].mxu0 %v1625
      %v1728 = vpop.f32.mrb[0].mxu0
      %v1729 = vadd.f32 0.0, %v1728
      %v1730 = vpop.f32.mrb[0].mxu0
      %1731 = vdwg.mxu0
      %v1732 = vpack.c.bf16 %v1699, %v1694
      %v1733 = vpack.c.bf16 %v1709, %v1704
      %v1734 = vpack.c.bf16 %v1719, %v1714
      %v1735 = vpack.c.bf16 %v1729, %v1724
      %v1736 = vld [vmem:[%s4 + $0x8] sm:$0xf]
      %v1738 = vsel %vm337, %v1732, 0
      %v1741 = vsel %vm337, %v1733, 0
      %v1744 = vsel %vm337, %v1734, 0
      %v1747 = vsel %vm337, %v1735, 0
      %v1750 = vsel %vm1165, %v1736, 0
      %1752 = vmatprep.subr.bf16.mxu0 0
      %1753 = vmatpush1.bf16.msra.mxu0 %v1750
      %1754 = vmatprep.subr.bf16.mxu0 0
      %1755 = vmatpush1.bf16.msra.mxu0 0
      %1756 = vmatprep.subr.bf16.mxu0 0
      %1757 = vmatpush1.bf16.msra.mxu0 0
      %1758 = vmatprep.subr.bf16.mxu0 0
      %1759 = vmatpush1.bf16.msra.mxu0 0
      %1760 = vmatprep.subr.bf16.mxu0 0
      %1761 = vmatpush1.bf16.msra.mxu0 0
      %1762 = vmatprep.subr.bf16.mxu0 0
      %1763 = vmatpush1.bf16.msra.mxu0 0
      %1764 = vmatprep.subr.bf16.mxu0 0
      %1765 = vmatpush1.bf16.msra.mxu0 0
      %1766 = vmatprep.subr.bf16.mxu0 0
      %1767 = vmatpush1.bf16.msra.mxu0 0
      %1768 = vmatprep.subr.bf16.mxu0 0
      %1769 = vmatpush1.bf16.msra.mxu0 0
      %1770 = vmatprep.subr.bf16.mxu0 0
      %1771 = vmatpush1.bf16.msra.mxu0 0
      %1772 = vmatprep.subr.bf16.mxu0 0
      %1773 = vmatpush1.bf16.msra.mxu0 0
      %1774 = vmatprep.subr.bf16.mxu0 0
      %1775 = vmatpush1.bf16.msra.mxu0 0
      %1776 = vmatprep.subr.bf16.mxu0 0
      %1777 = vmatpush1.bf16.msra.mxu0 0
      %1778 = vmatprep.subr.bf16.mxu0 0
      %1779 = vmatpush1.bf16.msra.mxu0 0
      %1780 = vmatprep.subr.bf16.mxu0 0
      %1781 = vmatpush1.bf16.msra.mxu0 0
      %1782 = vmatprep.subr.bf16.mxu0 0
      %1783 = vmatpush1.bf16.msra.mxu0 0
      %1784 = vmatprep.mubr.bf16.mxu0 0
      %1785 = vmatmul.mubr.bf16.gmra.mrb[0].mxu0 %v1738
      %v1786 = vpop.f32.mrb[0].mxu0
      %v1787 = vadd.f32 0.0, %v1786
      %v1788 = vpop.f32.mrb[0].mxu0
      %v1789 = vpop.f32.mrb[0].mxu0
      %v1790 = vadd.f32 0.0, %v1789
      %v1791 = vpop.f32.mrb[0].mxu0
      %1792 = vmatprep.mubr.bf16.mxu0 0
      %1793 = vmatmul.mubr.bf16.gmra.mrb[0].mxu0 %v1741
      %v1794 = vpop.f32.mrb[0].mxu0
      %v1795 = vadd.f32 0.0, %v1794
      %v1796 = vpop.f32.mrb[0].mxu0
      %v1797 = vpop.f32.mrb[0].mxu0
      %v1798 = vadd.f32 0.0, %v1797
      %v1799 = vpop.f32.mrb[0].mxu0
      %1800 = vmatprep.mubr.bf16.mxu0 0
      %1801 = vmatmul.mubr.bf16.gmra.mrb[0].mxu0 %v1744
      %v1802 = vpop.f32.mrb[0].mxu0
      %v1803 = vadd.f32 0.0, %v1802
      %v1804 = vpop.f32.mrb[0].mxu0
      %v1805 = vpop.f32.mrb[0].mxu0
      %v1806 = vadd.f32 0.0, %v1805
      %v1807 = vpop.f32.mrb[0].mxu0
      %1808 = vmatprep.mubr.bf16.mxu0 0
      %1809 = vmatmul.mubr.bf16.gmra.mrb[0].mxu0 %v1747
      %v1810 = vpop.f32.mrb[0].mxu0
      %v1811 = vadd.f32 0.0, %v1810
      %v1812 = vpop.f32.mrb[0].mxu0
      %v1813 = vpop.f32.mrb[0].mxu0
      %v1814 = vadd.f32 0.0, %v1813
      %v1815 = vpop.f32.mrb[0].mxu0
      %1816 = vdwg.mxu0
      %v1817 = vadd.f32 %v1284, %v1787
      %v1818 = vadd.f32 %v1287, %v1790
      %v1819 = vadd.f32 %v1292, %v1795
      %v1820 = vadd.f32 %v1295, %v1798
      %v1821 = vadd.f32 %v1300, %v1803
      %v1822 = vadd.f32 %v1303, %v1806
      %v1823 = vadd.f32 %v1308, %v1811
      %v1824 = vadd.f32 %v1311, %v1814
      %1825 = vrot.lane.b32.xlu0 %v313, 104
      %v1826 = vpop.permute.xlu0 %1825
      %1827 = vrot.lane.b32.xlu0 %v314, 104
      %v1828 = vpop.permute.xlu0 %1827
      %1829 = vrot.lane.b32.xlu0 %v315, 104
      %v1830 = vpop.permute.xlu0 %1829
      %1831 = vrot.lane.b32.xlu0 %v316, 104
      %v1832 = vpop.permute.xlu0 %1831
      %1833 = vrot.lane.b32.xlu0 %v317, 104
      %v1834 = vpop.permute.xlu0 %1833
      %1835 = vrot.lane.b32.xlu0 %v318, 104
      %v1836 = vpop.permute.xlu0 %1835
      %1837 = vrot.lane.b32.xlu0 %v319, 104
      %v1838 = vpop.permute.xlu0 %1837
      %1839 = vrot.lane.b32.xlu0 %v320, 104
      %v1840 = vpop.permute.xlu0 %1839
      %1841 = vrot.lane.b32.xlu0 %v321, 104
      %v1842 = vpop.permute.xlu0 %1841
      %1843 = vrot.lane.b32.xlu0 %v322, 104
      %v1844 = vpop.permute.xlu0 %1843
      %1845 = vrot.lane.b32.xlu0 %v323, 104
      %v1846 = vpop.permute.xlu0 %1845
      %1847 = vrot.lane.b32.xlu0 %v324, 104
      %v1848 = vpop.permute.xlu0 %1847
      %1849 = vrot.lane.b32.xlu0 %v325, 104
      %v1850 = vpop.permute.xlu0 %1849
      %1851 = vrot.lane.b32.xlu0 %v326, 104
      %v1852 = vpop.permute.xlu0 %1851
      %1853 = vrot.lane.b32.xlu0 %v327, 104
      %v1854 = vpop.permute.xlu0 %1853
      %1855 = vrot.lane.b32.xlu0 %v328, 104
      %v1856 = vpop.permute.xlu0 %1855
      %v1857 = vsel %vm337, %v1826, 0
      %v1859 = vsel %vm337, %v1828, 0
      %v1861 = vsel %vm337, %v1830, 0
      %v1863 = vsel %vm337, %v1832, 0
      %v1865 = vsel %vm337, %v1834, 0
      %v1867 = vsel %vm337, %v1836, 0
      %v1869 = vsel %vm337, %v1838, 0
      %v1871 = vsel %vm337, %v1840, 0
      %v1873 = vsel %vm337, %v1842, 0
      %v1875 = vsel %vm337, %v1844, 0
      %v1877 = vsel %vm337, %v1846, 0
      %v1879 = vsel %vm337, %v1848, 0
      %v1881 = vsel %vm337, %v1850, 0
      %v1883 = vsel %vm337, %v1852, 0
      %v1885 = vsel %vm337, %v1854, 0
      %v1887 = vsel %vm337, %v1856, 0
      %1889 = vmatprep.subr.mxu0 0.0
      %1890 = vmatpush1.xpose.msra.mxu0 %v1873
      %1891 = vmatprep.subr.mxu0 0.0
      %1892 = vmatpush1.xpose.msra.mxu0 %v1875
      %1893 = vmatprep.subr.mxu0 0.0
      %1894 = vmatpush1.xpose.msra.mxu0 %v1877
      %1895 = vmatprep.subr.mxu0 0.0
      %1896 = vmatpush1.xpose.msra.mxu0 %v1879
      %1897 = vmatprep.subr.mxu0 0.0
      %1898 = vmatpush1.xpose.msra.mxu0 %v1881
      %1899 = vmatprep.subr.mxu0 0.0
      %1900 = vmatpush1.xpose.msra.mxu0 %v1883
      %1901 = vmatprep.subr.mxu0 0.0
      %1902 = vmatpush1.xpose.msra.mxu0 %v1885
      %1903 = vmatprep.subr.mxu0 0.0
      %1904 = vmatpush1.xpose.msra.mxu0 %v1887
      %1905 = vmatprep.subr.mxu0 0.0
      %1906 = vmatpush1.xpose.msra.mxu0 0.0
      %1907 = vmatprep.subr.mxu0 0.0
      %1908 = vmatpush1.xpose.msra.mxu0 0.0
      %1909 = vmatprep.subr.mxu0 0.0
      %1910 = vmatpush1.xpose.msra.mxu0 0.0
      %1911 = vmatprep.subr.mxu0 0.0
      %1912 = vmatpush1.xpose.msra.mxu0 0.0
      %1913 = vmatprep.subr.mxu0 0.0
      %1914 = vmatpush1.xpose.msra.mxu0 0.0
      %1915 = vmatprep.subr.mxu0 0.0
      %1916 = vmatpush1.xpose.msra.mxu0 0.0
      %1917 = vmatprep.subr.mxu0 0.0
      %1918 = vmatpush1.xpose.msra.mxu0 0.0
      %1919 = vmatprep.subr.mxu0 0.0
      %1920 = vmatpush1.xpose.msra.mxu0 0.0
      %1921 = vmatprep.subr.mxu0 0.0
      %1922 = vmatpush1.xpose.msra.mxu0 0.0
      %1923 = vmatprep.subr.mxu0 0.0
      %1924 = vmatpush1.xpose.msra.mxu0 0.0
      %1925 = vmatprep.subr.mxu0 0.0
      %1926 = vmatpush1.xpose.msra.mxu0 0.0
      %1927 = vmatprep.subr.mxu0 0.0
      %1928 = vmatpush1.xpose.msra.mxu0 0.0
      %1929 = vmatprep.subr.mxu0 0.0
      %1930 = vmatpush1.xpose.msra.mxu0 0.0
      %1931 = vmatprep.subr.mxu0 0.0
      %1932 = vmatpush1.xpose.msra.mxu0 0.0
      %1933 = vmatprep.subr.mxu0 0.0
      %1934 = vmatpush1.xpose.msra.mxu0 0.0
      %1935 = vmatprep.subr.mxu0 0.0
      %1936 = vmatpush1.xpose.msra.mxu0 0.0
      %1937 = vmatprep.subr.mxu0 0.0
      %1938 = vmatpush1.xpose.msra.mxu0 0.0
      %1939 = vmatprep.subr.mxu0 0.0
      %1940 = vmatpush1.xpose.msra.mxu0 0.0
      %1941 = vmatprep.subr.mxu0 0.0
      %1942 = vmatpush1.xpose.msra.mxu0 0.0
      %1943 = vmatprep.subr.mxu0 0.0
      %1944 = vmatpush1.xpose.msra.mxu0 0.0
      %1945 = vmatprep.subr.mxu0 0.0
      %1946 = vmatpush1.xpose.msra.mxu0 0.0
      %1947 = vmatprep.subr.mxu0 0.0
      %1948 = vmatpush1.xpose.msra.mxu0 0.0
      %1949 = vmatprep.subr.mxu0 0.0
      %1950 = vmatpush1.xpose.msra.mxu0 0.0
      %1951 = vmatprep.subr.mxu0 0.0
      %1952 = vmatpush1.xpose.msra.mxu0 0.0
      %1953 = vmatprep.mubr.f32.mxu0 0.0
      %1954 = vmatmul.mubr.f32.gmra.mrb[0].mxu0 %v1857
      %v1955 = vpop.f32.mrb[0].mxu0
      %v1956 = vadd.f32 0.0, %v1955
      %v1957 = vpop.f32.mrb[0].mxu0
      %1958 = vmatprep.mubr.f32.mxu0 0.0
      %1959 = vmatmul.mubr.f32.gmra.mrb[0].mxu0 %v1859
      %v1960 = vpop.f32.mrb[0].mxu0
      %v1961 = vadd.f32 0.0, %v1960
      %v1962 = vpop.f32.mrb[0].mxu0
      %1963 = vmatprep.mubr.f32.mxu0 0.0
      %1964 = vmatmul.mubr.f32.gmra.mrb[0].mxu0 %v1861
      %v1965 = vpop.f32.mrb[0].mxu0
      %v1966 = vadd.f32 0.0, %v1965
      %v1967 = vpop.f32.mrb[0].mxu0
      %1968 = vmatprep.mubr.f32.mxu0 0.0
      %1969 = vmatmul.mubr.f32.gmra.mrb[0].mxu0 %v1863
      %v1970 = vpop.f32.mrb[0].mxu0
      %v1971 = vadd.f32 0.0, %v1970
      %v1972 = vpop.f32.mrb[0].mxu0
      %1973 = vmatprep.mubr.f32.mxu0 0.0
      %1974 = vmatmul.mubr.f32.gmra.mrb[0].mxu0 %v1865
      %v1975 = vpop.f32.mrb[0].mxu0
      %v1976 = vadd.f32 0.0, %v1975
      %v1977 = vpop.f32.mrb[0].mxu0
      %1978 = vmatprep.mubr.f32.mxu0 0.0
      %1979 = vmatmul.mubr.f32.gmra.mrb[0].mxu0 %v1867
      %v1980 = vpop.f32.mrb[0].mxu0
      %v1981 = vadd.f32 0.0, %v1980
      %v1982 = vpop.f32.mrb[0].mxu0
      %1983 = vmatprep.mubr.f32.mxu0 0.0
      %1984 = vmatmul.mubr.f32.gmra.mrb[0].mxu0 %v1869
      %v1985 = vpop.f32.mrb[0].mxu0
      %v1986 = vadd.f32 0.0, %v1985
      %v1987 = vpop.f32.mrb[0].mxu0
      %1988 = vmatprep.mubr.f32.mxu0 0.0
      %1989 = vmatmul.mubr.f32.gmra.mrb[0].mxu0 %v1871
      %v1990 = vpop.f32.mrb[0].mxu0
      %v1991 = vadd.f32 0.0, %v1990
      %v1992 = vpop.f32.mrb[0].mxu0
      %1993 = vdwg.mxu0
      %v1994 = vmul.f32 %v1956, 0.35355338
      %v1995 = vmul.f32 %v1961, 0.35355338
      %v1996 = vmul.f32 %v1966, 0.35355338
      %v1997 = vmul.f32 %v1971, 0.35355338
      %v1998 = vmul.f32 %v1976, 0.35355338
      %v1999 = vmul.f32 %v1981, 0.35355338
      %v2000 = vmul.f32 %v1986, 0.35355338
      %v2001 = vmul.f32 %v1991, 0.35355338
      %v2002 = vsel %vm499, %v1994, -inf
      %2003 = vmax.xlane.f32.xlu0 %v2002
      %v2004 = vpop.xlane.xlu0 %2003
      %v2005 = vsel %vm499, %v1995, -inf
      %2006 = vmax.xlane.f32.xlu0 %v2005
      %v2007 = vpop.xlane.xlu0 %2006
      %v2008 = vsel %vm499, %v1996, -inf
      %2009 = vmax.xlane.f32.xlu0 %v2008
      %v2010 = vpop.xlane.xlu0 %2009
      %v2011 = vsel %vm499, %v1997, -inf
      %2012 = vmax.xlane.f32.xlu0 %v2011
      %v2013 = vpop.xlane.xlu0 %2012
      %v2014 = vsel %vm499, %v1998, -inf
      %2015 = vmax.xlane.f32.xlu0 %v2014
      %v2016 = vpop.xlane.xlu0 %2015
      %v2017 = vsel %vm499, %v1999, -inf
      %2018 = vmax.xlane.f32.xlu0 %v2017
      %v2019 = vpop.xlane.xlu0 %2018
      %v2020 = vsel %vm499, %v2000, -inf
      %2021 = vmax.xlane.f32.xlu0 %v2020
      %v2022 = vpop.xlane.xlu0 %2021
      %v2023 = vsel %vm499, %v2001, -inf
      %2024 = vmax.xlane.f32.xlu0 %v2023
      %v2025 = vpop.xlane.xlu0 %2024
      %v2026 = vsub.f32 %v1994, %v2004
      %v2027 = vsub.f32 %v1995, %v2007
      %v2028 = vsub.f32 %v1996, %v2010
      %v2029 = vsub.f32 %v1997, %v2013
      %v2030 = vsub.f32 %v1998, %v2016
      %v2031 = vsub.f32 %v1999, %v2019
      %v2032 = vsub.f32 %v2000, %v2022
      %v2033 = vsub.f32 %v2001, %v2025
      %v2034 = vmul.f32 %v2026, 1.442695
      %v2035 = vpow.pop %v2034
      %v2036 = vmul.f32 %v2027, 1.442695
      %v2037 = vpow.pop %v2036
      %v2038 = vmul.f32 %v2028, 1.442695
      %v2039 = vpow.pop %v2038
      %v2040 = vmul.f32 %v2029, 1.442695
      %v2041 = vpow.pop %v2040
      %v2042 = vmul.f32 %v2030, 1.442695
      %v2043 = vpow.pop %v2042
      %v2044 = vmul.f32 %v2031, 1.442695
      %v2045 = vpow.pop %v2044
      %v2046 = vmul.f32 %v2032, 1.442695
      %v2047 = vpow.pop %v2046
      %v2048 = vmul.f32 %v2033, 1.442695
      %v2049 = vpow.pop %v2048
      %v2050 = vsel %vm499, %v2035, 0.0
      %2051 = vadd.xlane.f32.xlu0 %v2050
      %v2052 = vpop.xlane.xlu0 %2051
      %v2053 = vsel %vm499, %v2037, 0.0
      %2054 = vadd.xlane.f32.xlu0 %v2053
      %v2055 = vpop.xlane.xlu0 %2054
      %v2056 = vsel %vm499, %v2039, 0.0
      %2057 = vadd.xlane.f32.xlu0 %v2056
      %v2058 = vpop.xlane.xlu0 %2057
      %v2059 = vsel %vm499, %v2041, 0.0
      %2060 = vadd.xlane.f32.xlu0 %v2059
      %v2061 = vpop.xlane.xlu0 %2060
      %v2062 = vsel %vm499, %v2043, 0.0
      %2063 = vadd.xlane.f32.xlu0 %v2062
      %v2064 = vpop.xlane.xlu0 %2063
      %v2065 = vsel %vm499, %v2045, 0.0
      %2066 = vadd.xlane.f32.xlu0 %v2065
      %v2067 = vpop.xlane.xlu0 %2066
      %v2068 = vsel %vm499, %v2047, 0.0
      %2069 = vadd.xlane.f32.xlu0 %v2068
      %v2070 = vpop.xlane.xlu0 %2069
      %v2071 = vsel %vm499, %v2049, 0.0
      %2072 = vadd.xlane.f32.xlu0 %v2071
      %v2073 = vpop.xlane.xlu0 %2072
      %v2074 = vrcp.pop %v2052
      %v2075 = vrcp.pop %v2055
      %v2076 = vrcp.pop %v2058
      %v2077 = vrcp.pop %v2061
      %v2078 = vrcp.pop %v2064
      %v2079 = vrcp.pop %v2067
      %v2080 = vrcp.pop %v2070
      %v2081 = vrcp.pop %v2073
      %v2082 = vmul.f32 %v2035, %v2074
      %v2083 = vmul.f32 %v2037, %v2075
      %v2084 = vmul.f32 %v2039, %v2076
      %v2085 = vmul.f32 %v2041, %v2077
      %v2086 = vmul.f32 %v2043, %v2078
      %v2087 = vmul.f32 %v2045, %v2079
      %v2088 = vmul.f32 %v2047, %v2080
      %v2089 = vmul.f32 %v2049, %v2081
      %2090 = vrot.lane.b32.xlu0 %v329, 104
      %v2091 = vpop.permute.xlu0 %2090
      %2092 = vrot.lane.b32.xlu0 %v330, 104
      %v2093 = vpop.permute.xlu0 %2092
      %2094 = vrot.lane.b32.xlu0 %v331, 104
      %v2095 = vpop.permute.xlu0 %2094
      %2096 = vrot.lane.b32.xlu0 %v332, 104
      %v2097 = vpop.permute.xlu0 %2096
      %2098 = vrot.lane.b32.xlu0 %v333, 104
      %v2099 = vpop.permute.xlu0 %2098
      %2100 = vrot.lane.b32.xlu0 %v334, 104
      %v2101 = vpop.permute.xlu0 %2100
      %2102 = vrot.lane.b32.xlu0 %v335, 104
      %v2103 = vpop.permute.xlu0 %2102
      %2104 = vrot.lane.b32.xlu0 %v336, 104
      %v2105 = vpop.permute.xlu0 %2104
      %v2115 = vsel %vm499, %v2082, 0
      %v2118 = vsel %vm499, %v2083, 0
      %v2121 = vsel %vm499, %v2084, 0
      %v2124 = vsel %vm499, %v2085, 0
      %v2127 = vsel %vm499, %v2086, 0
      %v2130 = vsel %vm499, %v2087, 0
      %v2133 = vsel %vm499, %v2088, 0
      %v2136 = vsel %vm499, %v2089, 0
      %2138 = vmatprep.subr.mxu0 0.0
      %2139 = vmatpush1.msra.mxu0 %v2091
      %2140 = vmatprep.subr.mxu0 0.0
      %2141 = vmatpush1.msra.mxu0 %v2093
      %2142 = vmatprep.subr.mxu0 0.0
      %2143 = vmatpush1.msra.mxu0 %v2095
      %2144 = vmatprep.subr.mxu0 0.0
      %2145 = vmatpush1.msra.mxu0 %v2097
      %2146 = vmatprep.subr.mxu0 0.0
      %2147 = vmatpush1.msra.mxu0 %v2099
      %2148 = vmatprep.subr.mxu0 0.0
      %2149 = vmatpush1.msra.mxu0 %v2101
      %2150 = vmatprep.subr.mxu0 0.0
      %2151 = vmatpush1.msra.mxu0 %v2103
      %2152 = vmatprep.subr.mxu0 0.0
      %2153 = vmatpush1.msra.mxu0 %v2105
      %2154 = vmatprep.subr.mxu0 0.0
      %2155 = vmatpush1.msra.mxu0 0.0
      %2156 = vmatprep.subr.mxu0 0.0
      %2157 = vmatpush1.msra.mxu0 0.0
      %2158 = vmatprep.subr.mxu0 0.0
      %2159 = vmatpush1.msra.mxu0 0.0
      %2160 = vmatprep.subr.mxu0 0.0
      %2161 = vmatpush1.msra.mxu0 0.0
      %2162 = vmatprep.subr.mxu0 0.0
      %2163 = vmatpush1.msra.mxu0 0.0
      %2164 = vmatprep.subr.mxu0 0.0
      %2165 = vmatpush1.msra.mxu0 0.0
      %2166 = vmatprep.subr.mxu0 0.0
      %2167 = vmatpush1.msra.mxu0 0.0
      %2168 = vmatprep.subr.mxu0 0.0
      %2169 = vmatpush1.msra.mxu0 0.0
      %2170 = vmatprep.subr.mxu0 0.0
      %2171 = vmatpush1.msra.mxu0 0.0
      %2172 = vmatprep.subr.mxu0 0.0
      %2173 = vmatpush1.msra.mxu0 0.0
      %2174 = vmatprep.subr.mxu0 0.0
      %2175 = vmatpush1.msra.mxu0 0.0
      %2176 = vmatprep.subr.mxu0 0.0
      %2177 = vmatpush1.msra.mxu0 0.0
      %2178 = vmatprep.subr.mxu0 0.0
      %2179 = vmatpush1.msra.mxu0 0.0
      %2180 = vmatprep.subr.mxu0 0.0
      %2181 = vmatpush1.msra.mxu0 0.0
      %2182 = vmatprep.subr.mxu0 0.0
      %2183 = vmatpush1.msra.mxu0 0.0
      %2184 = vmatprep.subr.mxu0 0.0
      %2185 = vmatpush1.msra.mxu0 0.0
      %2186 = vmatprep.subr.mxu0 0.0
      %2187 = vmatpush1.msra.mxu0 0.0
      %2188 = vmatprep.subr.mxu0 0.0
      %2189 = vmatpush1.msra.mxu0 0.0
      %2190 = vmatprep.subr.mxu0 0.0
      %2191 = vmatpush1.msra.mxu0 0.0
      %2192 = vmatprep.subr.mxu0 0.0
      %2193 = vmatpush1.msra.mxu0 0.0
      %2194 = vmatprep.subr.mxu0 0.0
      %2195 = vmatpush1.msra.mxu0 0.0
      %2196 = vmatprep.subr.mxu0 0.0
      %2197 = vmatpush1.msra.mxu0 0.0
      %2198 = vmatprep.subr.mxu0 0.0
      %2199 = vmatpush1.msra.mxu0 0.0
      %2200 = vmatprep.subr.mxu0 0.0
      %2201 = vmatpush1.msra.mxu0 0.0
      %2202 = vmatprep.mubr.f32.mxu0 0.0
      %2203 = vmatmul.mubr.f32.gmra.mrb[0].mxu0 %v2115
      %v2204 = vpop.f32.mrb[0].mxu0
      %v2205 = vadd.f32 0.0, %v2204
      %v2206 = vpop.f32.mrb[0].mxu0
      %2207 = vmatprep.mubr.f32.mxu0 0.0
      %2208 = vmatmul.mubr.f32.gmra.mrb[0].mxu0 %v2118
      %v2209 = vpop.f32.mrb[0].mxu0
      %v2210 = vadd.f32 0.0, %v2209
      %v2211 = vpop.f32.mrb[0].mxu0
      %2212 = vmatprep.mubr.f32.mxu0 0.0
      %2213 = vmatmul.mubr.f32.gmra.mrb[0].mxu0 %v2121
      %v2214 = vpop.f32.mrb[0].mxu0
      %v2215 = vadd.f32 0.0, %v2214
      %v2216 = vpop.f32.mrb[0].mxu0
      %2217 = vmatprep.mubr.f32.mxu0 0.0
      %2218 = vmatmul.mubr.f32.gmra.mrb[0].mxu0 %v2124
      %v2219 = vpop.f32.mrb[0].mxu0
      %v2220 = vadd.f32 0.0, %v2219
      %v2221 = vpop.f32.mrb[0].mxu0
      %2222 = vmatprep.mubr.f32.mxu0 0.0
      %2223 = vmatmul.mubr.f32.gmra.mrb[0].mxu0 %v2127
      %v2224 = vpop.f32.mrb[0].mxu0
      %v2225 = vadd.f32 0.0, %v2224
      %v2226 = vpop.f32.mrb[0].mxu0
      %2227 = vmatprep.mubr.f32.mxu0 0.0
      %2228 = vmatmul.mubr.f32.gmra.mrb[0].mxu0 %v2130
      %v2229 = vpop.f32.mrb[0].mxu0
      %v2230 = vadd.f32 0.0, %v2229
      %v2231 = vpop.f32.mrb[0].mxu0
      %2232 = vmatprep.mubr.f32.mxu0 0.0
      %2233 = vmatmul.mubr.f32.gmra.mrb[0].mxu0 %v2133
      %v2234 = vpop.f32.mrb[0].mxu0
      %v2235 = vadd.f32 0.0, %v2234
      %v2236 = vpop.f32.mrb[0].mxu0
      %2237 = vmatprep.mubr.f32.mxu0 0.0
      %2238 = vmatmul.mubr.f32.gmra.mrb[0].mxu0 %v2136
      %v2239 = vpop.f32.mrb[0].mxu0
      %v2240 = vadd.f32 0.0, %v2239
      %v2241 = vpop.f32.mrb[0].mxu0
      %2242 = vdwg.mxu0
      %v2243 = vpack.c.bf16 %v2210, %v2205
      %v2244 = vpack.c.bf16 %v2220, %v2215
      %v2245 = vpack.c.bf16 %v2230, %v2225
      %v2246 = vpack.c.bf16 %v2240, %v2235
      %v2247 = vld [vmem:[%s4 + $0xc] sm:$0xf]
      %v2249 = vsel %vm337, %v2243, 0
      %v2252 = vsel %vm337, %v2244, 0
      %v2255 = vsel %vm337, %v2245, 0
      %v2258 = vsel %vm337, %v2246, 0
      %v2261 = vsel %vm1165, %v2247, 0
      %2263 = vmatprep.subr.bf16.mxu0 0
      %2264 = vmatpush1.bf16.msra.mxu0 %v2261
      %2265 = vmatprep.subr.bf16.mxu0 0
      %2266 = vmatpush1.bf16.msra.mxu0 0
      %2267 = vmatprep.subr.bf16.mxu0 0
      %2268 = vmatpush1.bf16.msra.mxu0 0
      %2269 = vmatprep.subr.bf16.mxu0 0
      %2270 = vmatpush1.bf16.msra.mxu0 0
      %2271 = vmatprep.subr.bf16.mxu0 0
      %2272 = vmatpush1.bf16.msra.mxu0 0
      %2273 = vmatprep.subr.bf16.mxu0 0
      %2274 = vmatpush1.bf16.msra.mxu0 0
      %2275 = vmatprep.subr.bf16.mxu0 0
      %2276 = vmatpush1.bf16.msra.mxu0 0
      %2277 = vmatprep.subr.bf16.mxu0 0
      %2278 = vmatpush1.bf16.msra.mxu0 0
      %2279 = vmatprep.subr.bf16.mxu0 0
      %2280 = vmatpush1.bf16.msra.mxu0 0
      %2281 = vmatprep.subr.bf16.mxu0 0
      %2282 = vmatpush1.bf16.msra.mxu0 0
      %2283 = vmatprep.subr.bf16.mxu0 0
      %2284 = vmatpush1.bf16.msra.mxu0 0
      %2285 = vmatprep.subr.bf16.mxu0 0
      %2286 = vmatpush1.bf16.msra.mxu0 0
      %2287 = vmatprep.subr.bf16.mxu0 0
      %2288 = vmatpush1.bf16.msra.mxu0 0
      %2289 = vmatprep.subr.bf16.mxu0 0
      %2290 = vmatpush1.bf16.msra.mxu0 0
      %2291 = vmatprep.subr.bf16.mxu0 0
      %2292 = vmatpush1.bf16.msra.mxu0 0
      %2293 = vmatprep.subr.bf16.mxu0 0
      %2294 = vmatpush1.bf16.msra.mxu0 0
      %2295 = vmatprep.mubr.bf16.mxu0 0
      %2296 = vmatmul.mubr.bf16.gmra.mrb[0].mxu0 %v2249
      %v2297 = vpop.f32.mrb[0].mxu0
      %v2298 = vadd.f32 0.0, %v2297
      %v2299 = vpop.f32.mrb[0].mxu0
      %v2300 = vpop.f32.mrb[0].mxu0
      %v2301 = vadd.f32 0.0, %v2300
      %v2302 = vpop.f32.mrb[0].mxu0
      %2303 = vmatprep.mubr.bf16.mxu0 0
      %2304 = vmatmul.mubr.bf16.gmra.mrb[0].mxu0 %v2252
      %v2305 = vpop.f32.mrb[0].mxu0
      %v2306 = vadd.f32 0.0, %v2305
      %v2307 = vpop.f32.mrb[0].mxu0
      %v2308 = vpop.f32.mrb[0].mxu0
      %v2309 = vadd.f32 0.0, %v2308
      %v2310 = vpop.f32.mrb[0].mxu0
      %2311 = vmatprep.mubr.bf16.mxu0 0
      %2312 = vmatmul.mubr.bf16.gmra.mrb[0].mxu0 %v2255
      %v2313 = vpop.f32.mrb[0].mxu0
      %v2314 = vadd.f32 0.0, %v2313
      %v2315 = vpop.f32.mrb[0].mxu0
      %v2316 = vpop.f32.mrb[0].mxu0
      %v2317 = vadd.f32 0.0, %v2316
      %v2318 = vpop.f32.mrb[0].mxu0
      %2319 = vmatprep.mubr.bf16.mxu0 0
      %2320 = vmatmul.mubr.bf16.gmra.mrb[0].mxu0 %v2258
      %v2321 = vpop.f32.mrb[0].mxu0
      %v2322 = vadd.f32 0.0, %v2321
      %v2323 = vpop.f32.mrb[0].mxu0
      %v2324 = vpop.f32.mrb[0].mxu0
      %v2325 = vadd.f32 0.0, %v2324
      %v2326 = vpop.f32.mrb[0].mxu0
      %2327 = vdwg.mxu0
      %v2328 = vadd.f32 %v1817, %v2298
      %v2329 = vadd.f32 %v1818, %v2301
      %v2330 = vadd.f32 %v1819, %v2306
      %v2331 = vadd.f32 %v1820, %v2309
      %v2332 = vadd.f32 %v1821, %v2314
      %v2333 = vadd.f32 %v1822, %v2317
      %v2334 = vadd.f32 %v1823, %v2322
      %v2335 = vadd.f32 %v1824, %v2325
      %v2336 = vld [vmem:[%s306] sm:$0xff]
      %v2337 = vld [vmem:[%s306 + $0x8] sm:$0xff]
      %v2338 = vld [vmem:[%s306 + $0x10] sm:$0xff]
      %v2339 = vld [vmem:[%s306 + $0x18] sm:$0xff]
      %v2340 = vld [vmem:[%s306 + $0x20] sm:$0xff]
      %v2341 = vld [vmem:[%s306 + $0x28] sm:$0xff]
      %v2342 = vld [vmem:[%s306 + $0x30] sm:$0xff]
      %v2343 = vld [vmem:[%s306 + $0x38] sm:$0xff]
      %v2344 = vadd.f32 %v2336, %v2328
      %v2345 = vadd.f32 %v2337, %v2329
      %v2346 = vadd.f32 %v2338, %v2330
      %v2347 = vadd.f32 %v2339, %v2331
      %v2348 = vadd.f32 %v2340, %v2332
      %v2349 = vadd.f32 %v2341, %v2333
      %v2350 = vadd.f32 %v2342, %v2334
      %v2351 = vadd.f32 %v2343, %v2335
      %v2352 = vld [vmem:[%s5] sm:$0x1]
      %v2354 = vlaneseq
      %v2355 = vshrl.u32 %v2354, 7
      %v2356 = vsub.s32 0, %v2355
      %v2357 = vrot.slane %v2352, %v2356
      %v2359 = vadd.f32 %v2344, %v2357
      %v2360 = vadd.f32 %v2345, %v2357
      %v2361 = vadd.f32 %v2346, %v2357
      %v2362 = vadd.f32 %v2347, %v2357
      %v2363 = vadd.f32 %v2348, %v2357
      %v2364 = vadd.f32 %v2349, %v2357
      %v2365 = vadd.f32 %v2350, %v2357
      %v2366 = vadd.f32 %v2351, %v2357
      %vm2367 = vcmask 261120
      %2368 = vst.msk [vmem:[%s311] sm:$0xff] %vm2367, %v2359
      %2369 = vst.msk [vmem:[%s311 + $0x8] sm:$0xff] %vm2367, %v2360
      %2370 = vst.msk [vmem:[%s311 + $0x10] sm:$0xff] %vm2367, %v2361
      %2371 = vst.msk [vmem:[%s311 + $0x18] sm:$0xff] %vm2367, %v2362
      %2372 = vst.msk [vmem:[%s311 + $0x20] sm:$0xff] %vm2367, %v2363
      %2373 = vst.msk [vmem:[%s311 + $0x28] sm:$0xff] %vm2367, %v2364
      %2374 = vst.msk [vmem:[%s311 + $0x30] sm:$0xff] %vm2367, %v2365
      %2375 = vst.msk [vmem:[%s311 + $0x38] sm:$0xff] %vm2367, %v2366
      %p2376 = scmp.lt.s32.totalorder %s17, 1
      %s2377 = scalar_select %p2376, %s17, 1
      %s2378 = smul.addr %s2377, 8
      %s2379 = smul.addr %s2378, 8
      %s2380 = scalar_lea.vmem %s6, %s2379
      // Predicated region
      $region45: #{resvit_generator.75} parent=43 // pred_check
        %p2381 = pneg %p181
      $region46: #{resvit_generator.75} parent=43 // pred_check_branch
        %2383 = sbr.rel (%p2381) target = $region48
      $region47: #{resvit_generator.75} parent=43 // pred_region
        _
      $region48: #{resvit_generator.75} parent=43 // pred_fallthru
        _
    $region44: #{resvit_generator.75} parent=5 // pred_fallthru
      _
    %p2384 = scmp.le.s32.totalorder 2, %s12
    // Predicated region
    $region49: #{resvit_generator.75} parent=5 // pred_check
      %p2385 = pneg %p2384
    $region50: #{resvit_generator.75} parent=5 // pred_check_branch
      %2387 = sbr.rel (%p2385) target = $region52
    $region51: #{resvit_generator.75} parent=5 // pred_region
      %s2388 = ssub.s32 %s12, 2
      // Predicated region
      $region53: #{resvit_generator.75} parent=51 // pred_check
        %p2389 = pneg %p187
      $region54: #{resvit_generator.75} parent=51 // pred_check_branch
        %2391 = sbr.rel (%p2389) target = $region56
      $region55: #{resvit_generator.75} parent=51 // pred_region
        %p2392 = scmp.lt.s32.totalorder %s18, 1
        %s2393 = scalar_select %p2392, %s18, 1
        %s2394 = smul.addr %s2393, 8
        %s2395 = smul.addr %s2394, 8
        %s2396 = scalar_lea.vmem %s6, %s2395
      $region56: #{resvit_generator.75} parent=51 // pred_fallthru
        _
    $region52: #{resvit_generator.75} parent=5 // pred_fallthru
      _
  $region6: #{resvit_generator.75} parent=0 // loop_footer
    %s16 = sadd.s32 1, %s12
  $region7: #{resvit_generator.75} parent=0 // loop_footer_branch
    %11 = sbr.rel target = $region3
  $region8: #{resvit_generator.75} parent=0 // loop_exit
    _

// kernel: resvit_generator.81
$region0: #{resvit_generator.81}
  #allocation0 [shape = 'u32[]', space=smem, size = 0x4, offset = 0x4, fixed_abs, tag = 'smem constant byte address 0x4 - core index']
  #allocation1 [shape = 'u32[144,128]{1,0:T(1,128)}', space=vmem, size = 0x12000, scoped, tag = 'internal scratch']
  %s0 = inlined_call_operand.vmem [shape: bf16[16,288], index: 0, kind: input, shape index: {}]
  %s1 = inlined_call_operand.vmem [shape: bf16[288,128], index: 1, kind: input, shape index: {}]
  %s2 = inlined_call_operand.vmem [shape: f32[16,128], index: 2, kind: output, shape index: {}]
  %s3 = sld [smem:[#allocation0]]
  $region18: #{resvit_generator.81} parent=0
    _
  %s5 = ssub.s32 1, %s3
  %s6 = scalar_select 0, %s5, %s3
  // Predicated region
  $region2: #{resvit_generator.81} parent=0 // pred_check
    _
  $region3: #{resvit_generator.81} parent=0 // pred_check_branch
    %8 = sbr.rel (0) target = $region5
  $region4: #{resvit_generator.81} parent=0 // pred_region
    _
  $region5: #{resvit_generator.81} parent=0 // pred_fallthru
    _
  // Predicated region
  $region6: #{resvit_generator.81} parent=0 // pred_check
    _
  $region7: #{resvit_generator.81} parent=0 // pred_check_branch
    %10 = sbr.rel (0) target = $region9
  $region8: #{resvit_generator.81} parent=0 // pred_region
    _
  $region9: #{resvit_generator.81} parent=0 // pred_fallthru
    _
  %v12 = vld [vmem:[%s0] sm:$0xff]
  %v13 = vld [vmem:[%s0 + $0x8] sm:$0xf]
  %v14 = vld [vmem:[%s0 + $0xc] sm:$0xff]
  %v15 = vld [vmem:[%s0 + $0x14] sm:$0xf]
  %v16 = vld [vmem:[%s1] sm:$0xf]
  %v17 = vld [vmem:[%s1 + $0x4] sm:$0xf]
  %v18 = vld [vmem:[%s1 + $0x8] sm:$0xf]
  %v19 = vld [vmem:[%s1 + $0xc] sm:$0xf]
  %v20 = vld [vmem:[%s1 + $0x10] sm:$0xf]
  %v21 = vld [vmem:[%s1 + $0x14] sm:$0xf]
  %v22 = vld [vmem:[%s1 + $0x18] sm:$0xf]
  %v23 = vld [vmem:[%s1 + $0x1c] sm:$0xf]
  %v24 = vld [vmem:[%s1 + $0x20] sm:$0xf]
  %v25 = vld [vmem:[%s1 + $0x24] sm:$0xf]
  %v26 = vld [vmem:[%s1 + $0x28] sm:$0xf]
  %v27 = vld [vmem:[%s1 + $0x2c] sm:$0xf]
  %v28 = vld [vmem:[%s1 + $0x30] sm:$0xf]
  %v29 = vld [vmem:[%s1 + $0x34] sm:$0xf]
  %v30 = vld [vmem:[%s1 + $0x38] sm:$0xf]
  %v31 = vld [vmem:[%s1 + $0x3c] sm:$0xf]
  %v32 = vld [vmem:[%s1 + $0x40] sm:$0xf]
  %v33 = vld [vmem:[%s1 + $0x44] sm:$0xf]
  %v34 = vld [vmem:[%s1 + $0x48] sm:$0xf]
  %v35 = vld [vmem:[%s1 + $0x4c] sm:$0xf]
  %v36 = vld [vmem:[%s1 + $0x50] sm:$0xf]
  %v37 = vld [vmem:[%s1 + $0x54] sm:$0xf]
  %v38 = vld [vmem:[%s1 + $0x58] sm:$0xf]
  %v39 = vld [vmem:[%s1 + $0x5c] sm:$0xf]
  %v40 = vld [vmem:[%s1 + $0x60] sm:$0xf]
  %v41 = vld [vmem:[%s1 + $0x64] sm:$0xf]
  %v42 = vld [vmem:[%s1 + $0x68] sm:$0xf]
  %v43 = vld [vmem:[%s1 + $0x6c] sm:$0xf]
  %v44 = vld [vmem:[%s1 + $0x70] sm:$0xf]
  %v45 = vld [vmem:[%s1 + $0x74] sm:$0xf]
  %v46 = vld [vmem:[%s1 + $0x78] sm:$0xf]
  %v47 = vld [vmem:[%s1 + $0x7c] sm:$0xf]
  %v48 = vld [vmem:[%s1 + $0x80] sm:$0xf]
  %v49 = vld [vmem:[%s1 + $0x84] sm:$0xf]
  %v50 = vld [vmem:[%s1 + $0x88] sm:$0xf]
  %v51 = vld [vmem:[%s1 + $0x8c] sm:$0xf]
  %v56 = vunpack.c.l.b16 %v12
  %v57 = vunpack.c.h.b16 %v12
  %v58 = vunpack.c.l.b16 %v13
  %v59 = vunpack.c.l.b16 %v14
  %v60 = vunpack.c.h.b16 %v14
  %v61 = vunpack.c.l.b16 %v15
  %v62 = vpack.c.b16 %v59, %v56
  %v63 = vpack.c.b16 %v60, %v57
  %v64 = vpack.c.b16 %v61, %v58
  %v103 = vunpack.c.l.b16 %v16
  %v104 = vunpack.c.l.b16 %v17
  %v105 = vunpack.c.l.b16 %v18
  %v106 = vunpack.c.l.b16 %v19
  %v107 = vunpack.c.l.b16 %v20
  %v108 = vunpack.c.l.b16 %v21
  %v109 = vunpack.c.l.b16 %v22
  %v110 = vunpack.c.l.b16 %v23
  %v111 = vunpack.c.l.b16 %v24
  %v112 = vunpack.c.l.b16 %v25
  %v113 = vunpack.c.l.b16 %v26
  %v114 = vunpack.c.l.b16 %v27
  %v115 = vunpack.c.l.b16 %v28
  %v116 = vunpack.c.l.b16 %v29
  %v117 = vunpack.c.l.b16 %v30
  %v118 = vunpack.c.l.b16 %v31
  %v119 = vunpack.c.l.b16 %v32
  %v120 = vunpack.c.l.b16 %v33
  %v121 = vunpack.c.l.b16 %v34
  %v122 = vunpack.c.l.b16 %v35
  %v123 = vunpack.c.l.b16 %v36
  %v124 = vunpack.c.l.b16 %v37
  %v125 = vunpack.c.l.b16 %v38
  %v126 = vunpack.c.l.b16 %v39
  %v127 = vunpack.c.l.b16 %v40
  %v128 = vunpack.c.l.b16 %v41
  %v129 = vunpack.c.l.b16 %v42
  %v130 = vunpack.c.l.b16 %v43
  %v131 = vunpack.c.l.b16 %v44
  %v132 = vunpack.c.l.b16 %v45
  %v133 = vunpack.c.l.b16 %v46
  %v134 = vunpack.c.l.b16 %v47
  %v135 = vunpack.c.l.b16 %v48
  %v136 = vunpack.c.l.b16 %v49
  %v137 = vunpack.c.l.b16 %v50
  %v138 = vunpack.c.l.b16 %v51
  %v139 = vpack.c.b16 %v104, %v103
  %v140 = vpack.c.b16 %v106, %v105
  %v141 = vpack.c.b16 %v108, %v107
  %v142 = vpack.c.b16 %v110, %v109
  %v143 = vpack.c.b16 %v112, %v111
  %v144 = vpack.c.b16 %v114, %v113
  %v145 = vpack.c.b16 %v116, %v115
  %v146 = vpack.c.b16 %v118, %v117
  %v147 = vpack.c.b16 %v120, %v119
  %v148 = vpack.c.b16 %v122, %v121
  %v149 = vpack.c.b16 %v124, %v123
  %v150 = vpack.c.b16 %v126, %v125
  %v151 = vpack.c.b16 %v128, %v127
  %v152 = vpack.c.b16 %v130, %v129
  %v153 = vpack.c.b16 %v132, %v131
  %v154 = vpack.c.b16 %v134, %v133
  %v155 = vpack.c.b16 %v136, %v135
  %v156 = vpack.c.b16 %v138, %v137
  %vm175 = vcmask 261120
  %v177 = vsel %vm175, %v64, 0
  %179 = vmatprep.subr.bf16.mxu0 0
  %180 = vmatpush1.bf16.msra.mxu0 %v139
  %181 = vmatprep.subr.bf16.mxu0 0
  %182 = vmatpush1.bf16.msra.mxu0 %v140
  %183 = vmatprep.subr.bf16.mxu0 0
  %184 = vmatpush1.bf16.msra.mxu0 %v141
  %185 = vmatprep.subr.bf16.mxu0 0
  %186 = vmatpush1.bf16.msra.mxu0 %v142
  %187 = vmatprep.subr.bf16.mxu0 0
  %188 = vmatpush1.bf16.msra.mxu0 %v143
  %189 = vmatprep.subr.bf16.mxu0 0
  %190 = vmatpush1.bf16.msra.mxu0 %v144
  %191 = vmatprep.subr.bf16.mxu0 0
  %192 = vmatpush1.bf16.msra.mxu0 %v145
  %193 = vmatprep.subr.bf16.mxu0 0
  %194 = vmatpush1.bf16.msra.mxu0 %v146
  %195 = vmatprep.subr.bf16.mxu0 0
  %196 = vmatpush1.bf16.msra.mxu0 %v147
  %197 = vmatprep.subr.bf16.mxu0 0
  %198 = vmatpush1.bf16.msra.mxu0 %v148
  %199 = vmatprep.subr.bf16.mxu0 0
  %200 = vmatpush1.bf16.msra.mxu0 %v149
  %201 = vmatprep.subr.bf16.mxu0 0
  %202 = vmatpush1.bf16.msra.mxu0 %v150
  %203 = vmatprep.subr.bf16.mxu0 0
  %204 = vmatpush1.bf16.msra.mxu0 %v151
  %205 = vmatprep.subr.bf16.mxu0 0
  %206 = vmatpush1.bf16.msra.mxu0 %v152
  %207 = vmatprep.subr.bf16.mxu0 0
  %208 = vmatpush1.bf16.msra.mxu0 %v153
  %209 = vmatprep.subr.bf16.mxu0 0
  %210 = vmatpush1.bf16.msra.mxu0 %v154
  %211 = vmatprep.mubr.bf16.mxu0 %v63
  %212 = vmatmul.mubr.bf16.gmra.mrb[0].mxu0 %v62
  %v213 = vpop.f32.mrb[0].mxu0
  %v214 = vadd.f32 0.0, %v213
  %v215 = vpop.f32.mrb[0].mxu0
  %v216 = vpop.f32.mrb[0].mxu0
  %v217 = vadd.f32 0.0, %v216
  %v218 = vpop.f32.mrb[0].mxu0
  %219 = vdwg.mxu0
  %220 = vmatprep.subr.bf16.mxu0 0
  %221 = vmatpush1.bf16.msra.mxu0 %v155
  %222 = vmatprep.subr.bf16.mxu0 0
  %223 = vmatpush1.bf16.msra.mxu0 %v156
  %224 = vmatprep.subr.bf16.mxu0 0
  %225 = vmatpush1.bf16.msra.mxu0 0
  %226 = vmatprep.subr.bf16.mxu0 0
  %227 = vmatpush1.bf16.msra.mxu0 0
  %228 = vmatprep.subr.bf16.mxu0 0
  %229 = vmatpush1.bf16.msra.mxu0 0
  %230 = vmatprep.subr.bf16.mxu0 0
  %231 = vmatpush1.bf16.msra.mxu0 0
  %232 = vmatprep.subr.bf16.mxu0 0
  %233 = vmatpush1.bf16.msra.mxu0 0
  %234 = vmatprep.subr.bf16.mxu0 0
  %235 = vmatpush1.bf16.msra.mxu0 0
  %236 = vmatprep.subr.bf16.mxu0 0
  %237 = vmatpush1.bf16.msra.mxu0 0
  %238 = vmatprep.subr.bf16.mxu0 0
  %239 = vmatpush1.bf16.msra.mxu0 0
  %240 = vmatprep.subr.bf16.mxu0 0
  %241 = vmatpush1.bf16.msra.mxu0 0
  %242 = vmatprep.subr.bf16.mxu0 0
  %243 = vmatpush1.bf16.msra.mxu0 0
  %244 = vmatprep.subr.bf16.mxu0 0
  %245 = vmatpush1.bf16.msra.mxu0 0
  %246 = vmatprep.subr.bf16.mxu0 0
  %247 = vmatpush1.bf16.msra.mxu0 0
  %248 = vmatprep.subr.bf16.mxu0 0
  %249 = vmatpush1.bf16.msra.mxu0 0
  %250 = vmatprep.subr.bf16.mxu0 0
  %251 = vmatpush1.bf16.msra.mxu0 0
  %252 = vmatprep.mubr.bf16.mxu0 0
  %253 = vmatmul.mubr.bf16.gmra.mrb[0].mxu0 %v177
  %v254 = vpop.f32.mrb[0].mxu0
  %v255 = vadd.f32 %v214, %v254
  %v256 = vpop.f32.mrb[0].mxu0
  %v257 = vpop.f32.mrb[0].mxu0
  %v258 = vadd.f32 %v217, %v257
  %v259 = vpop.f32.mrb[0].mxu0
  %260 = vdwg.mxu0
  %261 = vst [vmem:[%s2] sm:$0xff] %v255
  %262 = vst [vmem:[%s2 + $0x8] sm:$0xff] %v258
  // Predicated region
  $region10: #{resvit_generator.81} parent=0 // pred_check
    _
  $region11: #{resvit_generator.81} parent=0 // pred_check_branch
    %264 = sbr.rel (0) target = $region13
  $region12: #{resvit_generator.81} parent=0 // pred_region
    _
  $region13: #{resvit_generator.81} parent=0 // pred_fallthru
    _
  // Predicated region
  $region14: #{resvit_generator.81} parent=0 // pred_check
    _
  $region15: #{resvit_generator.81} parent=0 // pred_check_branch
    %266 = sbr.rel (0) target = $region17
  $region16: #{resvit_generator.81} parent=0 // pred_region
    _
  $region17: #{resvit_generator.81} parent=0 // pred_fallthru
    _

// kernel: resvit_generator.84
$region0: #{resvit_generator.84}
  #allocation0 [shape = 'u32[]', space=smem, size = 0x4, offset = 0x4, fixed_abs, tag = 'smem constant byte address 0x4 - core index']
  #allocation1 [shape = 'u32[144,128]{1,0:T(1,128)}', space=vmem, size = 0x12000, scoped, tag = 'internal scratch']
  %s0 = inlined_call_operand.vmem [shape: bf16[16,32], index: 0, kind: input, shape index: {}]
  %s1 = inlined_call_operand.vmem [shape: bf16[32,128], index: 1, kind: input, shape index: {}]
  %s2 = inlined_call_operand.vmem [shape: f32[16,1], index: 2, kind: input, shape index: {}]
  %s3 = inlined_call_operand.vmem [shape: f32[16,128], index: 3, kind: output, shape index: {}]
  %s4 = sld [smem:[#allocation0]]
  $region22: #{resvit_generator.84} parent=0
    _
  %s6 = ssub.s32 1, %s4
  %s7 = scalar_select 0, %s6, %s4
  // Predicated region
  $region2: #{resvit_generator.84} parent=0 // pred_check
    _
  $region3: #{resvit_generator.84} parent=0 // pred_check_branch
    %9 = sbr.rel (0) target = $region5
  $region4: #{resvit_generator.84} parent=0 // pred_region
    _
  $region5: #{resvit_generator.84} parent=0 // pred_fallthru
    _
  // Predicated region
  $region6: #{resvit_generator.84} parent=0 // pred_check
    _
  $region7: #{resvit_generator.84} parent=0 // pred_check_branch
    %11 = sbr.rel (0) target = $region9
  $region8: #{resvit_generator.84} parent=0 // pred_region
    _
  $region9: #{resvit_generator.84} parent=0 // pred_fallthru
    _
  // Predicated region
  $region10: #{resvit_generator.84} parent=0 // pred_check
    _
  $region11: #{resvit_generator.84} parent=0 // pred_check_branch
    %13 = sbr.rel (0) target = $region13
  $region12: #{resvit_generator.84} parent=0 // pred_region
    _
  $region13: #{resvit_generator.84} parent=0 // pred_fallthru
    _
  %v15 = vld [vmem:[%s0] sm:$0xf]
  %v16 = vld [vmem:[%s0 + $0x4] sm:$0xf]
  %v17 = vld [vmem:[%s1] sm:$0xf]
  %v18 = vld [vmem:[%s1 + $0x4] sm:$0xf]
  %v19 = vld [vmem:[%s1 + $0x8] sm:$0xf]
  %v20 = vld [vmem:[%s1 + $0xc] sm:$0xf]
  %v21 = vld [vmem:[%s2] sm:$0xff]
  %v22 = vld [vmem:[%s2 + $0x8] sm:$0xff]
  %24 = vset.pattern.permute.xlu0 0
  %25 = vperm.xlu0 %24, %v21
  %v26 = vpop.permute.xlu0 %25
  %29 = vset.pattern.permute.xlu0 0
  %30 = vperm.xlu0 %29, %v22
  %v31 = vpop.permute.xlu0 %30
  %v35 = vunpack.c.l.b16 %v15
  %v36 = vunpack.c.l.b16 %v16
  %v37 = vpack.c.b16 %v36, %v35
  %v42 = vunpack.c.l.b16 %v17
  %v43 = vunpack.c.l.b16 %v18
  %v44 = vunpack.c.l.b16 %v19
  %v45 = vunpack.c.l.b16 %v20
  %v46 = vpack.c.b16 %v43, %v42
  %v47 = vpack.c.b16 %v45, %v44
  %vm50 = vcmask 261120
  %v52 = vsel %vm50, %v37, 0
  %54 = vmatprep.subr.bf16.mxu0 0
  %55 = vmatpush1.bf16.msra.mxu0 %v46
  %56 = vmatprep.subr.bf16.mxu0 0
  %57 = vmatpush1.bf16.msra.mxu0 %v47
  %58 = vmatprep.subr.bf16.mxu0 0
  %59 = vmatpush1.bf16.msra.mxu0 0
  %60 = vmatprep.subr.bf16.mxu0 0
  %61 = vmatpush1.bf16.msra.mxu0 0
  %62 = vmatprep.subr.bf16.mxu0 0
  %63 = vmatpush1.bf16.msra.mxu0 0
  %64 = vmatprep.subr.bf16.mxu0 0
  %65 = vmatpush1.bf16.msra.mxu0 0
  %66 = vmatprep.subr.bf16.mxu0 0
  %67 = vmatpush1.bf16.msra.mxu0 0
  %68 = vmatprep.subr.bf16.mxu0 0
  %69 = vmatpush1.bf16.msra.mxu0 0
  %70 = vmatprep.subr.bf16.mxu0 0
  %71 = vmatpush1.bf16.msra.mxu0 0
  %72 = vmatprep.subr.bf16.mxu0 0
  %73 = vmatpush1.bf16.msra.mxu0 0
  %74 = vmatprep.subr.bf16.mxu0 0
  %75 = vmatpush1.bf16.msra.mxu0 0
  %76 = vmatprep.subr.bf16.mxu0 0
  %77 = vmatpush1.bf16.msra.mxu0 0
  %78 = vmatprep.subr.bf16.mxu0 0
  %79 = vmatpush1.bf16.msra.mxu0 0
  %80 = vmatprep.subr.bf16.mxu0 0
  %81 = vmatpush1.bf16.msra.mxu0 0
  %82 = vmatprep.subr.bf16.mxu0 0
  %83 = vmatpush1.bf16.msra.mxu0 0
  %84 = vmatprep.subr.bf16.mxu0 0
  %85 = vmatpush1.bf16.msra.mxu0 0
  %86 = vmatprep.mubr.bf16.mxu0 0
  %87 = vmatmul.mubr.bf16.gmra.mrb[0].mxu0 %v52
  %v88 = vpop.f32.mrb[0].mxu0
  %v89 = vadd.f32 %v26, %v88
  %v90 = vpop.f32.mrb[0].mxu0
  %v91 = vpop.f32.mrb[0].mxu0
  %v92 = vadd.f32 %v31, %v91
  %v93 = vpop.f32.mrb[0].mxu0
  %94 = vdwg.mxu0
  %95 = vst [vmem:[%s3] sm:$0xff] %v89
  %96 = vst [vmem:[%s3 + $0x8] sm:$0xff] %v92
  // Predicated region
  $region14: #{resvit_generator.84} parent=0 // pred_check
    _
  $region15: #{resvit_generator.84} parent=0 // pred_check_branch
    %98 = sbr.rel (0) target = $region17
  $region16: #{resvit_generator.84} parent=0 // pred_region
    _
  $region17: #{resvit_generator.84} parent=0 // pred_fallthru
    _
  // Predicated region
  $region18: #{resvit_generator.84} parent=0 // pred_check
    _
  $region19: #{resvit_generator.84} parent=0 // pred_check_branch
    %100 = sbr.rel (0) target = $region21
  $region20: #{resvit_generator.84} parent=0 // pred_region
    _
  $region21: #{resvit_generator.84} parent=0 // pred_fallthru
    _

// kernel: resvit_generator.85
$region0: #{resvit_generator.85}
  #allocation0 [shape = 'u32[]', space=smem, size = 0x4, offset = 0x4, fixed_abs, tag = 'smem constant byte address 0x4 - core index']
  #allocation1 [shape = 'u32[144,128]{1,0:T(1,128)}', space=vmem, size = 0x12000, scoped, tag = 'internal scratch']
  %s0 = inlined_call_operand.vmem [shape: bf16[16,144], index: 0, kind: input, shape index: {}]
  %s1 = inlined_call_operand.vmem [shape: bf16[144,128], index: 1, kind: input, shape index: {}]
  %s2 = inlined_call_operand.vmem [shape: f32[16,128], index: 2, kind: output, shape index: {}]
  %s3 = sld [smem:[#allocation0]]
  $region18: #{resvit_generator.85} parent=0
    _
  %s5 = ssub.s32 1, %s3
  %s6 = scalar_select 0, %s5, %s3
  // Predicated region
  $region2: #{resvit_generator.85} parent=0 // pred_check
    _
  $region3: #{resvit_generator.85} parent=0 // pred_check_branch
    %8 = sbr.rel (0) target = $region5
  $region4: #{resvit_generator.85} parent=0 // pred_region
    _
  $region5: #{resvit_generator.85} parent=0 // pred_fallthru
    _
  // Predicated region
  $region6: #{resvit_generator.85} parent=0 // pred_check
    _
  $region7: #{resvit_generator.85} parent=0 // pred_check_branch
    %10 = sbr.rel (0) target = $region9
  $region8: #{resvit_generator.85} parent=0 // pred_region
    _
  $region9: #{resvit_generator.85} parent=0 // pred_fallthru
    _
  %v12 = vld [vmem:[%s0] sm:$0xff]
  %v13 = vld [vmem:[%s0 + $0x8] sm:$0xff]
  %v14 = vld [vmem:[%s1] sm:$0xf]
  %v15 = vld [vmem:[%s1 + $0x4] sm:$0xf]
  %v16 = vld [vmem:[%s1 + $0x8] sm:$0xf]
  %v17 = vld [vmem:[%s1 + $0xc] sm:$0xf]
  %v18 = vld [vmem:[%s1 + $0x10] sm:$0xf]
  %v19 = vld [vmem:[%s1 + $0x14] sm:$0xf]
  %v20 = vld [vmem:[%s1 + $0x18] sm:$0xf]
  %v21 = vld [vmem:[%s1 + $0x1c] sm:$0xf]
  %v22 = vld [vmem:[%s1 + $0x20] sm:$0xf]
  %v23 = vld [vmem:[%s1 + $0x24] sm:$0xf]
  %v24 = vld [vmem:[%s1 + $0x28] sm:$0xf]
  %v25 = vld [vmem:[%s1 + $0x2c] sm:$0xf]
  %v26 = vld [vmem:[%s1 + $0x30] sm:$0xf]
  %v27 = vld [vmem:[%s1 + $0x34] sm:$0xf]
  %v28 = vld [vmem:[%s1 + $0x38] sm:$0xf]
  %v29 = vld [vmem:[%s1 + $0x3c] sm:$0xf]
  %v30 = vld [vmem:[%s1 + $0x40] sm:$0xf]
  %v31 = vld [vmem:[%s1 + $0x44] sm:$0xf]
  %v34 = vunpack.c.l.b16 %v12
  %v35 = vunpack.c.h.b16 %v12
  %v36 = vunpack.c.l.b16 %v13
  %v37 = vunpack.c.h.b16 %v13
  %v38 = vpack.c.b16 %v36, %v34
  %v39 = vpack.c.b16 %v37, %v35
  %v59 = vunpack.c.l.b16 %v14
  %v60 = vunpack.c.l.b16 %v15
  %v61 = vunpack.c.l.b16 %v16
  %v62 = vunpack.c.l.b16 %v17
  %v63 = vunpack.c.l.b16 %v18
  %v64 = vunpack.c.l.b16 %v19
  %v65 = vunpack.c.l.b16 %v20
  %v66 = vunpack.c.l.b16 %v21
  %v67 = vunpack.c.l.b16 %v22
  %v68 = vunpack.c.l.b16 %v23
  %v69 = vunpack.c.l.b16 %v24
  %v70 = vunpack.c.l.b16 %v25
  %v71 = vunpack.c.l.b16 %v26
  %v72 = vunpack.c.l.b16 %v27
  %v73 = vunpack.c.l.b16 %v28
  %v74 = vunpack.c.l.b16 %v29
  %v75 = vunpack.c.l.b16 %v30
  %v76 = vunpack.c.l.b16 %v31
  %v77 = vpack.c.b16 %v60, %v59
  %v78 = vpack.c.b16 %v62, %v61
  %v79 = vpack.c.b16 %v64, %v63
  %v80 = vpack.c.b16 %v66, %v65
  %v81 = vpack.c.b16 %v68, %v67
  %v82 = vpack.c.b16 %v70, %v69
  %v83 = vpack.c.b16 %v72, %v71
  %v84 = vpack.c.b16 %v74, %v73
  %v85 = vpack.c.b16 %v76, %v75
  %vm95 = vcmask 130048
  %v97 = vsel %vm95, %v39, 0
  %99 = vmatprep.subr.bf16.mxu0 0
  %100 = vmatpush1.bf16.msra.mxu0 %v77
  %101 = vmatprep.subr.bf16.mxu0 0
  %102 = vmatpush1.bf16.msra.mxu0 %v78
  %103 = vmatprep.subr.bf16.mxu0 0
  %104 = vmatpush1.bf16.msra.mxu0 %v79
  %105 = vmatprep.subr.bf16.mxu0 0
  %106 = vmatpush1.bf16.msra.mxu0 %v80
  %107 = vmatprep.subr.bf16.mxu0 0
  %108 = vmatpush1.bf16.msra.mxu0 %v81
  %109 = vmatprep.subr.bf16.mxu0 0
  %110 = vmatpush1.bf16.msra.mxu0 %v82
  %111 = vmatprep.subr.bf16.mxu0 0
  %112 = vmatpush1.bf16.msra.mxu0 %v83
  %113 = vmatprep.subr.bf16.mxu0 0
  %114 = vmatpush1.bf16.msra.mxu0 %v84
  %115 = vmatprep.subr.bf16.mxu0 0
  %116 = vmatpush1.bf16.msra.mxu0 %v85
  %117 = vmatprep.subr.bf16.mxu0 0
  %118 = vmatpush1.bf16.msra.mxu0 0
  %119 = vmatprep.subr.bf16.mxu0 0
  %120 = vmatpush1.bf16.msra.mxu0 0
  %121 = vmatprep.subr.bf16.mxu0 0
  %122 = vmatpush1.bf16.msra.mxu0 0
  %123 = vmatprep.subr.bf16.mxu0 0
  %124 = vmatpush1.bf16.msra.mxu0 0
  %125 = vmatprep.subr.bf16.mxu0 0
  %126 = vmatpush1.bf16.msra.mxu0 0
  %127 = vmatprep.subr.bf16.mxu0 0
  %128 = vmatpush1.bf16.msra.mxu0 0
  %129 = vmatprep.subr.bf16.mxu0 0
  %130 = vmatpush1.bf16.msra.mxu0 0
  %131 = vmatprep.mubr.bf16.mxu0 %v97
  %132 = vmatmul.mubr.bf16.gmra.mrb[0].mxu0 %v38
  %v133 = vpop.f32.mrb[0].mxu0
  %v134 = vadd.f32 0.0, %v133
  %v135 = vpop.f32.mrb[0].mxu0
  %v136 = vpop.f32.mrb[0].mxu0
  %v137 = vadd.f32 0.0, %v136
  %v138 = vpop.f32.mrb[0].mxu0
  %139 = vdwg.mxu0
  %140 = vst [vmem:[%s2] sm:$0xff] %v134
  %141 = vst [vmem:[%s2 + $0x8] sm:$0xff] %v137
  // Predicated region
  $region10: #{resvit_generator.85} parent=0 // pred_check
    _
  $region11: #{resvit_generator.85} parent=0 // pred_check_branch
    %143 = sbr.rel (0) target = $region13
  $region12: #{resvit_generator.85} parent=0 // pred_region
    _
  $region13: #{resvit_generator.85} parent=0 // pred_fallthru
    _
  // Predicated region
  $region14: #{resvit_generator.85} parent=0 // pred_check
    _
  $region15: #{resvit_generator.85} parent=0 // pred_check_branch
    %145 = sbr.rel (0) target = $region17
  $region16: #{resvit_generator.85} parent=0 // pred_region
    _
  $region17: #{resvit_generator.85} parent=0 // pred_fallthru
    _

// kernel: resvit_generator.90
$region0: #{resvit_generator.90}
  #allocation0 [shape = 'u32[]', space=smem, size = 0x4, offset = 0x4, fixed_abs, tag = 'smem constant byte address 0x4 - core index']
  #allocation1 [shape = 'u32[144,128]{1,0:T(1,128)}', space=vmem, size = 0x12000, scoped, tag = 'internal scratch']
  %s0 = inlined_call_operand.vmem [shape: f32[16,128], index: 0, kind: input, shape index: {}]
  %s1 = inlined_call_operand.vmem [shape: f32[16,1], index: 1, kind: input, shape index: {}]
  %s2 = inlined_call_operand.vmem [shape: f32[16,1], index: 2, kind: input, shape index: {}]
  %s3 = inlined_call_operand.vmem [shape: f32[16,1], index: 3, kind: input, shape index: {}]
  %s4 = inlined_call_operand.vmem [shape: f32[16,1], index: 4, kind: input, shape index: {}]
  %s5 = inlined_call_operand.vmem [shape: f32[16,128], index: 5, kind: output, shape index: {}]
  %s6 = sld [smem:[#allocation0]]
  $region30: #{resvit_generator.90} parent=0
    _
  %s8 = ssub.s32 1, %s6
  %s9 = scalar_select 0, %s8, %s6
  // Predicated region
  $region2: #{resvit_generator.90} parent=0 // pred_check
    _
  $region3: #{resvit_generator.90} parent=0 // pred_check_branch
    %11 = sbr.rel (0) target = $region5
  $region4: #{resvit_generator.90} parent=0 // pred_region
    _
  $region5: #{resvit_generator.90} parent=0 // pred_fallthru
    _
  // Predicated region
  $region6: #{resvit_generator.90} parent=0 // pred_check
    _
  $region7: #{resvit_generator.90} parent=0 // pred_check_branch
    %13 = sbr.rel (0) target = $region9
  $region8: #{resvit_generator.90} parent=0 // pred_region
    _
  $region9: #{resvit_generator.90} parent=0 // pred_fallthru
    _
  // Predicated region
  $region10: #{resvit_generator.90} parent=0 // pred_check
    _
  $region11: #{resvit_generator.90} parent=0 // pred_check_branch
    %15 = sbr.rel (0) target = $region13
  $region12: #{resvit_generator.90} parent=0 // pred_region
    _
  $region13: #{resvit_generator.90} parent=0 // pred_fallthru
    _
  // Predicated region
  $region14: #{resvit_generator.90} parent=0 // pred_check
    _
  $region15: #{resvit_generator.90} parent=0 // pred_check_branch
    %17 = sbr.rel (0) target = $region17
  $region16: #{resvit_generator.90} parent=0 // pred_region
    _
  $region17: #{resvit_generator.90} parent=0 // pred_fallthru
    _
  // Predicated region
  $region18: #{resvit_generator.90} parent=0 // pred_check
    _
  $region19: #{resvit_generator.90} parent=0 // pred_check_branch
    %19 = sbr.rel (0) target = $region21
  $region20: #{resvit_generator.90} parent=0 // pred_region
    _
  $region21: #{resvit_generator.90} parent=0 // pred_fallthru
    _
  %v20 = vld [vmem:[%s1] sm:$0xff]
  %v21 = vld [vmem:[%s1 + $0x8] sm:$0xff]
  %v22 = vmul.f32 %v20, 0.0078125
  %v23 = vmul.f32 %v21, 0.0078125
  %v24 = vld [vmem:[%s2] sm:$0xff]
  %v25 = vld [vmem:[%s2 + $0x8] sm:$0xff]
  %v26 = vmul.f32 %v24, 0.0078125
  %v27 = vmul.f32 %v25, 0.0078125
  %v28 = vmul.f32 %v22, %v22
  %v29 = vmul.f32 %v23, %v23
  %v30 = vsub.f32 %v26, %v28
  %v31 = vsub.f32 %v27, %v29
  %v32 = vmax.f32 %v30, 0.0
  %v33 = vmax.f32 %v31, 0.0
  %v34 = vadd.f32 %v32, 1e-05
  %v35 = vadd.f32 %v33, 1e-05
  %v36 = vrsqrt.pop %v34
  %v37 = vrsqrt.pop %v35
  %v38 = vld [vmem:[%s3] sm:$0xff]
  %v39 = vld [vmem:[%s3 + $0x8] sm:$0xff]
  %v40 = vmul.f32 %v36, %v38
  %v41 = vmul.f32 %v37, %v39
  %v42 = vld [vmem:[%s0] sm:$0xff]
  %v43 = vld [vmem:[%s0 + $0x8] sm:$0xff]
  %45 = vset.pattern.permute.xlu0 0
  %46 = vperm.xlu0 %45, %v22
  %v47 = vpop.permute.xlu0 %46
  %50 = vset.pattern.permute.xlu0 0
  %51 = vperm.xlu0 %50, %v23
  %v52 = vpop.permute.xlu0 %51
  %v54 = vsub.f32 %v42, %v47
  %v55 = vsub.f32 %v43, %v52
  %57 = vset.pattern.permute.xlu0 0
  %58 = vperm.xlu0 %57, %v40
  %v59 = vpop.permute.xlu0 %58
  %62 = vset.pattern.permute.xlu0 0
  %63 = vperm.xlu0 %62, %v41
  %v64 = vpop.permute.xlu0 %63
  %v66 = vmul.f32 %v54, %v59
  %v67 = vmul.f32 %v55, %v64
  %v68 = vld [vmem:[%s4] sm:$0xff]
  %v69 = vld [vmem:[%s4 + $0x8] sm:$0xff]
  %71 = vset.pattern.permute.xlu0 0
  %72 = vperm.xlu0 %71, %v68
  %v73 = vpop.permute.xlu0 %72
  %76 = vset.pattern.permute.xlu0 0
  %77 = vperm.xlu0 %76, %v69
  %v78 = vpop.permute.xlu0 %77
  %v80 = vadd.f32 %v66, %v73
  %v81 = vadd.f32 %v67, %v78
  %82 = vst [vmem:[%s5] sm:$0xff] %v80
  %83 = vst [vmem:[%s5 + $0x8] sm:$0xff] %v81
  // Predicated region
  $region22: #{resvit_generator.90} parent=0 // pred_check
    _
  $region23: #{resvit_generator.90} parent=0 // pred_check_branch
    %85 = sbr.rel (0) target = $region25
  $region24: #{resvit_generator.90} parent=0 // pred_region
    _
  $region25: #{resvit_generator.90} parent=0 // pred_fallthru
    _
  // Predicated region
  $region26: #{resvit_generator.90} parent=0 // pred_check
    _
  $region27: #{resvit_generator.90} parent=0 // pred_check_branch
    %87 = sbr.rel (0) target = $region29
  $region28: #{resvit_generator.90} parent=0 // pred_region
    _
  $region29: #{resvit_generator.90} parent=0 // pred_fallthru
    _

// kernel: resvit_generator.121
$region0: #{resvit_generator.121}
  #allocation0 [shape = 'u32[]', space=smem, size = 0x4, offset = 0x4, fixed_abs, tag = 'smem constant byte address 0x4 - core index']
  #allocation1 [shape = 'u32[144,128]{1,0:T(1,128)}', space=vmem, size = 0x12000, scoped, tag = 'internal scratch']
  %s0 = inlined_call_operand.vmem [shape: bf16[32,64], index: 0, kind: input, shape index: {}]
  %s1 = inlined_call_operand.vmem [shape: bf16[64,128], index: 1, kind: input, shape index: {}]
  %s2 = inlined_call_operand.vmem [shape: f32[32,128], index: 2, kind: output, shape index: {}]
  %s3 = sld [smem:[#allocation0]]
  $region18: #{resvit_generator.121} parent=0
    _
  %s5 = ssub.s32 1, %s3
  %s6 = scalar_select 0, %s5, %s3
  // Predicated region
  $region2: #{resvit_generator.121} parent=0 // pred_check
    _
  $region3: #{resvit_generator.121} parent=0 // pred_check_branch
    %8 = sbr.rel (0) target = $region5
  $region4: #{resvit_generator.121} parent=0 // pred_region
    _
  $region5: #{resvit_generator.121} parent=0 // pred_fallthru
    _
  // Predicated region
  $region6: #{resvit_generator.121} parent=0 // pred_check
    _
  $region7: #{resvit_generator.121} parent=0 // pred_check_branch
    %10 = sbr.rel (0) target = $region9
  $region8: #{resvit_generator.121} parent=0 // pred_region
    _
  $region9: #{resvit_generator.121} parent=0 // pred_fallthru
    _
  %v12 = vld [vmem:[%s0] sm:$0xf]
  %v13 = vld [vmem:[%s0 + $0x4] sm:$0xf]
  %v14 = vld [vmem:[%s0 + $0x8] sm:$0xf]
  %v15 = vld [vmem:[%s0 + $0xc] sm:$0xf]
  %v16 = vld [vmem:[%s1] sm:$0xf]
  %v17 = vld [vmem:[%s1 + $0x4] sm:$0xf]
  %v18 = vld [vmem:[%s1 + $0x8] sm:$0xf]
  %v19 = vld [vmem:[%s1 + $0xc] sm:$0xf]
  %v20 = vld [vmem:[%s1 + $0x10] sm:$0xf]
  %v21 = vld [vmem:[%s1 + $0x14] sm:$0xf]
  %v22 = vld [vmem:[%s1 + $0x18] sm:$0xf]
  %v23 = vld [vmem:[%s1 + $0x1c] sm:$0xf]
  %v28 = vunpack.c.l.b16 %v12
  %v29 = vunpack.c.l.b16 %v13
  %v30 = vunpack.c.l.b16 %v14
  %v31 = vunpack.c.l.b16 %v15
  %v32 = vpack.c.b16 %v29, %v28
  %v33 = vpack.c.b16 %v31, %v30
  %v42 = vunpack.c.l.b16 %v16
  %v43 = vunpack.c.l.b16 %v17
  %v44 = vunpack.c.l.b16 %v18
  %v45 = vunpack.c.l.b16 %v19
  %v46 = vunpack.c.l.b16 %v20
  %v47 = vunpack.c.l.b16 %v21
  %v48 = vunpack.c.l.b16 %v22
  %v49 = vunpack.c.l.b16 %v23
  %v50 = vpack.c.b16 %v43, %v42
  %v51 = vpack.c.b16 %v45, %v44
  %v52 = vpack.c.b16 %v47, %v46
  %v53 = vpack.c.b16 %v49, %v48
  %vm58 = vcmask 523264
  %v60 = vsel %vm58, %v32, 0
  %v63 = vsel %vm58, %v33, 0
  %65 = vmatprep.subr.bf16.mxu0 0
  %66 = vmatpush1.bf16.msra.mxu0 %v50
  %67 = vmatprep.subr.bf16.mxu0 0
  %68 = vmatpush1.bf16.msra.mxu0 %v51
  %69 = vmatprep.subr.bf16.mxu0 0
  %70 = vmatpush1.bf16.msra.mxu0 %v52
  %71 = vmatprep.subr.bf16.mxu0 0
  %72 = vmatpush1.bf16.msra.mxu0 %v53
  %73 = vmatprep.subr.bf16.mxu0 0
  %74 = vmatpush1.bf16.msra.mxu0 0
  %75 = vmatprep.subr.bf16.mxu0 0
  %76 = vmatpush1.bf16.msra.mxu0 0
  %77 = vmatprep.subr.bf16.mxu0 0
  %78 = vmatpush1.bf16.msra.mxu0 0
  %79 = vmatprep.subr.bf16.mxu0 0
  %80 = vmatpush1.bf16.msra.mxu0 0
  %81 = vmatprep.subr.bf16.mxu0 0
  %82 = vmatpush1.bf16.msra.mxu0 0
  %83 = vmatprep.subr.bf16.mxu0 0
  %84 = vmatpush1.bf16.msra.mxu0 0
  %85 = vmatprep.subr.bf16.mxu0 0
  %86 = vmatpush1.bf16.msra.mxu0 0
  %87 = vmatprep.subr.bf16.mxu0 0
  %88 = vmatpush1.bf16.msra.mxu0 0
  %89 = vmatprep.subr.bf16.mxu0 0
  %90 = vmatpush1.bf16.msra.mxu0 0
  %91 = vmatprep.subr.bf16.mxu0 0
  %92 = vmatpush1.bf16.msra.mxu0 0
  %93 = vmatprep.subr.bf16.mxu0 0
  %94 = vmatpush1.bf16.msra.mxu0 0
  %95 = vmatprep.subr.bf16.mxu0 0
  %96 = vmatpush1.bf16.msra.mxu0 0
  %97 = vmatprep.mubr.bf16.mxu0 0
  %98 = vmatmul.mubr.bf16.gmra.mrb[0].mxu0 %v60
  %v99 = vpop.f32.mrb[0].mxu0
  %v100 = vadd.f32 0.0, %v99
  %v101 = vpop.f32.mrb[0].mxu0
  %v102 = vpop.f32.mrb[0].mxu0
  %v103 = vadd.f32 0.0, %v102
  %v104 = vpop.f32.mrb[0].mxu0
  %105 = vmatprep.mubr.bf16.mxu0 0
  %106 = vmatmul.mubr.bf16.gmra.mrb[0].mxu0 %v63
  %v107 = vpop.f32.mrb[0].mxu0
  %v108 = vadd.f32 0.0, %v107
  %v109 = vpop.f32.mrb[0].mxu0
  %v110 = vpop.f32.mrb[0].mxu0
  %v111 = vadd.f32 0.0, %v110
  %v112 = vpop.f32.mrb[0].mxu0
  %113 = vdwg.mxu0
  %114 = vst [vmem:[%s2] sm:$0xff] %v100
  %115 = vst [vmem:[%s2 + $0x8] sm:$0xff] %v103
  %116 = vst [vmem:[%s2 + $0x10] sm:$0xff] %v108
  %117 = vst [vmem:[%s2 + $0x18] sm:$0xff] %v111
  // Predicated region
  $region10: #{resvit_generator.121} parent=0 // pred_check
    _
  $region11: #{resvit_generator.121} parent=0 // pred_check_branch
    %119 = sbr.rel (0) target = $region13
  $region12: #{resvit_generator.121} parent=0 // pred_region
    _
  $region13: #{resvit_generator.121} parent=0 // pred_fallthru
    _
  // Predicated region
  $region14: #{resvit_generator.121} parent=0 // pred_check
    _
  $region15: #{resvit_generator.121} parent=0 // pred_check_branch
    %121 = sbr.rel (0) target = $region17
  $region16: #{resvit_generator.121} parent=0 // pred_region
    _
  $region17: #{resvit_generator.121} parent=0 // pred_fallthru
    _

// kernel: squeeze.8
$region0: #{squeeze.8}
  %s0 = inlined_call_operand.vmem [shape: f32[8,128], index: 0, kind: input, shape index: {}]
  %s1 = inlined_call_operand.vmem [shape: f32[8,2,8,8,1], index: 1, kind: output, shape index: {}]
  %v2 = vld [vmem:[%s0] sm:$0xff]
  %vm3 = vcmask 64512
  %4 = vst.msk [vmem:[%s1] ss:$16 sm:$0x3] %vm3, %v2
  %5 = vst.msk [vmem:[%s1] ss:$16 sm:$0xc] %vm3, %v2
  %6 = vst.msk [vmem:[%s1] ss:$16 sm:$0x30] %vm3, %v2
  %7 = vst.msk [vmem:[%s1] ss:$16 sm:$0xc0] %vm3, %v2
  %v8 = vld [vmem:[%s0] sm:$0xff]
  %9 = vrot.lane.b32.xlu0 %v8, 120
  %v10 = vpop.permute.xlu0 %9
  %vm11 = vcmask 64512
  %s12 = scalar_lea.vmem %s1, 1
  %13 = vst.msk [vmem:[%s12] ss:$16 sm:$0x3] %vm11, %v10
  %s14 = scalar_lea.vmem %s1, 1
  %15 = vst.msk [vmem:[%s14] ss:$16 sm:$0xc] %vm11, %v10
  %s16 = scalar_lea.vmem %s1, 1
  %17 = vst.msk [vmem:[%s16] ss:$16 sm:$0x30] %vm11, %v10
  %s18 = scalar_lea.vmem %s1, 1
  %19 = vst.msk [vmem:[%s18] ss:$16 sm:$0xc0] %vm11, %v10
  %v20 = vld [vmem:[%s0] sm:$0xff]
  %21 = vrot.lane.b32.xlu0 %v20, 112
  %v22 = vpop.permute.xlu0 %21
  %vm23 = vcmask 64512
  %s24 = scalar_lea.vmem %s1, 2
  %25 = vst.msk [vmem:[%s24] ss:$16 sm:$0x3] %vm23, %v22
  %s26 = scalar_lea.vmem %s1, 2
  %27 = vst.msk [vmem:[%s26] ss:$16 sm:$0xc] %vm23, %v22
  %s28 = scalar_lea.vmem %s1, 2
  %29 = vst.msk [vmem:[%s28] ss:$16 sm:$0x30] %vm23, %v22
  %s30 = scalar_lea.vmem %s1, 2
  %31 = vst.msk [vmem:[%s30] ss:$16 sm:$0xc0] %vm23, %v22
  %v32 = vld [vmem:[%s0] sm:$0xff]
  %33 = vrot.lane.b32.xlu0 %v32, 104
  %v34 = vpop.permute.xlu0 %33
  %vm35 = vcmask 64512
  %s36 = scalar_lea.vmem %s1, 3
  %37 = vst.msk [vmem:[%s36] ss:$16 sm:$0x3] %vm35, %v34
  %s38 = scalar_lea.vmem %s1, 3
  %39 = vst.msk [vmem:[%s38] ss:$16 sm:$0xc] %vm35, %v34
  %s40 = scalar_lea.vmem %s1, 3
  %41 = vst.msk [vmem:[%s40] ss:$16 sm:$0x30] %vm35, %v34
  %s42 = scalar_lea.vmem %s1, 3
  %43 = vst.msk [vmem:[%s42] ss:$16 sm:$0xc0] %vm35, %v34
  %v44 = vld [vmem:[%s0] sm:$0xff]
  %45 = vrot.lane.b32.xlu0 %v44, 96
  %v46 = vpop.permute.xlu0 %45
  %vm47 = vcmask 64512
  %s48 = scalar_lea.vmem %s1, 4
  %49 = vst.msk [vmem:[%s48] ss:$16 sm:$0x3] %vm47, %v46
  %s50 = scalar_lea.vmem %s1, 4
  %51 = vst.msk [vmem:[%s50] ss:$16 sm:$0xc] %vm47, %v46
  %s52 = scalar_lea.vmem %s1, 4
  %53 = vst.msk [vmem:[%s52] ss:$16 sm:$0x30] %vm47, %v46
  %s54 = scalar_lea.vmem %s1, 4
  %55 = vst.msk [vmem:[%s54] ss:$16 sm:$0xc0] %vm47, %v46
  %v56 = vld [vmem:[%s0] sm:$0xff]
  %57 = vrot.lane.b32.xlu0 %v56, 88
  %v58 = vpop.permute.xlu0 %57
  %vm59 = vcmask 64512
  %s60 = scalar_lea.vmem %s1, 5
  %61 = vst.msk [vmem:[%s60] ss:$16 sm:$0x3] %vm59, %v58
  %s62 = scalar_lea.vmem %s1, 5
  %63 = vst.msk [vmem:[%s62] ss:$16 sm:$0xc] %vm59, %v58
  %s64 = scalar_lea.vmem %s1, 5
  %65 = vst.msk [vmem:[%s64] ss:$16 sm:$0x30] %vm59, %v58
  %s66 = scalar_lea.vmem %s1, 5
  %67 = vst.msk [vmem:[%s66] ss:$16 sm:$0xc0] %vm59, %v58
  %v68 = vld [vmem:[%s0] sm:$0xff]
  %69 = vrot.lane.b32.xlu0 %v68, 80
  %v70 = vpop.permute.xlu0 %69
  %vm71 = vcmask 64512
  %s72 = scalar_lea.vmem %s1, 6
  %73 = vst.msk [vmem:[%s72] ss:$16 sm:$0x3] %vm71, %v70
  %s74 = scalar_lea.vmem %s1, 6
  %75 = vst.msk [vmem:[%s74] ss:$16 sm:$0xc] %vm71, %v70
  %s76 = scalar_lea.vmem %s1, 6
  %77 = vst.msk [vmem:[%s76] ss:$16 sm:$0x30] %vm71, %v70
  %s78 = scalar_lea.vmem %s1, 6
  %79 = vst.msk [vmem:[%s78] ss:$16 sm:$0xc0] %vm71, %v70
  %v80 = vld [vmem:[%s0] sm:$0xff]
  %81 = vrot.lane.b32.xlu0 %v80, 72
  %v82 = vpop.permute.xlu0 %81
  %vm83 = vcmask 64512
  %s84 = scalar_lea.vmem %s1, 7
  %85 = vst.msk [vmem:[%s84] ss:$16 sm:$0x3] %vm83, %v82
  %s86 = scalar_lea.vmem %s1, 7
  %87 = vst.msk [vmem:[%s86] ss:$16 sm:$0xc] %vm83, %v82
  %s88 = scalar_lea.vmem %s1, 7
  %89 = vst.msk [vmem:[%s88] ss:$16 sm:$0x30] %vm83, %v82
  %s90 = scalar_lea.vmem %s1, 7
  %91 = vst.msk [vmem:[%s90] ss:$16 sm:$0xc0] %vm83, %v82
  %v92 = vld [vmem:[%s0] sm:$0xff]
  %93 = vrot.lane.b32.xlu0 %v92, 64
  %v94 = vpop.permute.xlu0 %93
  %vm95 = vcmask 64512
  %s96 = scalar_lea.vmem %s1, 8
  %97 = vst.msk [vmem:[%s96] ss:$16 sm:$0x3] %vm95, %v94
  %s98 = scalar_lea.vmem %s1, 8
  %99 = vst.msk [vmem:[%s98] ss:$16 sm:$0xc] %vm95, %v94
  %s100 = scalar_lea.vmem %s1, 8
  %101 = vst.msk [vmem:[%s100] ss:$16 sm:$0x30] %vm95, %v94
  %s102 = scalar_lea.vmem %s1, 8
  %103 = vst.msk [vmem:[%s102] ss:$16 sm:$0xc0] %vm95, %v94
  %v104 = vld [vmem:[%s0] sm:$0xff]
  %105 = vrot.lane.b32.xlu0 %v104, 56
  %v106 = vpop.permute.xlu0 %105
  %vm107 = vcmask 64512
  %s108 = scalar_lea.vmem %s1, 9
  %109 = vst.msk [vmem:[%s108] ss:$16 sm:$0x3] %vm107, %v106
  %s110 = scalar_lea.vmem %s1, 9
  %111 = vst.msk [vmem:[%s110] ss:$16 sm:$0xc] %vm107, %v106
  %s112 = scalar_lea.vmem %s1, 9
  %113 = vst.msk [vmem:[%s112] ss:$16 sm:$0x30] %vm107, %v106
  %s114 = scalar_lea.vmem %s1, 9
  %115 = vst.msk [vmem:[%s114] ss:$16 sm:$0xc0] %vm107, %v106
  %v116 = vld [vmem:[%s0] sm:$0xff]
  %117 = vrot.lane.b32.xlu0 %v116, 48
  %v118 = vpop.permute.xlu0 %117
  %vm119 = vcmask 64512
  %s120 = scalar_lea.vmem %s1, 10
  %121 = vst.msk [vmem:[%s120] ss:$16 sm:$0x3] %vm119, %v118
  %s122 = scalar_lea.vmem %s1, 10
  %123 = vst.msk [vmem:[%s122] ss:$16 sm:$0xc] %vm119, %v118
  %s124 = scalar_lea.vmem %s1, 10
  %125 = vst.msk [vmem:[%s124] ss:$16 sm:$0x30] %vm119, %v118
  %s126 = scalar_lea.vmem %s1, 10
  %127 = vst.msk [vmem:[%s126] ss:$16 sm:$0xc0] %vm119, %v118
  %v128 = vld [vmem:[%s0] sm:$0xff]
  %129 = vrot.lane.b32.xlu0 %v128, 40
  %v130 = vpop.permute.xlu0 %129
  %vm131 = vcmask 64512
  %s132 = scalar_lea.vmem %s1, 11
  %133 = vst.msk [vmem:[%s132] ss:$16 sm:$0x3] %vm131, %v130
  %s134 = scalar_lea.vmem %s1, 11
  %135 = vst.msk [vmem:[%s134] ss:$16 sm:$0xc] %vm131, %v130
  %s136 = scalar_lea.vmem %s1, 11
  %137 = vst.msk [vmem:[%s136] ss:$16 sm:$0x30] %vm131, %v130
  %s138 = scalar_lea.vmem %s1, 11
  %139 = vst.msk [vmem:[%s138] ss:$16 sm:$0xc0] %vm131, %v130
  %v140 = vld [vmem:[%s0] sm:$0xff]
  %141 = vrot.lane.b32.xlu0 %v140, 32
  %v142 = vpop.permute.xlu0 %141
  %vm143 = vcmask 64512
  %s144 = scalar_lea.vmem %s1, 12
  %145 = vst.msk [vmem:[%s144] ss:$16 sm:$0x3] %vm143, %v142
  %s146 = scalar_lea.vmem %s1, 12
  %147 = vst.msk [vmem:[%s146] ss:$16 sm:$0xc] %vm143, %v142
  %s148 = scalar_lea.vmem %s1, 12
  %149 = vst.msk [vmem:[%s148] ss:$16 sm:$0x30] %vm143, %v142
  %s150 = scalar_lea.vmem %s1, 12
  %151 = vst.msk [vmem:[%s150] ss:$16 sm:$0xc0] %vm143, %v142
  %v152 = vld [vmem:[%s0] sm:$0xff]
  %153 = vrot.lane.b32.xlu0 %v152, 24
  %v154 = vpop.permute.xlu0 %153
  %vm155 = vcmask 64512
  %s156 = scalar_lea.vmem %s1, 13
  %157 = vst.msk [vmem:[%s156] ss:$16 sm:$0x3] %vm155, %v154
  %s158 = scalar_lea.vmem %s1, 13
  %159 = vst.msk [vmem:[%s158] ss:$16 sm:$0xc] %vm155, %v154
  %s160 = scalar_lea.vmem %s1, 13
  %161 = vst.msk [vmem:[%s160] ss:$16 sm:$0x30] %vm155, %v154
  %s162 = scalar_lea.vmem %s1, 13
  %163 = vst.msk [vmem:[%s162] ss:$16 sm:$0xc0] %vm155, %v154
  %v164 = vld [vmem:[%s0] sm:$0xff]
  %165 = vrot.lane.b32.xlu0 %v164, 16
  %v166 = vpop.permute.xlu0 %165
  %vm167 = vcmask 64512
  %s168 = scalar_lea.vmem %s1, 14
  %169 = vst.msk [vmem:[%s168] ss:$16 sm:$0x3] %vm167, %v166
  %s170 = scalar_lea.vmem %s1, 14
  %171 = vst.msk [vmem:[%s170] ss:$16 sm:$0xc] %vm167, %v166
  %s172 = scalar_lea.vmem %s1, 14
  %173 = vst.msk [vmem:[%s172] ss:$16 sm:$0x30] %vm167, %v166
  %s174 = scalar_lea.vmem %s1, 14
  %175 = vst.msk [vmem:[%s174] ss:$16 sm:$0xc0] %vm167, %v166
  %v176 = vld [vmem:[%s0] sm:$0xff]
  %177 = vrot.lane.b32.xlu0 %v176, 8
  %v178 = vpop.permute.xlu0 %177
  %vm179 = vcmask 64512
  %s180 = scalar_lea.vmem %s1, 15
  %181 = vst.msk [vmem:[%s180] ss:$16 sm:$0x3] %vm179, %v178
  %s182 = scalar_lea.vmem %s1, 15
  %183 = vst.msk [vmem:[%s182] ss:$16 sm:$0xc] %vm179, %v178
  %s184 = scalar_lea.vmem %s1, 15
  %185 = vst.msk [vmem:[%s184] ss:$16 sm:$0x30] %vm179, %v178
  %s186 = scalar_lea.vmem %s1, 15
  %187 = vst.msk [vmem:[%s186] ss:$16 sm:$0xc0] %vm179, %v178

// kernel: resvit_generator.124
$region0: #{resvit_generator.124}
  #allocation0 [shape = 'u32[]', space=smem, size = 0x4, offset = 0x4, fixed_abs, tag = 'smem constant byte address 0x4 - core index']
  #allocation1 [shape = 'u32[144,128]{1,0:T(1,128)}', space=vmem, size = 0x12000, scoped, tag = 'internal scratch']
  %s0 = inlined_call_operand.vmem [shape: bf16[16,32], index: 0, kind: input, shape index: {}]
  %s1 = inlined_call_operand.vmem [shape: bf16[32,512], index: 1, kind: input, shape index: {}]
  %s2 = inlined_call_operand.vmem [shape: f32[16,512], index: 2, kind: output, shape index: {}]
  %s3 = sld [smem:[#allocation0]]
  $region18: #{resvit_generator.124} parent=0
    _
  %s5 = ssub.s32 1, %s3
  %s6 = scalar_select 0, %s5, %s3
  // Predicated region
  $region2: #{resvit_generator.124} parent=0 // pred_check
    _
  $region3: #{resvit_generator.124} parent=0 // pred_check_branch
    %8 = sbr.rel (0) target = $region5
  $region4: #{resvit_generator.124} parent=0 // pred_region
    _
  $region5: #{resvit_generator.124} parent=0 // pred_fallthru
    _
  // Predicated region
  $region6: #{resvit_generator.124} parent=0 // pred_check
    _
  $region7: #{resvit_generator.124} parent=0 // pred_check_branch
    %10 = sbr.rel (0) target = $region9
  $region8: #{resvit_generator.124} parent=0 // pred_region
    _
  $region9: #{resvit_generator.124} parent=0 // pred_fallthru
    _
  %v12 = vld [vmem:[%s0] sm:$0xf]
  %v13 = vld [vmem:[%s0 + $0x4] sm:$0xf]
  %v14 = vld [vmem:[%s1] sm:$0xff]
  %v15 = vld [vmem:[%s1 + $0x8] sm:$0xff]
  %v16 = vld [vmem:[%s1 + $0x10] sm:$0xff]
  %v17 = vld [vmem:[%s1 + $0x18] sm:$0xff]
  %v18 = vld [vmem:[%s1 + $0x20] sm:$0xff]
  %v19 = vld [vmem:[%s1 + $0x28] sm:$0xff]
  %v20 = vld [vmem:[%s1 + $0x30] sm:$0xff]
  %v21 = vld [vmem:[%s1 + $0x38] sm:$0xff]
  %v24 = vunpack.c.l.b16 %v12
  %v25 = vunpack.c.l.b16 %v13
  %v26 = vpack.c.b16 %v25, %v24
  %v35 = vunpack.c.l.b16 %v14
  %v36 = vunpack.c.h.b16 %v14
  %v37 = vunpack.c.l.b16 %v15
  %v38 = vunpack.c.h.b16 %v15
  %v39 = vunpack.c.l.b16 %v16
  %v40 = vunpack.c.h.b16 %v16
  %v41 = vunpack.c.l.b16 %v17
  %v42 = vunpack.c.h.b16 %v17
  %v43 = vunpack.c.l.b16 %v18
  %v44 = vunpack.c.h.b16 %v18
  %v45 = vunpack.c.l.b16 %v19
  %v46 = vunpack.c.h.b16 %v19
  %v47 = vunpack.c.l.b16 %v20
  %v48 = vunpack.c.h.b16 %v20
  %v49 = vunpack.c.l.b16 %v21
  %v50 = vunpack.c.h.b16 %v21
  %v51 = vpack.c.b16 %v39, %v35
  %v52 = vpack.c.b16 %v40, %v36
  %v53 = vpack.c.b16 %v41, %v37
  %v54 = vpack.c.b16 %v42, %v38
  %v55 = vpack.c.b16 %v47, %v43
  %v56 = vpack.c.b16 %v48, %v44
  %v57 = vpack.c.b16 %v49, %v45
  %v58 = vpack.c.b16 %v50, %v46
  %vm67 = vcmask 261120
  %v69 = vsel %vm67, %v26, 0
  %71 = vmatprep.subr.bf16.mxu0 %v52
  %72 = vmatpush1.bf16.msra.mxu0 %v51
  %73 = vmatprep.subr.bf16.mxu0 %v56
  %74 = vmatpush1.bf16.msra.mxu0 %v55
  %75 = vmatprep.subr.bf16.mxu0 0
  %76 = vmatpush1.bf16.msra.mxu0 0
  %77 = vmatprep.subr.bf16.mxu0 0
  %78 = vmatpush1.bf16.msra.mxu0 0
  %79 = vmatprep.subr.bf16.mxu0 0
  %80 = vmatpush1.bf16.msra.mxu0 0
  %81 = vmatprep.subr.bf16.mxu0 0
  %82 = vmatpush1.bf16.msra.mxu0 0
  %83 = vmatprep.subr.bf16.mxu0 0
  %84 = vmatpush1.bf16.msra.mxu0 0
  %85 = vmatprep.subr.bf16.mxu0 0
  %86 = vmatpush1.bf16.msra.mxu0 0
  %87 = vmatprep.subr.bf16.mxu0 0
  %88 = vmatpush1.bf16.msra.mxu0 0
  %89 = vmatprep.subr.bf16.mxu0 0
  %90 = vmatpush1.bf16.msra.mxu0 0
  %91 = vmatprep.subr.bf16.mxu0 0
  %92 = vmatpush1.bf16.msra.mxu0 0
  %93 = vmatprep.subr.bf16.mxu0 0
  %94 = vmatpush1.bf16.msra.mxu0 0
  %95 = vmatprep.subr.bf16.mxu0 0
  %96 = vmatpush1.bf16.msra.mxu0 0
  %97 = vmatprep.subr.bf16.mxu0 0
  %98 = vmatpush1.bf16.msra.mxu0 0
  %99 = vmatprep.subr.bf16.mxu0 0
  %100 = vmatpush1.bf16.msra.mxu0 0
  %101 = vmatprep.subr.bf16.mxu0 0
  %102 = vmatpush1.bf16.msra.mxu0 0
  %103 = vmatprep.mubr.bf16.mxu0 0
  %104 = vmatmul.mubr.bf16.gmra.mrb[0].mxu0 %v69
  %v105 = vpop.f32.mrb[0].mxu0
  %v106 = vadd.f32 0.0, %v105
  %v107 = vpop.f32.mrb[0].mxu0
  %v108 = vadd.f32 0.0, %v107
  %v109 = vpop.f32.mrb[0].mxu0
  %v110 = vadd.f32 0.0, %v109
  %v111 = vpop.f32.mrb[0].mxu0
  %v112 = vadd.f32 0.0, %v111
  %113 = vdwg.mxu0
  %114 = vmatprep.subr.bf16.mxu0 %v54
  %115 = vmatpush1.bf16.msra.mxu0 %v53
  %116 = vmatprep.subr.bf16.mxu0 %v58
  %117 = vmatpush1.bf16.msra.mxu0 %v57
  %118 = vmatprep.subr.bf16.mxu0 0
  %119 = vmatpush1.bf16.msra.mxu0 0
  %120 = vmatprep.subr.bf16.mxu0 0
  %121 = vmatpush1.bf16.msra.mxu0 0
  %122 = vmatprep.subr.bf16.mxu0 0
  %123 = vmatpush1.bf16.msra.mxu0 0
  %124 = vmatprep.subr.bf16.mxu0 0
  %125 = vmatpush1.bf16.msra.mxu0 0
  %126 = vmatprep.subr.bf16.mxu0 0
  %127 = vmatpush1.bf16.msra.mxu0 0
  %128 = vmatprep.subr.bf16.mxu0 0
  %129 = vmatpush1.bf16.msra.mxu0 0
  %130 = vmatprep.subr.bf16.mxu0 0
  %131 = vmatpush1.bf16.msra.mxu0 0
  %132 = vmatprep.subr.bf16.mxu0 0
  %133 = vmatpush1.bf16.msra.mxu0 0
  %134 = vmatprep.subr.bf16.mxu0 0
  %135 = vmatpush1.bf16.msra.mxu0 0
  %136 = vmatprep.subr.bf16.mxu0 0
  %137 = vmatpush1.bf16.msra.mxu0 0
  %138 = vmatprep.subr.bf16.mxu0 0
  %139 = vmatpush1.bf16.msra.mxu0 0
  %140 = vmatprep.subr.bf16.mxu0 0
  %141 = vmatpush1.bf16.msra.mxu0 0
  %142 = vmatprep.subr.bf16.mxu0 0
  %143 = vmatpush1.bf16.msra.mxu0 0
  %144 = vmatprep.subr.bf16.mxu0 0
  %145 = vmatpush1.bf16.msra.mxu0 0
  %146 = vmatprep.mubr.bf16.mxu0 0
  %147 = vmatmul.mubr.bf16.gmra.mrb[0].mxu0 %v69
  %v148 = vpop.f32.mrb[0].mxu0
  %v149 = vadd.f32 0.0, %v148
  %v150 = vpop.f32.mrb[0].mxu0
  %v151 = vadd.f32 0.0, %v150
  %v152 = vpop.f32.mrb[0].mxu0
  %v153 = vadd.f32 0.0, %v152
  %v154 = vpop.f32.mrb[0].mxu0
  %v155 = vadd.f32 0.0, %v154
  %156 = vdwg.mxu0
  %157 = vst [vmem:[%s2] sm:$0xff] %v106
  %158 = vst [vmem:[%s2 + $0x8] sm:$0xff] %v108
  %159 = vst [vmem:[%s2 + $0x10] sm:$0xff] %v149
  %160 = vst [vmem:[%s2 + $0x18] sm:$0xff] %v151
  %161 = vst [vmem:[%s2 + $0x20] sm:$0xff] %v110
  %162 = vst [vmem:[%s2 + $0x28] sm:$0xff] %v112
  %163 = vst [vmem:[%s2 + $0x30] sm:$0xff] %v153
  %164 = vst [vmem:[%s2 + $0x38] sm:$0xff] %v155
  // Predicated region
  $region10: #{resvit_generator.124} parent=0 // pred_check
    _
  $region11: #{resvit_generator.124} parent=0 // pred_check_branch
    %166 = sbr.rel (0) target = $region13
  $region12: #{resvit_generator.124} parent=0 // pred_region
    _
  $region13: #{resvit_generator.124} parent=0 // pred_fallthru
    _
  // Predicated region
  $region14: #{resvit_generator.124} parent=0 // pred_check
    _
  $region15: #{resvit_generator.124} parent=0 // pred_check_branch
    %168 = sbr.rel (0) target = $region17
  $region16: #{resvit_generator.124} parent=0 // pred_region
    _
  $region17: #{resvit_generator.124} parent=0 // pred_fallthru
    _

// kernel: squeeze.12
$region0: #{squeeze.12}
  %s0 = inlined_call_operand.vmem [shape: f32[4,512], index: 0, kind: input, shape index: {}]
  %s1 = inlined_call_operand.vmem [shape: f32[4,2,16,16,1], index: 1, kind: output, shape index: {}]
  $region1: #{squeeze.12} parent=0
    #allocation0 [shape = 'u8[16384]{0}', space=vmem, size = 0x4000, scoped, tag = 'scoped mem for input reshape']
    %s3 = sshllo.u32 0, 4
    %s4 = smul.addr 4, 3
    %s5 = scalar_lea.vmem %s0, %s4
    %v6 = vld [vmem:[%s5] sm:%s3]
    %s7 = scalar_lea.vmem [#allocation0], 24
    %8 = vst [vmem:[%s7] sm:%s3] %v6
    %s9 = smul.addr 4, 2
    %s10 = scalar_lea.vmem %s0, %s9
    %v11 = vld [vmem:[%s10] sm:%s3]
    %s12 = scalar_lea.vmem [#allocation0], 16
    %13 = vst [vmem:[%s12] sm:%s3] %v11
    %s14 = scalar_lea.vmem %s0, 4
    %v15 = vld [vmem:[%s14] sm:%s3]
    %s16 = scalar_lea.vmem [#allocation0], 8
    %17 = vst [vmem:[%s16] sm:%s3] %v15
    %v18 = vld [vmem:[%s0] sm:%s3]
    %19 = vst [vmem:[#allocation0] sm:%s3] %v18
    %v20 = vld [vmem:[#allocation0] sm:$0xf]
    %vm21 = vcmask 130048
    %22 = vst.msk [vmem:[%s1] sm:$0x1] %vm21, %v20
    %s23 = scalar_lea.vmem %s1, 31
    %24 = vst.msk [vmem:[%s23] sm:$0x2] %vm21, %v20
    %s25 = scalar_lea.vmem %s1, 62
    %26 = vst.msk [vmem:[%s25] sm:$0x4] %vm21, %v20
    %s27 = scalar_lea.vmem %s1, 93
    %28 = vst.msk [vmem:[%s27] sm:$0x8] %vm21, %v20
    %s29 = scalar_lea.vmem [#allocation0], 8
    %v30 = vld [vmem:[%s29] sm:$0xf]
    %vm31 = vcmask 130048
    %s32 = scalar_lea.vmem %s1, 8
    %33 = vst.msk [vmem:[%s32] sm:$0x1] %vm31, %v30
    %s34 = scalar_lea.vmem %s1, 39
    %35 = vst.msk [vmem:[%s34] sm:$0x2] %vm31, %v30
    %s36 = scalar_lea.vmem %s1, 70
    %37 = vst.msk [vmem:[%s36] sm:$0x4] %vm31, %v30
    %s38 = scalar_lea.vmem %s1, 101
    %39 = vst.msk [vmem:[%s38] sm:$0x8] %vm31, %v30
    %s40 = scalar_lea.vmem [#allocation0], 16
    %v41 = vld [vmem:[%s40] sm:$0xf]
    %vm42 = vcmask 130048
    %s43 = scalar_lea.vmem %s1, 16
    %44 = vst.msk [vmem:[%s43] sm:$0x1] %vm42, %v41
    %s45 = scalar_lea.vmem %s1, 47
    %46 = vst.msk [vmem:[%s45] sm:$0x2] %vm42, %v41
    %s47 = scalar_lea.vmem %s1, 78
    %48 = vst.msk [vmem:[%s47] sm:$0x4] %vm42, %v41
    %s49 = scalar_lea.vmem %s1, 109
    %50 = vst.msk [vmem:[%s49] sm:$0x8] %vm42, %v41
    %s51 = scalar_lea.vmem [#allocation0], 24
    %v52 = vld [vmem:[%s51] sm:$0xf]
    %vm53 = vcmask 130048
    %s54 = scalar_lea.vmem %s1, 24
    %55 = vst.msk [vmem:[%s54] sm:$0x1] %vm53, %v52
    %s56 = scalar_lea.vmem %s1, 55
    %57 = vst.msk [vmem:[%s56] sm:$0x2] %vm53, %v52
    %s58 = scalar_lea.vmem %s1, 86
    %59 = vst.msk [vmem:[%s58] sm:$0x4] %vm53, %v52
    %s60 = scalar_lea.vmem %s1, 117
    %61 = vst.msk [vmem:[%s60] sm:$0x8] %vm53, %v52
    %v62 = vld [vmem:[#allocation0] ss:$8 sm:$0xf]
    %s63 = scalar_lea.vmem [#allocation0], 4294967265
    %v64 = vld [vmem:[%s63] ss:$8 sm:$0xf0]
    %vm65 = vcmask 1047556
    %v66 = vsel %vm65, %v64, %v62
    %67 = vrot.lane.b32.xlu0 %v66, 112
    %v68 = vpop.permute.xlu0 %67
    %vm69 = vcmask 130048
    %s70 = scalar_lea.vmem %s1, 1
    %71 = vst.msk [vmem:[%s70] ss:$8 sm:$0xf] %vm69, %v68
    %s72 = scalar_lea.vmem %s1, 1
    %73 = vst.msk [vmem:[%s72] ss:$8 sm:$0xf0] %vm69, %v68
    %s74 = scalar_lea.vmem [#allocation0], 2
    %v75 = vld [vmem:[%s74] ss:$8 sm:$0xf]
    %s76 = scalar_lea.vmem [#allocation0], 4294967267
    %v77 = vld [vmem:[%s76] ss:$8 sm:$0xf0]
    %vm78 = vcmask 1047556
    %v79 = vsel %vm78, %v77, %v75
    %80 = vrot.lane.b32.xlu0 %v79, 112
    %v81 = vpop.permute.xlu0 %80
    %vm82 = vcmask 130048
    %s83 = scalar_lea.vmem %s1, 65
    %84 = vst.msk [vmem:[%s83] ss:$8 sm:$0xf] %vm82, %v81
    %s85 = scalar_lea.vmem %s1, 65
    %86 = vst.msk [vmem:[%s85] ss:$8 sm:$0xf0] %vm82, %v81
    %v87 = vld [vmem:[#allocation0] ss:$8 sm:$0xf]
    %s88 = scalar_lea.vmem [#allocation0], 4294967265
    %v89 = vld [vmem:[%s88] ss:$8 sm:$0xf0]
    %vm90 = vcmask 1047556
    %v91 = vsel %vm90, %v89, %v87
    %92 = vrot.lane.b32.xlu0 %v91, 96
    %v93 = vpop.permute.xlu0 %92
    %vm94 = vcmask 130048
    %s95 = scalar_lea.vmem %s1, 2
    %96 = vst.msk [vmem:[%s95] ss:$8 sm:$0xf] %vm94, %v93
    %s97 = scalar_lea.vmem %s1, 2
    %98 = vst.msk [vmem:[%s97] ss:$8 sm:$0xf0] %vm94, %v93
    %s99 = scalar_lea.vmem [#allocation0], 2
    %v100 = vld [vmem:[%s99] ss:$8 sm:$0xf]
    %s101 = scalar_lea.vmem [#allocation0], 4294967267
    %v102 = vld [vmem:[%s101] ss:$8 sm:$0xf0]
    %vm103 = vcmask 1047556
    %v104 = vsel %vm103, %v102, %v100
    %105 = vrot.lane.b32.xlu0 %v104, 96
    %v106 = vpop.permute.xlu0 %105
    %vm107 = vcmask 130048
    %s108 = scalar_lea.vmem %s1, 66
    %109 = vst.msk [vmem:[%s108] ss:$8 sm:$0xf] %vm107, %v106
    %s110 = scalar_lea.vmem %s1, 66
    %111 = vst.msk [vmem:[%s110] ss:$8 sm:$0xf0] %vm107, %v106
    %v112 = vld [vmem:[#allocation0] ss:$8 sm:$0xf]
    %s113 = scalar_lea.vmem [#allocation0], 4294967265
    %v114 = vld [vmem:[%s113] ss:$8 sm:$0xf0]
    %vm115 = vcmask 1047556
    %v116 = vsel %vm115, %v114, %v112
    %117 = vrot.lane.b32.xlu0 %v116, 80
    %v118 = vpop.permute.xlu0 %117
    %vm119 = vcmask 130048
    %s120 = scalar_lea.vmem %s1, 3
    %121 = vst.msk [vmem:[%s120] ss:$8 sm:$0xf] %vm119, %v118
    %s122 = scalar_lea.vmem %s1, 3
    %123 = vst.msk [vmem:[%s122] ss:$8 sm:$0xf0] %vm119, %v118
    %s124 = scalar_lea.vmem [#allocation0], 2
    %v125 = vld [vmem:[%s124] ss:$8 sm:$0xf]
    %s126 = scalar_lea.vmem [#allocation0], 4294967267
    %v127 = vld [vmem:[%s126] ss:$8 sm:$0xf0]
    %vm128 = vcmask 1047556
    %v129 = vsel %vm128, %v127, %v125
    %130 = vrot.lane.b32.xlu0 %v129, 80
    %v131 = vpop.permute.xlu0 %130
    %vm132 = vcmask 130048
    %s133 = scalar_lea.vmem %s1, 67
    %134 = vst.msk [vmem:[%s133] ss:$8 sm:$0xf] %vm132, %v131
    %s135 = scalar_lea.vmem %s1, 67
    %136 = vst.msk [vmem:[%s135] ss:$8 sm:$0xf0] %vm132, %v131
    %v137 = vld [vmem:[#allocation0] ss:$8 sm:$0xf]
    %s138 = scalar_lea.vmem [#allocation0], 4294967265
    %v139 = vld [vmem:[%s138] ss:$8 sm:$0xf0]
    %vm140 = vcmask 1047556
    %v141 = vsel %vm140, %v139, %v137
    %142 = vrot.lane.b32.xlu0 %v141, 64
    %v143 = vpop.permute.xlu0 %142
    %vm144 = vcmask 130048
    %s145 = scalar_lea.vmem %s1, 4
    %146 = vst.msk [vmem:[%s145] ss:$8 sm:$0xf] %vm144, %v143
    %s147 = scalar_lea.vmem %s1, 4
    %148 = vst.msk [vmem:[%s147] ss:$8 sm:$0xf0] %vm144, %v143
    %s149 = scalar_lea.vmem [#allocation0], 2
    %v150 = vld [vmem:[%s149] ss:$8 sm:$0xf]
    %s151 = scalar_lea.vmem [#allocation0], 4294967267
    %v152 = vld [vmem:[%s151] ss:$8 sm:$0xf0]
    %vm153 = vcmask 1047556
    %v154 = vsel %vm153, %v152, %v150
    %155 = vrot.lane.b32.xlu0 %v154, 64
    %v156 = vpop.permute.xlu0 %155
    %vm157 = vcmask 130048
    %s158 = scalar_lea.vmem %s1, 68
    %159 = vst.msk [vmem:[%s158] ss:$8 sm:$0xf] %vm157, %v156
    %s160 = scalar_lea.vmem %s1, 68
    %161 = vst.msk [vmem:[%s160] ss:$8 sm:$0xf0] %vm157, %v156
    %v162 = vld [vmem:[#allocation0] ss:$8 sm:$0xf]
    %s163 = scalar_lea.vmem [#allocation0], 4294967265
    %v164 = vld [vmem:[%s163] ss:$8 sm:$0xf0]
    %vm165 = vcmask 1047556
    %v166 = vsel %vm165, %v164, %v162
    %167 = vrot.lane.b32.xlu0 %v166, 48
    %v168 = vpop.permute.xlu0 %167
    %vm169 = vcmask 130048
    %s170 = scalar_lea.vmem %s1, 5
    %171 = vst.msk [vmem:[%s170] ss:$8 sm:$0xf] %vm169, %v168
    %s172 = scalar_lea.vmem %s1, 5
    %173 = vst.msk [vmem:[%s172] ss:$8 sm:$0xf0] %vm169, %v168
    %s174 = scalar_lea.vmem [#allocation0], 2
    %v175 = vld [vmem:[%s174] ss:$8 sm:$0xf]
    %s176 = scalar_lea.vmem [#allocation0], 4294967267
    %v177 = vld [vmem:[%s176] ss:$8 sm:$0xf0]
    %vm178 = vcmask 1047556
    %v179 = vsel %vm178, %v177, %v175
    %180 = vrot.lane.b32.xlu0 %v179, 48
    %v181 = vpop.permute.xlu0 %180
    %vm182 = vcmask 130048
    %s183 = scalar_lea.vmem %s1, 69
    %184 = vst.msk [vmem:[%s183] ss:$8 sm:$0xf] %vm182, %v181
    %s185 = scalar_lea.vmem %s1, 69
    %186 = vst.msk [vmem:[%s185] ss:$8 sm:$0xf0] %vm182, %v181
    %v187 = vld [vmem:[#allocation0] ss:$8 sm:$0xf]
    %s188 = scalar_lea.vmem [#allocation0], 4294967265
    %v189 = vld [vmem:[%s188] ss:$8 sm:$0xf0]
    %vm190 = vcmask 1047556
    %v191 = vsel %vm190, %v189, %v187
    %192 = vrot.lane.b32.xlu0 %v191, 32
    %v193 = vpop.permute.xlu0 %192
    %vm194 = vcmask 130048
    %s195 = scalar_lea.vmem %s1, 6
    %196 = vst.msk [vmem:[%s195] ss:$8 sm:$0xf] %vm194, %v193
    %s197 = scalar_lea.vmem %s1, 6
    %198 = vst.msk [vmem:[%s197] ss:$8 sm:$0xf0] %vm194, %v193
    %s199 = scalar_lea.vmem [#allocation0], 2
    %v200 = vld [vmem:[%s199] ss:$8 sm:$0xf]
    %s201 = scalar_lea.vmem [#allocation0], 4294967267
    %v202 = vld [vmem:[%s201] ss:$8 sm:$0xf0]
    %vm203 = vcmask 1047556
    %v204 = vsel %vm203, %v202, %v200
    %205 = vrot.lane.b32.xlu0 %v204, 32
    %v206 = vpop.permute.xlu0 %205
    %vm207 = vcmask 130048
    %s208 = scalar_lea.vmem %s1, 70
    %209 = vst.msk [vmem:[%s208] ss:$8 sm:$0xf] %vm207, %v206
    %s210 = scalar_lea.vmem %s1, 70
    %211 = vst.msk [vmem:[%s210] ss:$8 sm:$0xf0] %vm207, %v206
    %v212 = vld [vmem:[#allocation0] ss:$8 sm:$0xf]
    %s213 = scalar_lea.vmem [#allocation0], 4294967265
    %v214 = vld [vmem:[%s213] ss:$8 sm:$0xf0]
    %vm215 = vcmask 1047556
    %v216 = vsel %vm215, %v214, %v212
    %217 = vrot.lane.b32.xlu0 %v216, 16
    %v218 = vpop.permute.xlu0 %217
    %vm219 = vcmask 130048
    %s220 = scalar_lea.vmem %s1, 7
    %221 = vst.msk [vmem:[%s220] ss:$8 sm:$0xf] %vm219, %v218
    %s222 = scalar_lea.vmem %s1, 7
    %223 = vst.msk [vmem:[%s222] ss:$8 sm:$0xf0] %vm219, %v218
    %s224 = scalar_lea.vmem [#allocation0], 2
    %v225 = vld [vmem:[%s224] ss:$8 sm:$0xf]
    %s226 = scalar_lea.vmem [#allocation0], 4294967267
    %v227 = vld [vmem:[%s226] ss:$8 sm:$0xf0]
    %vm228 = vcmask 1047556
    %v229 = vsel %vm228, %v227, %v225
    %230 = vrot.lane.b32.xlu0 %v229, 16
    %v231 = vpop.permute.xlu0 %230
    %vm232 = vcmask 130048
    %s233 = scalar_lea.vmem %s1, 71
    %234 = vst.msk [vmem:[%s233] ss:$8 sm:$0xf] %vm232, %v231
    %s235 = scalar_lea.vmem %s1, 71
    %236 = vst.msk [vmem:[%s235] ss:$8 sm:$0xf0] %vm232, %v231

// kernel: resvit_generator.127
$region0: #{resvit_generator.127}
  #allocation0 [shape = 'u32[]', space=smem, size = 0x4, offset = 0x4, fixed_abs, tag = 'smem constant byte address 0x4 - core index']
  #allocation1 [shape = 'u32[144,128]{1,0:T(1,128)}', space=vmem, size = 0x12000, scoped, tag = 'internal scratch']
  #allocation2 [shape = 'f32[1,1]{1,0:T(1,128)S(1)}', space=vmem, size = 0x200, scoped, tag = 'scoped memory for resvit_generator.127']
  %s0 = inlined_call_operand.vmem [shape: bf16[1,196], index: 0, kind: input, shape index: {}]
  %s1 = inlined_call_operand.vmem [shape: bf16[196,2048], index: 1, kind: input, shape index: {}]
  %s2 = inlined_call_operand.<no memory space> [shape: f32[1,1], index: 2, kind: input, shape index: {}]
  %s3 = inlined_call_operand.vmem [shape: f32[1,2048], index: 3, kind: output, shape index: {}]
  %s4 = sld [smem:[#allocation0]]
  $region68: #{resvit_generator.127} parent=0
    _
  %s6 = ssub.s32 1, %s4
  %s7 = scalar_select 0, %s6, %s4
  %v8 = vstv %s2
  %9 = vst [vmem:[#allocation2] sm:$0x1] %v8
  $region1: #{resvit_generator.127} parent=0
    #allocation3 [shape = 'u8[409600]{0}', space=vmem, size = 0x64000, scoped, tag = 'input window, operand 1']
    loop: start=0, step=1, limit=6
    $region2: #{resvit_generator.127} parent=1 // loop_pre_header
      _
    $region3: #{resvit_generator.127} parent=1 // loop_header
      %s11 = sphi 0, %s15
      %p12 = scmp.ge.s32.totalorder %s11, 6
      %s19 = sphi 0, %s19
      %s21 = sphi 0, %s19
      %s22 = sphi 0, %s21
      %s36 = sphi 0, %s22
      %s42 = sphi 0, %s44
      %s45 = sphi 0, %s42
      %s46 = sphi 0, %s45
      %s62 = sphi 0, %s46
      %s66 = sphi 0, %s66
      %s68 = sphi 0, %s66
      %s69 = sphi 0, %s68
      %s83 = sphi 0, %s69
      %s89 = sphi 0, %s91
      %s92 = sphi 0, %s89
      %s93 = sphi 0, %s92
      %s109 = sphi 0, %s93
    $region4: #{resvit_generator.127} parent=1 // loop_header_branch
      %14 = sbr.rel (%p12) target = $region8
    $region5: #{resvit_generator.127} parent=1 // loop_body
      %s16 = ssub.s32 %s11, 1
      %s17 = ssub.s32 %s11, 2
      %s18 = sadd.s32 %s11, 1
      %s20 = sadd.s32 %s19, 1
      %p23 = scmp.eq.s32.totalorder %s11, 3
      %p24 = scmp.ne.s32.totalorder %s19, %s21
      %p25 = scmp.eq.s32.totalorder %s11, 0
      %p26 = por %p24, %p25
      %p27 = scmp.ne.s32.totalorder %s19, %s21
      %p28 = scmp.eq.s32.totalorder %s16, 3
      %p29 = por %p27, %p28
      %p30 = scmp.ne.s32.totalorder %s21, %s22
      %p31 = scmp.eq.s32.totalorder %s16, 0
      %p32 = por %p30, %p31
      %p33 = scmp.ne.s32.totalorder %s21, %s22
      %p34 = scmp.eq.s32.totalorder %s17, 3
      %p35 = por %p33, %p34
      %p37 = scmp.ne.s32.totalorder %s22, %s36
      %p38 = scmp.eq.s32.totalorder %s17, 0
      %p39 = por %p37, %p38
      %s40 = ssub.s32 %s11, %s18
      %p41 = scmp.eq.s32.totalorder %s40, 0
      %s43 = sadd.s32 %s42, 1
      %s44 = scalar_select %p41, %s42, %s43
      %p47 = pneg %p41
      %p48 = scmp.eq.s32.totalorder %s11, 3
      %p49 = por %p47, %p48
      %p50 = scmp.ne.s32.totalorder %s42, %s45
      %p51 = scmp.eq.s32.totalorder %s11, 0
      %p52 = por %p50, %p51
      %p53 = scmp.ne.s32.totalorder %s42, %s45
      %p54 = scmp.eq.s32.totalorder %s16, 3
      %p55 = por %p53, %p54
      %p56 = scmp.ne.s32.totalorder %s45, %s46
      %p57 = scmp.eq.s32.totalorder %s16, 0
      %p58 = por %p56, %p57
      %p59 = scmp.ne.s32.totalorder %s45, %s46
      %p60 = scmp.eq.s32.totalorder %s17, 3
      %p61 = por %p59, %p60
      %p63 = scmp.ne.s32.totalorder %s46, %s62
      %p64 = scmp.eq.s32.totalorder %s17, 0
      %p65 = por %p63, %p64
      %s67 = sadd.s32 %s66, 1
      %p70 = scmp.eq.s32.totalorder %s11, 3
      %p71 = scmp.ne.s32.totalorder %s66, %s68
      %p72 = scmp.eq.s32.totalorder %s11, 0
      %p73 = por %p71, %p72
      %p74 = scmp.ne.s32.totalorder %s66, %s68
      %p75 = scmp.eq.s32.totalorder %s16, 3
      %p76 = por %p74, %p75
      %p77 = scmp.ne.s32.totalorder %s68, %s69
      %p78 = scmp.eq.s32.totalorder %s16, 0
      %p79 = por %p77, %p78
      %p80 = scmp.ne.s32.totalorder %s68, %s69
      %p81 = scmp.eq.s32.totalorder %s17, 3
      %p82 = por %p80, %p81
      %p84 = scmp.ne.s32.totalorder %s69, %s83
      %p85 = scmp.eq.s32.totalorder %s17, 0
      %p86 = por %p84, %p85
      %s87 = ssub.s32 %s11, %s18
      %p88 = scmp.eq.s32.totalorder %s87, 0
      %s90 = sadd.s32 %s89, 1
      %s91 = scalar_select %p88, %s89, %s90
      %p94 = pneg %p88
      %p95 = scmp.eq.s32.totalorder %s11, 3
      %p96 = por %p94, %p95
      %p97 = scmp.ne.s32.totalorder %s89, %s92
      %p98 = scmp.eq.s32.totalorder %s11, 0
      %p99 = por %p97, %p98
      %p100 = scmp.ne.s32.totalorder %s89, %s92
      %p101 = scmp.eq.s32.totalorder %s16, 3
      %p102 = por %p100, %p101
      %p103 = scmp.ne.s32.totalorder %s92, %s93
      %p104 = scmp.eq.s32.totalorder %s16, 0
      %p105 = por %p103, %p104
      %p106 = scmp.ne.s32.totalorder %s92, %s93
      %p107 = scmp.eq.s32.totalorder %s17, 3
      %p108 = por %p106, %p107
      %p110 = scmp.ne.s32.totalorder %s93, %s109
      %p111 = scmp.eq.s32.totalorder %s17, 0
      %p112 = por %p110, %p111
      %p113 = scmp.le.s32.totalorder 1, %s11
      %p114 = scmp.lt.s32.totalorder %s11, 5
      %p115 = pnand %p113, %p114
      %p116 = pneg %p115
      // Predicated region
      $region9: #{resvit_generator.127} parent=5 // pred_check
        _
      $region10: #{resvit_generator.127} parent=5 // pred_check_branch
        %118 = sbr.rel (%p115) target = $region12
      $region11: #{resvit_generator.127} parent=5 // pred_region
        %s119 = ssub.s32 %s11, 1
        // Predicated region
        $region13: #{resvit_generator.127} parent=11 // pred_check
          %p120 = pneg %p32
        $region14: #{resvit_generator.127} parent=11 // pred_check_branch
          %122 = sbr.rel (%p120) target = $region16
        $region15: #{resvit_generator.127} parent=11 // pred_region
          _
        $region16: #{resvit_generator.127} parent=11 // pred_fallthru
          _
        // Predicated region
        $region17: #{resvit_generator.127} parent=11 // pred_check
          %p123 = pneg %p79
        $region18: #{resvit_generator.127} parent=11 // pred_check_branch
          %125 = sbr.rel (%p123) target = $region20
        $region19: #{resvit_generator.127} parent=11 // pred_region
          _
        $region20: #{resvit_generator.127} parent=11 // pred_fallthru
          _
      $region12: #{resvit_generator.127} parent=5 // pred_fallthru
        _
      %p126 = scmp.lt.s32.totalorder %s11, 4
      // Predicated region
      $region21: #{resvit_generator.127} parent=5 // pred_check
        %p127 = pneg %p126
      $region22: #{resvit_generator.127} parent=5 // pred_check_branch
        %129 = sbr.rel (%p127) target = $region24
      $region23: #{resvit_generator.127} parent=5 // pred_region
        // Predicated region
        $region25: #{resvit_generator.127} parent=23 // pred_check
          %p130 = pneg %p52
        $region26: #{resvit_generator.127} parent=23 // pred_check_branch
          %132 = sbr.rel (%p130) target = $region28
        $region27: #{resvit_generator.127} parent=23 // pred_region
          %s133 = sand.u32 %s42, 1
          %s134 = sand.u32 %s42, 1
          %s135 = smul.addr %s134, 400
          %s136 = scalar_lea.vmem [#allocation3], %s135
          %s137 = smul.u32 4, %s11
          %s138 = smul.addr %s137, 4
          %s139 = scalar_lea.vmem %s1, %s138
          // Predicated region
          $region29: #{resvit_generator.127} parent=27 // pred_check
            _
          $region30: #{resvit_generator.127} parent=27 // pred_check_branch
            %141 = sbr.rel (0) target = $region32
          $region31: #{resvit_generator.127} parent=27 // pred_region
            // Predicated region
            $region33: #{resvit_generator.127} parent=31 // pred_check
              _
            $region34: #{resvit_generator.127} parent=31 // pred_check_branch
              %143 = sbr.rel (0) target = $region36
            $region35: #{resvit_generator.127} parent=31 // pred_region
              loop: start=0, step=1, limit=1
              $region37: #{resvit_generator.127} parent=35 // loop_pre_header
                _
              $region38: #{resvit_generator.127} parent=35 // loop_header
                %s145 = sphi 0, %s149
                %p146 = scmp.ge.s32.totalorder %s145, 1
                %s150 = sphi %s139, %s139
                %s151 = sphi %s136, %s136
              $region39: #{resvit_generator.127} parent=35 // loop_header_branch
                %148 = sbr.rel (%p146) target = $region43
              $region40: #{resvit_generator.127} parent=35 // loop_body
                %v152 = vld [vmem:[%s150] sm:$0xff]
                %153 = vst [vmem:[%s151] sm:$0xff] %v152
                %v154 = vld [vmem:[%s150 + $0x8] sm:$0xff]
                %155 = vst [vmem:[%s151 + $0x8] sm:$0xff] %v154
                %v156 = vld [vmem:[%s150 + $0x40] sm:$0xff]
                %157 = vst [vmem:[%s151 + $0x10] sm:$0xff] %v156
                %v158 = vld [vmem:[%s150 + $0x48] sm:$0xff]
                %159 = vst [vmem:[%s151 + $0x18] sm:$0xff] %v158
                %v160 = vld [vmem:[%s150 + $0x80] sm:$0xff]
                %161 = vst [vmem:[%s151 + $0x20] sm:$0xff] %v160
                %v162 = vld [vmem:[%s150 + $0x88] sm:$0xff]
                %163 = vst [vmem:[%s151 + $0x28] sm:$0xff] %v162
                %v164 = vld [vmem:[%s150 + $0xc0] sm:$0xff]
                %165 = vst [vmem:[%s151 + $0x30] sm:$0xff] %v164
                %v166 = vld [vmem:[%s150 + $0xc8] sm:$0xff]
                %167 = vst [vmem:[%s151 + $0x38] sm:$0xff] %v166
                %v168 = vld [vmem:[%s150 + $0x100] sm:$0xff]
                %169 = vst [vmem:[%s151 + $0x40] sm:$0xff] %v168
                %v170 = vld [vmem:[%s150 + $0x108] sm:$0xff]
                %171 = vst [vmem:[%s151 + $0x48] sm:$0xff] %v170
                %v172 = vld [vmem:[%s150 + $0x140] sm:$0xff]
                %173 = vst [vmem:[%s151 + $0x50] sm:$0xff] %v172
                %v174 = vld [vmem:[%s150 + $0x148] sm:$0xff]
                %175 = vst [vmem:[%s151 + $0x58] sm:$0xff] %v174
                %v176 = vld [vmem:[%s150 + $0x180] sm:$0xff]
                %177 = vst [vmem:[%s151 + $0x60] sm:$0xff] %v176
                %v178 = vld [vmem:[%s150 + $0x188] sm:$0xff]
                %179 = vst [vmem:[%s151 + $0x68] sm:$0xff] %v178
                %v180 = vld [vmem:[%s150 + $0x1c0] sm:$0xff]
                %181 = vst [vmem:[%s151 + $0x70] sm:$0xff] %v180
                %v182 = vld [vmem:[%s150 + $0x1c8] sm:$0xff]
                %183 = vst [vmem:[%s151 + $0x78] sm:$0xff] %v182
                %v184 = vld [vmem:[%s150 + $0x200] sm:$0xff]
                %185 = vst [vmem:[%s151 + $0x80] sm:$0xff] %v184
                %v186 = vld [vmem:[%s150 + $0x208] sm:$0xff]
                %187 = vst [vmem:[%s151 + $0x88] sm:$0xff] %v186
                %v188 = vld [vmem:[%s150 + $0x240] sm:$0xff]
                %189 = vst [vmem:[%s151 + $0x90] sm:$0xff] %v188
                %v190 = vld [vmem:[%s150 + $0x248] sm:$0xff]
                %191 = vst [vmem:[%s151 + $0x98] sm:$0xff] %v190
                %v192 = vld [vmem:[%s150 + $0x280] sm:$0xff]
                %193 = vst [vmem:[%s151 + $0xa0] sm:$0xff] %v192
                %v194 = vld [vmem:[%s150 + $0x288] sm:$0xff]
                %195 = vst [vmem:[%s151 + $0xa8] sm:$0xff] %v194
                %v196 = vld [vmem:[%s150 + $0x2c0] sm:$0xff]
                %197 = vst [vmem:[%s151 + $0xb0] sm:$0xff] %v196
                %v198 = vld [vmem:[%s150 + $0x2c8] sm:$0xff]
                %199 = vst [vmem:[%s151 + $0xb8] sm:$0xff] %v198
                %v200 = vld [vmem:[%s150 + $0x300] sm:$0xff]
                %201 = vst [vmem:[%s151 + $0xc0] sm:$0xff] %v200
                %v202 = vld [vmem:[%s150 + $0x308] sm:$0xff]
                %203 = vst [vmem:[%s151 + $0xc8] sm:$0xff] %v202
                %v204 = vld [vmem:[%s150 + $0x340] sm:$0xff]
                %205 = vst [vmem:[%s151 + $0xd0] sm:$0xff] %v204
                %v206 = vld [vmem:[%s150 + $0x348] sm:$0xff]
                %207 = vst [vmem:[%s151 + $0xd8] sm:$0xff] %v206
                %v208 = vld [vmem:[%s150 + $0x380] sm:$0xff]
                %209 = vst [vmem:[%s151 + $0xe0] sm:$0xff] %v208
                %v210 = vld [vmem:[%s150 + $0x388] sm:$0xff]
                %211 = vst [vmem:[%s151 + $0xe8] sm:$0xff] %v210
                %v212 = vld [vmem:[%s150 + $0x3c0] sm:$0xff]
                %213 = vst [vmem:[%s151 + $0xf0] sm:$0xff] %v212
                %v214 = vld [vmem:[%s150 + $0x3c8] sm:$0xff]
                %215 = vst [vmem:[%s151 + $0xf8] sm:$0xff] %v214
                %v216 = vld [vmem:[%s150 + $0x400] sm:$0xff]
                %217 = vst [vmem:[%s151 + $0x100] sm:$0xff] %v216
                %v218 = vld [vmem:[%s150 + $0x408] sm:$0xff]
                %219 = vst [vmem:[%s151 + $0x108] sm:$0xff] %v218
                %v220 = vld [vmem:[%s150 + $0x440] sm:$0xff]
                %221 = vst [vmem:[%s151 + $0x110] sm:$0xff] %v220
                %v222 = vld [vmem:[%s150 + $0x448] sm:$0xff]
                %223 = vst [vmem:[%s151 + $0x118] sm:$0xff] %v222
                %v224 = vld [vmem:[%s150 + $0x480] sm:$0xff]
                %225 = vst [vmem:[%s151 + $0x120] sm:$0xff] %v224
                %v226 = vld [vmem:[%s150 + $0x488] sm:$0xff]
                %227 = vst [vmem:[%s151 + $0x128] sm:$0xff] %v226
                %v228 = vld [vmem:[%s150 + $0x4c0] sm:$0xff]
                %229 = vst [vmem:[%s151 + $0x130] sm:$0xff] %v228
                %v230 = vld [vmem:[%s150 + $0x4c8] sm:$0xff]
                %231 = vst [vmem:[%s151 + $0x138] sm:$0xff] %v230
                %v232 = vld [vmem:[%s150 + $0x500] sm:$0xff]
                %233 = vst [vmem:[%s151 + $0x140] sm:$0xff] %v232
                %v234 = vld [vmem:[%s150 + $0x508] sm:$0xff]
                %235 = vst [vmem:[%s151 + $0x148] sm:$0xff] %v234
                %v236 = vld [vmem:[%s150 + $0x540] sm:$0xff]
                %237 = vst [vmem:[%s151 + $0x150] sm:$0xff] %v236
                %v238 = vld [vmem:[%s150 + $0x548] sm:$0xff]
                %239 = vst [vmem:[%s151 + $0x158] sm:$0xff] %v238
                %v240 = vld [vmem:[%s150 + $0x580] sm:$0xff]
                %241 = vst [vmem:[%s151 + $0x160] sm:$0xff] %v240
                %v242 = vld [vmem:[%s150 + $0x588] sm:$0xff]
                %243 = vst [vmem:[%s151 + $0x168] sm:$0xff] %v242
                %v244 = vld [vmem:[%s150 + $0x5c0] sm:$0xff]
                %245 = vst [vmem:[%s151 + $0x170] sm:$0xff] %v244
                %v246 = vld [vmem:[%s150 + $0x5c8] sm:$0xff]
                %247 = vst [vmem:[%s151 + $0x178] sm:$0xff] %v246
                %v248 = vld [vmem:[%s150 + $0x600] sm:$0xff]
                %249 = vst [vmem:[%s151 + $0x180] sm:$0xff] %v248
                %v250 = vld [vmem:[%s150 + $0x608] sm:$0xff]
                %251 = vst [vmem:[%s151 + $0x188] sm:$0xff] %v250
              $region41: #{resvit_generator.127} parent=35 // loop_footer
                %s149 = sadd.s32 1, %s145
              $region42: #{resvit_generator.127} parent=35 // loop_footer_branch
                %144 = sbr.rel target = $region38
              $region43: #{resvit_generator.127} parent=35 // loop_exit
                _
            $region36: #{resvit_generator.127} parent=31 // pred_fallthru
              _
            // Predicated region
            $region44: #{resvit_generator.127} parent=31 // pred_check
              _
            $region45: #{resvit_generator.127} parent=31 // pred_check_branch
              %253 = sbr.rel target = $region47
            $region46: #{resvit_generator.127} parent=31 // pred_region
              _
            $region47: #{resvit_generator.127} parent=31 // pred_fallthru
              _
          $region32: #{resvit_generator.127} parent=27 // pred_fallthru
            _
          %254 = vnop
        $region28: #{resvit_generator.127} parent=23 // pred_fallthru
          _
      $region24: #{resvit_generator.127} parent=5 // pred_fallthru
        _
      %p255 = scmp.le.s32.totalorder 1, %s11
      %p256 = scmp.lt.s32.totalorder %s11, 5
      %p257 = pnand %p255, %p256
      %p258 = pneg %p257
      // Predicated region
      $region48: #{resvit_generator.127} parent=5 // pred_check
        _
      $region49: #{resvit_generator.127} parent=5 // pred_check_branch
        %260 = sbr.rel (%p257) target = $region51
      $region50: #{resvit_generator.127} parent=5 // pred_region
        %s261 = ssub.s32 %s11, 1
        %s262 = sand.u32 %s45, 1
        %s263 = sand.u32 %s45, 1
        %s264 = smul.addr %s263, 400
        %s265 = scalar_lea.vmem [#allocation3], %s264
        // Predicated region
        $region52: #{resvit_generator.127} parent=50 // pred_check
          %p266 = pneg %p58
        $region53: #{resvit_generator.127} parent=50 // pred_check_branch
          %268 = sbr.rel (%p266) target = $region55
        $region54: #{resvit_generator.127} parent=50 // pred_region
          _
        $region55: #{resvit_generator.127} parent=50 // pred_fallthru
          _
        %p269 = pneg %p32
        %p270 = pneg %p29
        %s271 = sand.u32 %s45, 1
        %s272 = sand.u32 %s45, 1
        %s273 = smul.addr %s272, 400
        %s274 = scalar_lea.vmem [#allocation3], %s273
        %p275 = pneg %p58
        %p276 = pneg %p55
        %p277 = pneg %p79
        %p278 = pneg %p76
        %p279 = pneg %p105
        %p280 = pneg %p102
        %s281 = smul.u32 4, %s16
        %p282 = scmp.lt.s32.totalorder %s281, 15
        %s283 = scalar_select %p282, %s281, 15
        %s284 = scalar_lea.vmem %s3, %s283
        %s285 = smul.u32 4, %s16
        %s286 = smul.u32 4, %s16
        %p287 = scmp.lt.s32.totalorder %s286, 15
        %s288 = scalar_select %p287, %s286, 15
        %s289 = scalar_lea.vmem %s3, %s288
        %s290 = smul.u32 4, %s16
        %v292 = vld [vmem:[%s0] sm:$0x3]
        %v293 = vld [vmem:[%s265] sm:$0xff]
        %v294 = vld [vmem:[%s265 + $0x8] sm:$0xff]
        %v295 = vld [vmem:[%s265 + $0x10] sm:$0xff]
        %v296 = vld [vmem:[%s265 + $0x18] sm:$0xff]
        %v297 = vld [vmem:[%s265 + $0x20] sm:$0xff]
        %v298 = vld [vmem:[%s265 + $0x28] sm:$0xff]
        %v299 = vld [vmem:[%s265 + $0x30] sm:$0xff]
        %v300 = vld [vmem:[%s265 + $0x38] sm:$0xff]
        %v301 = vld [vmem:[%s265 + $0x40] sm:$0xff]
        %v302 = vld [vmem:[%s265 + $0x48] sm:$0xff]
        %v303 = vld [vmem:[%s265 + $0x50] sm:$0xff]
        %v304 = vld [vmem:[%s265 + $0x58] sm:$0xff]
        %v305 = vld [vmem:[%s265 + $0x60] sm:$0xff]
        %v306 = vld [vmem:[%s265 + $0x68] sm:$0xff]
        %v307 = vld [vmem:[%s265 + $0x70] sm:$0xff]
        %v308 = vld [vmem:[%s265 + $0x78] sm:$0xff]
        %v309 = vld [vmem:[%s265 + $0x80] sm:$0xff]
        %v310 = vld [vmem:[%s265 + $0x88] sm:$0xff]
        %v311 = vld [vmem:[%s265 + $0x90] sm:$0xff]
        %v312 = vld [vmem:[%s265 + $0x98] sm:$0xff]
        %v313 = vld [vmem:[%s265 + $0xa0] sm:$0xff]
        %v314 = vld [vmem:[%s265 + $0xa8] sm:$0xff]
        %v315 = vld [vmem:[%s265 + $0xb0] sm:$0xff]
        %v316 = vld [vmem:[%s265 + $0xb8] sm:$0xff]
        %v317 = vld [vmem:[%s265 + $0xc0] sm:$0xff]
        %v318 = vld [vmem:[%s265 + $0xc8] sm:$0xff]
        %v319 = vld [vmem:[%s265 + $0xd0] sm:$0xff]
        %v320 = vld [vmem:[%s265 + $0xd8] sm:$0xff]
        %v321 = vld [vmem:[%s265 + $0xe0] sm:$0xff]
        %v322 = vld [vmem:[%s265 + $0xe8] sm:$0xff]
        %v323 = vld [vmem:[%s265 + $0xf0] sm:$0xff]
        %v324 = vld [vmem:[%s265 + $0xf8] sm:$0xff]
        %v325 = vld [vmem:[%s265 + $0x100] sm:$0xff]
        %v326 = vld [vmem:[%s265 + $0x108] sm:$0xff]
        %v327 = vld [vmem:[%s265 + $0x110] sm:$0xff]
        %v328 = vld [vmem:[%s265 + $0x118] sm:$0xff]
        %v329 = vld [vmem:[%s265 + $0x120] sm:$0xff]
        %v330 = vld [vmem:[%s265 + $0x128] sm:$0xff]
        %v331 = vld [vmem:[%s265 + $0x130] sm:$0xff]
        %v332 = vld [vmem:[%s265 + $0x138] sm:$0xff]
        %v333 = vld [vmem:[%s265 + $0x140] sm:$0xff]
        %v334 = vld [vmem:[%s265 + $0x148] sm:$0xff]
        %v335 = vld [vmem:[%s265 + $0x150] sm:$0xff]
        %v336 = vld [vmem:[%s265 + $0x158] sm:$0xff]
        %v337 = vld [vmem:[%s265 + $0x160] sm:$0xff]
        %v338 = vld [vmem:[%s265 + $0x168] sm:$0xff]
        %v339 = vld [vmem:[%s265 + $0x170] sm:$0xff]
        %v340 = vld [vmem:[%s265 + $0x178] sm:$0xff]
        %v341 = vld [vmem:[%s265 + $0x180] sm:$0x33]
        %v342 = vld [vmem:[%s265 + $0x188] sm:$0x33]
        %v343 = vld [vmem:[#allocation2] sm:$0x1]
        %345 = vset.pattern.permute.xlu0 0
        %346 = vperm.xlu0 %345, %v343
        %v347 = vpop.permute.xlu0 %346
        %v349 = vlaneseq
        %v350 = vshrl.u32 %v349, 7
        %v351 = vsub.s32 0, %v350
        %v352 = vrot.slane %v347, %v351
        %v355 = vunpack.c.l.s4 1966171168
        %v356 = vunpack.c.0.s8 %v355
        %v357 = vlaneseq
        %v358 = vshrl.u32 %v357, 7
        %v359 = vsub.s32 %v356, %v358
        %v360 = vrot.slane %v292, %v359
        %v361 = vcombine.high %v360, %v360
        %v363 = vunpack.c.l.s4 1966171168
        %v364 = vunpack.c.0.s8 %v363
        %v365 = vlaneseq
        %v366 = vshrl.u32 %v365, 7
        %v367 = vsub.s32 %v364, %v366
        %v368 = vrot.slane %v360, %v367
        %v370 = vunpack.c.l.s4 1966171168
        %v371 = vunpack.c.0.s8 %v370
        %v372 = vlaneseq
        %v373 = vshrl.u32 %v372, 7
        %v374 = vsub.s32 %v371, %v373
        %v375 = vrot.slane %v361, %v374
        %v427 = vunpack.c.l.b16 %v293
        %v428 = vunpack.c.h.b16 %v293
        %v429 = vunpack.c.l.b16 %v294
        %v430 = vunpack.c.h.b16 %v294
        %v431 = vunpack.c.l.b16 %v295
        %v432 = vunpack.c.h.b16 %v295
        %v433 = vunpack.c.l.b16 %v296
        %v434 = vunpack.c.h.b16 %v296
        %v435 = vunpack.c.l.b16 %v297
        %v436 = vunpack.c.h.b16 %v297
        %v437 = vunpack.c.l.b16 %v298
        %v438 = vunpack.c.h.b16 %v298
        %v439 = vunpack.c.l.b16 %v299
        %v440 = vunpack.c.h.b16 %v299
        %v441 = vunpack.c.l.b16 %v300
        %v442 = vunpack.c.h.b16 %v300
        %v443 = vunpack.c.l.b16 %v301
        %v444 = vunpack.c.h.b16 %v301
        %v445 = vunpack.c.l.b16 %v302
        %v446 = vunpack.c.h.b16 %v302
        %v447 = vunpack.c.l.b16 %v303
        %v448 = vunpack.c.h.b16 %v303
        %v449 = vunpack.c.l.b16 %v304
        %v450 = vunpack.c.h.b16 %v304
        %v451 = vunpack.c.l.b16 %v305
        %v452 = vunpack.c.h.b16 %v305
        %v453 = vunpack.c.l.b16 %v306
        %v454 = vunpack.c.h.b16 %v306
        %v455 = vunpack.c.l.b16 %v307
        %v456 = vunpack.c.h.b16 %v307
        %v457 = vunpack.c.l.b16 %v308
        %v458 = vunpack.c.h.b16 %v308
        %v459 = vunpack.c.l.b16 %v309
        %v460 = vunpack.c.h.b16 %v309
        %v461 = vunpack.c.l.b16 %v310
        %v462 = vunpack.c.h.b16 %v310
        %v463 = vunpack.c.l.b16 %v311
        %v464 = vunpack.c.h.b16 %v311
        %v465 = vunpack.c.l.b16 %v312
        %v466 = vunpack.c.h.b16 %v312
        %v467 = vunpack.c.l.b16 %v313
        %v468 = vunpack.c.h.b16 %v313
        %v469 = vunpack.c.l.b16 %v314
        %v470 = vunpack.c.h.b16 %v314
        %v471 = vunpack.c.l.b16 %v315
        %v472 = vunpack.c.h.b16 %v315
        %v473 = vunpack.c.l.b16 %v316
        %v474 = vunpack.c.h.b16 %v316
        %v475 = vunpack.c.l.b16 %v317
        %v476 = vunpack.c.h.b16 %v317
        %v477 = vunpack.c.l.b16 %v318
        %v478 = vunpack.c.h.b16 %v318
        %v479 = vunpack.c.l.b16 %v319
        %v480 = vunpack.c.h.b16 %v319
        %v481 = vunpack.c.l.b16 %v320
        %v482 = vunpack.c.h.b16 %v320
        %v483 = vunpack.c.l.b16 %v321
        %v484 = vunpack.c.h.b16 %v321
        %v485 = vunpack.c.l.b16 %v322
        %v486 = vunpack.c.h.b16 %v322
        %v487 = vunpack.c.l.b16 %v323
        %v488 = vunpack.c.h.b16 %v323
        %v489 = vunpack.c.l.b16 %v324
        %v490 = vunpack.c.h.b16 %v324
        %v491 = vunpack.c.l.b16 %v325
        %v492 = vunpack.c.h.b16 %v325
        %v493 = vunpack.c.l.b16 %v326
        %v494 = vunpack.c.h.b16 %v326
        %v495 = vunpack.c.l.b16 %v327
        %v496 = vunpack.c.h.b16 %v327
        %v497 = vunpack.c.l.b16 %v328
        %v498 = vunpack.c.h.b16 %v328
        %v499 = vunpack.c.l.b16 %v329
        %v500 = vunpack.c.h.b16 %v329
        %v501 = vunpack.c.l.b16 %v330
        %v502 = vunpack.c.h.b16 %v330
        %v503 = vunpack.c.l.b16 %v331
        %v504 = vunpack.c.h.b16 %v331
        %v505 = vunpack.c.l.b16 %v332
        %v506 = vunpack.c.h.b16 %v332
        %v507 = vunpack.c.l.b16 %v333
        %v508 = vunpack.c.h.b16 %v333
        %v509 = vunpack.c.l.b16 %v334
        %v510 = vunpack.c.h.b16 %v334
        %v511 = vunpack.c.l.b16 %v335
        %v512 = vunpack.c.h.b16 %v335
        %v513 = vunpack.c.l.b16 %v336
        %v514 = vunpack.c.h.b16 %v336
        %v515 = vunpack.c.l.b16 %v337
        %v516 = vunpack.c.h.b16 %v337
        %v517 = vunpack.c.l.b16 %v338
        %v518 = vunpack.c.h.b16 %v338
        %v519 = vunpack.c.l.b16 %v339
        %v520 = vunpack.c.h.b16 %v339
        %v521 = vunpack.c.l.b16 %v340
        %v522 = vunpack.c.h.b16 %v340
        %v523 = vunpack.c.l.b16 %v341
        %v524 = vunpack.c.h.b16 %v341
        %v525 = vunpack.c.l.b16 %v342
        %v526 = vunpack.c.h.b16 %v342
        %v527 = vpack.c.b16 %v431, %v427
        %v528 = vpack.c.b16 %v432, %v428
        %v529 = vpack.c.b16 %v433, %v429
        %v530 = vpack.c.b16 %v434, %v430
        %v531 = vpack.c.b16 %v439, %v435
        %v532 = vpack.c.b16 %v440, %v436
        %v533 = vpack.c.b16 %v441, %v437
        %v534 = vpack.c.b16 %v442, %v438
        %v535 = vpack.c.b16 %v447, %v443
        %v536 = vpack.c.b16 %v448, %v444
        %v537 = vpack.c.b16 %v449, %v445
        %v538 = vpack.c.b16 %v450, %v446
        %v539 = vpack.c.b16 %v455, %v451
        %v540 = vpack.c.b16 %v456, %v452
        %v541 = vpack.c.b16 %v457, %v453
        %v542 = vpack.c.b16 %v458, %v454
        %v543 = vpack.c.b16 %v463, %v459
        %v544 = vpack.c.b16 %v464, %v460
        %v545 = vpack.c.b16 %v465, %v461
        %v546 = vpack.c.b16 %v466, %v462
        %v547 = vpack.c.b16 %v471, %v467
        %v548 = vpack.c.b16 %v472, %v468
        %v549 = vpack.c.b16 %v473, %v469
        %v550 = vpack.c.b16 %v474, %v470
        %v551 = vpack.c.b16 %v479, %v475
        %v552 = vpack.c.b16 %v480, %v476
        %v553 = vpack.c.b16 %v481, %v477
        %v554 = vpack.c.b16 %v482, %v478
        %v555 = vpack.c.b16 %v487, %v483
        %v556 = vpack.c.b16 %v488, %v484
        %v557 = vpack.c.b16 %v489, %v485
        %v558 = vpack.c.b16 %v490, %v486
        %v559 = vpack.c.b16 %v495, %v491
        %v560 = vpack.c.b16 %v496, %v492
        %v561 = vpack.c.b16 %v497, %v493
        %v562 = vpack.c.b16 %v498, %v494
        %v563 = vpack.c.b16 %v503, %v499
        %v564 = vpack.c.b16 %v504, %v500
        %v565 = vpack.c.b16 %v505, %v501
        %v566 = vpack.c.b16 %v506, %v502
        %v567 = vpack.c.b16 %v511, %v507
        %v568 = vpack.c.b16 %v512, %v508
        %v569 = vpack.c.b16 %v513, %v509
        %v570 = vpack.c.b16 %v514, %v510
        %v571 = vpack.c.b16 %v519, %v515
        %v572 = vpack.c.b16 %v520, %v516
        %v573 = vpack.c.b16 %v521, %v517
        %v574 = vpack.c.b16 %v522, %v518
        %v575 = vpack.c.b16 %v523, %v523
        %v576 = vpack.c.b16 %v524, %v524
        %v577 = vpack.c.b16 %v525, %v525
        %v578 = vpack.c.b16 %v526, %v526
        %vm627 = vcmask 556032
        %v629 = vsel %vm627, %v375, 0
        %vm631 = vcmask 1041408
        %v633 = vsel %vm631, %v575, 0
        %v636 = vsel %vm631, %v576, 0
        %v639 = vsel %vm631, %v577, 0
        %v642 = vsel %vm631, %v578, 0
        %644 = vmatprep.subr.bf16.mxu0 %v528
        %645 = vmatpush1.bf16.msra.mxu0 %v527
        %646 = vmatprep.subr.bf16.mxu0 %v532
        %647 = vmatpush1.bf16.msra.mxu0 %v531
        %648 = vmatprep.subr.bf16.mxu0 %v536
        %649 = vmatpush1.bf16.msra.mxu0 %v535
        %650 = vmatprep.subr.bf16.mxu0 %v540
        %651 = vmatpush1.bf16.msra.mxu0 %v539
        %652 = vmatprep.subr.bf16.mxu0 %v544
        %653 = vmatpush1.bf16.msra.mxu0 %v543
        %654 = vmatprep.subr.bf16.mxu0 %v548
        %655 = vmatpush1.bf16.msra.mxu0 %v547
        %656 = vmatprep.subr.bf16.mxu0 %v552
        %657 = vmatpush1.bf16.msra.mxu0 %v551
        %658 = vmatprep.subr.bf16.mxu0 %v556
        %659 = vmatpush1.bf16.msra.mxu0 %v555
        %660 = vmatprep.subr.bf16.mxu0 %v560
        %661 = vmatpush1.bf16.msra.mxu0 %v559
        %662 = vmatprep.subr.bf16.mxu0 %v564
        %663 = vmatpush1.bf16.msra.mxu0 %v563
        %664 = vmatprep.subr.bf16.mxu0 %v568
        %665 = vmatpush1.bf16.msra.mxu0 %v567
        %666 = vmatprep.subr.bf16.mxu0 %v572
        %667 = vmatpush1.bf16.msra.mxu0 %v571
        %668 = vmatprep.subr.bf16.mxu0 %v636
        %669 = vmatpush1.bf16.msra.mxu0 %v633
        %670 = vmatprep.subr.bf16.mxu0 0
        %671 = vmatpush1.bf16.msra.mxu0 0
        %672 = vmatprep.subr.bf16.mxu0 0
        %673 = vmatpush1.bf16.msra.mxu0 0
        %674 = vmatprep.subr.bf16.mxu0 0
        %675 = vmatpush1.bf16.msra.mxu0 0
        %676 = vmatprep.mubr.bf16.mxu0 %v629
        %677 = vmatmul.mubr.bf16.gmra.mrb[0].mxu0 %v368
        %v678 = vpop.f32.mrb[0].mxu0
        %v679 = vadd.f32 %v352, %v678
        %v680 = vpop.f32.mrb[0].mxu0
        %v681 = vadd.f32 %v352, %v680
        %v682 = vpop.f32.mrb[0].mxu0
        %v683 = vpop.f32.mrb[0].mxu0
        %684 = vdwg.mxu0
        %685 = vmatprep.subr.bf16.mxu0 %v530
        %686 = vmatpush1.bf16.msra.mxu0 %v529
        %687 = vmatprep.subr.bf16.mxu0 %v534
        %688 = vmatpush1.bf16.msra.mxu0 %v533
        %689 = vmatprep.subr.bf16.mxu0 %v538
        %690 = vmatpush1.bf16.msra.mxu0 %v537
        %691 = vmatprep.subr.bf16.mxu0 %v542
        %692 = vmatpush1.bf16.msra.mxu0 %v541
        %693 = vmatprep.subr.bf16.mxu0 %v546
        %694 = vmatpush1.bf16.msra.mxu0 %v545
        %695 = vmatprep.subr.bf16.mxu0 %v550
        %696 = vmatpush1.bf16.msra.mxu0 %v549
        %697 = vmatprep.subr.bf16.mxu0 %v554
        %698 = vmatpush1.bf16.msra.mxu0 %v553
        %699 = vmatprep.subr.bf16.mxu0 %v558
        %700 = vmatpush1.bf16.msra.mxu0 %v557
        %701 = vmatprep.subr.bf16.mxu0 %v562
        %702 = vmatpush1.bf16.msra.mxu0 %v561
        %703 = vmatprep.subr.bf16.mxu0 %v566
        %704 = vmatpush1.bf16.msra.mxu0 %v565
        %705 = vmatprep.subr.bf16.mxu0 %v570
        %706 = vmatpush1.bf16.msra.mxu0 %v569
        %707 = vmatprep.subr.bf16.mxu0 %v574
        %708 = vmatpush1.bf16.msra.mxu0 %v573
        %709 = vmatprep.subr.bf16.mxu0 %v642
        %710 = vmatpush1.bf16.msra.mxu0 %v639
        %711 = vmatprep.subr.bf16.mxu0 0
        %712 = vmatpush1.bf16.msra.mxu0 0
        %713 = vmatprep.subr.bf16.mxu0 0
        %714 = vmatpush1.bf16.msra.mxu0 0
        %715 = vmatprep.subr.bf16.mxu0 0
        %716 = vmatpush1.bf16.msra.mxu0 0
        %717 = vmatprep.mubr.bf16.mxu0 %v629
        %718 = vmatmul.mubr.bf16.gmra.mrb[0].mxu0 %v368
        %v719 = vpop.f32.mrb[0].mxu0
        %v720 = vadd.f32 %v352, %v719
        %v721 = vpop.f32.mrb[0].mxu0
        %v722 = vadd.f32 %v352, %v721
        %v723 = vpop.f32.mrb[0].mxu0
        %v724 = vpop.f32.mrb[0].mxu0
        %725 = vdwg.mxu0
        %v726 = vtanh.pop %v679
        %v727 = vtanh.pop %v681
        %v728 = vtanh.pop %v720
        %v729 = vtanh.pop %v722
        %v734 = vcombine.low %v726, %v727
        %v735 = vcombine.low %v728, %v729
        %v737 = vunpack.c.l.s4 1966171168
        %v738 = vunpack.c.0.s8 %v737
        %v739 = vlaneseq
        %v740 = vshrl.u32 %v739, 7
        %v741 = vsub.s32 %v738, %v740
        %v742 = vrot.slane %v734, %v741
        %v744 = vunpack.c.l.s4 1966171168
        %v745 = vunpack.c.0.s8 %v744
        %v746 = vlaneseq
        %v747 = vshrl.u32 %v746, 7
        %v748 = vsub.s32 %v745, %v747
        %v749 = vrot.slane %v735, %v748
        %v750 = vcombine.low %v742, %v749
        %v752 = vunpack.c.l.s4 1966171168
        %v753 = vunpack.c.0.s8 %v752
        %v754 = vlaneseq
        %v755 = vshrl.u32 %v754, 7
        %v756 = vsub.s32 %v753, %v755
        %v757 = vrot.slane %v750, %v756
        %v759 = vlaneseq
        %vm760 = vcmp.ge.s32.totalorder %v759, 0
        %vm761 = vcmp.lt.s32.totalorder %v759, 512
        %vm762 = vmand %vm760, %vm761
        %763 = vst.msk [vmem:[%s289] sm:$0xf] %vm762, %v757
        %s764 = smul.u32 4, %s16
        %p765 = scmp.lt.s32.totalorder %s764, 15
        %s766 = scalar_select %p765, %s764, 15
        %s767 = scalar_lea.vmem %s3, %s766
        // Predicated region
        $region56: #{resvit_generator.127} parent=50 // pred_check
          %p768 = pneg %p102
        $region57: #{resvit_generator.127} parent=50 // pred_check_branch
          %770 = sbr.rel (%p768) target = $region59
        $region58: #{resvit_generator.127} parent=50 // pred_region
          %s771 = smul.u32 4, %s16
        $region59: #{resvit_generator.127} parent=50 // pred_fallthru
          _
      $region51: #{resvit_generator.127} parent=5 // pred_fallthru
        _
      %p772 = scmp.le.s32.totalorder 2, %s11
      // Predicated region
      $region60: #{resvit_generator.127} parent=5 // pred_check
        %p773 = pneg %p772
      $region61: #{resvit_generator.127} parent=5 // pred_check_branch
        %775 = sbr.rel (%p773) target = $region63
      $region62: #{resvit_generator.127} parent=5 // pred_region
        %s776 = ssub.s32 %s11, 2
        // Predicated region
        $region64: #{resvit_generator.127} parent=62 // pred_check
          %p777 = pneg %p108
        $region65: #{resvit_generator.127} parent=62 // pred_check_branch
          %779 = sbr.rel (%p777) target = $region67
        $region66: #{resvit_generator.127} parent=62 // pred_region
          %s780 = smul.u32 4, %s17
          %p781 = scmp.lt.s32.totalorder %s780, 15
          %s782 = scalar_select %p781, %s780, 15
          %s783 = scalar_lea.vmem %s3, %s782
        $region67: #{resvit_generator.127} parent=62 // pred_fallthru
          _
      $region63: #{resvit_generator.127} parent=5 // pred_fallthru
        _
    $region6: #{resvit_generator.127} parent=1 // loop_footer
      %s15 = sadd.s32 1, %s11
    $region7: #{resvit_generator.127} parent=1 // loop_footer_branch
      %10 = sbr.rel target = $region3
    $region8: #{resvit_generator.127} parent=1 // loop_exit
      _

</llo_original>
